<compile_context>
chip_gen: v5e
topology: v5e:2x2
jax: 0.10.0
libtpu: 0.0.40
codegen_flags: <defaults>
</compile_context>

<pallas_src>
import numpy as np

import jax
import jax.numpy as jnp
from jax.experimental import pallas as pl
from jax.experimental.pallas import tpu as pltpu


# ---------------------------------------------------------------------------
# Parameter init (same scheme as torch default: U(+-1/sqrt(fan_in))).
# ---------------------------------------------------------------------------
def _uniform(key, shape, fan_in):
    bound = 1.0 / np.sqrt(float(fan_in))
    return jax.random.uniform(key, shape, jnp.float32, -bound, bound)


def init_ac_params(key, input_shape, num_actions):
    h, w, c = input_shape
    o1h, o1w = (h - 8) // 4 + 1, (w - 8) // 4 + 1
    o2h, o2w = (o1h - 4) // 2 + 1, (o1w - 4) // 2 + 1
    o3h, o3w = o2h - 2, o2w - 2
    f = 64 * o3h * o3w
    ks = jax.random.split(key, 12)
    return {
        "c1_w": _uniform(ks[0], (32, c, 8, 8), c * 64),
        "c1_b": _uniform(ks[1], (32,), c * 64),
        "c2_w": _uniform(ks[2], (64, 32, 4, 4), 32 * 16),
        "c2_b": _uniform(ks[3], (64,), 32 * 16),
        "c3_w": _uniform(ks[4], (64, 64, 3, 3), 64 * 9),
        "c3_b": _uniform(ks[5], (64,), 64 * 9),
        "fc_w": _uniform(ks[6], (512, f), f),
        "fc_b": _uniform(ks[7], (512,), f),
        "actor_w": _uniform(ks[8], (num_actions, 512), 512),
        "actor_b": _uniform(ks[9], (num_actions,), 512),
        "critic_w": _uniform(ks[10], (1, 512), 512),
        "critic_b": _uniform(ks[11], (1,), 512),
    }


# ---------------------------------------------------------------------------
# One-time (outside jit) weight preparation.
# ---------------------------------------------------------------------------
def _round_up(x, m):
    return ((x + m - 1) // m) * m


def _build_toeplitz(w, stride, in_w):
    """w: (OC, IC, KH, KW) conv weight  ->  T: (KH, in_w*IC, out_w*OC).

    With input rows packed as lanes (iw, ic) and output rows as lanes (ow, oc):
        out_row[oh] = sum_kh  in_row[stride*oh + kh] @ T[kh]
    implements the (valid, cross-correlation) conv exactly.
    """
    oc, ic, kh, kw = w.shape
    out_w = (in_w - kw) // stride + 1
    t = np.zeros((kh, in_w * ic, out_w * oc), dtype=np.float32)
    for a in range(kh):
        wt = np.transpose(w[:, :, a, :], (2, 1, 0))  # (KW, IC, OC)
        for ow in range(out_w):
            for b in range(kw):
                iw = stride * ow + b
                t[a, iw * ic:(iw + 1) * ic, ow * oc:(ow + 1) * oc] = wt[b]
    return t


def prepare_ac_params(params, input_shape, num_actions):
    """Pre-pack every weight into the (bf16, 128-lane padded) kernel layout."""
    h, w, c = input_shape
    assert h % 4 == 0 and w % 4 == 0, "AC conv1 (k=8, s=4) needs H, W % 4 == 0"
    o1h, o1w = (h - 8) // 4 + 1, (w - 8) // 4 + 1
    o2h, o2w = (o1h - 4) // 2 + 1, (o1w - 4) // 2 + 1
    o3h, o3w = o2h - 2, o2w - 2
    assert o3h >= 1 and o3w >= 1, "input too small for the AC conv stack"
    p = {k: np.asarray(v, np.float32) for k, v in params.items()}

    ww = w // 4
    w1, w2, w3 = o1w * 32, o2w * 64, o3w * 64
    w1p, w2p, w3p = (_round_up(v, 128) for v in (w1, w2, w3))
    hp = _round_up(num_actions + 1, 128)

    # conv1 -> space-to-depth(4) weights: (32, c, 8, 8) -> (32, 16*c, 2, 2).
    # s2d feature order is (dh, dw, c), matching the wrapper's input repack.
    cw1 = p["c1_w"].reshape(32, c, 2, 4, 2, 4)       # oc, ci, a, dh, b, dw
    cw1 = np.transpose(cw1, (0, 3, 5, 1, 2, 4))      # oc, dh, dw, ci, a, b
    cw1 = cw1.reshape(32, 16 * c, 2, 2)

    t1 = _build_toeplitz(cw1, stride=1, in_w=ww)           # (2, ww*16c, w1)
    t2 = _build_toeplitz(p["c2_w"], stride=2, in_w=o1w)    # (4, w1,     w2)
    t3 = _build_toeplitz(p["c3_w"], stride=1, in_w=o2w)    # (3, w2,     w3)

    # Pad every GEMM N dim to a multiple of 128 (lane-dense stores) and the
    # matching downstream K rows with zeros -> padded lanes stay exactly 0.
    t1 = np.pad(t1, ((0, 0), (0, 0), (0, w1p - w1)))
    t2 = np.pad(t2, ((0, 0), (0, w1p - w1), (0, w2p - w2)))
    t3 = np.pad(t3, ((0, 0), (0, w2p - w2), (0, w3p - w3)))

    b1 = np.pad(np.tile(p["c1_b"], o1w), (0, w1p - w1))[None, :]
    b2 = np.pad(np.tile(p["c2_b"], o2w), (0, w2p - w2))[None, :]
    b3 = np.pad(np.tile(p["c3_b"], o3w), (0, w3p - w3))[None, :]

    # fc split per conv3 output row (K-split GEMM).  torch flatten order is
    # (c, h, w); the kernel's conv3 row lane order is (w, c).
    fc = p["fc_w"].reshape(512, 64, o3h, o3w)
    fc = np.transpose(fc, (2, 3, 1, 0)).reshape(o3h, w3, 512)
    fc = np.pad(fc, ((0, 0), (0, w3p - w3), (0, 0)))
    fcb = p["fc_b"][None, :]

    # Fused actor+critic head, padded to a lane-dense multiple of 128.
    hw = np.concatenate([p["actor_w"], p["critic_w"]], axis=0).T   # (512, A+1)
    hb = np.concatenate([p["actor_b"], p["critic_b"]])[None, :]
    hw = np.pad(hw, ((0, 0), (0, hp - hw.shape[1])))
    hb = np.pad(hb, ((0, 0), (0, hp - hb.shape[1])))

    bf = lambda a: jnp.asarray(a, jnp.bfloat16)    # MXU operands
    f32 = lambda a: jnp.asarray(a, jnp.float32)    # biases stay f32
    return {"t1": bf(t1), "b1": f32(b1), "t2": bf(t2), "b2": f32(b2),
            "t3": bf(t3), "b3": f32(b3), "fc_w": bf(fc), "fc_b": f32(fcb),
            "head_w": bf(hw), "head_b": f32(hb)}


# ---------------------------------------------------------------------------
# The single fused Pallas kernel: whole forward pass for one batch block.
# ---------------------------------------------------------------------------
def _ac_fused_kernel(x_ref, t1_ref, b1_ref, t2_ref, b2_ref, t3_ref, b3_ref,
                     fcw_ref, fcb_ref, hw_ref, hb_ref, out_ref,
                     a1_ref, a2_ref):
    o1h, tb, w1p = a1_ref.shape
    o2h, _, w2p = a2_ref.shape
    o3h = fcw_ref.shape[0]
    kh1, kh2, kh3 = t1_ref.shape[0], t2_ref.shape[0], t3_ref.shape[0]

    def dot(a, b):  # bf16 operands, f32 accumulation on the MXU
        return jnp.dot(a.astype(jnp.bfloat16), b,
                       preferred_element_type=jnp.float32)

    # --- conv1 (8x8, s4) == 2-tap stride-1 row conv on the s2d input.
    #     One GEMM per tap with M = o1h*tb, one slab store.
    y1 = dot(x_ref[0:o1h, :, :].reshape(o1h * tb, -1), t1_ref[0])
    for a in range(1, kh1):
        y1 = y1 + dot(x_ref[a:a + o1h, :, :].reshape(o1h * tb, -1), t1_ref[a])
    a1_ref[...] = jnp.maximum(y1 + b1_ref[...], 0.0).reshape(o1h, tb, w1p)

    # --- conv2 (4x4, s2): 4 taps over row-stride-2 views of a1, M = o2h*tb.
    #     (Row gather done with aligned sublane concats; a strided
    #      a1_ref[pl.ds(a, o2h, stride=2)] view would also work.)
    def row_stack(ref, start, n, step):
        if n == 1:
            return ref[start]
        return jnp.concatenate([ref[start + step * i] for i in range(n)],
                               axis=0)

    y2 = None
    for a in range(kh2):
        t = dot(row_stack(a1_ref, a, o2h, 2), t2_ref[a])
        y2 = t if y2 is None else y2 + t
    a2_ref[...] = jnp.maximum(y2 + b2_ref[...], 0.0).reshape(o2h, tb, w2p)

    # --- conv3 (3x3, s1): 3 taps, M = o3h*tb; result kept as one slab value.
    y3 = None
    for a in range(kh3):
        t = dot(a2_ref[a:a + o3h, :, :].reshape(o3h * tb, w2p), t3_ref[a])
        y3 = t if y3 is None else y3 + t
    c3 = jnp.maximum(y3 + b3_ref[...], 0.0)        # (o3h*tb, w3p), pad lanes == 0

    # --- fc as a K-split sum over conv3 rows (no flatten / lane concat).
    lat = None
    for i in range(o3h):
        t = dot(c3[i * tb:(i + 1) * tb, :], fcw_ref[i])
        lat = t if lat is None else lat + t
    lat = jnp.maximum(lat + fcb_ref[...], 0.0)     # (tb, 512)

    # --- fused (actor | critic) head; the only HBM store (lane-dense, 128).
    out_ref[...] = dot(lat, hw_ref[...]) + hb_ref[...]


# ---------------------------------------------------------------------------
# Forward wrapper (jit-able; num_actions / buffering flag are static).
# ---------------------------------------------------------------------------
def ac_forward(prepped, x, num_actions, single_buffer_weights=True):
    """x: (N, C, H, W) float32 (NCHW, like torch) -> (logits (N, A), value (N, 1))."""
    n, c, h, w = x.shape
    o1h, o1w = (h - 8) // 4 + 1, (w - 8) // 4 + 1
    o2h, o2w = (o1h - 4) // 2 + 1, (o1w - 4) // 2 + 1
    o3h, o3w = o2h - 2, o2w - 2
    hh, ww = h // 4, w // 4
    wc = ww * 16 * c
    w1p = prepped["b1"].shape[1]
    w2p = prepped["b2"].shape[1]
    hp = prepped["head_w"].shape[1]

    # Space-to-depth(4) repack: NCHW -> (H/4, N, (W/4)*16c), lanes = (jw,dh,dw,ci).
    # TODO(synk): accept s2d/NHWC input straight from the host pipeline (or use
    # CompilerParams(allow_input_fusion) on this operand) to avoid this extra
    # HBM round trip at large batch.
    xr = x.reshape(n, c, hh, 4, ww, 4)
    xr = jnp.transpose(xr, (2, 0, 4, 3, 5, 1)).reshape(hh, n, wc)

    # Batch tiling: round small batches to the 8-row sublane multiple only,
    # cap at 128 rows per grid step, prefer >=2 grid steps (2 TCs on v7x).
    npad = _round_up(n, 8)
    if npad >= 16:
        tb = min(128, _round_up(max(npad // 2, 8), 8))
    else:
        tb = npad
    npad = _round_up(n, tb)
    nb = npad // tb
    if npad != n:
        xr = jnp.pad(xr, ((0, 0), (0, npad - n), (0, 0)))

    def const_spec(arr):
        shape = arr.shape
        imap = lambda i: (0,) * len(shape)
        if single_buffer_weights:
            try:
                # Constant-index weight blocks never change -> single buffer.
                return pl.BlockSpec(shape, imap, pipeline_mode=pl.Buffered(1))
            except Exception:
                pass
        return pl.BlockSpec(shape, imap)

    weights = (prepped["t1"], prepped["b1"], prepped["t2"], prepped["b2"],
               prepped["t3"], prepped["b3"], prepped["fc_w"], prepped["fc_b"],
               prepped["head_w"], prepped["head_b"])

    in_specs = [pl.BlockSpec((hh, tb, wc), lambda i: (0, i, 0))]
    in_specs += [const_spec(wt) for wt in weights]

    # Rough roofline hint for the XLA scheduler around the custom call.
    macs = (o1h * o1w * 32 * (c * 64) + o2h * o2w * 64 * 512
            + o3h * o3w * 64 * 576 + o3h * o3w * 64 * 512 + 512 * hp)
    wbytes = sum(int(np.prod(wt.shape)) * wt.dtype.itemsize for wt in weights)
    cost = pl.CostEstimate(flops=2 * npad * macs, transcendentals=0,
                           bytes_accessed=int(xr.size) * 4 + npad * hp * 4 + wbytes)

    # VMEM budget: stay under v7x's 64 MiB physical, allow more on v5e/v6e.
    try:
        vmem_cap = int(pltpu.get_tpu_info().vmem_capacity_bytes)
    except Exception:
        vmem_cap = 64 * 1024 * 1024
    vmem_limit = int(min(max(vmem_cap - 8 * 1024 * 1024, 32 * 1024 * 1024),
                         100 * 1024 * 1024))

    out = pl.pallas_call(
        _ac_fused_kernel,
        out_shape=jax.ShapeDtypeStruct((npad, hp), jnp.float32),
        grid=(nb,),
        in_specs=in_specs,
        out_specs=pl.BlockSpec((tb, hp), lambda i: (i, 0)),
        scratch_shapes=[
            pltpu.VMEM((o1h, tb, w1p), jnp.float32),   # conv1 activation slab
            pltpu.VMEM((o2h, tb, w2p), jnp.float32),   # conv2 activation slab
        ],
        compiler_params=pltpu.CompilerParams(
            dimension_semantics=("parallel",),
            vmem_limit_bytes=vmem_limit),
        cost_estimate=cost,
    )(xr, *weights)

    logits = out[:n, :num_actions]
    value = out[:n, num_actions:num_actions + 1]
    return logits, value


# ---------------------------------------------------------------------------
# Pure-JAX reference (same math as the PyTorch module) for self-validation.
# ---------------------------------------------------------------------------
def ac_forward_reference(params, x):
    def conv(x, wgt, b, s):
        y = jax.lax.conv_general_dilated(
            x, wgt, (s, s), "VALID",
            dimension_numbers=("NCHW", "OIHW", "NCHW"))
        return jax.nn.relu(y + b[None, :, None, None])

    x = conv(x, params["c1_w"], params["c1_b"], 4)
    x = conv(x, params["c2_w"], params["c2_b"], 2)
    x = conv(x, params["c3_w"], params["c3_b"], 1)
    flat = x.reshape(x.shape[0], -1)
    latent = jax.nn.relu(flat @ params["fc_w"].T + params["fc_b"])
    logits = latent @ params["actor_w"].T + params["actor_b"]
    value = latent @ params["critic_w"].T + params["critic_b"]
    return logits, value


if __name__ == "__main__":
    # Smallest square input that survives the conv stack: 36 -> 8 -> 3 -> 1.
    H = W = 36
    C = 4
    N = 2
    NUM_ACTIONS = 6

    key = jax.random.PRNGKey(0)
    k_params, k_x = jax.random.split(key)
    params = init_ac_params(k_params, (H, W, C), NUM_ACTIONS)
    prepped = prepare_ac_params(params, (H, W, C), NUM_ACTIONS)
    x = jax.random.normal(k_x, (N, C, H, W), jnp.float32)

    fwd = jax.jit(ac_forward,
                  static_argnames=("num_actions", "single_buffer_weights"))
    try:
        logits, value = fwd(prepped, x, num_actions=NUM_ACTIONS,
                            single_buffer_weights=True)
        jax.block_until_ready((logits, value))
    except Exception:
        # pipeline_mode=pl.Buffered(1) unsupported on this jax version ->
        # fall back to default double-buffered weight blocks (same math).
        logits, value = fwd(prepped, x, num_actions=NUM_ACTIONS,
                            single_buffer_weights=False)
        jax.block_until_ready((logits, value))

    assert logits.shape == (N, NUM_ACTIONS), logits.shape
    assert value.shape == (N, 1), value.shape

    ref_logits, ref_value = ac_forward_reference(params, x)
    # bf16 MXU operands with f32 accumulation -> 5e-2 tolerance.
    assert jnp.allclose(logits, ref_logits, atol=5e-2, rtol=5e-2), (
        "logits mismatch", float(jnp.max(jnp.abs(logits - ref_logits))))
    assert jnp.allclose(value, ref_value, atol=5e-2, rtol=5e-2), (
        "value mismatch", float(jnp.max(jnp.abs(value - ref_value))))

    print("KERNEL_OK")
</pallas_src>

<mosaic_0001>
module attributes {stable_mosaic.version = 11 : i64} {
  func.func @_ac_fused_kernel(%arg0: i32, %arg1: memref<9x8x576xf32, #tpu.memory_space<vmem>>, %arg2: memref<2x576x256xbf16, #tpu.memory_space<vmem>>, %arg3: memref<1x256xf32, #tpu.memory_space<vmem>>, %arg4: memref<4x256x256xbf16, #tpu.memory_space<vmem>>, %arg5: memref<1x256xf32, #tpu.memory_space<vmem>>, %arg6: memref<3x256x128xbf16, #tpu.memory_space<vmem>>, %arg7: memref<1x128xf32, #tpu.memory_space<vmem>>, %arg8: memref<1x128x512xbf16, #tpu.memory_space<vmem>>, %arg9: memref<1x512xf32, #tpu.memory_space<vmem>>, %arg10: memref<512x128xbf16, #tpu.memory_space<vmem>>, %arg11: memref<1x128xf32, #tpu.memory_space<vmem>>, %arg12: memref<8x128xf32, #tpu.memory_space<vmem>>, %arg13: memref<8x8x256xf32, #tpu.memory_space<vmem>>, %arg14: memref<3x8x256xf32, #tpu.memory_space<vmem>>) attributes {dimension_semantics = [#tpu.dimension_semantics<parallel>], iteration_bounds = array<i64: 1>, scalar_prefetch = 0 : i64, scratch_operands = 2 : i64, tpu.core_type = #tpu.core_type<tc>, window_params = [{transform_indices = @transform_0, window_bounds = array<i64: 9, 8, 576>}, {pipeline_mode = #tpu.pipeline_mode<synchronous>, transform_indices = @transform_1, window_bounds = array<i64: 2, 576, 256>}, {pipeline_mode = #tpu.pipeline_mode<synchronous>, transform_indices = @transform_2, window_bounds = array<i64: 1, 256>}, {pipeline_mode = #tpu.pipeline_mode<synchronous>, transform_indices = @transform_3, window_bounds = array<i64: 4, 256, 256>}, {pipeline_mode = #tpu.pipeline_mode<synchronous>, transform_indices = @transform_4, window_bounds = array<i64: 1, 256>}, {pipeline_mode = #tpu.pipeline_mode<synchronous>, transform_indices = @transform_5, window_bounds = array<i64: 3, 256, 128>}, {pipeline_mode = #tpu.pipeline_mode<synchronous>, transform_indices = @transform_6, window_bounds = array<i64: 1, 128>}, {pipeline_mode = #tpu.pipeline_mode<synchronous>, transform_indices = @transform_7, window_bounds = array<i64: 1, 128, 512>}, {pipeline_mode = #tpu.pipeline_mode<synchronous>, transform_indices = @transform_8, window_bounds = array<i64: 1, 512>}, {pipeline_mode = #tpu.pipeline_mode<synchronous>, transform_indices = @transform_9, window_bounds = array<i64: 512, 128>}, {pipeline_mode = #tpu.pipeline_mode<synchronous>, transform_indices = @transform_10, window_bounds = array<i64: 1, 128>}, {transform_indices = @transform_11, window_bounds = array<i64: 8, 128>}]} {
    %c0 = arith.constant 0 : index
    %c0_0 = arith.constant 0 : index
    %c0_1 = arith.constant 0 : index
    %0 = vector.load %arg1[%c0, %c0_0, %c0_1] : memref<9x8x576xf32, #tpu.memory_space<vmem>>, vector<8x8x576xf32>
    %1 = vector.shape_cast %0 : vector<8x8x576xf32> to vector<64x576xf32>
    %c0_2 = arith.constant 0 : index
    %c0_3 = arith.constant 0 : index
    %c0_4 = arith.constant 0 : index
    %2 = vector.load %arg2[%c0_2, %c0_3, %c0_4] : memref<2x576x256xbf16, #tpu.memory_space<vmem>>, vector<1x576x256xbf16>
    %3 = vector.shape_cast %2 : vector<1x576x256xbf16> to vector<576x256xbf16>
    %4 = arith.truncf %1 : vector<64x576xf32> to vector<64x576xbf16>
    %cst = arith.constant dense<0.000000e+00> : vector<64x256xf32>
    %5 = tpu.matmul %4, %3, %cst {dimension_numbers = #tpu.dot_dimension_numbers<[1], [0], [0], [1], [0, 0, 1, 1], [], []>} : vector<64x576xbf16>, vector<576x256xbf16>, vector<64x256xf32> -> vector<64x256xf32>
    %c1 = arith.constant 1 : index
    %c0_5 = arith.constant 0 : index
    %c0_6 = arith.constant 0 : index
    %6 = vector.load %arg1[%c1, %c0_5, %c0_6] : memref<9x8x576xf32, #tpu.memory_space<vmem>>, vector<8x8x576xf32>
    %7 = vector.shape_cast %6 : vector<8x8x576xf32> to vector<64x576xf32>
    %c1_7 = arith.constant 1 : index
    %c0_8 = arith.constant 0 : index
    %c0_9 = arith.constant 0 : index
    %8 = vector.load %arg2[%c1_7, %c0_8, %c0_9] : memref<2x576x256xbf16, #tpu.memory_space<vmem>>, vector<1x576x256xbf16>
    %9 = vector.shape_cast %8 : vector<1x576x256xbf16> to vector<576x256xbf16>
    %10 = arith.truncf %7 : vector<64x576xf32> to vector<64x576xbf16>
    %cst_10 = arith.constant dense<0.000000e+00> : vector<64x256xf32>
    %11 = tpu.matmul %10, %9, %cst_10 {dimension_numbers = #tpu.dot_dimension_numbers<[1], [0], [0], [1], [0, 0, 1, 1], [], []>} : vector<64x576xbf16>, vector<576x256xbf16>, vector<64x256xf32> -> vector<64x256xf32>
    %12 = arith.addf %5, %11 : vector<64x256xf32>
    %c0_11 = arith.constant 0 : index
    %c0_12 = arith.constant 0 : index
    %13 = vector.load %arg3[%c0_11, %c0_12] : memref<1x256xf32, #tpu.memory_space<vmem>>, vector<1x256xf32>
    %14 = vector.broadcast %13 : vector<1x256xf32> to vector<64x256xf32>
    %15 = arith.addf %12, %14 : vector<64x256xf32>
    %cst_13 = arith.constant 0.000000e+00 : f32
    %16 = vector.broadcast %cst_13 : f32 to vector<64x256xf32>
    %17 = arith.maximumf %15, %16 : vector<64x256xf32>
    %18 = vector.shape_cast %17 : vector<64x256xf32> to vector<8x8x256xf32>
    %c0_14 = arith.constant 0 : index
    %c0_15 = arith.constant 0 : index
    %c0_16 = arith.constant 0 : index
    %19 = vector.load %arg13[%c0_14, %c0_15, %c0_16] : memref<8x8x256xf32, #tpu.memory_space<vmem>>, vector<8x8x256xf32>
    tpu.vector_store %arg13[%c0_14, %c0_15, %c0_16], %18 {strides = array<i32>} : memref<8x8x256xf32, #tpu.memory_space<vmem>>, vector<8x8x256xf32>,
    %c0_17 = arith.constant 0 : index
    %c0_18 = arith.constant 0 : index
    %c0_19 = arith.constant 0 : index
    %20 = vector.load %arg13[%c0_17, %c0_18, %c0_19] : memref<8x8x256xf32, #tpu.memory_space<vmem>>, vector<1x8x256xf32>
    %21 = vector.shape_cast %20 : vector<1x8x256xf32> to vector<8x256xf32>
    %c2 = arith.constant 2 : index
    %c0_20 = arith.constant 0 : index
    %c0_21 = arith.constant 0 : index
    %22 = vector.load %arg13[%c2, %c0_20, %c0_21] : memref<8x8x256xf32, #tpu.memory_space<vmem>>, vector<1x8x256xf32>
    %23 = vector.shape_cast %22 : vector<1x8x256xf32> to vector<8x256xf32>
    %c4 = arith.constant 4 : index
    %c0_22 = arith.constant 0 : index
    %c0_23 = arith.constant 0 : index
    %24 = vector.load %arg13[%c4, %c0_22, %c0_23] : memref<8x8x256xf32, #tpu.memory_space<vmem>>, vector<1x8x256xf32>
    %25 = vector.shape_cast %24 : vector<1x8x256xf32> to vector<8x256xf32>
    %26 = tpu.concatenate %21, %23, %25 in 0 : vector<8x256xf32>, vector<8x256xf32>, vector<8x256xf32> -> vector<24x256xf32>
    %c0_24 = arith.constant 0 : index
    %c0_25 = arith.constant 0 : index
    %c0_26 = arith.constant 0 : index
    %27 = vector.load %arg4[%c0_24, %c0_25, %c0_26] : memref<4x256x256xbf16, #tpu.memory_space<vmem>>, vector<1x256x256xbf16>
    %28 = vector.shape_cast %27 : vector<1x256x256xbf16> to vector<256x256xbf16>
    %29 = arith.truncf %26 : vector<24x256xf32> to vector<24x256xbf16>
    %cst_27 = arith.constant dense<0.000000e+00> : vector<24x256xf32>
    %30 = tpu.matmul %29, %28, %cst_27 {dimension_numbers = #tpu.dot_dimension_numbers<[1], [0], [0], [1], [0, 0, 1, 1], [], []>} : vector<24x256xbf16>, vector<256x256xbf16>, vector<24x256xf32> -> vector<24x256xf32>
    %c1_28 = arith.constant 1 : index
    %c0_29 = arith.constant 0 : index
    %c0_30 = arith.constant 0 : index
    %31 = vector.load %arg13[%c1_28, %c0_29, %c0_30] : memref<8x8x256xf32, #tpu.memory_space<vmem>>, vector<1x8x256xf32>
    %32 = vector.shape_cast %31 : vector<1x8x256xf32> to vector<8x256xf32>
    %c3 = arith.constant 3 : index
    %c0_31 = arith.constant 0 : index
    %c0_32 = arith.constant 0 : index
    %33 = vector.load %arg13[%c3, %c0_31, %c0_32] : memref<8x8x256xf32, #tpu.memory_space<vmem>>, vector<1x8x256xf32>
    %34 = vector.shape_cast %33 : vector<1x8x256xf32> to vector<8x256xf32>
    %c5 = arith.constant 5 : index
    %c0_33 = arith.constant 0 : index
    %c0_34 = arith.constant 0 : index
    %35 = vector.load %arg13[%c5, %c0_33, %c0_34] : memref<8x8x256xf32, #tpu.memory_space<vmem>>, vector<1x8x256xf32>
    %36 = vector.shape_cast %35 : vector<1x8x256xf32> to vector<8x256xf32>
    %37 = tpu.concatenate %32, %34, %36 in 0 : vector<8x256xf32>, vector<8x256xf32>, vector<8x256xf32> -> vector<24x256xf32>
    %c1_35 = arith.constant 1 : index
    %c0_36 = arith.constant 0 : index
    %c0_37 = arith.constant 0 : index
    %38 = vector.load %arg4[%c1_35, %c0_36, %c0_37] : memref<4x256x256xbf16, #tpu.memory_space<vmem>>, vector<1x256x256xbf16>
    %39 = vector.shape_cast %38 : vector<1x256x256xbf16> to vector<256x256xbf16>
    %40 = arith.truncf %37 : vector<24x256xf32> to vector<24x256xbf16>
    %cst_38 = arith.constant dense<0.000000e+00> : vector<24x256xf32>
    %41 = tpu.matmul %40, %39, %cst_38 {dimension_numbers = #tpu.dot_dimension_numbers<[1], [0], [0], [1], [0, 0, 1, 1], [], []>} : vector<24x256xbf16>, vector<256x256xbf16>, vector<24x256xf32> -> vector<24x256xf32>
    %42 = arith.addf %30, %41 : vector<24x256xf32>
    %c2_39 = arith.constant 2 : index
    %c0_40 = arith.constant 0 : index
    %c0_41 = arith.constant 0 : index
    %43 = vector.load %arg13[%c2_39, %c0_40, %c0_41] : memref<8x8x256xf32, #tpu.memory_space<vmem>>, vector<1x8x256xf32>
    %44 = vector.shape_cast %43 : vector<1x8x256xf32> to vector<8x256xf32>
    %c4_42 = arith.constant 4 : index
    %c0_43 = arith.constant 0 : index
    %c0_44 = arith.constant 0 : index
    %45 = vector.load %arg13[%c4_42, %c0_43, %c0_44] : memref<8x8x256xf32, #tpu.memory_space<vmem>>, vector<1x8x256xf32>
    %46 = vector.shape_cast %45 : vector<1x8x256xf32> to vector<8x256xf32>
    %c6 = arith.constant 6 : index
    %c0_45 = arith.constant 0 : index
    %c0_46 = arith.constant 0 : index
    %47 = vector.load %arg13[%c6, %c0_45, %c0_46] : memref<8x8x256xf32, #tpu.memory_space<vmem>>, vector<1x8x256xf32>
    %48 = vector.shape_cast %47 : vector<1x8x256xf32> to vector<8x256xf32>
    %49 = tpu.concatenate %44, %46, %48 in 0 : vector<8x256xf32>, vector<8x256xf32>, vector<8x256xf32> -> vector<24x256xf32>
    %c2_47 = arith.constant 2 : index
    %c0_48 = arith.constant 0 : index
    %c0_49 = arith.constant 0 : index
    %50 = vector.load %arg4[%c2_47, %c0_48, %c0_49] : memref<4x256x256xbf16, #tpu.memory_space<vmem>>, vector<1x256x256xbf16>
    %51 = vector.shape_cast %50 : vector<1x256x256xbf16> to vector<256x256xbf16>
    %52 = arith.truncf %49 : vector<24x256xf32> to vector<24x256xbf16>
    %cst_50 = arith.constant dense<0.000000e+00> : vector<24x256xf32>
    %53 = tpu.matmul %52, %51, %cst_50 {dimension_numbers = #tpu.dot_dimension_numbers<[1], [0], [0], [1], [0, 0, 1, 1], [], []>} : vector<24x256xbf16>, vector<256x256xbf16>, vector<24x256xf32> -> vector<24x256xf32>
    %54 = arith.addf %42, %53 : vector<24x256xf32>
    %c3_51 = arith.constant 3 : index
    %c0_52 = arith.constant 0 : index
    %c0_53 = arith.constant 0 : index
    %55 = vector.load %arg13[%c3_51, %c0_52, %c0_53] : memref<8x8x256xf32, #tpu.memory_space<vmem>>, vector<1x8x256xf32>
    %56 = vector.shape_cast %55 : vector<1x8x256xf32> to vector<8x256xf32>
    %c5_54 = arith.constant 5 : index
    %c0_55 = arith.constant 0 : index
    %c0_56 = arith.constant 0 : index
    %57 = vector.load %arg13[%c5_54, %c0_55, %c0_56] : memref<8x8x256xf32, #tpu.memory_space<vmem>>, vector<1x8x256xf32>
    %58 = vector.shape_cast %57 : vector<1x8x256xf32> to vector<8x256xf32>
    %c7 = arith.constant 7 : index
    %c0_57 = arith.constant 0 : index
    %c0_58 = arith.constant 0 : index
    %59 = vector.load %arg13[%c7, %c0_57, %c0_58] : memref<8x8x256xf32, #tpu.memory_space<vmem>>, vector<1x8x256xf32>
    %60 = vector.shape_cast %59 : vector<1x8x256xf32> to vector<8x256xf32>
    %61 = tpu.concatenate %56, %58, %60 in 0 : vector<8x256xf32>, vector<8x256xf32>, vector<8x256xf32> -> vector<24x256xf32>
    %c3_59 = arith.constant 3 : index
    %c0_60 = arith.constant 0 : index
    %c0_61 = arith.constant 0 : index
    %62 = vector.load %arg4[%c3_59, %c0_60, %c0_61] : memref<4x256x256xbf16, #tpu.memory_space<vmem>>, vector<1x256x256xbf16>
    %63 = vector.shape_cast %62 : vector<1x256x256xbf16> to vector<256x256xbf16>
    %64 = arith.truncf %61 : vector<24x256xf32> to vector<24x256xbf16>
    %cst_62 = arith.constant dense<0.000000e+00> : vector<24x256xf32>
    %65 = tpu.matmul %64, %63, %cst_62 {dimension_numbers = #tpu.dot_dimension_numbers<[1], [0], [0], [1], [0, 0, 1, 1], [], []>} : vector<24x256xbf16>, vector<256x256xbf16>, vector<24x256xf32> -> vector<24x256xf32>
    %66 = arith.addf %54, %65 : vector<24x256xf32>
    %c0_63 = arith.constant 0 : index
    %c0_64 = arith.constant 0 : index
    %67 = vector.load %arg5[%c0_63, %c0_64] : memref<1x256xf32, #tpu.memory_space<vmem>>, vector<1x256xf32>
    %68 = vector.broadcast %67 : vector<1x256xf32> to vector<24x256xf32>
    %69 = arith.addf %66, %68 : vector<24x256xf32>
    %cst_65 = arith.constant 0.000000e+00 : f32
    %70 = vector.broadcast %cst_65 : f32 to vector<24x256xf32>
    %71 = arith.maximumf %69, %70 : vector<24x256xf32>
    %72 = vector.shape_cast %71 : vector<24x256xf32> to vector<3x8x256xf32>
    %c0_66 = arith.constant 0 : index
    %c0_67 = arith.constant 0 : index
    %c0_68 = arith.constant 0 : index
    %73 = vector.load %arg14[%c0_66, %c0_67, %c0_68] : memref<3x8x256xf32, #tpu.memory_space<vmem>>, vector<3x8x256xf32>
    tpu.vector_store %arg14[%c0_66, %c0_67, %c0_68], %72 {strides = array<i32>} : memref<3x8x256xf32, #tpu.memory_space<vmem>>, vector<3x8x256xf32>,
    %c0_69 = arith.constant 0 : index
    %c0_70 = arith.constant 0 : index
    %c0_71 = arith.constant 0 : index
    %74 = vector.load %arg14[%c0_69, %c0_70, %c0_71] : memref<3x8x256xf32, #tpu.memory_space<vmem>>, vector<1x8x256xf32>
    %75 = vector.shape_cast %74 : vector<1x8x256xf32> to vector<8x256xf32>
    %c0_72 = arith.constant 0 : index
    %c0_73 = arith.constant 0 : index
    %c0_74 = arith.constant 0 : index
    %76 = vector.load %arg6[%c0_72, %c0_73, %c0_74] : memref<3x256x128xbf16, #tpu.memory_space<vmem>>, vector<1x256x128xbf16>
    %77 = vector.shape_cast %76 : vector<1x256x128xbf16> to vector<256x128xbf16>
    %78 = arith.truncf %75 : vector<8x256xf32> to vector<8x256xbf16>
    %cst_75 = arith.constant dense<0.000000e+00> : vector<8x128xf32>
    %79 = tpu.matmul %78, %77, %cst_75 {dimension_numbers = #tpu.dot_dimension_numbers<[1], [0], [0], [1], [0, 0, 1, 1], [], []>} : vector<8x256xbf16>, vector<256x128xbf16>, vector<8x128xf32> -> vector<8x128xf32>
    %c1_76 = arith.constant 1 : index
    %c0_77 = arith.constant 0 : index
    %c0_78 = arith.constant 0 : index
    %80 = vector.load %arg14[%c1_76, %c0_77, %c0_78] : memref<3x8x256xf32, #tpu.memory_space<vmem>>, vector<1x8x256xf32>
    %81 = vector.shape_cast %80 : vector<1x8x256xf32> to vector<8x256xf32>
    %c1_79 = arith.constant 1 : index
    %c0_80 = arith.constant 0 : index
    %c0_81 = arith.constant 0 : index
    %82 = vector.load %arg6[%c1_79, %c0_80, %c0_81] : memref<3x256x128xbf16, #tpu.memory_space<vmem>>, vector<1x256x128xbf16>
    %83 = vector.shape_cast %82 : vector<1x256x128xbf16> to vector<256x128xbf16>
    %84 = arith.truncf %81 : vector<8x256xf32> to vector<8x256xbf16>
    %cst_82 = arith.constant dense<0.000000e+00> : vector<8x128xf32>
    %85 = tpu.matmul %84, %83, %cst_82 {dimension_numbers = #tpu.dot_dimension_numbers<[1], [0], [0], [1], [0, 0, 1, 1], [], []>} : vector<8x256xbf16>, vector<256x128xbf16>, vector<8x128xf32> -> vector<8x128xf32>
    %86 = arith.addf %79, %85 : vector<8x128xf32>
    %c2_83 = arith.constant 2 : index
    %c0_84 = arith.constant 0 : index
    %c0_85 = arith.constant 0 : index
    %87 = vector.load %arg14[%c2_83, %c0_84, %c0_85] : memref<3x8x256xf32, #tpu.memory_space<vmem>>, vector<1x8x256xf32>
    %88 = vector.shape_cast %87 : vector<1x8x256xf32> to vector<8x256xf32>
    %c2_86 = arith.constant 2 : index
    %c0_87 = arith.constant 0 : index
    %c0_88 = arith.constant 0 : index
    %89 = vector.load %arg6[%c2_86, %c0_87, %c0_88] : memref<3x256x128xbf16, #tpu.memory_space<vmem>>, vector<1x256x128xbf16>
    %90 = vector.shape_cast %89 : vector<1x256x128xbf16> to vector<256x128xbf16>
    %91 = arith.truncf %88 : vector<8x256xf32> to vector<8x256xbf16>
    %cst_89 = arith.constant dense<0.000000e+00> : vector<8x128xf32>
    %92 = tpu.matmul %91, %90, %cst_89 {dimension_numbers = #tpu.dot_dimension_numbers<[1], [0], [0], [1], [0, 0, 1, 1], [], []>} : vector<8x256xbf16>, vector<256x128xbf16>, vector<8x128xf32> -> vector<8x128xf32>
    %93 = arith.addf %86, %92 : vector<8x128xf32>
    %c0_90 = arith.constant 0 : index
    %c0_91 = arith.constant 0 : index
    %94 = vector.load %arg7[%c0_90, %c0_91] : memref<1x128xf32, #tpu.memory_space<vmem>>, vector<1x128xf32>
    %95 = vector.broadcast %94 : vector<1x128xf32> to vector<8x128xf32>
    %96 = arith.addf %93, %95 : vector<8x128xf32>
    %cst_92 = arith.constant 0.000000e+00 : f32
    %97 = vector.broadcast %cst_92 : f32 to vector<8x128xf32>
    %98 = arith.maximumf %96, %97 : vector<8x128xf32>
    %c0_93 = arith.constant 0 : index
    %c0_94 = arith.constant 0 : index
    %c0_95 = arith.constant 0 : index
    %99 = vector.load %arg8[%c0_93, %c0_94, %c0_95] : memref<1x128x512xbf16, #tpu.memory_space<vmem>>, vector<1x128x512xbf16>
    %100 = vector.shape_cast %99 : vector<1x128x512xbf16> to vector<128x512xbf16>
    %101 = arith.truncf %98 : vector<8x128xf32> to vector<8x128xbf16>
    %cst_96 = arith.constant dense<0.000000e+00> : vector<8x512xf32>
    %102 = tpu.matmul %101, %100, %cst_96 {dimension_numbers = #tpu.dot_dimension_numbers<[1], [0], [0], [1], [0, 0, 1, 1], [], []>} : vector<8x128xbf16>, vector<128x512xbf16>, vector<8x512xf32> -> vector<8x512xf32>
    %c0_97 = arith.constant 0 : index
    %c0_98 = arith.constant 0 : index
    %103 = vector.load %arg9[%c0_97, %c0_98] : memref<1x512xf32, #tpu.memory_space<vmem>>, vector<1x512xf32>
    %104 = vector.broadcast %103 : vector<1x512xf32> to vector<8x512xf32>
    %105 = arith.addf %102, %104 : vector<8x512xf32>
    %cst_99 = arith.constant 0.000000e+00 : f32
    %106 = vector.broadcast %cst_99 : f32 to vector<8x512xf32>
    %107 = arith.maximumf %105, %106 : vector<8x512xf32>
    %c0_100 = arith.constant 0 : index
    %c0_101 = arith.constant 0 : index
    %108 = vector.load %arg10[%c0_100, %c0_101] : memref<512x128xbf16, #tpu.memory_space<vmem>>, vector<512x128xbf16>
    %109 = arith.truncf %107 : vector<8x512xf32> to vector<8x512xbf16>
    %cst_102 = arith.constant dense<0.000000e+00> : vector<8x128xf32>
    %110 = tpu.matmul %109, %108, %cst_102 {dimension_numbers = #tpu.dot_dimension_numbers<[1], [0], [0], [1], [0, 0, 1, 1], [], []>} : vector<8x512xbf16>, vector<512x128xbf16>, vector<8x128xf32> -> vector<8x128xf32>
    %c0_103 = arith.constant 0 : index
    %c0_104 = arith.constant 0 : index
    %111 = vector.load %arg11[%c0_103, %c0_104] : memref<1x128xf32, #tpu.memory_space<vmem>>, vector<1x128xf32>
    %112 = vector.broadcast %111 : vector<1x128xf32> to vector<8x128xf32>
    %113 = arith.addf %110, %112 : vector<8x128xf32>
    %c0_105 = arith.constant 0 : index
    %c0_106 = arith.constant 0 : index
    %114 = vector.load %arg12[%c0_105, %c0_106] : memref<8x128xf32, #tpu.memory_space<vmem>>, vector<8x128xf32>
    tpu.vector_store %arg12[%c0_105, %c0_106], %113 {strides = array<i32>} : memref<8x128xf32, #tpu.memory_space<vmem>>, vector<8x128xf32>,
    return
  }
  func.func @transform_0(%arg0: i32) -> (i32, i32, i32) {
    %c0_i32 = arith.constant 0 : i32
    %c0_i32_0 = arith.constant 0 : i32
    %c0_i32_1 = arith.constant 0 : i32
    return %c0_i32, %arg0, %c0_i32_0 : i32, i32, i32
  }
  func.func @transform_1(%arg0: i32) -> (i32, i32, i32) {
    %c0_i32 = arith.constant 0 : i32
    %c0_i32_0 = arith.constant 0 : i32
    %c0_i32_1 = arith.constant 0 : i32
    %c0_i32_2 = arith.constant 0 : i32
    return %c0_i32, %c0_i32_0, %c0_i32_1 : i32, i32, i32
  }
  func.func @transform_2(%arg0: i32) -> (i32, i32) {
    %c0_i32 = arith.constant 0 : i32
    %c0_i32_0 = arith.constant 0 : i32
    %c0_i32_1 = arith.constant 0 : i32
    return %c0_i32, %c0_i32_0 : i32, i32
  }
  func.func @transform_3(%arg0: i32) -> (i32, i32, i32) {
    %c0_i32 = arith.constant 0 : i32
    %c0_i32_0 = arith.constant 0 : i32
    %c0_i32_1 = arith.constant 0 : i32
    %c0_i32_2 = arith.constant 0 : i32
    return %c0_i32, %c0_i32_0, %c0_i32_1 : i32, i32, i32
  }
  func.func @transform_4(%arg0: i32) -> (i32, i32) {
    %c0_i32 = arith.constant 0 : i32
    %c0_i32_0 = arith.constant 0 : i32
    %c0_i32_1 = arith.constant 0 : i32
    return %c0_i32, %c0_i32_0 : i32, i32
  }
  func.func @transform_5(%arg0: i32) -> (i32, i32, i32) {
    %c0_i32 = arith.constant 0 : i32
    %c0_i32_0 = arith.constant 0 : i32
    %c0_i32_1 = arith.constant 0 : i32
    %c0_i32_2 = arith.constant 0 : i32
    return %c0_i32, %c0_i32_0, %c0_i32_1 : i32, i32, i32
  }
  func.func @transform_6(%arg0: i32) -> (i32, i32) {
    %c0_i32 = arith.constant 0 : i32
    %c0_i32_0 = arith.constant 0 : i32
    %c0_i32_1 = arith.constant 0 : i32
    return %c0_i32, %c0_i32_0 : i32, i32
  }
  func.func @transform_7(%arg0: i32) -> (i32, i32, i32) {
    %c0_i32 = arith.constant 0 : i32
    %c0_i32_0 = arith.constant 0 : i32
    %c0_i32_1 = arith.constant 0 : i32
    %c0_i32_2 = arith.constant 0 : i32
    return %c0_i32, %c0_i32_0, %c0_i32_1 : i32, i32, i32
  }
  func.func @transform_8(%arg0: i32) -> (i32, i32) {
    %c0_i32 = arith.constant 0 : i32
    %c0_i32_0 = arith.constant 0 : i32
    %c0_i32_1 = arith.constant 0 : i32
    return %c0_i32, %c0_i32_0 : i32, i32
  }
  func.func @transform_9(%arg0: i32) -> (i32, i32) {
    %c0_i32 = arith.constant 0 : i32
    %c0_i32_0 = arith.constant 0 : i32
    %c0_i32_1 = arith.constant 0 : i32
    return %c0_i32, %c0_i32_0 : i32, i32
  }
  func.func @transform_10(%arg0: i32) -> (i32, i32) {
    %c0_i32 = arith.constant 0 : i32
    %c0_i32_0 = arith.constant 0 : i32
    %c0_i32_1 = arith.constant 0 : i32
    return %c0_i32, %c0_i32_0 : i32, i32
  }
  func.func @transform_11(%arg0: i32) -> (i32, i32) {
    %c0_i32 = arith.constant 0 : i32
    %c0_i32_0 = arith.constant 0 : i32
    return %arg0, %c0_i32 : i32, i32
  }
}

module attributes {stable_mosaic.version = 11 : i64} {
  func.func @_ac_fused_kernel(%arg0: i32, %arg1: memref<9x8x576xf32, #tpu.memory_space<vmem>>, %arg2: memref<2x576x256xbf16, #tpu.memory_space<vmem>>, %arg3: memref<1x256xf32, #tpu.memory_space<vmem>>, %arg4: memref<4x256x256xbf16, #tpu.memory_space<vmem>>, %arg5: memref<1x256xf32, #tpu.memory_space<vmem>>, %arg6: memref<3x256x128xbf16, #tpu.memory_space<vmem>>, %arg7: memref<1x128xf32, #tpu.memory_space<vmem>>, %arg8: memref<1x128x512xbf16, #tpu.memory_space<vmem>>, %arg9: memref<1x512xf32, #tpu.memory_space<vmem>>, %arg10: memref<512x128xbf16, #tpu.memory_space<vmem>>, %arg11: memref<1x128xf32, #tpu.memory_space<vmem>>, %arg12: memref<8x128xf32, #tpu.memory_space<vmem>>, %arg13: memref<8x8x256xf32, #tpu.memory_space<vmem>>, %arg14: memref<3x8x256xf32, #tpu.memory_space<vmem>>) attributes {dimension_semantics = [#tpu.dimension_semantics<parallel>], iteration_bounds = array<i64: 1>, scalar_prefetch = 0 : i64, scratch_operands = 2 : i64, tpu.core_type = #tpu.core_type<tc>, window_params = [{transform_indices = @transform_0, window_bounds = array<i64: 9, 8, 576>}, {pipeline_mode = #tpu.pipeline_mode<synchronous>, transform_indices = @transform_1, window_bounds = array<i64: 2, 576, 256>}, {pipeline_mode = #tpu.pipeline_mode<synchronous>, transform_indices = @transform_2, window_bounds = array<i64: 1, 256>}, {pipeline_mode = #tpu.pipeline_mode<synchronous>, transform_indices = @transform_3, window_bounds = array<i64: 4, 256, 256>}, {pipeline_mode = #tpu.pipeline_mode<synchronous>, transform_indices = @transform_4, window_bounds = array<i64: 1, 256>}, {pipeline_mode = #tpu.pipeline_mode<synchronous>, transform_indices = @transform_5, window_bounds = array<i64: 3, 256, 128>}, {pipeline_mode = #tpu.pipeline_mode<synchronous>, transform_indices = @transform_6, window_bounds = array<i64: 1, 128>}, {pipeline_mode = #tpu.pipeline_mode<synchronous>, transform_indices = @transform_7, window_bounds = array<i64: 1, 128, 512>}, {pipeline_mode = #tpu.pipeline_mode<synchronous>, transform_indices = @transform_8, window_bounds = array<i64: 1, 512>}, {pipeline_mode = #tpu.pipeline_mode<synchronous>, transform_indices = @transform_9, window_bounds = array<i64: 512, 128>}, {pipeline_mode = #tpu.pipeline_mode<synchronous>, transform_indices = @transform_10, window_bounds = array<i64: 1, 128>}, {transform_indices = @transform_11, window_bounds = array<i64: 8, 128>}]} {
    %c0 = arith.constant 0 : index
    %c0_0 = arith.constant 0 : index
    %c0_1 = arith.constant 0 : index
    %0 = vector.load %arg1[%c0, %c0_0, %c0_1] : memref<9x8x576xf32, #tpu.memory_space<vmem>>, vector<8x8x576xf32>
    %1 = vector.shape_cast %0 : vector<8x8x576xf32> to vector<64x576xf32>
    %c0_2 = arith.constant 0 : index
    %c0_3 = arith.constant 0 : index
    %c0_4 = arith.constant 0 : index
    %2 = vector.load %arg2[%c0_2, %c0_3, %c0_4] : memref<2x576x256xbf16, #tpu.memory_space<vmem>>, vector<1x576x256xbf16>
    %3 = vector.shape_cast %2 : vector<1x576x256xbf16> to vector<576x256xbf16>
    %4 = arith.truncf %1 : vector<64x576xf32> to vector<64x576xbf16>
    %cst = arith.constant dense<0.000000e+00> : vector<64x256xf32>
    %5 = tpu.matmul %4, %3, %cst {dimension_numbers = #tpu.dot_dimension_numbers<[1], [0], [0], [1], [0, 0, 1, 1], [], []>} : vector<64x576xbf16>, vector<576x256xbf16>, vector<64x256xf32> -> vector<64x256xf32>
    %c1 = arith.constant 1 : index
    %c0_5 = arith.constant 0 : index
    %c0_6 = arith.constant 0 : index
    %6 = vector.load %arg1[%c1, %c0_5, %c0_6] : memref<9x8x576xf32, #tpu.memory_space<vmem>>, vector<8x8x576xf32>
    %7 = vector.shape_cast %6 : vector<8x8x576xf32> to vector<64x576xf32>
    %c1_7 = arith.constant 1 : index
    %c0_8 = arith.constant 0 : index
    %c0_9 = arith.constant 0 : index
    %8 = vector.load %arg2[%c1_7, %c0_8, %c0_9] : memref<2x576x256xbf16, #tpu.memory_space<vmem>>, vector<1x576x256xbf16>
    %9 = vector.shape_cast %8 : vector<1x576x256xbf16> to vector<576x256xbf16>
    %10 = arith.truncf %7 : vector<64x576xf32> to vector<64x576xbf16>
    %cst_10 = arith.constant dense<0.000000e+00> : vector<64x256xf32>
    %11 = tpu.matmul %10, %9, %cst_10 {dimension_numbers = #tpu.dot_dimension_numbers<[1], [0], [0], [1], [0, 0, 1, 1], [], []>} : vector<64x576xbf16>, vector<576x256xbf16>, vector<64x256xf32> -> vector<64x256xf32>
    %12 = arith.addf %5, %11 : vector<64x256xf32>
    %c0_11 = arith.constant 0 : index
    %c0_12 = arith.constant 0 : index
    %13 = vector.load %arg3[%c0_11, %c0_12] : memref<1x256xf32, #tpu.memory_space<vmem>>, vector<1x256xf32>
    %14 = vector.broadcast %13 : vector<1x256xf32> to vector<64x256xf32>
    %15 = arith.addf %12, %14 : vector<64x256xf32>
    %cst_13 = arith.constant 0.000000e+00 : f32
    %16 = vector.broadcast %cst_13 : f32 to vector<64x256xf32>
    %17 = arith.maximumf %15, %16 : vector<64x256xf32>
    %18 = vector.shape_cast %17 : vector<64x256xf32> to vector<8x8x256xf32>
    %c0_14 = arith.constant 0 : index
    %c0_15 = arith.constant 0 : index
    %c0_16 = arith.constant 0 : index
    %19 = vector.load %arg13[%c0_14, %c0_15, %c0_16] : memref<8x8x256xf32, #tpu.memory_space<vmem>>, vector<8x8x256xf32>
    tpu.vector_store %arg13[%c0_14, %c0_15, %c0_16], %18 {strides = array<i32>} : memref<8x8x256xf32, #tpu.memory_space<vmem>>, vector<8x8x256xf32>,
    %c0_17 = arith.constant 0 : index
    %c0_18 = arith.constant 0 : index
    %c0_19 = arith.constant 0 : index
    %20 = vector.load %arg13[%c0_17, %c0_18, %c0_19] : memref<8x8x256xf32, #tpu.memory_space<vmem>>, vector<1x8x256xf32>
    %21 = vector.shape_cast %20 : vector<1x8x256xf32> to vector<8x256xf32>
    %c2 = arith.constant 2 : index
    %c0_20 = arith.constant 0 : index
    %c0_21 = arith.constant 0 : index
    %22 = vector.load %arg13[%c2, %c0_20, %c0_21] : memref<8x8x256xf32, #tpu.memory_space<vmem>>, vector<1x8x256xf32>
    %23 = vector.shape_cast %22 : vector<1x8x256xf32> to vector<8x256xf32>
    %c4 = arith.constant 4 : index
    %c0_22 = arith.constant 0 : index
    %c0_23 = arith.constant 0 : index
    %24 = vector.load %arg13[%c4, %c0_22, %c0_23] : memref<8x8x256xf32, #tpu.memory_space<vmem>>, vector<1x8x256xf32>
    %25 = vector.shape_cast %24 : vector<1x8x256xf32> to vector<8x256xf32>
    %26 = tpu.concatenate %21, %23, %25 in 0 : vector<8x256xf32>, vector<8x256xf32>, vector<8x256xf32> -> vector<24x256xf32>
    %c0_24 = arith.constant 0 : index
    %c0_25 = arith.constant 0 : index
    %c0_26 = arith.constant 0 : index
    %27 = vector.load %arg4[%c0_24, %c0_25, %c0_26] : memref<4x256x256xbf16, #tpu.memory_space<vmem>>, vector<1x256x256xbf16>
    %28 = vector.shape_cast %27 : vector<1x256x256xbf16> to vector<256x256xbf16>
    %29 = arith.truncf %26 : vector<24x256xf32> to vector<24x256xbf16>
    %cst_27 = arith.constant dense<0.000000e+00> : vector<24x256xf32>
    %30 = tpu.matmul %29, %28, %cst_27 {dimension_numbers = #tpu.dot_dimension_numbers<[1], [0], [0], [1], [0, 0, 1, 1], [], []>} : vector<24x256xbf16>, vector<256x256xbf16>, vector<24x256xf32> -> vector<24x256xf32>
    %c1_28 = arith.constant 1 : index
    %c0_29 = arith.constant 0 : index
    %c0_30 = arith.constant 0 : index
    %31 = vector.load %arg13[%c1_28, %c0_29, %c0_30] : memref<8x8x256xf32, #tpu.memory_space<vmem>>, vector<1x8x256xf32>
    %32 = vector.shape_cast %31 : vector<1x8x256xf32> to vector<8x256xf32>
    %c3 = arith.constant 3 : index
    %c0_31 = arith.constant 0 : index
    %c0_32 = arith.constant 0 : index
    %33 = vector.load %arg13[%c3, %c0_31, %c0_32] : memref<8x8x256xf32, #tpu.memory_space<vmem>>, vector<1x8x256xf32>
    %34 = vector.shape_cast %33 : vector<1x8x256xf32> to vector<8x256xf32>
    %c5 = arith.constant 5 : index
    %c0_33 = arith.constant 0 : index
    %c0_34 = arith.constant 0 : index
    %35 = vector.load %arg13[%c5, %c0_33, %c0_34] : memref<8x8x256xf32, #tpu.memory_space<vmem>>, vector<1x8x256xf32>
    %36 = vector.shape_cast %35 : vector<1x8x256xf32> to vector<8x256xf32>
    %37 = tpu.concatenate %32, %34, %36 in 0 : vector<8x256xf32>, vector<8x256xf32>, vector<8x256xf32> -> vector<24x256xf32>
    %c1_35 = arith.constant 1 : index
    %c0_36 = arith.constant 0 : index
    %c0_37 = arith.constant 0 : index
    %38 = vector.load %arg4[%c1_35, %c0_36, %c0_37] : memref<4x256x256xbf16, #tpu.memory_space<vmem>>, vector<1x256x256xbf16>
    %39 = vector.shape_cast %38 : vector<1x256x256xbf16> to vector<256x256xbf16>
    %40 = arith.truncf %37 : vector<24x256xf32> to vector<24x256xbf16>
    %cst_38 = arith.constant dense<0.000000e+00> : vector<24x256xf32>
    %41 = tpu.matmul %40, %39, %cst_38 {dimension_numbers = #tpu.dot_dimension_numbers<[1], [0], [0], [1], [0, 0, 1, 1], [], []>} : vector<24x256xbf16>, vector<256x256xbf16>, vector<24x256xf32> -> vector<24x256xf32>
    %42 = arith.addf %30, %41 : vector<24x256xf32>
    %c2_39 = arith.constant 2 : index
    %c0_40 = arith.constant 0 : index
    %c0_41 = arith.constant 0 : index
    %43 = vector.load %arg13[%c2_39, %c0_40, %c0_41] : memref<8x8x256xf32, #tpu.memory_space<vmem>>, vector<1x8x256xf32>
    %44 = vector.shape_cast %43 : vector<1x8x256xf32> to vector<8x256xf32>
    %c4_42 = arith.constant 4 : index
    %c0_43 = arith.constant 0 : index
    %c0_44 = arith.constant 0 : index
    %45 = vector.load %arg13[%c4_42, %c0_43, %c0_44] : memref<8x8x256xf32, #tpu.memory_space<vmem>>, vector<1x8x256xf32>
    %46 = vector.shape_cast %45 : vector<1x8x256xf32> to vector<8x256xf32>
    %c6 = arith.constant 6 : index
    %c0_45 = arith.constant 0 : index
    %c0_46 = arith.constant 0 : index
    %47 = vector.load %arg13[%c6, %c0_45, %c0_46] : memref<8x8x256xf32, #tpu.memory_space<vmem>>, vector<1x8x256xf32>
    %48 = vector.shape_cast %47 : vector<1x8x256xf32> to vector<8x256xf32>
    %49 = tpu.concatenate %44, %46, %48 in 0 : vector<8x256xf32>, vector<8x256xf32>, vector<8x256xf32> -> vector<24x256xf32>
    %c2_47 = arith.constant 2 : index
    %c0_48 = arith.constant 0 : index
    %c0_49 = arith.constant 0 : index
    %50 = vector.load %arg4[%c2_47, %c0_48, %c0_49] : memref<4x256x256xbf16, #tpu.memory_space<vmem>>, vector<1x256x256xbf16>
    %51 = vector.shape_cast %50 : vector<1x256x256xbf16> to vector<256x256xbf16>
    %52 = arith.truncf %49 : vector<24x256xf32> to vector<24x256xbf16>
    %cst_50 = arith.constant dense<0.000000e+00> : vector<24x256xf32>
    %53 = tpu.matmul %52, %51, %cst_50 {dimension_numbers = #tpu.dot_dimension_numbers<[1], [0], [0], [1], [0, 0, 1, 1], [], []>} : vector<24x256xbf16>, vector<256x256xbf16>, vector<24x256xf32> -> vector<24x256xf32>
    %54 = arith.addf %42, %53 : vector<24x256xf32>
    %c3_51 = arith.constant 3 : index
    %c0_52 = arith.constant 0 : index
    %c0_53 = arith.constant 0 : index
    %55 = vector.load %arg13[%c3_51, %c0_52, %c0_53] : memref<8x8x256xf32, #tpu.memory_space<vmem>>, vector<1x8x256xf32>
    %56 = vector.shape_cast %55 : vector<1x8x256xf32> to vector<8x256xf32>
    %c5_54 = arith.constant 5 : index
    %c0_55 = arith.constant 0 : index
    %c0_56 = arith.constant 0 : index
    %57 = vector.load %arg13[%c5_54, %c0_55, %c0_56] : memref<8x8x256xf32, #tpu.memory_space<vmem>>, vector<1x8x256xf32>
    %58 = vector.shape_cast %57 : vector<1x8x256xf32> to vector<8x256xf32>
    %c7 = arith.constant 7 : index
    %c0_57 = arith.constant 0 : index
    %c0_58 = arith.constant 0 : index
    %59 = vector.load %arg13[%c7, %c0_57, %c0_58] : memref<8x8x256xf32, #tpu.memory_space<vmem>>, vector<1x8x256xf32>
    %60 = vector.shape_cast %59 : vector<1x8x256xf32> to vector<8x256xf32>
    %61 = tpu.concatenate %56, %58, %60 in 0 : vector<8x256xf32>, vector<8x256xf32>, vector<8x256xf32> -> vector<24x256xf32>
    %c3_59 = arith.constant 3 : index
    %c0_60 = arith.constant 0 : index
    %c0_61 = arith.constant 0 : index
    %62 = vector.load %arg4[%c3_59, %c0_60, %c0_61] : memref<4x256x256xbf16, #tpu.memory_space<vmem>>, vector<1x256x256xbf16>
    %63 = vector.shape_cast %62 : vector<1x256x256xbf16> to vector<256x256xbf16>
    %64 = arith.truncf %61 : vector<24x256xf32> to vector<24x256xbf16>
    %cst_62 = arith.constant dense<0.000000e+00> : vector<24x256xf32>
    %65 = tpu.matmul %64, %63, %cst_62 {dimension_numbers = #tpu.dot_dimension_numbers<[1], [0], [0], [1], [0, 0, 1, 1], [], []>} : vector<24x256xbf16>, vector<256x256xbf16>, vector<24x256xf32> -> vector<24x256xf32>
    %66 = arith.addf %54, %65 : vector<24x256xf32>
    %c0_63 = arith.constant 0 : index
    %c0_64 = arith.constant 0 : index
    %67 = vector.load %arg5[%c0_63, %c0_64] : memref<1x256xf32, #tpu.memory_space<vmem>>, vector<1x256xf32>
    %68 = vector.broadcast %67 : vector<1x256xf32> to vector<24x256xf32>
    %69 = arith.addf %66, %68 : vector<24x256xf32>
    %cst_65 = arith.constant 0.000000e+00 : f32
    %70 = vector.broadcast %cst_65 : f32 to vector<24x256xf32>
    %71 = arith.maximumf %69, %70 : vector<24x256xf32>
    %72 = vector.shape_cast %71 : vector<24x256xf32> to vector<3x8x256xf32>
    %c0_66 = arith.constant 0 : index
    %c0_67 = arith.constant 0 : index
    %c0_68 = arith.constant 0 : index
    %73 = vector.load %arg14[%c0_66, %c0_67, %c0_68] : memref<3x8x256xf32, #tpu.memory_space<vmem>>, vector<3x8x256xf32>
    tpu.vector_store %arg14[%c0_66, %c0_67, %c0_68], %72 {strides = array<i32>} : memref<3x8x256xf32, #tpu.memory_space<vmem>>, vector<3x8x256xf32>,
    %c0_69 = arith.constant 0 : index
    %c0_70 = arith.constant 0 : index
    %c0_71 = arith.constant 0 : index
    %74 = vector.load %arg14[%c0_69, %c0_70, %c0_71] : memref<3x8x256xf32, #tpu.memory_space<vmem>>, vector<1x8x256xf32>
    %75 = vector.shape_cast %74 : vector<1x8x256xf32> to vector<8x256xf32>
    %c0_72 = arith.constant 0 : index
    %c0_73 = arith.constant 0 : index
    %c0_74 = arith.constant 0 : index
    %76 = vector.load %arg6[%c0_72, %c0_73, %c0_74] : memref<3x256x128xbf16, #tpu.memory_space<vmem>>, vector<1x256x128xbf16>
    %77 = vector.shape_cast %76 : vector<1x256x128xbf16> to vector<256x128xbf16>
    %78 = arith.truncf %75 : vector<8x256xf32> to vector<8x256xbf16>
    %cst_75 = arith.constant dense<0.000000e+00> : vector<8x128xf32>
    %79 = tpu.matmul %78, %77, %cst_75 {dimension_numbers = #tpu.dot_dimension_numbers<[1], [0], [0], [1], [0, 0, 1, 1], [], []>} : vector<8x256xbf16>, vector<256x128xbf16>, vector<8x128xf32> -> vector<8x128xf32>
    %c1_76 = arith.constant 1 : index
    %c0_77 = arith.constant 0 : index
    %c0_78 = arith.constant 0 : index
    %80 = vector.load %arg14[%c1_76, %c0_77, %c0_78] : memref<3x8x256xf32, #tpu.memory_space<vmem>>, vector<1x8x256xf32>
    %81 = vector.shape_cast %80 : vector<1x8x256xf32> to vector<8x256xf32>
    %c1_79 = arith.constant 1 : index
    %c0_80 = arith.constant 0 : index
    %c0_81 = arith.constant 0 : index
    %82 = vector.load %arg6[%c1_79, %c0_80, %c0_81] : memref<3x256x128xbf16, #tpu.memory_space<vmem>>, vector<1x256x128xbf16>
    %83 = vector.shape_cast %82 : vector<1x256x128xbf16> to vector<256x128xbf16>
    %84 = arith.truncf %81 : vector<8x256xf32> to vector<8x256xbf16>
    %cst_82 = arith.constant dense<0.000000e+00> : vector<8x128xf32>
    %85 = tpu.matmul %84, %83, %cst_82 {dimension_numbers = #tpu.dot_dimension_numbers<[1], [0], [0], [1], [0, 0, 1, 1], [], []>} : vector<8x256xbf16>, vector<256x128xbf16>, vector<8x128xf32> -> vector<8x128xf32>
    %86 = arith.addf %79, %85 : vector<8x128xf32>
    %c2_83 = arith.constant 2 : index
    %c0_84 = arith.constant 0 : index
    %c0_85 = arith.constant 0 : index
    %87 = vector.load %arg14[%c2_83, %c0_84, %c0_85] : memref<3x8x256xf32, #tpu.memory_space<vmem>>, vector<1x8x256xf32>
    %88 = vector.shape_cast %87 : vector<1x8x256xf32> to vector<8x256xf32>
    %c2_86 = arith.constant 2 : index
    %c0_87 = arith.constant 0 : index
    %c0_88 = arith.constant 0 : index
    %89 = vector.load %arg6[%c2_86, %c0_87, %c0_88] : memref<3x256x128xbf16, #tpu.memory_space<vmem>>, vector<1x256x128xbf16>
    %90 = vector.shape_cast %89 : vector<1x256x128xbf16> to vector<256x128xbf16>
    %91 = arith.truncf %88 : vector<8x256xf32> to vector<8x256xbf16>
    %cst_89 = arith.constant dense<0.000000e+00> : vector<8x128xf32>
    %92 = tpu.matmul %91, %90, %cst_89 {dimension_numbers = #tpu.dot_dimension_numbers<[1], [0], [0], [1], [0, 0, 1, 1], [], []>} : vector<8x256xbf16>, vector<256x128xbf16>, vector<8x128xf32> -> vector<8x128xf32>
    %93 = arith.addf %86, %92 : vector<8x128xf32>
    %c0_90 = arith.constant 0 : index
    %c0_91 = arith.constant 0 : index
    %94 = vector.load %arg7[%c0_90, %c0_91] : memref<1x128xf32, #tpu.memory_space<vmem>>, vector<1x128xf32>
    %95 = vector.broadcast %94 : vector<1x128xf32> to vector<8x128xf32>
    %96 = arith.addf %93, %95 : vector<8x128xf32>
    %cst_92 = arith.constant 0.000000e+00 : f32
    %97 = vector.broadcast %cst_92 : f32 to vector<8x128xf32>
    %98 = arith.maximumf %96, %97 : vector<8x128xf32>
    %c0_93 = arith.constant 0 : index
    %c0_94 = arith.constant 0 : index
    %c0_95 = arith.constant 0 : index
    %99 = vector.load %arg8[%c0_93, %c0_94, %c0_95] : memref<1x128x512xbf16, #tpu.memory_space<vmem>>, vector<1x128x512xbf16>
    %100 = vector.shape_cast %99 : vector<1x128x512xbf16> to vector<128x512xbf16>
    %101 = arith.truncf %98 : vector<8x128xf32> to vector<8x128xbf16>
    %cst_96 = arith.constant dense<0.000000e+00> : vector<8x512xf32>
    %102 = tpu.matmul %101, %100, %cst_96 {dimension_numbers = #tpu.dot_dimension_numbers<[1], [0], [0], [1], [0, 0, 1, 1], [], []>} : vector<8x128xbf16>, vector<128x512xbf16>, vector<8x512xf32> -> vector<8x512xf32>
    %c0_97 = arith.constant 0 : index
    %c0_98 = arith.constant 0 : index
    %103 = vector.load %arg9[%c0_97, %c0_98] : memref<1x512xf32, #tpu.memory_space<vmem>>, vector<1x512xf32>
    %104 = vector.broadcast %103 : vector<1x512xf32> to vector<8x512xf32>
    %105 = arith.addf %102, %104 : vector<8x512xf32>
    %cst_99 = arith.constant 0.000000e+00 : f32
    %106 = vector.broadcast %cst_99 : f32 to vector<8x512xf32>
    %107 = arith.maximumf %105, %106 : vector<8x512xf32>
    %c0_100 = arith.constant 0 : index
    %c0_101 = arith.constant 0 : index
    %108 = vector.load %arg10[%c0_100, %c0_101] : memref<512x128xbf16, #tpu.memory_space<vmem>>, vector<512x128xbf16>
    %109 = arith.truncf %107 : vector<8x512xf32> to vector<8x512xbf16>
    %cst_102 = arith.constant dense<0.000000e+00> : vector<8x128xf32>
    %110 = tpu.matmul %109, %108, %cst_102 {dimension_numbers = #tpu.dot_dimension_numbers<[1], [0], [0], [1], [0, 0, 1, 1], [], []>} : vector<8x512xbf16>, vector<512x128xbf16>, vector<8x128xf32> -> vector<8x128xf32>
    %c0_103 = arith.constant 0 : index
    %c0_104 = arith.constant 0 : index
    %111 = vector.load %arg11[%c0_103, %c0_104] : memref<1x128xf32, #tpu.memory_space<vmem>>, vector<1x128xf32>
    %112 = vector.broadcast %111 : vector<1x128xf32> to vector<8x128xf32>
    %113 = arith.addf %110, %112 : vector<8x128xf32>
    %c0_105 = arith.constant 0 : index
    %c0_106 = arith.constant 0 : index
    %114 = vector.load %arg12[%c0_105, %c0_106] : memref<8x128xf32, #tpu.memory_space<vmem>>, vector<8x128xf32>
    tpu.vector_store %arg12[%c0_105, %c0_106], %113 {strides = array<i32>} : memref<8x128xf32, #tpu.memory_space<vmem>>, vector<8x128xf32>,
    return
  }
  func.func @transform_0(%arg0: i32) -> (i32, i32, i32) {
    %c0_i32 = arith.constant 0 : i32
    %c0_i32_0 = arith.constant 0 : i32
    %c0_i32_1 = arith.constant 0 : i32
    return %c0_i32, %arg0, %c0_i32_0 : i32, i32, i32
  }
  func.func @transform_1(%arg0: i32) -> (i32, i32, i32) {
    %c0_i32 = arith.constant 0 : i32
    %c0_i32_0 = arith.constant 0 : i32
    %c0_i32_1 = arith.constant 0 : i32
    %c0_i32_2 = arith.constant 0 : i32
    return %c0_i32, %c0_i32_0, %c0_i32_1 : i32, i32, i32
  }
  func.func @transform_2(%arg0: i32) -> (i32, i32) {
    %c0_i32 = arith.constant 0 : i32
    %c0_i32_0 = arith.constant 0 : i32
    %c0_i32_1 = arith.constant 0 : i32
    return %c0_i32, %c0_i32_0 : i32, i32
  }
  func.func @transform_3(%arg0: i32) -> (i32, i32, i32) {
    %c0_i32 = arith.constant 0 : i32
    %c0_i32_0 = arith.constant 0 : i32
    %c0_i32_1 = arith.constant 0 : i32
    %c0_i32_2 = arith.constant 0 : i32
    return %c0_i32, %c0_i32_0, %c0_i32_1 : i32, i32, i32
  }
  func.func @transform_4(%arg0: i32) -> (i32, i32) {
    %c0_i32 = arith.constant 0 : i32
    %c0_i32_0 = arith.constant 0 : i32
    %c0_i32_1 = arith.constant 0 : i32
    return %c0_i32, %c0_i32_0 : i32, i32
  }
  func.func @transform_5(%arg0: i32) -> (i32, i32, i32) {
    %c0_i32 = arith.constant 0 : i32
    %c0_i32_0 = arith.constant 0 : i32
    %c0_i32_1 = arith.constant 0 : i32
    %c0_i32_2 = arith.constant 0 : i32
    return %c0_i32, %c0_i32_0, %c0_i32_1 : i32, i32, i32
  }
  func.func @transform_6(%arg0: i32) -> (i32, i32) {
    %c0_i32 = arith.constant 0 : i32
    %c0_i32_0 = arith.constant 0 : i32
    %c0_i32_1 = arith.constant 0 : i32
    return %c0_i32, %c0_i32_0 : i32, i32
  }
  func.func @transform_7(%arg0: i32) -> (i32, i32, i32) {
    %c0_i32 = arith.constant 0 : i32
    %c0_i32_0 = arith.constant 0 : i32
    %c0_i32_1 = arith.constant 0 : i32
    %c0_i32_2 = arith.constant 0 : i32
    return %c0_i32, %c0_i32_0, %c0_i32_1 : i32, i32, i32
  }
  func.func @transform_8(%arg0: i32) -> (i32, i32) {
    %c0_i32 = arith.constant 0 : i32
    %c0_i32_0 = arith.constant 0 : i32
    %c0_i32_1 = arith.constant 0 : i32
    return %c0_i32, %c0_i32_0 : i32, i32
  }
  func.func @transform_9(%arg0: i32) -> (i32, i32) {
    %c0_i32 = arith.constant 0 : i32
    %c0_i32_0 = arith.constant 0 : i32
    %c0_i32_1 = arith.constant 0 : i32
    return %c0_i32, %c0_i32_0 : i32, i32
  }
  func.func @transform_10(%arg0: i32) -> (i32, i32) {
    %c0_i32 = arith.constant 0 : i32
    %c0_i32_0 = arith.constant 0 : i32
    %c0_i32_1 = arith.constant 0 : i32
    return %c0_i32, %c0_i32_0 : i32, i32
  }
  func.func @transform_11(%arg0: i32) -> (i32, i32) {
    %c0_i32 = arith.constant 0 : i32
    %c0_i32_0 = arith.constant 0 : i32
    return %arg0, %c0_i32 : i32, i32
  }
}

</mosaic_0001>

<llo_original>
// kernel: ac_forward.1
$region0: #{ac_forward.1}
  #allocation0 [shape = 'u32[]', space=smem, size = 0x4, offset = 0x4, fixed_abs, tag = 'smem constant byte address 0x4 - core index']
  #allocation1 [shape = 'u32[72,128]{1,0:T(1,128)}', space=vmem, size = 0x9000, scoped, tag = 'internal scratch']
  #allocation2 [shape = 'f32[8,8,256]{2,1,0:T(8,128)}', space=vmem, size = 0x10000, scoped, tag = 'scratch operand']
  #allocation3 [shape = 'f32[3,8,256]{2,1,0:T(8,128)}', space=vmem, size = 0x6000, scoped, tag = 'scratch operand']
  %s0 = inlined_call_operand.vmem [shape: f32[9,8,576], index: 0, kind: input, shape index: {}]
  %s1 = inlined_call_operand.vmem [shape: bf16[2,576,256], index: 1, kind: input, shape index: {}]
  %s2 = inlined_call_operand.vmem [shape: f32[1,256], index: 2, kind: input, shape index: {}]
  %s3 = inlined_call_operand.vmem [shape: bf16[4,256,256], index: 3, kind: input, shape index: {}]
  %s4 = inlined_call_operand.vmem [shape: f32[1,256], index: 4, kind: input, shape index: {}]
  %s5 = inlined_call_operand.vmem [shape: bf16[3,256,128], index: 5, kind: input, shape index: {}]
  %s6 = inlined_call_operand.vmem [shape: f32[1,128], index: 6, kind: input, shape index: {}]
  %s7 = inlined_call_operand.vmem [shape: bf16[1,128,512], index: 7, kind: input, shape index: {}]
  %s8 = inlined_call_operand.vmem [shape: f32[1,512], index: 8, kind: input, shape index: {}]
  %s9 = inlined_call_operand.vmem [shape: bf16[512,128], index: 9, kind: input, shape index: {}]
  %s10 = inlined_call_operand.vmem [shape: f32[1,128], index: 10, kind: input, shape index: {}]
  %s11 = inlined_call_operand.vmem [shape: f32[8,128], index: 11, kind: output, shape index: {}]
  %s12 = sld [smem:[#allocation0]]
  $region54: #{ac_forward.1} parent=0
    _
  %s14 = ssub.s32 1, %s12
  %s15 = scalar_select 0, %s14, %s12
  // Predicated region
  $region2: #{ac_forward.1} parent=0 // pred_check
    _
  $region3: #{ac_forward.1} parent=0 // pred_check_branch
    %17 = sbr.rel (0) target = $region5
  $region4: #{ac_forward.1} parent=0 // pred_region
    _
  $region5: #{ac_forward.1} parent=0 // pred_fallthru
    _
  // Predicated region
  $region6: #{ac_forward.1} parent=0 // pred_check
    _
  $region7: #{ac_forward.1} parent=0 // pred_check_branch
    %19 = sbr.rel (0) target = $region9
  $region8: #{ac_forward.1} parent=0 // pred_region
    _
  $region9: #{ac_forward.1} parent=0 // pred_fallthru
    _
  // Predicated region
  $region10: #{ac_forward.1} parent=0 // pred_check
    _
  $region11: #{ac_forward.1} parent=0 // pred_check_branch
    %21 = sbr.rel (0) target = $region13
  $region12: #{ac_forward.1} parent=0 // pred_region
    _
  $region13: #{ac_forward.1} parent=0 // pred_fallthru
    _
  // Predicated region
  $region14: #{ac_forward.1} parent=0 // pred_check
    _
  $region15: #{ac_forward.1} parent=0 // pred_check_branch
    %23 = sbr.rel (0) target = $region17
  $region16: #{ac_forward.1} parent=0 // pred_region
    _
  $region17: #{ac_forward.1} parent=0 // pred_fallthru
    _
  // Predicated region
  $region18: #{ac_forward.1} parent=0 // pred_check
    _
  $region19: #{ac_forward.1} parent=0 // pred_check_branch
    %25 = sbr.rel (0) target = $region21
  $region20: #{ac_forward.1} parent=0 // pred_region
    _
  $region21: #{ac_forward.1} parent=0 // pred_fallthru
    _
  // Predicated region
  $region22: #{ac_forward.1} parent=0 // pred_check
    _
  $region23: #{ac_forward.1} parent=0 // pred_check_branch
    %27 = sbr.rel (0) target = $region25
  $region24: #{ac_forward.1} parent=0 // pred_region
    _
  $region25: #{ac_forward.1} parent=0 // pred_fallthru
    _
  // Predicated region
  $region26: #{ac_forward.1} parent=0 // pred_check
    _
  $region27: #{ac_forward.1} parent=0 // pred_check_branch
    %29 = sbr.rel (0) target = $region29
  $region28: #{ac_forward.1} parent=0 // pred_region
    _
  $region29: #{ac_forward.1} parent=0 // pred_fallthru
    _
  // Predicated region
  $region30: #{ac_forward.1} parent=0 // pred_check
    _
  $region31: #{ac_forward.1} parent=0 // pred_check_branch
    %31 = sbr.rel (0) target = $region33
  $region32: #{ac_forward.1} parent=0 // pred_region
    _
  $region33: #{ac_forward.1} parent=0 // pred_fallthru
    _
  // Predicated region
  $region34: #{ac_forward.1} parent=0 // pred_check
    _
  $region35: #{ac_forward.1} parent=0 // pred_check_branch
    %33 = sbr.rel (0) target = $region37
  $region36: #{ac_forward.1} parent=0 // pred_region
    _
  $region37: #{ac_forward.1} parent=0 // pred_fallthru
    _
  // Predicated region
  $region38: #{ac_forward.1} parent=0 // pred_check
    _
  $region39: #{ac_forward.1} parent=0 // pred_check_branch
    %35 = sbr.rel (0) target = $region41
  $region40: #{ac_forward.1} parent=0 // pred_region
    _
  $region41: #{ac_forward.1} parent=0 // pred_fallthru
    _
  // Predicated region
  $region42: #{ac_forward.1} parent=0 // pred_check
    _
  $region43: #{ac_forward.1} parent=0 // pred_check_branch
    %37 = sbr.rel (0) target = $region45
  $region44: #{ac_forward.1} parent=0 // pred_region
    _
  $region45: #{ac_forward.1} parent=0 // pred_fallthru
    _
  %v39 = vld [vmem:[%s0] sm:$0xff]
  %v40 = vld [vmem:[%s0 + $0x8] sm:$0xff]
  %v41 = vld [vmem:[%s0 + $0x10] sm:$0xff]
  %v42 = vld [vmem:[%s0 + $0x18] sm:$0xff]
  %v43 = vld [vmem:[%s0 + $0x20] sm:$0xff]
  %v44 = vld [vmem:[%s0 + $0x28] sm:$0xff]
  %v45 = vld [vmem:[%s0 + $0x30] sm:$0xff]
  %v46 = vld [vmem:[%s0 + $0x38] sm:$0xff]
  %v47 = vld [vmem:[%s0 + $0x40] sm:$0xff]
  %v48 = vld [vmem:[%s0 + $0x48] sm:$0xff]
  %v49 = vld [vmem:[%s0 + $0x50] sm:$0xff]
  %v50 = vld [vmem:[%s0 + $0x58] sm:$0xff]
  %v51 = vld [vmem:[%s0 + $0x60] sm:$0xff]
  %v52 = vld [vmem:[%s0 + $0x68] sm:$0xff]
  %v53 = vld [vmem:[%s0 + $0x70] sm:$0xff]
  %v54 = vld [vmem:[%s0 + $0x78] sm:$0xff]
  %v55 = vld [vmem:[%s0 + $0x80] sm:$0xff]
  %v56 = vld [vmem:[%s0 + $0x88] sm:$0xff]
  %v57 = vld [vmem:[%s0 + $0x90] sm:$0xff]
  %v58 = vld [vmem:[%s0 + $0x98] sm:$0xff]
  %v59 = vld [vmem:[%s0 + $0xa0] sm:$0xff]
  %v60 = vld [vmem:[%s0 + $0xa8] sm:$0xff]
  %v61 = vld [vmem:[%s0 + $0xb0] sm:$0xff]
  %v62 = vld [vmem:[%s0 + $0xb8] sm:$0xff]
  %v63 = vld [vmem:[%s0 + $0xc0] sm:$0xff]
  %v64 = vld [vmem:[%s0 + $0xc8] sm:$0xff]
  %v65 = vld [vmem:[%s0 + $0xd0] sm:$0xff]
  %v66 = vld [vmem:[%s0 + $0xd8] sm:$0xff]
  %v67 = vld [vmem:[%s0 + $0xe0] sm:$0xff]
  %v68 = vld [vmem:[%s0 + $0xe8] sm:$0xff]
  %v69 = vld [vmem:[%s0 + $0xf0] sm:$0xff]
  %v70 = vld [vmem:[%s0 + $0xf8] sm:$0xff]
  %v71 = vld [vmem:[%s0 + $0x100] sm:$0xff]
  %v72 = vld [vmem:[%s0 + $0x108] sm:$0xff]
  %v73 = vld [vmem:[%s0 + $0x110] sm:$0xff]
  %v74 = vld [vmem:[%s0 + $0x118] sm:$0xff]
  %v75 = vld [vmem:[%s0 + $0x120] sm:$0xff]
  %v76 = vld [vmem:[%s0 + $0x128] sm:$0xff]
  %v77 = vld [vmem:[%s0 + $0x130] sm:$0xff]
  %v78 = vld [vmem:[%s0 + $0x138] sm:$0xff]
  %v79 = vld [vmem:[%s1] sm:$0xff]
  %v80 = vld [vmem:[%s1 + $0x8] sm:$0xff]
  %v81 = vld [vmem:[%s1 + $0x10] sm:$0xff]
  %v82 = vld [vmem:[%s1 + $0x18] sm:$0xff]
  %v83 = vld [vmem:[%s1 + $0x20] sm:$0xff]
  %v84 = vld [vmem:[%s1 + $0x28] sm:$0xff]
  %v85 = vld [vmem:[%s1 + $0x30] sm:$0xff]
  %v86 = vld [vmem:[%s1 + $0x38] sm:$0xff]
  %v87 = vld [vmem:[%s1 + $0x40] sm:$0xff]
  %v88 = vld [vmem:[%s1 + $0x48] sm:$0xff]
  %v89 = vld [vmem:[%s1 + $0x50] sm:$0xff]
  %v90 = vld [vmem:[%s1 + $0x58] sm:$0xff]
  %v91 = vld [vmem:[%s1 + $0x60] sm:$0xff]
  %v92 = vld [vmem:[%s1 + $0x68] sm:$0xff]
  %v93 = vld [vmem:[%s1 + $0x70] sm:$0xff]
  %v94 = vld [vmem:[%s1 + $0x78] sm:$0xff]
  %v95 = vld [vmem:[%s1 + $0x80] sm:$0xff]
  %v96 = vld [vmem:[%s1 + $0x88] sm:$0xff]
  %v97 = vld [vmem:[%s1 + $0x90] sm:$0xff]
  %v98 = vld [vmem:[%s1 + $0x98] sm:$0xff]
  %v99 = vld [vmem:[%s1 + $0xa0] sm:$0xff]
  %v100 = vld [vmem:[%s1 + $0xa8] sm:$0xff]
  %v101 = vld [vmem:[%s1 + $0xb0] sm:$0xff]
  %v102 = vld [vmem:[%s1 + $0xb8] sm:$0xff]
  %v103 = vld [vmem:[%s1 + $0xc0] sm:$0xff]
  %v104 = vld [vmem:[%s1 + $0xc8] sm:$0xff]
  %v105 = vld [vmem:[%s1 + $0xd0] sm:$0xff]
  %v106 = vld [vmem:[%s1 + $0xd8] sm:$0xff]
  %v107 = vld [vmem:[%s1 + $0xe0] sm:$0xff]
  %v108 = vld [vmem:[%s1 + $0xe8] sm:$0xff]
  %v109 = vld [vmem:[%s1 + $0xf0] sm:$0xff]
  %v110 = vld [vmem:[%s1 + $0xf8] sm:$0xff]
  %v111 = vld [vmem:[%s1 + $0x100] sm:$0xff]
  %v112 = vld [vmem:[%s1 + $0x108] sm:$0xff]
  %v113 = vld [vmem:[%s1 + $0x110] sm:$0xff]
  %v114 = vld [vmem:[%s1 + $0x118] sm:$0xff]
  %v115 = vld [vmem:[%s1 + $0x120] sm:$0xff]
  %v116 = vld [vmem:[%s1 + $0x128] sm:$0xff]
  %v117 = vld [vmem:[%s1 + $0x130] sm:$0xff]
  %v118 = vld [vmem:[%s1 + $0x138] sm:$0xff]
  %v119 = vld [vmem:[%s1 + $0x140] sm:$0xff]
  %v120 = vld [vmem:[%s1 + $0x148] sm:$0xff]
  %v121 = vld [vmem:[%s1 + $0x150] sm:$0xff]
  %v122 = vld [vmem:[%s1 + $0x158] sm:$0xff]
  %v123 = vld [vmem:[%s1 + $0x160] sm:$0xff]
  %v124 = vld [vmem:[%s1 + $0x168] sm:$0xff]
  %v125 = vld [vmem:[%s1 + $0x170] sm:$0xff]
  %v126 = vld [vmem:[%s1 + $0x178] sm:$0xff]
  %v127 = vld [vmem:[%s1 + $0x180] sm:$0xff]
  %v128 = vld [vmem:[%s1 + $0x188] sm:$0xff]
  %v129 = vld [vmem:[%s1 + $0x190] sm:$0xff]
  %v130 = vld [vmem:[%s1 + $0x198] sm:$0xff]
  %v131 = vld [vmem:[%s1 + $0x1a0] sm:$0xff]
  %v132 = vld [vmem:[%s1 + $0x1a8] sm:$0xff]
  %v133 = vld [vmem:[%s1 + $0x1b0] sm:$0xff]
  %v134 = vld [vmem:[%s1 + $0x1b8] sm:$0xff]
  %v135 = vld [vmem:[%s1 + $0x1c0] sm:$0xff]
  %v136 = vld [vmem:[%s1 + $0x1c8] sm:$0xff]
  %v137 = vld [vmem:[%s1 + $0x1d0] sm:$0xff]
  %v138 = vld [vmem:[%s1 + $0x1d8] sm:$0xff]
  %v139 = vld [vmem:[%s1 + $0x1e0] sm:$0xff]
  %v140 = vld [vmem:[%s1 + $0x1e8] sm:$0xff]
  %v141 = vld [vmem:[%s1 + $0x1f0] sm:$0xff]
  %v142 = vld [vmem:[%s1 + $0x1f8] sm:$0xff]
  %v143 = vld [vmem:[%s1 + $0x200] sm:$0xff]
  %v144 = vld [vmem:[%s1 + $0x208] sm:$0xff]
  %v145 = vld [vmem:[%s1 + $0x210] sm:$0xff]
  %v146 = vld [vmem:[%s1 + $0x218] sm:$0xff]
  %v147 = vld [vmem:[%s1 + $0x220] sm:$0xff]
  %v148 = vld [vmem:[%s1 + $0x228] sm:$0xff]
  %v149 = vld [vmem:[%s1 + $0x230] sm:$0xff]
  %v150 = vld [vmem:[%s1 + $0x238] sm:$0xff]
  %v151 = vpack.c.bf16 %v44, %v39
  %v152 = vpack.c.bf16 %v45, %v40
  %v153 = vpack.c.bf16 %v46, %v41
  %v154 = vpack.c.bf16 %v47, %v42
  %v155 = vpack.c.bf16 %v48, %v43
  %v156 = vpack.c.bf16 %v54, %v49
  %v157 = vpack.c.bf16 %v55, %v50
  %v158 = vpack.c.bf16 %v56, %v51
  %v159 = vpack.c.bf16 %v57, %v52
  %v160 = vpack.c.bf16 %v58, %v53
  %v161 = vpack.c.bf16 %v64, %v59
  %v162 = vpack.c.bf16 %v65, %v60
  %v163 = vpack.c.bf16 %v66, %v61
  %v164 = vpack.c.bf16 %v67, %v62
  %v165 = vpack.c.bf16 %v68, %v63
  %v166 = vpack.c.bf16 %v74, %v69
  %v167 = vpack.c.bf16 %v75, %v70
  %v168 = vpack.c.bf16 %v76, %v71
  %v169 = vpack.c.bf16 %v77, %v72
  %v170 = vpack.c.bf16 %v78, %v73
  %s171 = scalar_lea.vmem %s0, 40
  %v172 = vld [vmem:[%s171] sm:$0xff]
  %v173 = vld [vmem:[%s171 + $0x8] sm:$0xff]
  %v174 = vld [vmem:[%s171 + $0x10] sm:$0xff]
  %v175 = vld [vmem:[%s171 + $0x18] sm:$0xff]
  %v176 = vld [vmem:[%s171 + $0x20] sm:$0xff]
  %v177 = vld [vmem:[%s171 + $0x28] sm:$0xff]
  %v178 = vld [vmem:[%s171 + $0x30] sm:$0xff]
  %v179 = vld [vmem:[%s171 + $0x38] sm:$0xff]
  %v180 = vld [vmem:[%s171 + $0x40] sm:$0xff]
  %v181 = vld [vmem:[%s171 + $0x48] sm:$0xff]
  %v182 = vld [vmem:[%s171 + $0x50] sm:$0xff]
  %v183 = vld [vmem:[%s171 + $0x58] sm:$0xff]
  %v184 = vld [vmem:[%s171 + $0x60] sm:$0xff]
  %v185 = vld [vmem:[%s171 + $0x68] sm:$0xff]
  %v186 = vld [vmem:[%s171 + $0x70] sm:$0xff]
  %v187 = vld [vmem:[%s171 + $0x78] sm:$0xff]
  %v188 = vld [vmem:[%s171 + $0x80] sm:$0xff]
  %v189 = vld [vmem:[%s171 + $0x88] sm:$0xff]
  %v190 = vld [vmem:[%s171 + $0x90] sm:$0xff]
  %v191 = vld [vmem:[%s171 + $0x98] sm:$0xff]
  %v192 = vld [vmem:[%s171 + $0xa0] sm:$0xff]
  %v193 = vld [vmem:[%s171 + $0xa8] sm:$0xff]
  %v194 = vld [vmem:[%s171 + $0xb0] sm:$0xff]
  %v195 = vld [vmem:[%s171 + $0xb8] sm:$0xff]
  %v196 = vld [vmem:[%s171 + $0xc0] sm:$0xff]
  %v197 = vld [vmem:[%s171 + $0xc8] sm:$0xff]
  %v198 = vld [vmem:[%s171 + $0xd0] sm:$0xff]
  %v199 = vld [vmem:[%s171 + $0xd8] sm:$0xff]
  %v200 = vld [vmem:[%s171 + $0xe0] sm:$0xff]
  %v201 = vld [vmem:[%s171 + $0xe8] sm:$0xff]
  %v202 = vld [vmem:[%s171 + $0xf0] sm:$0xff]
  %v203 = vld [vmem:[%s171 + $0xf8] sm:$0xff]
  %v204 = vld [vmem:[%s171 + $0x100] sm:$0xff]
  %v205 = vld [vmem:[%s171 + $0x108] sm:$0xff]
  %v206 = vld [vmem:[%s171 + $0x110] sm:$0xff]
  %v207 = vld [vmem:[%s171 + $0x118] sm:$0xff]
  %v208 = vld [vmem:[%s171 + $0x120] sm:$0xff]
  %v209 = vld [vmem:[%s171 + $0x128] sm:$0xff]
  %v210 = vld [vmem:[%s171 + $0x130] sm:$0xff]
  %v211 = vld [vmem:[%s171 + $0x138] sm:$0xff]
  %s212 = scalar_lea.vmem %s1, 576
  %v213 = vld [vmem:[%s212] sm:$0xff]
  %v214 = vld [vmem:[%s212 + $0x8] sm:$0xff]
  %v215 = vld [vmem:[%s212 + $0x10] sm:$0xff]
  %v216 = vld [vmem:[%s212 + $0x18] sm:$0xff]
  %v217 = vld [vmem:[%s212 + $0x20] sm:$0xff]
  %v218 = vld [vmem:[%s212 + $0x28] sm:$0xff]
  %v219 = vld [vmem:[%s212 + $0x30] sm:$0xff]
  %v220 = vld [vmem:[%s212 + $0x38] sm:$0xff]
  %v221 = vld [vmem:[%s212 + $0x40] sm:$0xff]
  %v222 = vld [vmem:[%s212 + $0x48] sm:$0xff]
  %v223 = vld [vmem:[%s212 + $0x50] sm:$0xff]
  %v224 = vld [vmem:[%s212 + $0x58] sm:$0xff]
  %v225 = vld [vmem:[%s212 + $0x60] sm:$0xff]
  %v226 = vld [vmem:[%s212 + $0x68] sm:$0xff]
  %v227 = vld [vmem:[%s212 + $0x70] sm:$0xff]
  %v228 = vld [vmem:[%s212 + $0x78] sm:$0xff]
  %v229 = vld [vmem:[%s212 + $0x80] sm:$0xff]
  %v230 = vld [vmem:[%s212 + $0x88] sm:$0xff]
  %v231 = vld [vmem:[%s212 + $0x90] sm:$0xff]
  %v232 = vld [vmem:[%s212 + $0x98] sm:$0xff]
  %v233 = vld [vmem:[%s212 + $0xa0] sm:$0xff]
  %v234 = vld [vmem:[%s212 + $0xa8] sm:$0xff]
  %v235 = vld [vmem:[%s212 + $0xb0] sm:$0xff]
  %v236 = vld [vmem:[%s212 + $0xb8] sm:$0xff]
  %v237 = vld [vmem:[%s212 + $0xc0] sm:$0xff]
  %v238 = vld [vmem:[%s212 + $0xc8] sm:$0xff]
  %v239 = vld [vmem:[%s212 + $0xd0] sm:$0xff]
  %v240 = vld [vmem:[%s212 + $0xd8] sm:$0xff]
  %v241 = vld [vmem:[%s212 + $0xe0] sm:$0xff]
  %v242 = vld [vmem:[%s212 + $0xe8] sm:$0xff]
  %v243 = vld [vmem:[%s212 + $0xf0] sm:$0xff]
  %v244 = vld [vmem:[%s212 + $0xf8] sm:$0xff]
  %v245 = vld [vmem:[%s212 + $0x100] sm:$0xff]
  %v246 = vld [vmem:[%s212 + $0x108] sm:$0xff]
  %v247 = vld [vmem:[%s212 + $0x110] sm:$0xff]
  %v248 = vld [vmem:[%s212 + $0x118] sm:$0xff]
  %v249 = vld [vmem:[%s212 + $0x120] sm:$0xff]
  %v250 = vld [vmem:[%s212 + $0x128] sm:$0xff]
  %v251 = vld [vmem:[%s212 + $0x130] sm:$0xff]
  %v252 = vld [vmem:[%s212 + $0x138] sm:$0xff]
  %v253 = vld [vmem:[%s212 + $0x140] sm:$0xff]
  %v254 = vld [vmem:[%s212 + $0x148] sm:$0xff]
  %v255 = vld [vmem:[%s212 + $0x150] sm:$0xff]
  %v256 = vld [vmem:[%s212 + $0x158] sm:$0xff]
  %v257 = vld [vmem:[%s212 + $0x160] sm:$0xff]
  %v258 = vld [vmem:[%s212 + $0x168] sm:$0xff]
  %v259 = vld [vmem:[%s212 + $0x170] sm:$0xff]
  %v260 = vld [vmem:[%s212 + $0x178] sm:$0xff]
  %v261 = vld [vmem:[%s212 + $0x180] sm:$0xff]
  %v262 = vld [vmem:[%s212 + $0x188] sm:$0xff]
  %v263 = vld [vmem:[%s212 + $0x190] sm:$0xff]
  %v264 = vld [vmem:[%s212 + $0x198] sm:$0xff]
  %v265 = vld [vmem:[%s212 + $0x1a0] sm:$0xff]
  %v266 = vld [vmem:[%s212 + $0x1a8] sm:$0xff]
  %v267 = vld [vmem:[%s212 + $0x1b0] sm:$0xff]
  %v268 = vld [vmem:[%s212 + $0x1b8] sm:$0xff]
  %v269 = vld [vmem:[%s212 + $0x1c0] sm:$0xff]
  %v270 = vld [vmem:[%s212 + $0x1c8] sm:$0xff]
  %v271 = vld [vmem:[%s212 + $0x1d0] sm:$0xff]
  %v272 = vld [vmem:[%s212 + $0x1d8] sm:$0xff]
  %v273 = vld [vmem:[%s212 + $0x1e0] sm:$0xff]
  %v274 = vld [vmem:[%s212 + $0x1e8] sm:$0xff]
  %v275 = vld [vmem:[%s212 + $0x1f0] sm:$0xff]
  %v276 = vld [vmem:[%s212 + $0x1f8] sm:$0xff]
  %v277 = vld [vmem:[%s212 + $0x200] sm:$0xff]
  %v278 = vld [vmem:[%s212 + $0x208] sm:$0xff]
  %v279 = vld [vmem:[%s212 + $0x210] sm:$0xff]
  %v280 = vld [vmem:[%s212 + $0x218] sm:$0xff]
  %v281 = vld [vmem:[%s212 + $0x220] sm:$0xff]
  %v282 = vld [vmem:[%s212 + $0x228] sm:$0xff]
  %v283 = vld [vmem:[%s212 + $0x230] sm:$0xff]
  %v284 = vld [vmem:[%s212 + $0x238] sm:$0xff]
  %v285 = vpack.c.bf16 %v177, %v172
  %v286 = vpack.c.bf16 %v178, %v173
  %v287 = vpack.c.bf16 %v179, %v174
  %v288 = vpack.c.bf16 %v180, %v175
  %v289 = vpack.c.bf16 %v181, %v176
  %v290 = vpack.c.bf16 %v187, %v182
  %v291 = vpack.c.bf16 %v188, %v183
  %v292 = vpack.c.bf16 %v189, %v184
  %v293 = vpack.c.bf16 %v190, %v185
  %v294 = vpack.c.bf16 %v191, %v186
  %v295 = vpack.c.bf16 %v197, %v192
  %v296 = vpack.c.bf16 %v198, %v193
  %v297 = vpack.c.bf16 %v199, %v194
  %v298 = vpack.c.bf16 %v200, %v195
  %v299 = vpack.c.bf16 %v201, %v196
  %v300 = vpack.c.bf16 %v207, %v202
  %v301 = vpack.c.bf16 %v208, %v203
  %v302 = vpack.c.bf16 %v209, %v204
  %v303 = vpack.c.bf16 %v210, %v205
  %v304 = vpack.c.bf16 %v211, %v206
  %v377 = vunpack.c.l.b16 %v213
  %v378 = vunpack.c.h.b16 %v213
  %v379 = vunpack.c.l.b16 %v214
  %v380 = vunpack.c.h.b16 %v214
  %v381 = vunpack.c.l.b16 %v215
  %v382 = vunpack.c.h.b16 %v215
  %v383 = vunpack.c.l.b16 %v216
  %v384 = vunpack.c.h.b16 %v216
  %v385 = vunpack.c.l.b16 %v217
  %v386 = vunpack.c.h.b16 %v217
  %v387 = vunpack.c.l.b16 %v218
  %v388 = vunpack.c.h.b16 %v218
  %v389 = vunpack.c.l.b16 %v219
  %v390 = vunpack.c.h.b16 %v219
  %v391 = vunpack.c.l.b16 %v220
  %v392 = vunpack.c.h.b16 %v220
  %v393 = vunpack.c.l.b16 %v221
  %v394 = vunpack.c.h.b16 %v221
  %v395 = vunpack.c.l.b16 %v222
  %v396 = vunpack.c.h.b16 %v222
  %v397 = vunpack.c.l.b16 %v223
  %v398 = vunpack.c.h.b16 %v223
  %v399 = vunpack.c.l.b16 %v224
  %v400 = vunpack.c.h.b16 %v224
  %v401 = vunpack.c.l.b16 %v225
  %v402 = vunpack.c.h.b16 %v225
  %v403 = vunpack.c.l.b16 %v226
  %v404 = vunpack.c.h.b16 %v226
  %v405 = vunpack.c.l.b16 %v227
  %v406 = vunpack.c.h.b16 %v227
  %v407 = vunpack.c.l.b16 %v228
  %v408 = vunpack.c.h.b16 %v228
  %v409 = vunpack.c.l.b16 %v229
  %v410 = vunpack.c.h.b16 %v229
  %v411 = vunpack.c.l.b16 %v230
  %v412 = vunpack.c.h.b16 %v230
  %v413 = vunpack.c.l.b16 %v231
  %v414 = vunpack.c.h.b16 %v231
  %v415 = vunpack.c.l.b16 %v232
  %v416 = vunpack.c.h.b16 %v232
  %v417 = vunpack.c.l.b16 %v233
  %v418 = vunpack.c.h.b16 %v233
  %v419 = vunpack.c.l.b16 %v234
  %v420 = vunpack.c.h.b16 %v234
  %v421 = vunpack.c.l.b16 %v235
  %v422 = vunpack.c.h.b16 %v235
  %v423 = vunpack.c.l.b16 %v236
  %v424 = vunpack.c.h.b16 %v236
  %v425 = vunpack.c.l.b16 %v237
  %v426 = vunpack.c.h.b16 %v237
  %v427 = vunpack.c.l.b16 %v238
  %v428 = vunpack.c.h.b16 %v238
  %v429 = vunpack.c.l.b16 %v239
  %v430 = vunpack.c.h.b16 %v239
  %v431 = vunpack.c.l.b16 %v240
  %v432 = vunpack.c.h.b16 %v240
  %v433 = vunpack.c.l.b16 %v241
  %v434 = vunpack.c.h.b16 %v241
  %v435 = vunpack.c.l.b16 %v242
  %v436 = vunpack.c.h.b16 %v242
  %v437 = vunpack.c.l.b16 %v243
  %v438 = vunpack.c.h.b16 %v243
  %v439 = vunpack.c.l.b16 %v244
  %v440 = vunpack.c.h.b16 %v244
  %v441 = vunpack.c.l.b16 %v245
  %v442 = vunpack.c.h.b16 %v245
  %v443 = vunpack.c.l.b16 %v246
  %v444 = vunpack.c.h.b16 %v246
  %v445 = vunpack.c.l.b16 %v247
  %v446 = vunpack.c.h.b16 %v247
  %v447 = vunpack.c.l.b16 %v248
  %v448 = vunpack.c.h.b16 %v248
  %v449 = vunpack.c.l.b16 %v249
  %v450 = vunpack.c.h.b16 %v249
  %v451 = vunpack.c.l.b16 %v250
  %v452 = vunpack.c.h.b16 %v250
  %v453 = vunpack.c.l.b16 %v251
  %v454 = vunpack.c.h.b16 %v251
  %v455 = vunpack.c.l.b16 %v252
  %v456 = vunpack.c.h.b16 %v252
  %v457 = vunpack.c.l.b16 %v253
  %v458 = vunpack.c.h.b16 %v253
  %v459 = vunpack.c.l.b16 %v254
  %v460 = vunpack.c.h.b16 %v254
  %v461 = vunpack.c.l.b16 %v255
  %v462 = vunpack.c.h.b16 %v255
  %v463 = vunpack.c.l.b16 %v256
  %v464 = vunpack.c.h.b16 %v256
  %v465 = vunpack.c.l.b16 %v257
  %v466 = vunpack.c.h.b16 %v257
  %v467 = vunpack.c.l.b16 %v258
  %v468 = vunpack.c.h.b16 %v258
  %v469 = vunpack.c.l.b16 %v259
  %v470 = vunpack.c.h.b16 %v259
  %v471 = vunpack.c.l.b16 %v260
  %v472 = vunpack.c.h.b16 %v260
  %v473 = vunpack.c.l.b16 %v261
  %v474 = vunpack.c.h.b16 %v261
  %v475 = vunpack.c.l.b16 %v262
  %v476 = vunpack.c.h.b16 %v262
  %v477 = vunpack.c.l.b16 %v263
  %v478 = vunpack.c.h.b16 %v263
  %v479 = vunpack.c.l.b16 %v264
  %v480 = vunpack.c.h.b16 %v264
  %v481 = vunpack.c.l.b16 %v265
  %v482 = vunpack.c.h.b16 %v265
  %v483 = vunpack.c.l.b16 %v266
  %v484 = vunpack.c.h.b16 %v266
  %v485 = vunpack.c.l.b16 %v267
  %v486 = vunpack.c.h.b16 %v267
  %v487 = vunpack.c.l.b16 %v268
  %v488 = vunpack.c.h.b16 %v268
  %v489 = vunpack.c.l.b16 %v269
  %v490 = vunpack.c.h.b16 %v269
  %v491 = vunpack.c.l.b16 %v270
  %v492 = vunpack.c.h.b16 %v270
  %v493 = vunpack.c.l.b16 %v271
  %v494 = vunpack.c.h.b16 %v271
  %v495 = vunpack.c.l.b16 %v272
  %v496 = vunpack.c.h.b16 %v272
  %v497 = vunpack.c.l.b16 %v273
  %v498 = vunpack.c.h.b16 %v273
  %v499 = vunpack.c.l.b16 %v274
  %v500 = vunpack.c.h.b16 %v274
  %v501 = vunpack.c.l.b16 %v275
  %v502 = vunpack.c.h.b16 %v275
  %v503 = vunpack.c.l.b16 %v276
  %v504 = vunpack.c.h.b16 %v276
  %v505 = vunpack.c.l.b16 %v277
  %v506 = vunpack.c.h.b16 %v277
  %v507 = vunpack.c.l.b16 %v278
  %v508 = vunpack.c.h.b16 %v278
  %v509 = vunpack.c.l.b16 %v279
  %v510 = vunpack.c.h.b16 %v279
  %v511 = vunpack.c.l.b16 %v280
  %v512 = vunpack.c.h.b16 %v280
  %v513 = vunpack.c.l.b16 %v281
  %v514 = vunpack.c.h.b16 %v281
  %v515 = vunpack.c.l.b16 %v282
  %v516 = vunpack.c.h.b16 %v282
  %v517 = vunpack.c.l.b16 %v283
  %v518 = vunpack.c.h.b16 %v283
  %v519 = vunpack.c.l.b16 %v284
  %v520 = vunpack.c.h.b16 %v284
  %v521 = vpack.c.b16 %v379, %v377
  %v522 = vpack.c.b16 %v380, %v378
  %v523 = vpack.c.b16 %v383, %v381
  %v524 = vpack.c.b16 %v384, %v382
  %v525 = vpack.c.b16 %v387, %v385
  %v526 = vpack.c.b16 %v388, %v386
  %v527 = vpack.c.b16 %v391, %v389
  %v528 = vpack.c.b16 %v392, %v390
  %v529 = vpack.c.b16 %v395, %v393
  %v530 = vpack.c.b16 %v396, %v394
  %v531 = vpack.c.b16 %v399, %v397
  %v532 = vpack.c.b16 %v400, %v398
  %v533 = vpack.c.b16 %v403, %v401
  %v534 = vpack.c.b16 %v404, %v402
  %v535 = vpack.c.b16 %v407, %v405
  %v536 = vpack.c.b16 %v408, %v406
  %v537 = vpack.c.b16 %v411, %v409
  %v538 = vpack.c.b16 %v412, %v410
  %v539 = vpack.c.b16 %v415, %v413
  %v540 = vpack.c.b16 %v416, %v414
  %v541 = vpack.c.b16 %v419, %v417
  %v542 = vpack.c.b16 %v420, %v418
  %v543 = vpack.c.b16 %v423, %v421
  %v544 = vpack.c.b16 %v424, %v422
  %v545 = vpack.c.b16 %v427, %v425
  %v546 = vpack.c.b16 %v428, %v426
  %v547 = vpack.c.b16 %v431, %v429
  %v548 = vpack.c.b16 %v432, %v430
  %v549 = vpack.c.b16 %v435, %v433
  %v550 = vpack.c.b16 %v436, %v434
  %v551 = vpack.c.b16 %v439, %v437
  %v552 = vpack.c.b16 %v440, %v438
  %v553 = vpack.c.b16 %v443, %v441
  %v554 = vpack.c.b16 %v444, %v442
  %v555 = vpack.c.b16 %v447, %v445
  %v556 = vpack.c.b16 %v448, %v446
  %v557 = vpack.c.b16 %v451, %v449
  %v558 = vpack.c.b16 %v452, %v450
  %v559 = vpack.c.b16 %v455, %v453
  %v560 = vpack.c.b16 %v456, %v454
  %v561 = vpack.c.b16 %v459, %v457
  %v562 = vpack.c.b16 %v460, %v458
  %v563 = vpack.c.b16 %v463, %v461
  %v564 = vpack.c.b16 %v464, %v462
  %v565 = vpack.c.b16 %v467, %v465
  %v566 = vpack.c.b16 %v468, %v466
  %v567 = vpack.c.b16 %v471, %v469
  %v568 = vpack.c.b16 %v472, %v470
  %v569 = vpack.c.b16 %v475, %v473
  %v570 = vpack.c.b16 %v476, %v474
  %v571 = vpack.c.b16 %v479, %v477
  %v572 = vpack.c.b16 %v480, %v478
  %v573 = vpack.c.b16 %v483, %v481
  %v574 = vpack.c.b16 %v484, %v482
  %v575 = vpack.c.b16 %v487, %v485
  %v576 = vpack.c.b16 %v488, %v486
  %v577 = vpack.c.b16 %v491, %v489
  %v578 = vpack.c.b16 %v492, %v490
  %v579 = vpack.c.b16 %v495, %v493
  %v580 = vpack.c.b16 %v496, %v494
  %v581 = vpack.c.b16 %v499, %v497
  %v582 = vpack.c.b16 %v500, %v498
  %v583 = vpack.c.b16 %v503, %v501
  %v584 = vpack.c.b16 %v504, %v502
  %v585 = vpack.c.b16 %v507, %v505
  %v586 = vpack.c.b16 %v508, %v506
  %v587 = vpack.c.b16 %v511, %v509
  %v588 = vpack.c.b16 %v512, %v510
  %v589 = vpack.c.b16 %v515, %v513
  %v590 = vpack.c.b16 %v516, %v514
  %v591 = vpack.c.b16 %v519, %v517
  %v592 = vpack.c.b16 %v520, %v518
  %vm665 = vcmask 523264
  %v667 = vsel %vm665, %v289, 0
  %v670 = vsel %vm665, %v294, 0
  %v673 = vsel %vm665, %v299, 0
  %v676 = vsel %vm665, %v304, 0
  %678 = vmatpush.bf16.msra.mxu0 %v535
  %679 = vmatpush.bf16.msra.mxu0 %v533
  %680 = vmatpush.bf16.msra.mxu0 %v531
  %681 = vmatpush.bf16.msra.mxu0 %v529
  %682 = vmatpush.bf16.msra.mxu0 %v527
  %683 = vmatpush.bf16.msra.mxu0 %v525
  %684 = vmatpush.bf16.msra.mxu0 %v523
  %685 = vmatpush.bf16.msra.mxu0 %v521
  %686 = vmatmul.bf16.gmra.mxu0 %v285
  %v687 = vpop.f32.mrf.mxu0
  %v688 = vadd.f32 0.0, %v687
  %v689 = vpop.f32.mrf.mxu0
  %v690 = vadd.f32 0.0, %v689
  %691 = vmatmul.bf16.gmra.mxu0 %v290
  %v692 = vpop.f32.mrf.mxu0
  %v693 = vadd.f32 0.0, %v692
  %v694 = vpop.f32.mrf.mxu0
  %v695 = vadd.f32 0.0, %v694
  %696 = vmatmul.bf16.gmra.mxu0 %v295
  %v697 = vpop.f32.mrf.mxu0
  %v698 = vadd.f32 0.0, %v697
  %v699 = vpop.f32.mrf.mxu0
  %v700 = vadd.f32 0.0, %v699
  %701 = vmatmul.bf16.gmra.mxu0 %v300
  %v702 = vpop.f32.mrf.mxu0
  %v703 = vadd.f32 0.0, %v702
  %v704 = vpop.f32.mrf.mxu0
  %v705 = vadd.f32 0.0, %v704
  %706 = vdwg.mxu0
  %707 = vmatpush.bf16.msra.mxu0 %v551
  %708 = vmatpush.bf16.msra.mxu0 %v549
  %709 = vmatpush.bf16.msra.mxu0 %v547
  %710 = vmatpush.bf16.msra.mxu0 %v545
  %711 = vmatpush.bf16.msra.mxu0 %v543
  %712 = vmatpush.bf16.msra.mxu0 %v541
  %713 = vmatpush.bf16.msra.mxu0 %v539
  %714 = vmatpush.bf16.msra.mxu0 %v537
  %715 = vmatmul.bf16.gmra.mxu0 %v286
  %v716 = vpop.f32.mrf.mxu0
  %v717 = vadd.f32 %v688, %v716
  %v718 = vpop.f32.mrf.mxu0
  %v719 = vadd.f32 %v690, %v718
  %720 = vmatmul.bf16.gmra.mxu0 %v291
  %v721 = vpop.f32.mrf.mxu0
  %v722 = vadd.f32 %v693, %v721
  %v723 = vpop.f32.mrf.mxu0
  %v724 = vadd.f32 %v695, %v723
  %725 = vmatmul.bf16.gmra.mxu0 %v296
  %v726 = vpop.f32.mrf.mxu0
  %v727 = vadd.f32 %v698, %v726
  %v728 = vpop.f32.mrf.mxu0
  %v729 = vadd.f32 %v700, %v728
  %730 = vmatmul.bf16.gmra.mxu0 %v301
  %v731 = vpop.f32.mrf.mxu0
  %v732 = vadd.f32 %v703, %v731
  %v733 = vpop.f32.mrf.mxu0
  %v734 = vadd.f32 %v705, %v733
  %735 = vdwg.mxu0
  %736 = vmatpush.bf16.msra.mxu0 %v567
  %737 = vmatpush.bf16.msra.mxu0 %v565
  %738 = vmatpush.bf16.msra.mxu0 %v563
  %739 = vmatpush.bf16.msra.mxu0 %v561
  %740 = vmatpush.bf16.msra.mxu0 %v559
  %741 = vmatpush.bf16.msra.mxu0 %v557
  %742 = vmatpush.bf16.msra.mxu0 %v555
  %743 = vmatpush.bf16.msra.mxu0 %v553
  %744 = vmatmul.bf16.gmra.mxu0 %v287
  %v745 = vpop.f32.mrf.mxu0
  %v746 = vadd.f32 %v717, %v745
  %v747 = vpop.f32.mrf.mxu0
  %v748 = vadd.f32 %v719, %v747
  %749 = vmatmul.bf16.gmra.mxu0 %v292
  %v750 = vpop.f32.mrf.mxu0
  %v751 = vadd.f32 %v722, %v750
  %v752 = vpop.f32.mrf.mxu0
  %v753 = vadd.f32 %v724, %v752
  %754 = vmatmul.bf16.gmra.mxu0 %v297
  %v755 = vpop.f32.mrf.mxu0
  %v756 = vadd.f32 %v727, %v755
  %v757 = vpop.f32.mrf.mxu0
  %v758 = vadd.f32 %v729, %v757
  %759 = vmatmul.bf16.gmra.mxu0 %v302
  %v760 = vpop.f32.mrf.mxu0
  %v761 = vadd.f32 %v732, %v760
  %v762 = vpop.f32.mrf.mxu0
  %v763 = vadd.f32 %v734, %v762
  %764 = vdwg.mxu0
  %765 = vmatpush.bf16.msra.mxu0 %v583
  %766 = vmatpush.bf16.msra.mxu0 %v581
  %767 = vmatpush.bf16.msra.mxu0 %v579
  %768 = vmatpush.bf16.msra.mxu0 %v577
  %769 = vmatpush.bf16.msra.mxu0 %v575
  %770 = vmatpush.bf16.msra.mxu0 %v573
  %771 = vmatpush.bf16.msra.mxu0 %v571
  %772 = vmatpush.bf16.msra.mxu0 %v569
  %773 = vmatmul.bf16.gmra.mxu0 %v288
  %v774 = vpop.f32.mrf.mxu0
  %v775 = vadd.f32 %v746, %v774
  %v776 = vpop.f32.mrf.mxu0
  %v777 = vadd.f32 %v748, %v776
  %778 = vmatmul.bf16.gmra.mxu0 %v293
  %v779 = vpop.f32.mrf.mxu0
  %v780 = vadd.f32 %v751, %v779
  %v781 = vpop.f32.mrf.mxu0
  %v782 = vadd.f32 %v753, %v781
  %783 = vmatmul.bf16.gmra.mxu0 %v298
  %v784 = vpop.f32.mrf.mxu0
  %v785 = vadd.f32 %v756, %v784
  %v786 = vpop.f32.mrf.mxu0
  %v787 = vadd.f32 %v758, %v786
  %788 = vmatmul.bf16.gmra.mxu0 %v303
  %v789 = vpop.f32.mrf.mxu0
  %v790 = vadd.f32 %v761, %v789
  %v791 = vpop.f32.mrf.mxu0
  %v792 = vadd.f32 %v763, %v791
  %793 = vdwg.mxu0
  %794 = vmatpush.bf16.msra.mxu0 0
  %795 = vmatpush.bf16.msra.mxu0 0
  %796 = vmatpush.bf16.msra.mxu0 0
  %797 = vmatpush.bf16.msra.mxu0 0
  %798 = vmatpush.bf16.msra.mxu0 %v591
  %799 = vmatpush.bf16.msra.mxu0 %v589
  %800 = vmatpush.bf16.msra.mxu0 %v587
  %801 = vmatpush.bf16.msra.mxu0 %v585
  %802 = vmatmul.bf16.gmra.mxu0 %v667
  %v803 = vpop.f32.mrf.mxu0
  %v804 = vadd.f32 %v775, %v803
  %v805 = vpop.f32.mrf.mxu0
  %v806 = vadd.f32 %v777, %v805
  %807 = vmatmul.bf16.gmra.mxu0 %v670
  %v808 = vpop.f32.mrf.mxu0
  %v809 = vadd.f32 %v780, %v808
  %v810 = vpop.f32.mrf.mxu0
  %v811 = vadd.f32 %v782, %v810
  %812 = vmatmul.bf16.gmra.mxu0 %v673
  %v813 = vpop.f32.mrf.mxu0
  %v814 = vadd.f32 %v785, %v813
  %v815 = vpop.f32.mrf.mxu0
  %v816 = vadd.f32 %v787, %v815
  %817 = vmatmul.bf16.gmra.mxu0 %v676
  %v818 = vpop.f32.mrf.mxu0
  %v819 = vadd.f32 %v790, %v818
  %v820 = vpop.f32.mrf.mxu0
  %v821 = vadd.f32 %v792, %v820
  %822 = vdwg.mxu0
  %823 = vmatpush.bf16.msra.mxu0 %v536
  %824 = vmatpush.bf16.msra.mxu0 %v534
  %825 = vmatpush.bf16.msra.mxu0 %v532
  %826 = vmatpush.bf16.msra.mxu0 %v530
  %827 = vmatpush.bf16.msra.mxu0 %v528
  %828 = vmatpush.bf16.msra.mxu0 %v526
  %829 = vmatpush.bf16.msra.mxu0 %v524
  %830 = vmatpush.bf16.msra.mxu0 %v522
  %831 = vmatmul.bf16.gmra.mxu0 %v285
  %v832 = vpop.f32.mrf.mxu0
  %v833 = vadd.f32 0.0, %v832
  %v834 = vpop.f32.mrf.mxu0
  %v835 = vadd.f32 0.0, %v834
  %836 = vmatmul.bf16.gmra.mxu0 %v290
  %v837 = vpop.f32.mrf.mxu0
  %v838 = vadd.f32 0.0, %v837
  %v839 = vpop.f32.mrf.mxu0
  %v840 = vadd.f32 0.0, %v839
  %841 = vmatmul.bf16.gmra.mxu0 %v295
  %v842 = vpop.f32.mrf.mxu0
  %v843 = vadd.f32 0.0, %v842
  %v844 = vpop.f32.mrf.mxu0
  %v845 = vadd.f32 0.0, %v844
  %846 = vmatmul.bf16.gmra.mxu0 %v300
  %v847 = vpop.f32.mrf.mxu0
  %v848 = vadd.f32 0.0, %v847
  %v849 = vpop.f32.mrf.mxu0
  %v850 = vadd.f32 0.0, %v849
  %851 = vdwg.mxu0
  %852 = vmatpush.bf16.msra.mxu0 %v552
  %853 = vmatpush.bf16.msra.mxu0 %v550
  %854 = vmatpush.bf16.msra.mxu0 %v548
  %855 = vmatpush.bf16.msra.mxu0 %v546
  %856 = vmatpush.bf16.msra.mxu0 %v544
  %857 = vmatpush.bf16.msra.mxu0 %v542
  %858 = vmatpush.bf16.msra.mxu0 %v540
  %859 = vmatpush.bf16.msra.mxu0 %v538
  %860 = vmatmul.bf16.gmra.mxu0 %v286
  %v861 = vpop.f32.mrf.mxu0
  %v862 = vadd.f32 %v833, %v861
  %v863 = vpop.f32.mrf.mxu0
  %v864 = vadd.f32 %v835, %v863
  %865 = vmatmul.bf16.gmra.mxu0 %v291
  %v866 = vpop.f32.mrf.mxu0
  %v867 = vadd.f32 %v838, %v866
  %v868 = vpop.f32.mrf.mxu0
  %v869 = vadd.f32 %v840, %v868
  %870 = vmatmul.bf16.gmra.mxu0 %v296
  %v871 = vpop.f32.mrf.mxu0
  %v872 = vadd.f32 %v843, %v871
  %v873 = vpop.f32.mrf.mxu0
  %v874 = vadd.f32 %v845, %v873
  %875 = vmatmul.bf16.gmra.mxu0 %v301
  %v876 = vpop.f32.mrf.mxu0
  %v877 = vadd.f32 %v848, %v876
  %v878 = vpop.f32.mrf.mxu0
  %v879 = vadd.f32 %v850, %v878
  %880 = vdwg.mxu0
  %881 = vmatpush.bf16.msra.mxu0 %v568
  %882 = vmatpush.bf16.msra.mxu0 %v566
  %883 = vmatpush.bf16.msra.mxu0 %v564
  %884 = vmatpush.bf16.msra.mxu0 %v562
  %885 = vmatpush.bf16.msra.mxu0 %v560
  %886 = vmatpush.bf16.msra.mxu0 %v558
  %887 = vmatpush.bf16.msra.mxu0 %v556
  %888 = vmatpush.bf16.msra.mxu0 %v554
  %889 = vmatmul.bf16.gmra.mxu0 %v287
  %v890 = vpop.f32.mrf.mxu0
  %v891 = vadd.f32 %v862, %v890
  %v892 = vpop.f32.mrf.mxu0
  %v893 = vadd.f32 %v864, %v892
  %894 = vmatmul.bf16.gmra.mxu0 %v292
  %v895 = vpop.f32.mrf.mxu0
  %v896 = vadd.f32 %v867, %v895
  %v897 = vpop.f32.mrf.mxu0
  %v898 = vadd.f32 %v869, %v897
  %899 = vmatmul.bf16.gmra.mxu0 %v297
  %v900 = vpop.f32.mrf.mxu0
  %v901 = vadd.f32 %v872, %v900
  %v902 = vpop.f32.mrf.mxu0
  %v903 = vadd.f32 %v874, %v902
  %904 = vmatmul.bf16.gmra.mxu0 %v302
  %v905 = vpop.f32.mrf.mxu0
  %v906 = vadd.f32 %v877, %v905
  %v907 = vpop.f32.mrf.mxu0
  %v908 = vadd.f32 %v879, %v907
  %909 = vdwg.mxu0
  %910 = vmatpush.bf16.msra.mxu0 %v584
  %911 = vmatpush.bf16.msra.mxu0 %v582
  %912 = vmatpush.bf16.msra.mxu0 %v580
  %913 = vmatpush.bf16.msra.mxu0 %v578
  %914 = vmatpush.bf16.msra.mxu0 %v576
  %915 = vmatpush.bf16.msra.mxu0 %v574
  %916 = vmatpush.bf16.msra.mxu0 %v572
  %917 = vmatpush.bf16.msra.mxu0 %v570
  %918 = vmatmul.bf16.gmra.mxu0 %v288
  %v919 = vpop.f32.mrf.mxu0
  %v920 = vadd.f32 %v891, %v919
  %v921 = vpop.f32.mrf.mxu0
  %v922 = vadd.f32 %v893, %v921
  %923 = vmatmul.bf16.gmra.mxu0 %v293
  %v924 = vpop.f32.mrf.mxu0
  %v925 = vadd.f32 %v896, %v924
  %v926 = vpop.f32.mrf.mxu0
  %v927 = vadd.f32 %v898, %v926
  %928 = vmatmul.bf16.gmra.mxu0 %v298
  %v929 = vpop.f32.mrf.mxu0
  %v930 = vadd.f32 %v901, %v929
  %v931 = vpop.f32.mrf.mxu0
  %v932 = vadd.f32 %v903, %v931
  %933 = vmatmul.bf16.gmra.mxu0 %v303
  %v934 = vpop.f32.mrf.mxu0
  %v935 = vadd.f32 %v906, %v934
  %v936 = vpop.f32.mrf.mxu0
  %v937 = vadd.f32 %v908, %v936
  %938 = vdwg.mxu0
  %939 = vmatpush.bf16.msra.mxu0 0
  %940 = vmatpush.bf16.msra.mxu0 0
  %941 = vmatpush.bf16.msra.mxu0 0
  %942 = vmatpush.bf16.msra.mxu0 0
  %943 = vmatpush.bf16.msra.mxu0 %v592
  %944 = vmatpush.bf16.msra.mxu0 %v590
  %945 = vmatpush.bf16.msra.mxu0 %v588
  %946 = vmatpush.bf16.msra.mxu0 %v586
  %947 = vmatmul.bf16.gmra.mxu0 %v667
  %v948 = vpop.f32.mrf.mxu0
  %v949 = vadd.f32 %v920, %v948
  %v950 = vpop.f32.mrf.mxu0
  %v951 = vadd.f32 %v922, %v950
  %952 = vmatmul.bf16.gmra.mxu0 %v670
  %v953 = vpop.f32.mrf.mxu0
  %v954 = vadd.f32 %v925, %v953
  %v955 = vpop.f32.mrf.mxu0
  %v956 = vadd.f32 %v927, %v955
  %957 = vmatmul.bf16.gmra.mxu0 %v673
  %v958 = vpop.f32.mrf.mxu0
  %v959 = vadd.f32 %v930, %v958
  %v960 = vpop.f32.mrf.mxu0
  %v961 = vadd.f32 %v932, %v960
  %962 = vmatmul.bf16.gmra.mxu0 %v676
  %v963 = vpop.f32.mrf.mxu0
  %v964 = vadd.f32 %v935, %v963
  %v965 = vpop.f32.mrf.mxu0
  %v966 = vadd.f32 %v937, %v965
  %967 = vdwg.mxu0
  %v1040 = vunpack.c.l.b16 %v79
  %v1041 = vunpack.c.h.b16 %v79
  %v1042 = vunpack.c.l.b16 %v80
  %v1043 = vunpack.c.h.b16 %v80
  %v1044 = vunpack.c.l.b16 %v81
  %v1045 = vunpack.c.h.b16 %v81
  %v1046 = vunpack.c.l.b16 %v82
  %v1047 = vunpack.c.h.b16 %v82
  %v1048 = vunpack.c.l.b16 %v83
  %v1049 = vunpack.c.h.b16 %v83
  %v1050 = vunpack.c.l.b16 %v84
  %v1051 = vunpack.c.h.b16 %v84
  %v1052 = vunpack.c.l.b16 %v85
  %v1053 = vunpack.c.h.b16 %v85
  %v1054 = vunpack.c.l.b16 %v86
  %v1055 = vunpack.c.h.b16 %v86
  %v1056 = vunpack.c.l.b16 %v87
  %v1057 = vunpack.c.h.b16 %v87
  %v1058 = vunpack.c.l.b16 %v88
  %v1059 = vunpack.c.h.b16 %v88
  %v1060 = vunpack.c.l.b16 %v89
  %v1061 = vunpack.c.h.b16 %v89
  %v1062 = vunpack.c.l.b16 %v90
  %v1063 = vunpack.c.h.b16 %v90
  %v1064 = vunpack.c.l.b16 %v91
  %v1065 = vunpack.c.h.b16 %v91
  %v1066 = vunpack.c.l.b16 %v92
  %v1067 = vunpack.c.h.b16 %v92
  %v1068 = vunpack.c.l.b16 %v93
  %v1069 = vunpack.c.h.b16 %v93
  %v1070 = vunpack.c.l.b16 %v94
  %v1071 = vunpack.c.h.b16 %v94
  %v1072 = vunpack.c.l.b16 %v95
  %v1073 = vunpack.c.h.b16 %v95
  %v1074 = vunpack.c.l.b16 %v96
  %v1075 = vunpack.c.h.b16 %v96
  %v1076 = vunpack.c.l.b16 %v97
  %v1077 = vunpack.c.h.b16 %v97
  %v1078 = vunpack.c.l.b16 %v98
  %v1079 = vunpack.c.h.b16 %v98
  %v1080 = vunpack.c.l.b16 %v99
  %v1081 = vunpack.c.h.b16 %v99
  %v1082 = vunpack.c.l.b16 %v100
  %v1083 = vunpack.c.h.b16 %v100
  %v1084 = vunpack.c.l.b16 %v101
  %v1085 = vunpack.c.h.b16 %v101
  %v1086 = vunpack.c.l.b16 %v102
  %v1087 = vunpack.c.h.b16 %v102
  %v1088 = vunpack.c.l.b16 %v103
  %v1089 = vunpack.c.h.b16 %v103
  %v1090 = vunpack.c.l.b16 %v104
  %v1091 = vunpack.c.h.b16 %v104
  %v1092 = vunpack.c.l.b16 %v105
  %v1093 = vunpack.c.h.b16 %v105
  %v1094 = vunpack.c.l.b16 %v106
  %v1095 = vunpack.c.h.b16 %v106
  %v1096 = vunpack.c.l.b16 %v107
  %v1097 = vunpack.c.h.b16 %v107
  %v1098 = vunpack.c.l.b16 %v108
  %v1099 = vunpack.c.h.b16 %v108
  %v1100 = vunpack.c.l.b16 %v109
  %v1101 = vunpack.c.h.b16 %v109
  %v1102 = vunpack.c.l.b16 %v110
  %v1103 = vunpack.c.h.b16 %v110
  %v1104 = vunpack.c.l.b16 %v111
  %v1105 = vunpack.c.h.b16 %v111
  %v1106 = vunpack.c.l.b16 %v112
  %v1107 = vunpack.c.h.b16 %v112
  %v1108 = vunpack.c.l.b16 %v113
  %v1109 = vunpack.c.h.b16 %v113
  %v1110 = vunpack.c.l.b16 %v114
  %v1111 = vunpack.c.h.b16 %v114
  %v1112 = vunpack.c.l.b16 %v115
  %v1113 = vunpack.c.h.b16 %v115
  %v1114 = vunpack.c.l.b16 %v116
  %v1115 = vunpack.c.h.b16 %v116
  %v1116 = vunpack.c.l.b16 %v117
  %v1117 = vunpack.c.h.b16 %v117
  %v1118 = vunpack.c.l.b16 %v118
  %v1119 = vunpack.c.h.b16 %v118
  %v1120 = vunpack.c.l.b16 %v119
  %v1121 = vunpack.c.h.b16 %v119
  %v1122 = vunpack.c.l.b16 %v120
  %v1123 = vunpack.c.h.b16 %v120
  %v1124 = vunpack.c.l.b16 %v121
  %v1125 = vunpack.c.h.b16 %v121
  %v1126 = vunpack.c.l.b16 %v122
  %v1127 = vunpack.c.h.b16 %v122
  %v1128 = vunpack.c.l.b16 %v123
  %v1129 = vunpack.c.h.b16 %v123
  %v1130 = vunpack.c.l.b16 %v124
  %v1131 = vunpack.c.h.b16 %v124
  %v1132 = vunpack.c.l.b16 %v125
  %v1133 = vunpack.c.h.b16 %v125
  %v1134 = vunpack.c.l.b16 %v126
  %v1135 = vunpack.c.h.b16 %v126
  %v1136 = vunpack.c.l.b16 %v127
  %v1137 = vunpack.c.h.b16 %v127
  %v1138 = vunpack.c.l.b16 %v128
  %v1139 = vunpack.c.h.b16 %v128
  %v1140 = vunpack.c.l.b16 %v129
  %v1141 = vunpack.c.h.b16 %v129
  %v1142 = vunpack.c.l.b16 %v130
  %v1143 = vunpack.c.h.b16 %v130
  %v1144 = vunpack.c.l.b16 %v131
  %v1145 = vunpack.c.h.b16 %v131
  %v1146 = vunpack.c.l.b16 %v132
  %v1147 = vunpack.c.h.b16 %v132
  %v1148 = vunpack.c.l.b16 %v133
  %v1149 = vunpack.c.h.b16 %v133
  %v1150 = vunpack.c.l.b16 %v134
  %v1151 = vunpack.c.h.b16 %v134
  %v1152 = vunpack.c.l.b16 %v135
  %v1153 = vunpack.c.h.b16 %v135
  %v1154 = vunpack.c.l.b16 %v136
  %v1155 = vunpack.c.h.b16 %v136
  %v1156 = vunpack.c.l.b16 %v137
  %v1157 = vunpack.c.h.b16 %v137
  %v1158 = vunpack.c.l.b16 %v138
  %v1159 = vunpack.c.h.b16 %v138
  %v1160 = vunpack.c.l.b16 %v139
  %v1161 = vunpack.c.h.b16 %v139
  %v1162 = vunpack.c.l.b16 %v140
  %v1163 = vunpack.c.h.b16 %v140
  %v1164 = vunpack.c.l.b16 %v141
  %v1165 = vunpack.c.h.b16 %v141
  %v1166 = vunpack.c.l.b16 %v142
  %v1167 = vunpack.c.h.b16 %v142
  %v1168 = vunpack.c.l.b16 %v143
  %v1169 = vunpack.c.h.b16 %v143
  %v1170 = vunpack.c.l.b16 %v144
  %v1171 = vunpack.c.h.b16 %v144
  %v1172 = vunpack.c.l.b16 %v145
  %v1173 = vunpack.c.h.b16 %v145
  %v1174 = vunpack.c.l.b16 %v146
  %v1175 = vunpack.c.h.b16 %v146
  %v1176 = vunpack.c.l.b16 %v147
  %v1177 = vunpack.c.h.b16 %v147
  %v1178 = vunpack.c.l.b16 %v148
  %v1179 = vunpack.c.h.b16 %v148
  %v1180 = vunpack.c.l.b16 %v149
  %v1181 = vunpack.c.h.b16 %v149
  %v1182 = vunpack.c.l.b16 %v150
  %v1183 = vunpack.c.h.b16 %v150
  %v1184 = vpack.c.b16 %v1042, %v1040
  %v1185 = vpack.c.b16 %v1043, %v1041
  %v1186 = vpack.c.b16 %v1046, %v1044
  %v1187 = vpack.c.b16 %v1047, %v1045
  %v1188 = vpack.c.b16 %v1050, %v1048
  %v1189 = vpack.c.b16 %v1051, %v1049
  %v1190 = vpack.c.b16 %v1054, %v1052
  %v1191 = vpack.c.b16 %v1055, %v1053
  %v1192 = vpack.c.b16 %v1058, %v1056
  %v1193 = vpack.c.b16 %v1059, %v1057
  %v1194 = vpack.c.b16 %v1062, %v1060
  %v1195 = vpack.c.b16 %v1063, %v1061
  %v1196 = vpack.c.b16 %v1066, %v1064
  %v1197 = vpack.c.b16 %v1067, %v1065
  %v1198 = vpack.c.b16 %v1070, %v1068
  %v1199 = vpack.c.b16 %v1071, %v1069
  %v1200 = vpack.c.b16 %v1074, %v1072
  %v1201 = vpack.c.b16 %v1075, %v1073
  %v1202 = vpack.c.b16 %v1078, %v1076
  %v1203 = vpack.c.b16 %v1079, %v1077
  %v1204 = vpack.c.b16 %v1082, %v1080
  %v1205 = vpack.c.b16 %v1083, %v1081
  %v1206 = vpack.c.b16 %v1086, %v1084
  %v1207 = vpack.c.b16 %v1087, %v1085
  %v1208 = vpack.c.b16 %v1090, %v1088
  %v1209 = vpack.c.b16 %v1091, %v1089
  %v1210 = vpack.c.b16 %v1094, %v1092
  %v1211 = vpack.c.b16 %v1095, %v1093
  %v1212 = vpack.c.b16 %v1098, %v1096
  %v1213 = vpack.c.b16 %v1099, %v1097
  %v1214 = vpack.c.b16 %v1102, %v1100
  %v1215 = vpack.c.b16 %v1103, %v1101
  %v1216 = vpack.c.b16 %v1106, %v1104
  %v1217 = vpack.c.b16 %v1107, %v1105
  %v1218 = vpack.c.b16 %v1110, %v1108
  %v1219 = vpack.c.b16 %v1111, %v1109
  %v1220 = vpack.c.b16 %v1114, %v1112
  %v1221 = vpack.c.b16 %v1115, %v1113
  %v1222 = vpack.c.b16 %v1118, %v1116
  %v1223 = vpack.c.b16 %v1119, %v1117
  %v1224 = vpack.c.b16 %v1122, %v1120
  %v1225 = vpack.c.b16 %v1123, %v1121
  %v1226 = vpack.c.b16 %v1126, %v1124
  %v1227 = vpack.c.b16 %v1127, %v1125
  %v1228 = vpack.c.b16 %v1130, %v1128
  %v1229 = vpack.c.b16 %v1131, %v1129
  %v1230 = vpack.c.b16 %v1134, %v1132
  %v1231 = vpack.c.b16 %v1135, %v1133
  %v1232 = vpack.c.b16 %v1138, %v1136
  %v1233 = vpack.c.b16 %v1139, %v1137
  %v1234 = vpack.c.b16 %v1142, %v1140
  %v1235 = vpack.c.b16 %v1143, %v1141
  %v1236 = vpack.c.b16 %v1146, %v1144
  %v1237 = vpack.c.b16 %v1147, %v1145
  %v1238 = vpack.c.b16 %v1150, %v1148
  %v1239 = vpack.c.b16 %v1151, %v1149
  %v1240 = vpack.c.b16 %v1154, %v1152
  %v1241 = vpack.c.b16 %v1155, %v1153
  %v1242 = vpack.c.b16 %v1158, %v1156
  %v1243 = vpack.c.b16 %v1159, %v1157
  %v1244 = vpack.c.b16 %v1162, %v1160
  %v1245 = vpack.c.b16 %v1163, %v1161
  %v1246 = vpack.c.b16 %v1166, %v1164
  %v1247 = vpack.c.b16 %v1167, %v1165
  %v1248 = vpack.c.b16 %v1170, %v1168
  %v1249 = vpack.c.b16 %v1171, %v1169
  %v1250 = vpack.c.b16 %v1174, %v1172
  %v1251 = vpack.c.b16 %v1175, %v1173
  %v1252 = vpack.c.b16 %v1178, %v1176
  %v1253 = vpack.c.b16 %v1179, %v1177
  %v1254 = vpack.c.b16 %v1182, %v1180
  %v1255 = vpack.c.b16 %v1183, %v1181
  %v1329 = vsel %vm665, %v155, 0
  %v1332 = vsel %vm665, %v160, 0
  %v1335 = vsel %vm665, %v165, 0
  %v1338 = vsel %vm665, %v170, 0
  %1340 = vmatpush.bf16.msra.mxu0 %v1198
  %1341 = vmatpush.bf16.msra.mxu0 %v1196
  %1342 = vmatpush.bf16.msra.mxu0 %v1194
  %1343 = vmatpush.bf16.msra.mxu0 %v1192
  %1344 = vmatpush.bf16.msra.mxu0 %v1190
  %1345 = vmatpush.bf16.msra.mxu0 %v1188
  %1346 = vmatpush.bf16.msra.mxu0 %v1186
  %1347 = vmatpush.bf16.msra.mxu0 %v1184
  %1348 = vmatmul.bf16.gmra.mxu0 %v151
  %v1349 = vpop.f32.mrf.mxu0
  %v1350 = vadd.f32 %v804, %v1349
  %v1351 = vpop.f32.mrf.mxu0
  %v1352 = vadd.f32 %v806, %v1351
  %1353 = vmatmul.bf16.gmra.mxu0 %v156
  %v1354 = vpop.f32.mrf.mxu0
  %v1355 = vadd.f32 %v809, %v1354
  %v1356 = vpop.f32.mrf.mxu0
  %v1357 = vadd.f32 %v811, %v1356
  %1358 = vmatmul.bf16.gmra.mxu0 %v161
  %v1359 = vpop.f32.mrf.mxu0
  %v1360 = vadd.f32 %v814, %v1359
  %v1361 = vpop.f32.mrf.mxu0
  %v1362 = vadd.f32 %v816, %v1361
  %1363 = vmatmul.bf16.gmra.mxu0 %v166
  %v1364 = vpop.f32.mrf.mxu0
  %v1365 = vadd.f32 %v819, %v1364
  %v1366 = vpop.f32.mrf.mxu0
  %v1367 = vadd.f32 %v821, %v1366
  %1368 = vdwg.mxu0
  %1369 = vmatpush.bf16.msra.mxu0 %v1214
  %1370 = vmatpush.bf16.msra.mxu0 %v1212
  %1371 = vmatpush.bf16.msra.mxu0 %v1210
  %1372 = vmatpush.bf16.msra.mxu0 %v1208
  %1373 = vmatpush.bf16.msra.mxu0 %v1206
  %1374 = vmatpush.bf16.msra.mxu0 %v1204
  %1375 = vmatpush.bf16.msra.mxu0 %v1202
  %1376 = vmatpush.bf16.msra.mxu0 %v1200
  %1377 = vmatmul.bf16.gmra.mxu0 %v152
  %v1378 = vpop.f32.mrf.mxu0
  %v1379 = vadd.f32 %v1350, %v1378
  %v1380 = vpop.f32.mrf.mxu0
  %v1381 = vadd.f32 %v1352, %v1380
  %1382 = vmatmul.bf16.gmra.mxu0 %v157
  %v1383 = vpop.f32.mrf.mxu0
  %v1384 = vadd.f32 %v1355, %v1383
  %v1385 = vpop.f32.mrf.mxu0
  %v1386 = vadd.f32 %v1357, %v1385
  %1387 = vmatmul.bf16.gmra.mxu0 %v162
  %v1388 = vpop.f32.mrf.mxu0
  %v1389 = vadd.f32 %v1360, %v1388
  %v1390 = vpop.f32.mrf.mxu0
  %v1391 = vadd.f32 %v1362, %v1390
  %1392 = vmatmul.bf16.gmra.mxu0 %v167
  %v1393 = vpop.f32.mrf.mxu0
  %v1394 = vadd.f32 %v1365, %v1393
  %v1395 = vpop.f32.mrf.mxu0
  %v1396 = vadd.f32 %v1367, %v1395
  %1397 = vdwg.mxu0
  %1398 = vmatpush.bf16.msra.mxu0 %v1230
  %1399 = vmatpush.bf16.msra.mxu0 %v1228
  %1400 = vmatpush.bf16.msra.mxu0 %v1226
  %1401 = vmatpush.bf16.msra.mxu0 %v1224
  %1402 = vmatpush.bf16.msra.mxu0 %v1222
  %1403 = vmatpush.bf16.msra.mxu0 %v1220
  %1404 = vmatpush.bf16.msra.mxu0 %v1218
  %1405 = vmatpush.bf16.msra.mxu0 %v1216
  %1406 = vmatmul.bf16.gmra.mxu0 %v153
  %v1407 = vpop.f32.mrf.mxu0
  %v1408 = vadd.f32 %v1379, %v1407
  %v1409 = vpop.f32.mrf.mxu0
  %v1410 = vadd.f32 %v1381, %v1409
  %1411 = vmatmul.bf16.gmra.mxu0 %v158
  %v1412 = vpop.f32.mrf.mxu0
  %v1413 = vadd.f32 %v1384, %v1412
  %v1414 = vpop.f32.mrf.mxu0
  %v1415 = vadd.f32 %v1386, %v1414
  %1416 = vmatmul.bf16.gmra.mxu0 %v163
  %v1417 = vpop.f32.mrf.mxu0
  %v1418 = vadd.f32 %v1389, %v1417
  %v1419 = vpop.f32.mrf.mxu0
  %v1420 = vadd.f32 %v1391, %v1419
  %1421 = vmatmul.bf16.gmra.mxu0 %v168
  %v1422 = vpop.f32.mrf.mxu0
  %v1423 = vadd.f32 %v1394, %v1422
  %v1424 = vpop.f32.mrf.mxu0
  %v1425 = vadd.f32 %v1396, %v1424
  %1426 = vdwg.mxu0
  %1427 = vmatpush.bf16.msra.mxu0 %v1246
  %1428 = vmatpush.bf16.msra.mxu0 %v1244
  %1429 = vmatpush.bf16.msra.mxu0 %v1242
  %1430 = vmatpush.bf16.msra.mxu0 %v1240
  %1431 = vmatpush.bf16.msra.mxu0 %v1238
  %1432 = vmatpush.bf16.msra.mxu0 %v1236
  %1433 = vmatpush.bf16.msra.mxu0 %v1234
  %1434 = vmatpush.bf16.msra.mxu0 %v1232
  %1435 = vmatmul.bf16.gmra.mxu0 %v154
  %v1436 = vpop.f32.mrf.mxu0
  %v1437 = vadd.f32 %v1408, %v1436
  %v1438 = vpop.f32.mrf.mxu0
  %v1439 = vadd.f32 %v1410, %v1438
  %1440 = vmatmul.bf16.gmra.mxu0 %v159
  %v1441 = vpop.f32.mrf.mxu0
  %v1442 = vadd.f32 %v1413, %v1441
  %v1443 = vpop.f32.mrf.mxu0
  %v1444 = vadd.f32 %v1415, %v1443
  %1445 = vmatmul.bf16.gmra.mxu0 %v164
  %v1446 = vpop.f32.mrf.mxu0
  %v1447 = vadd.f32 %v1418, %v1446
  %v1448 = vpop.f32.mrf.mxu0
  %v1449 = vadd.f32 %v1420, %v1448
  %1450 = vmatmul.bf16.gmra.mxu0 %v169
  %v1451 = vpop.f32.mrf.mxu0
  %v1452 = vadd.f32 %v1423, %v1451
  %v1453 = vpop.f32.mrf.mxu0
  %v1454 = vadd.f32 %v1425, %v1453
  %1455 = vdwg.mxu0
  %1456 = vmatpush.bf16.msra.mxu0 0
  %1457 = vmatpush.bf16.msra.mxu0 0
  %1458 = vmatpush.bf16.msra.mxu0 0
  %1459 = vmatpush.bf16.msra.mxu0 0
  %1460 = vmatpush.bf16.msra.mxu0 %v1254
  %1461 = vmatpush.bf16.msra.mxu0 %v1252
  %1462 = vmatpush.bf16.msra.mxu0 %v1250
  %1463 = vmatpush.bf16.msra.mxu0 %v1248
  %1464 = vmatmul.bf16.gmra.mxu0 %v1329
  %v1465 = vpop.f32.mrf.mxu0
  %v1466 = vadd.f32 %v1437, %v1465
  %v1467 = vpop.f32.mrf.mxu0
  %v1468 = vadd.f32 %v1439, %v1467
  %1469 = vmatmul.bf16.gmra.mxu0 %v1332
  %v1470 = vpop.f32.mrf.mxu0
  %v1471 = vadd.f32 %v1442, %v1470
  %v1472 = vpop.f32.mrf.mxu0
  %v1473 = vadd.f32 %v1444, %v1472
  %1474 = vmatmul.bf16.gmra.mxu0 %v1335
  %v1475 = vpop.f32.mrf.mxu0
  %v1476 = vadd.f32 %v1447, %v1475
  %v1477 = vpop.f32.mrf.mxu0
  %v1478 = vadd.f32 %v1449, %v1477
  %1479 = vmatmul.bf16.gmra.mxu0 %v1338
  %v1480 = vpop.f32.mrf.mxu0
  %v1481 = vadd.f32 %v1452, %v1480
  %v1482 = vpop.f32.mrf.mxu0
  %v1483 = vadd.f32 %v1454, %v1482
  %1484 = vdwg.mxu0
  %1485 = vmatpush.bf16.msra.mxu0 %v1199
  %1486 = vmatpush.bf16.msra.mxu0 %v1197
  %1487 = vmatpush.bf16.msra.mxu0 %v1195
  %1488 = vmatpush.bf16.msra.mxu0 %v1193
  %1489 = vmatpush.bf16.msra.mxu0 %v1191
  %1490 = vmatpush.bf16.msra.mxu0 %v1189
  %1491 = vmatpush.bf16.msra.mxu0 %v1187
  %1492 = vmatpush.bf16.msra.mxu0 %v1185
  %1493 = vmatmul.bf16.gmra.mxu0 %v151
  %v1494 = vpop.f32.mrf.mxu0
  %v1495 = vadd.f32 %v949, %v1494
  %v1496 = vpop.f32.mrf.mxu0
  %v1497 = vadd.f32 %v951, %v1496
  %1498 = vmatmul.bf16.gmra.mxu0 %v156
  %v1499 = vpop.f32.mrf.mxu0
  %v1500 = vadd.f32 %v954, %v1499
  %v1501 = vpop.f32.mrf.mxu0
  %v1502 = vadd.f32 %v956, %v1501
  %1503 = vmatmul.bf16.gmra.mxu0 %v161
  %v1504 = vpop.f32.mrf.mxu0
  %v1505 = vadd.f32 %v959, %v1504
  %v1506 = vpop.f32.mrf.mxu0
  %v1507 = vadd.f32 %v961, %v1506
  %1508 = vmatmul.bf16.gmra.mxu0 %v166
  %v1509 = vpop.f32.mrf.mxu0
  %v1510 = vadd.f32 %v964, %v1509
  %v1511 = vpop.f32.mrf.mxu0
  %v1512 = vadd.f32 %v966, %v1511
  %1513 = vdwg.mxu0
  %1514 = vmatpush.bf16.msra.mxu0 %v1215
  %1515 = vmatpush.bf16.msra.mxu0 %v1213
  %1516 = vmatpush.bf16.msra.mxu0 %v1211
  %1517 = vmatpush.bf16.msra.mxu0 %v1209
  %1518 = vmatpush.bf16.msra.mxu0 %v1207
  %1519 = vmatpush.bf16.msra.mxu0 %v1205
  %1520 = vmatpush.bf16.msra.mxu0 %v1203
  %1521 = vmatpush.bf16.msra.mxu0 %v1201
  %1522 = vmatmul.bf16.gmra.mxu0 %v152
  %v1523 = vpop.f32.mrf.mxu0
  %v1524 = vadd.f32 %v1495, %v1523
  %v1525 = vpop.f32.mrf.mxu0
  %v1526 = vadd.f32 %v1497, %v1525
  %1527 = vmatmul.bf16.gmra.mxu0 %v157
  %v1528 = vpop.f32.mrf.mxu0
  %v1529 = vadd.f32 %v1500, %v1528
  %v1530 = vpop.f32.mrf.mxu0
  %v1531 = vadd.f32 %v1502, %v1530
  %1532 = vmatmul.bf16.gmra.mxu0 %v162
  %v1533 = vpop.f32.mrf.mxu0
  %v1534 = vadd.f32 %v1505, %v1533
  %v1535 = vpop.f32.mrf.mxu0
  %v1536 = vadd.f32 %v1507, %v1535
  %1537 = vmatmul.bf16.gmra.mxu0 %v167
  %v1538 = vpop.f32.mrf.mxu0
  %v1539 = vadd.f32 %v1510, %v1538
  %v1540 = vpop.f32.mrf.mxu0
  %v1541 = vadd.f32 %v1512, %v1540
  %1542 = vdwg.mxu0
  %1543 = vmatpush.bf16.msra.mxu0 %v1231
  %1544 = vmatpush.bf16.msra.mxu0 %v1229
  %1545 = vmatpush.bf16.msra.mxu0 %v1227
  %1546 = vmatpush.bf16.msra.mxu0 %v1225
  %1547 = vmatpush.bf16.msra.mxu0 %v1223
  %1548 = vmatpush.bf16.msra.mxu0 %v1221
  %1549 = vmatpush.bf16.msra.mxu0 %v1219
  %1550 = vmatpush.bf16.msra.mxu0 %v1217
  %1551 = vmatmul.bf16.gmra.mxu0 %v153
  %v1552 = vpop.f32.mrf.mxu0
  %v1553 = vadd.f32 %v1524, %v1552
  %v1554 = vpop.f32.mrf.mxu0
  %v1555 = vadd.f32 %v1526, %v1554
  %1556 = vmatmul.bf16.gmra.mxu0 %v158
  %v1557 = vpop.f32.mrf.mxu0
  %v1558 = vadd.f32 %v1529, %v1557
  %v1559 = vpop.f32.mrf.mxu0
  %v1560 = vadd.f32 %v1531, %v1559
  %1561 = vmatmul.bf16.gmra.mxu0 %v163
  %v1562 = vpop.f32.mrf.mxu0
  %v1563 = vadd.f32 %v1534, %v1562
  %v1564 = vpop.f32.mrf.mxu0
  %v1565 = vadd.f32 %v1536, %v1564
  %1566 = vmatmul.bf16.gmra.mxu0 %v168
  %v1567 = vpop.f32.mrf.mxu0
  %v1568 = vadd.f32 %v1539, %v1567
  %v1569 = vpop.f32.mrf.mxu0
  %v1570 = vadd.f32 %v1541, %v1569
  %1571 = vdwg.mxu0
  %1572 = vmatpush.bf16.msra.mxu0 %v1247
  %1573 = vmatpush.bf16.msra.mxu0 %v1245
  %1574 = vmatpush.bf16.msra.mxu0 %v1243
  %1575 = vmatpush.bf16.msra.mxu0 %v1241
  %1576 = vmatpush.bf16.msra.mxu0 %v1239
  %1577 = vmatpush.bf16.msra.mxu0 %v1237
  %1578 = vmatpush.bf16.msra.mxu0 %v1235
  %1579 = vmatpush.bf16.msra.mxu0 %v1233
  %1580 = vmatmul.bf16.gmra.mxu0 %v154
  %v1581 = vpop.f32.mrf.mxu0
  %v1582 = vadd.f32 %v1553, %v1581
  %v1583 = vpop.f32.mrf.mxu0
  %v1584 = vadd.f32 %v1555, %v1583
  %1585 = vmatmul.bf16.gmra.mxu0 %v159
  %v1586 = vpop.f32.mrf.mxu0
  %v1587 = vadd.f32 %v1558, %v1586
  %v1588 = vpop.f32.mrf.mxu0
  %v1589 = vadd.f32 %v1560, %v1588
  %1590 = vmatmul.bf16.gmra.mxu0 %v164
  %v1591 = vpop.f32.mrf.mxu0
  %v1592 = vadd.f32 %v1563, %v1591
  %v1593 = vpop.f32.mrf.mxu0
  %v1594 = vadd.f32 %v1565, %v1593
  %1595 = vmatmul.bf16.gmra.mxu0 %v169
  %v1596 = vpop.f32.mrf.mxu0
  %v1597 = vadd.f32 %v1568, %v1596
  %v1598 = vpop.f32.mrf.mxu0
  %v1599 = vadd.f32 %v1570, %v1598
  %1600 = vdwg.mxu0
  %1601 = vmatpush.bf16.msra.mxu0 0
  %1602 = vmatpush.bf16.msra.mxu0 0
  %1603 = vmatpush.bf16.msra.mxu0 0
  %1604 = vmatpush.bf16.msra.mxu0 0
  %1605 = vmatpush.bf16.msra.mxu0 %v1255
  %1606 = vmatpush.bf16.msra.mxu0 %v1253
  %1607 = vmatpush.bf16.msra.mxu0 %v1251
  %1608 = vmatpush.bf16.msra.mxu0 %v1249
  %1609 = vmatmul.bf16.gmra.mxu0 %v1329
  %v1610 = vpop.f32.mrf.mxu0
  %v1611 = vadd.f32 %v1582, %v1610
  %v1612 = vpop.f32.mrf.mxu0
  %v1613 = vadd.f32 %v1584, %v1612
  %1614 = vmatmul.bf16.gmra.mxu0 %v1332
  %v1615 = vpop.f32.mrf.mxu0
  %v1616 = vadd.f32 %v1587, %v1615
  %v1617 = vpop.f32.mrf.mxu0
  %v1618 = vadd.f32 %v1589, %v1617
  %1619 = vmatmul.bf16.gmra.mxu0 %v1335
  %v1620 = vpop.f32.mrf.mxu0
  %v1621 = vadd.f32 %v1592, %v1620
  %v1622 = vpop.f32.mrf.mxu0
  %v1623 = vadd.f32 %v1594, %v1622
  %1624 = vmatmul.bf16.gmra.mxu0 %v1338
  %v1625 = vpop.f32.mrf.mxu0
  %v1626 = vadd.f32 %v1597, %v1625
  %v1627 = vpop.f32.mrf.mxu0
  %v1628 = vadd.f32 %v1599, %v1627
  %1629 = vdwg.mxu0
  %v1630 = vld [vmem:[%s2] sm:$0x3]
  %v1632 = vperm.slane %v1630, 0
  %v1633 = vperm.slane %v1630, 1
  %v1636 = vadd.f32 %v1466, %v1632
  %v1637 = vadd.f32 %v1611, %v1633
  %v1638 = vadd.f32 %v1468, %v1632
  %v1639 = vadd.f32 %v1613, %v1633
  %v1640 = vadd.f32 %v1471, %v1632
  %v1641 = vadd.f32 %v1616, %v1633
  %v1642 = vadd.f32 %v1473, %v1632
  %v1643 = vadd.f32 %v1618, %v1633
  %v1644 = vadd.f32 %v1476, %v1632
  %v1645 = vadd.f32 %v1621, %v1633
  %v1646 = vadd.f32 %v1478, %v1632
  %v1647 = vadd.f32 %v1623, %v1633
  %v1648 = vadd.f32 %v1481, %v1632
  %v1649 = vadd.f32 %v1626, %v1633
  %v1650 = vadd.f32 %v1483, %v1632
  %v1651 = vadd.f32 %v1628, %v1633
  %v1652 = vmax.f32 %v1636, 0.0
  %v1653 = vmax.f32 %v1637, 0.0
  %v1654 = vmax.f32 %v1638, 0.0
  %v1655 = vmax.f32 %v1639, 0.0
  %v1656 = vmax.f32 %v1640, 0.0
  %v1657 = vmax.f32 %v1641, 0.0
  %v1658 = vmax.f32 %v1642, 0.0
  %v1659 = vmax.f32 %v1643, 0.0
  %v1660 = vmax.f32 %v1644, 0.0
  %v1661 = vmax.f32 %v1645, 0.0
  %v1662 = vmax.f32 %v1646, 0.0
  %v1663 = vmax.f32 %v1647, 0.0
  %v1664 = vmax.f32 %v1648, 0.0
  %v1665 = vmax.f32 %v1649, 0.0
  %v1666 = vmax.f32 %v1650, 0.0
  %v1667 = vmax.f32 %v1651, 0.0
  %1668 = vst [vmem:[#allocation2] sm:$0xff] %v1652
  %1669 = vst [vmem:[#allocation2 + $0x8] sm:$0xff] %v1653
  %1670 = vst [vmem:[#allocation2 + $0x10] sm:$0xff] %v1654
  %1671 = vst [vmem:[#allocation2 + $0x18] sm:$0xff] %v1655
  %1672 = vst [vmem:[#allocation2 + $0x20] sm:$0xff] %v1656
  %1673 = vst [vmem:[#allocation2 + $0x28] sm:$0xff] %v1657
  %1674 = vst [vmem:[#allocation2 + $0x30] sm:$0xff] %v1658
  %1675 = vst [vmem:[#allocation2 + $0x38] sm:$0xff] %v1659
  %1676 = vst [vmem:[#allocation2 + $0x40] sm:$0xff] %v1660
  %1677 = vst [vmem:[#allocation2 + $0x48] sm:$0xff] %v1661
  %1678 = vst [vmem:[#allocation2 + $0x50] sm:$0xff] %v1662
  %1679 = vst [vmem:[#allocation2 + $0x58] sm:$0xff] %v1663
  %1680 = vst [vmem:[#allocation2 + $0x60] sm:$0xff] %v1664
  %1681 = vst [vmem:[#allocation2 + $0x68] sm:$0xff] %v1665
  %1682 = vst [vmem:[#allocation2 + $0x70] sm:$0xff] %v1666
  %1683 = vst [vmem:[#allocation2 + $0x78] sm:$0xff] %v1667
  %v1684 = vld [vmem:[#allocation2] sm:$0xff]
  %v1685 = vld [vmem:[#allocation2 + $0x8] sm:$0xff]
  %s1686 = scalar_lea.vmem [#allocation2], 32
  %v1687 = vld [vmem:[%s1686] sm:$0xff]
  %v1688 = vld [vmem:[%s1686 + $0x8] sm:$0xff]
  %s1689 = scalar_lea.vmem [#allocation2], 64
  %v1690 = vld [vmem:[%s1689] sm:$0xff]
  %v1691 = vld [vmem:[%s1689 + $0x8] sm:$0xff]
  %v1692 = vld [vmem:[%s3] sm:$0xff]
  %v1693 = vld [vmem:[%s3 + $0x8] sm:$0xff]
  %v1694 = vld [vmem:[%s3 + $0x10] sm:$0xff]
  %v1695 = vld [vmem:[%s3 + $0x18] sm:$0xff]
  %v1696 = vld [vmem:[%s3 + $0x20] sm:$0xff]
  %v1697 = vld [vmem:[%s3 + $0x28] sm:$0xff]
  %v1698 = vld [vmem:[%s3 + $0x30] sm:$0xff]
  %v1699 = vld [vmem:[%s3 + $0x38] sm:$0xff]
  %v1700 = vld [vmem:[%s3 + $0x40] sm:$0xff]
  %v1701 = vld [vmem:[%s3 + $0x48] sm:$0xff]
  %v1702 = vld [vmem:[%s3 + $0x50] sm:$0xff]
  %v1703 = vld [vmem:[%s3 + $0x58] sm:$0xff]
  %v1704 = vld [vmem:[%s3 + $0x60] sm:$0xff]
  %v1705 = vld [vmem:[%s3 + $0x68] sm:$0xff]
  %v1706 = vld [vmem:[%s3 + $0x70] sm:$0xff]
  %v1707 = vld [vmem:[%s3 + $0x78] sm:$0xff]
  %v1708 = vld [vmem:[%s3 + $0x80] sm:$0xff]
  %v1709 = vld [vmem:[%s3 + $0x88] sm:$0xff]
  %v1710 = vld [vmem:[%s3 + $0x90] sm:$0xff]
  %v1711 = vld [vmem:[%s3 + $0x98] sm:$0xff]
  %v1712 = vld [vmem:[%s3 + $0xa0] sm:$0xff]
  %v1713 = vld [vmem:[%s3 + $0xa8] sm:$0xff]
  %v1714 = vld [vmem:[%s3 + $0xb0] sm:$0xff]
  %v1715 = vld [vmem:[%s3 + $0xb8] sm:$0xff]
  %v1716 = vld [vmem:[%s3 + $0xc0] sm:$0xff]
  %v1717 = vld [vmem:[%s3 + $0xc8] sm:$0xff]
  %v1718 = vld [vmem:[%s3 + $0xd0] sm:$0xff]
  %v1719 = vld [vmem:[%s3 + $0xd8] sm:$0xff]
  %v1720 = vld [vmem:[%s3 + $0xe0] sm:$0xff]
  %v1721 = vld [vmem:[%s3 + $0xe8] sm:$0xff]
  %v1722 = vld [vmem:[%s3 + $0xf0] sm:$0xff]
  %v1723 = vld [vmem:[%s3 + $0xf8] sm:$0xff]
  %v1724 = vpack.c.bf16 %v1687, %v1684
  %v1725 = vpack.c.bf16 %v1688, %v1685
  %v1726 = vpack.c.bf16 %v1690, %v1690
  %v1727 = vpack.c.bf16 %v1691, %v1691
  %s1728 = scalar_lea.vmem [#allocation2], 16
  %v1729 = vld [vmem:[%s1728] sm:$0xff]
  %v1730 = vld [vmem:[%s1728 + $0x8] sm:$0xff]
  %s1731 = scalar_lea.vmem [#allocation2], 48
  %v1732 = vld [vmem:[%s1731] sm:$0xff]
  %v1733 = vld [vmem:[%s1731 + $0x8] sm:$0xff]
  %s1734 = scalar_lea.vmem [#allocation2], 80
  %v1735 = vld [vmem:[%s1734] sm:$0xff]
  %v1736 = vld [vmem:[%s1734 + $0x8] sm:$0xff]
  %s1737 = scalar_lea.vmem %s3, 256
  %v1738 = vld [vmem:[%s1737] sm:$0xff]
  %v1739 = vld [vmem:[%s1737 + $0x8] sm:$0xff]
  %v1740 = vld [vmem:[%s1737 + $0x10] sm:$0xff]
  %v1741 = vld [vmem:[%s1737 + $0x18] sm:$0xff]
  %v1742 = vld [vmem:[%s1737 + $0x20] sm:$0xff]
  %v1743 = vld [vmem:[%s1737 + $0x28] sm:$0xff]
  %v1744 = vld [vmem:[%s1737 + $0x30] sm:$0xff]
  %v1745 = vld [vmem:[%s1737 + $0x38] sm:$0xff]
  %v1746 = vld [vmem:[%s1737 + $0x40] sm:$0xff]
  %v1747 = vld [vmem:[%s1737 + $0x48] sm:$0xff]
  %v1748 = vld [vmem:[%s1737 + $0x50] sm:$0xff]
  %v1749 = vld [vmem:[%s1737 + $0x58] sm:$0xff]
  %v1750 = vld [vmem:[%s1737 + $0x60] sm:$0xff]
  %v1751 = vld [vmem:[%s1737 + $0x68] sm:$0xff]
  %v1752 = vld [vmem:[%s1737 + $0x70] sm:$0xff]
  %v1753 = vld [vmem:[%s1737 + $0x78] sm:$0xff]
  %v1754 = vld [vmem:[%s1737 + $0x80] sm:$0xff]
  %v1755 = vld [vmem:[%s1737 + $0x88] sm:$0xff]
  %v1756 = vld [vmem:[%s1737 + $0x90] sm:$0xff]
  %v1757 = vld [vmem:[%s1737 + $0x98] sm:$0xff]
  %v1758 = vld [vmem:[%s1737 + $0xa0] sm:$0xff]
  %v1759 = vld [vmem:[%s1737 + $0xa8] sm:$0xff]
  %v1760 = vld [vmem:[%s1737 + $0xb0] sm:$0xff]
  %v1761 = vld [vmem:[%s1737 + $0xb8] sm:$0xff]
  %v1762 = vld [vmem:[%s1737 + $0xc0] sm:$0xff]
  %v1763 = vld [vmem:[%s1737 + $0xc8] sm:$0xff]
  %v1764 = vld [vmem:[%s1737 + $0xd0] sm:$0xff]
  %v1765 = vld [vmem:[%s1737 + $0xd8] sm:$0xff]
  %v1766 = vld [vmem:[%s1737 + $0xe0] sm:$0xff]
  %v1767 = vld [vmem:[%s1737 + $0xe8] sm:$0xff]
  %v1768 = vld [vmem:[%s1737 + $0xf0] sm:$0xff]
  %v1769 = vld [vmem:[%s1737 + $0xf8] sm:$0xff]
  %v1770 = vpack.c.bf16 %v1732, %v1729
  %v1771 = vpack.c.bf16 %v1733, %v1730
  %v1772 = vpack.c.bf16 %v1735, %v1735
  %v1773 = vpack.c.bf16 %v1736, %v1736
  %v1806 = vunpack.c.l.b16 %v1738
  %v1807 = vunpack.c.h.b16 %v1738
  %v1808 = vunpack.c.l.b16 %v1739
  %v1809 = vunpack.c.h.b16 %v1739
  %v1810 = vunpack.c.l.b16 %v1740
  %v1811 = vunpack.c.h.b16 %v1740
  %v1812 = vunpack.c.l.b16 %v1741
  %v1813 = vunpack.c.h.b16 %v1741
  %v1814 = vunpack.c.l.b16 %v1742
  %v1815 = vunpack.c.h.b16 %v1742
  %v1816 = vunpack.c.l.b16 %v1743
  %v1817 = vunpack.c.h.b16 %v1743
  %v1818 = vunpack.c.l.b16 %v1744
  %v1819 = vunpack.c.h.b16 %v1744
  %v1820 = vunpack.c.l.b16 %v1745
  %v1821 = vunpack.c.h.b16 %v1745
  %v1822 = vunpack.c.l.b16 %v1746
  %v1823 = vunpack.c.h.b16 %v1746
  %v1824 = vunpack.c.l.b16 %v1747
  %v1825 = vunpack.c.h.b16 %v1747
  %v1826 = vunpack.c.l.b16 %v1748
  %v1827 = vunpack.c.h.b16 %v1748
  %v1828 = vunpack.c.l.b16 %v1749
  %v1829 = vunpack.c.h.b16 %v1749
  %v1830 = vunpack.c.l.b16 %v1750
  %v1831 = vunpack.c.h.b16 %v1750
  %v1832 = vunpack.c.l.b16 %v1751
  %v1833 = vunpack.c.h.b16 %v1751
  %v1834 = vunpack.c.l.b16 %v1752
  %v1835 = vunpack.c.h.b16 %v1752
  %v1836 = vunpack.c.l.b16 %v1753
  %v1837 = vunpack.c.h.b16 %v1753
  %v1838 = vunpack.c.l.b16 %v1754
  %v1839 = vunpack.c.h.b16 %v1754
  %v1840 = vunpack.c.l.b16 %v1755
  %v1841 = vunpack.c.h.b16 %v1755
  %v1842 = vunpack.c.l.b16 %v1756
  %v1843 = vunpack.c.h.b16 %v1756
  %v1844 = vunpack.c.l.b16 %v1757
  %v1845 = vunpack.c.h.b16 %v1757
  %v1846 = vunpack.c.l.b16 %v1758
  %v1847 = vunpack.c.h.b16 %v1758
  %v1848 = vunpack.c.l.b16 %v1759
  %v1849 = vunpack.c.h.b16 %v1759
  %v1850 = vunpack.c.l.b16 %v1760
  %v1851 = vunpack.c.h.b16 %v1760
  %v1852 = vunpack.c.l.b16 %v1761
  %v1853 = vunpack.c.h.b16 %v1761
  %v1854 = vunpack.c.l.b16 %v1762
  %v1855 = vunpack.c.h.b16 %v1762
  %v1856 = vunpack.c.l.b16 %v1763
  %v1857 = vunpack.c.h.b16 %v1763
  %v1858 = vunpack.c.l.b16 %v1764
  %v1859 = vunpack.c.h.b16 %v1764
  %v1860 = vunpack.c.l.b16 %v1765
  %v1861 = vunpack.c.h.b16 %v1765
  %v1862 = vunpack.c.l.b16 %v1766
  %v1863 = vunpack.c.h.b16 %v1766
  %v1864 = vunpack.c.l.b16 %v1767
  %v1865 = vunpack.c.h.b16 %v1767
  %v1866 = vunpack.c.l.b16 %v1768
  %v1867 = vunpack.c.h.b16 %v1768
  %v1868 = vunpack.c.l.b16 %v1769
  %v1869 = vunpack.c.h.b16 %v1769
  %v1870 = vpack.c.b16 %v1808, %v1806
  %v1871 = vpack.c.b16 %v1809, %v1807
  %v1872 = vpack.c.b16 %v1812, %v1810
  %v1873 = vpack.c.b16 %v1813, %v1811
  %v1874 = vpack.c.b16 %v1816, %v1814
  %v1875 = vpack.c.b16 %v1817, %v1815
  %v1876 = vpack.c.b16 %v1820, %v1818
  %v1877 = vpack.c.b16 %v1821, %v1819
  %v1878 = vpack.c.b16 %v1824, %v1822
  %v1879 = vpack.c.b16 %v1825, %v1823
  %v1880 = vpack.c.b16 %v1828, %v1826
  %v1881 = vpack.c.b16 %v1829, %v1827
  %v1882 = vpack.c.b16 %v1832, %v1830
  %v1883 = vpack.c.b16 %v1833, %v1831
  %v1884 = vpack.c.b16 %v1836, %v1834
  %v1885 = vpack.c.b16 %v1837, %v1835
  %v1886 = vpack.c.b16 %v1840, %v1838
  %v1887 = vpack.c.b16 %v1841, %v1839
  %v1888 = vpack.c.b16 %v1844, %v1842
  %v1889 = vpack.c.b16 %v1845, %v1843
  %v1890 = vpack.c.b16 %v1848, %v1846
  %v1891 = vpack.c.b16 %v1849, %v1847
  %v1892 = vpack.c.b16 %v1852, %v1850
  %v1893 = vpack.c.b16 %v1853, %v1851
  %v1894 = vpack.c.b16 %v1856, %v1854
  %v1895 = vpack.c.b16 %v1857, %v1855
  %v1896 = vpack.c.b16 %v1860, %v1858
  %v1897 = vpack.c.b16 %v1861, %v1859
  %v1898 = vpack.c.b16 %v1864, %v1862
  %v1899 = vpack.c.b16 %v1865, %v1863
  %v1900 = vpack.c.b16 %v1868, %v1866
  %v1901 = vpack.c.b16 %v1869, %v1867
  %1934 = vmatpush.bf16.msra.mxu0 %v1884
  %1935 = vmatpush.bf16.msra.mxu0 %v1882
  %1936 = vmatpush.bf16.msra.mxu0 %v1880
  %1937 = vmatpush.bf16.msra.mxu0 %v1878
  %1938 = vmatpush.bf16.msra.mxu0 %v1876
  %1939 = vmatpush.bf16.msra.mxu0 %v1874
  %1940 = vmatpush.bf16.msra.mxu0 %v1872
  %1941 = vmatpush.bf16.msra.mxu0 %v1870
  %1942 = vmatmul.bf16.gmra.mxu0 %v1770
  %v1943 = vpop.f32.mrf.mxu0
  %v1944 = vadd.f32 0.0, %v1943
  %v1945 = vpop.f32.mrf.mxu0
  %v1946 = vadd.f32 0.0, %v1945
  %1947 = vmatmul.bf16.gmra.mxu0 %v1772
  %v1948 = vpop.f32.mrf.mxu0
  %v1949 = vadd.f32 0.0, %v1948
  %v1950 = vpop.f32.mrf.mxu0
  %1951 = vdwg.mxu0
  %1952 = vmatpush.bf16.msra.mxu0 %v1900
  %1953 = vmatpush.bf16.msra.mxu0 %v1898
  %1954 = vmatpush.bf16.msra.mxu0 %v1896
  %1955 = vmatpush.bf16.msra.mxu0 %v1894
  %1956 = vmatpush.bf16.msra.mxu0 %v1892
  %1957 = vmatpush.bf16.msra.mxu0 %v1890
  %1958 = vmatpush.bf16.msra.mxu0 %v1888
  %1959 = vmatpush.bf16.msra.mxu0 %v1886
  %1960 = vmatmul.bf16.gmra.mxu0 %v1771
  %v1961 = vpop.f32.mrf.mxu0
  %v1962 = vadd.f32 %v1944, %v1961
  %v1963 = vpop.f32.mrf.mxu0
  %v1964 = vadd.f32 %v1946, %v1963
  %1965 = vmatmul.bf16.gmra.mxu0 %v1773
  %v1966 = vpop.f32.mrf.mxu0
  %v1967 = vadd.f32 %v1949, %v1966
  %v1968 = vpop.f32.mrf.mxu0
  %1969 = vdwg.mxu0
  %1970 = vmatpush.bf16.msra.mxu0 %v1885
  %1971 = vmatpush.bf16.msra.mxu0 %v1883
  %1972 = vmatpush.bf16.msra.mxu0 %v1881
  %1973 = vmatpush.bf16.msra.mxu0 %v1879
  %1974 = vmatpush.bf16.msra.mxu0 %v1877
  %1975 = vmatpush.bf16.msra.mxu0 %v1875
  %1976 = vmatpush.bf16.msra.mxu0 %v1873
  %1977 = vmatpush.bf16.msra.mxu0 %v1871
  %1978 = vmatmul.bf16.gmra.mxu0 %v1770
  %v1979 = vpop.f32.mrf.mxu0
  %v1980 = vadd.f32 0.0, %v1979
  %v1981 = vpop.f32.mrf.mxu0
  %v1982 = vadd.f32 0.0, %v1981
  %1983 = vmatmul.bf16.gmra.mxu0 %v1772
  %v1984 = vpop.f32.mrf.mxu0
  %v1985 = vadd.f32 0.0, %v1984
  %v1986 = vpop.f32.mrf.mxu0
  %1987 = vdwg.mxu0
  %1988 = vmatpush.bf16.msra.mxu0 %v1901
  %1989 = vmatpush.bf16.msra.mxu0 %v1899
  %1990 = vmatpush.bf16.msra.mxu0 %v1897
  %1991 = vmatpush.bf16.msra.mxu0 %v1895
  %1992 = vmatpush.bf16.msra.mxu0 %v1893
  %1993 = vmatpush.bf16.msra.mxu0 %v1891
  %1994 = vmatpush.bf16.msra.mxu0 %v1889
  %1995 = vmatpush.bf16.msra.mxu0 %v1887
  %1996 = vmatmul.bf16.gmra.mxu0 %v1771
  %v1997 = vpop.f32.mrf.mxu0
  %v1998 = vadd.f32 %v1980, %v1997
  %v1999 = vpop.f32.mrf.mxu0
  %v2000 = vadd.f32 %v1982, %v1999
  %2001 = vmatmul.bf16.gmra.mxu0 %v1773
  %v2002 = vpop.f32.mrf.mxu0
  %v2003 = vadd.f32 %v1985, %v2002
  %v2004 = vpop.f32.mrf.mxu0
  %2005 = vdwg.mxu0
  %v2038 = vunpack.c.l.b16 %v1692
  %v2039 = vunpack.c.h.b16 %v1692
  %v2040 = vunpack.c.l.b16 %v1693
  %v2041 = vunpack.c.h.b16 %v1693
  %v2042 = vunpack.c.l.b16 %v1694
  %v2043 = vunpack.c.h.b16 %v1694
  %v2044 = vunpack.c.l.b16 %v1695
  %v2045 = vunpack.c.h.b16 %v1695
  %v2046 = vunpack.c.l.b16 %v1696
  %v2047 = vunpack.c.h.b16 %v1696
  %v2048 = vunpack.c.l.b16 %v1697
  %v2049 = vunpack.c.h.b16 %v1697
  %v2050 = vunpack.c.l.b16 %v1698
  %v2051 = vunpack.c.h.b16 %v1698
  %v2052 = vunpack.c.l.b16 %v1699
  %v2053 = vunpack.c.h.b16 %v1699
  %v2054 = vunpack.c.l.b16 %v1700
  %v2055 = vunpack.c.h.b16 %v1700
  %v2056 = vunpack.c.l.b16 %v1701
  %v2057 = vunpack.c.h.b16 %v1701
  %v2058 = vunpack.c.l.b16 %v1702
  %v2059 = vunpack.c.h.b16 %v1702
  %v2060 = vunpack.c.l.b16 %v1703
  %v2061 = vunpack.c.h.b16 %v1703
  %v2062 = vunpack.c.l.b16 %v1704
  %v2063 = vunpack.c.h.b16 %v1704
  %v2064 = vunpack.c.l.b16 %v1705
  %v2065 = vunpack.c.h.b16 %v1705
  %v2066 = vunpack.c.l.b16 %v1706
  %v2067 = vunpack.c.h.b16 %v1706
  %v2068 = vunpack.c.l.b16 %v1707
  %v2069 = vunpack.c.h.b16 %v1707
  %v2070 = vunpack.c.l.b16 %v1708
  %v2071 = vunpack.c.h.b16 %v1708
  %v2072 = vunpack.c.l.b16 %v1709
  %v2073 = vunpack.c.h.b16 %v1709
  %v2074 = vunpack.c.l.b16 %v1710
  %v2075 = vunpack.c.h.b16 %v1710
  %v2076 = vunpack.c.l.b16 %v1711
  %v2077 = vunpack.c.h.b16 %v1711
  %v2078 = vunpack.c.l.b16 %v1712
  %v2079 = vunpack.c.h.b16 %v1712
  %v2080 = vunpack.c.l.b16 %v1713
  %v2081 = vunpack.c.h.b16 %v1713
  %v2082 = vunpack.c.l.b16 %v1714
  %v2083 = vunpack.c.h.b16 %v1714
  %v2084 = vunpack.c.l.b16 %v1715
  %v2085 = vunpack.c.h.b16 %v1715
  %v2086 = vunpack.c.l.b16 %v1716
  %v2087 = vunpack.c.h.b16 %v1716
  %v2088 = vunpack.c.l.b16 %v1717
  %v2089 = vunpack.c.h.b16 %v1717
  %v2090 = vunpack.c.l.b16 %v1718
  %v2091 = vunpack.c.h.b16 %v1718
  %v2092 = vunpack.c.l.b16 %v1719
  %v2093 = vunpack.c.h.b16 %v1719
  %v2094 = vunpack.c.l.b16 %v1720
  %v2095 = vunpack.c.h.b16 %v1720
  %v2096 = vunpack.c.l.b16 %v1721
  %v2097 = vunpack.c.h.b16 %v1721
  %v2098 = vunpack.c.l.b16 %v1722
  %v2099 = vunpack.c.h.b16 %v1722
  %v2100 = vunpack.c.l.b16 %v1723
  %v2101 = vunpack.c.h.b16 %v1723
  %v2102 = vpack.c.b16 %v2040, %v2038
  %v2103 = vpack.c.b16 %v2041, %v2039
  %v2104 = vpack.c.b16 %v2044, %v2042
  %v2105 = vpack.c.b16 %v2045, %v2043
  %v2106 = vpack.c.b16 %v2048, %v2046
  %v2107 = vpack.c.b16 %v2049, %v2047
  %v2108 = vpack.c.b16 %v2052, %v2050
  %v2109 = vpack.c.b16 %v2053, %v2051
  %v2110 = vpack.c.b16 %v2056, %v2054
  %v2111 = vpack.c.b16 %v2057, %v2055
  %v2112 = vpack.c.b16 %v2060, %v2058
  %v2113 = vpack.c.b16 %v2061, %v2059
  %v2114 = vpack.c.b16 %v2064, %v2062
  %v2115 = vpack.c.b16 %v2065, %v2063
  %v2116 = vpack.c.b16 %v2068, %v2066
  %v2117 = vpack.c.b16 %v2069, %v2067
  %v2118 = vpack.c.b16 %v2072, %v2070
  %v2119 = vpack.c.b16 %v2073, %v2071
  %v2120 = vpack.c.b16 %v2076, %v2074
  %v2121 = vpack.c.b16 %v2077, %v2075
  %v2122 = vpack.c.b16 %v2080, %v2078
  %v2123 = vpack.c.b16 %v2081, %v2079
  %v2124 = vpack.c.b16 %v2084, %v2082
  %v2125 = vpack.c.b16 %v2085, %v2083
  %v2126 = vpack.c.b16 %v2088, %v2086
  %v2127 = vpack.c.b16 %v2089, %v2087
  %v2128 = vpack.c.b16 %v2092, %v2090
  %v2129 = vpack.c.b16 %v2093, %v2091
  %v2130 = vpack.c.b16 %v2096, %v2094
  %v2131 = vpack.c.b16 %v2097, %v2095
  %v2132 = vpack.c.b16 %v2100, %v2098
  %v2133 = vpack.c.b16 %v2101, %v2099
  %2166 = vmatpush.bf16.msra.mxu0 %v2116
  %2167 = vmatpush.bf16.msra.mxu0 %v2114
  %2168 = vmatpush.bf16.msra.mxu0 %v2112
  %2169 = vmatpush.bf16.msra.mxu0 %v2110
  %2170 = vmatpush.bf16.msra.mxu0 %v2108
  %2171 = vmatpush.bf16.msra.mxu0 %v2106
  %2172 = vmatpush.bf16.msra.mxu0 %v2104
  %2173 = vmatpush.bf16.msra.mxu0 %v2102
  %2174 = vmatmul.bf16.gmra.mxu0 %v1724
  %v2175 = vpop.f32.mrf.mxu0
  %v2176 = vadd.f32 %v1962, %v2175
  %v2177 = vpop.f32.mrf.mxu0
  %v2178 = vadd.f32 %v1964, %v2177
  %2179 = vmatmul.bf16.gmra.mxu0 %v1726
  %v2180 = vpop.f32.mrf.mxu0
  %v2181 = vadd.f32 %v1967, %v2180
  %v2182 = vpop.f32.mrf.mxu0
  %2183 = vdwg.mxu0
  %2184 = vmatpush.bf16.msra.mxu0 %v2132
  %2185 = vmatpush.bf16.msra.mxu0 %v2130
  %2186 = vmatpush.bf16.msra.mxu0 %v2128
  %2187 = vmatpush.bf16.msra.mxu0 %v2126
  %2188 = vmatpush.bf16.msra.mxu0 %v2124
  %2189 = vmatpush.bf16.msra.mxu0 %v2122
  %2190 = vmatpush.bf16.msra.mxu0 %v2120
  %2191 = vmatpush.bf16.msra.mxu0 %v2118
  %2192 = vmatmul.bf16.gmra.mxu0 %v1725
  %v2193 = vpop.f32.mrf.mxu0
  %v2194 = vadd.f32 %v2176, %v2193
  %v2195 = vpop.f32.mrf.mxu0
  %v2196 = vadd.f32 %v2178, %v2195
  %2197 = vmatmul.bf16.gmra.mxu0 %v1727
  %v2198 = vpop.f32.mrf.mxu0
  %v2199 = vadd.f32 %v2181, %v2198
  %v2200 = vpop.f32.mrf.mxu0
  %2201 = vdwg.mxu0
  %2202 = vmatpush.bf16.msra.mxu0 %v2117
  %2203 = vmatpush.bf16.msra.mxu0 %v2115
  %2204 = vmatpush.bf16.msra.mxu0 %v2113
  %2205 = vmatpush.bf16.msra.mxu0 %v2111
  %2206 = vmatpush.bf16.msra.mxu0 %v2109
  %2207 = vmatpush.bf16.msra.mxu0 %v2107
  %2208 = vmatpush.bf16.msra.mxu0 %v2105
  %2209 = vmatpush.bf16.msra.mxu0 %v2103
  %2210 = vmatmul.bf16.gmra.mxu0 %v1724
  %v2211 = vpop.f32.mrf.mxu0
  %v2212 = vadd.f32 %v1998, %v2211
  %v2213 = vpop.f32.mrf.mxu0
  %v2214 = vadd.f32 %v2000, %v2213
  %2215 = vmatmul.bf16.gmra.mxu0 %v1726
  %v2216 = vpop.f32.mrf.mxu0
  %v2217 = vadd.f32 %v2003, %v2216
  %v2218 = vpop.f32.mrf.mxu0
  %2219 = vdwg.mxu0
  %2220 = vmatpush.bf16.msra.mxu0 %v2133
  %2221 = vmatpush.bf16.msra.mxu0 %v2131
  %2222 = vmatpush.bf16.msra.mxu0 %v2129
  %2223 = vmatpush.bf16.msra.mxu0 %v2127
  %2224 = vmatpush.bf16.msra.mxu0 %v2125
  %2225 = vmatpush.bf16.msra.mxu0 %v2123
  %2226 = vmatpush.bf16.msra.mxu0 %v2121
  %2227 = vmatpush.bf16.msra.mxu0 %v2119
  %2228 = vmatmul.bf16.gmra.mxu0 %v1725
  %v2229 = vpop.f32.mrf.mxu0
  %v2230 = vadd.f32 %v2212, %v2229
  %v2231 = vpop.f32.mrf.mxu0
  %v2232 = vadd.f32 %v2214, %v2231
  %2233 = vmatmul.bf16.gmra.mxu0 %v1727
  %v2234 = vpop.f32.mrf.mxu0
  %v2235 = vadd.f32 %v2217, %v2234
  %v2236 = vpop.f32.mrf.mxu0
  %2237 = vdwg.mxu0
  %s2238 = scalar_lea.vmem [#allocation2], 96
  %v2239 = vld [vmem:[%s2238] sm:$0xff]
  %v2240 = vld [vmem:[%s2238 + $0x8] sm:$0xff]
  %s2241 = scalar_lea.vmem %s3, 512
  %v2242 = vld [vmem:[%s2241] sm:$0xff]
  %v2243 = vld [vmem:[%s2241 + $0x8] sm:$0xff]
  %v2244 = vld [vmem:[%s2241 + $0x10] sm:$0xff]
  %v2245 = vld [vmem:[%s2241 + $0x18] sm:$0xff]
  %v2246 = vld [vmem:[%s2241 + $0x20] sm:$0xff]
  %v2247 = vld [vmem:[%s2241 + $0x28] sm:$0xff]
  %v2248 = vld [vmem:[%s2241 + $0x30] sm:$0xff]
  %v2249 = vld [vmem:[%s2241 + $0x38] sm:$0xff]
  %v2250 = vld [vmem:[%s2241 + $0x40] sm:$0xff]
  %v2251 = vld [vmem:[%s2241 + $0x48] sm:$0xff]
  %v2252 = vld [vmem:[%s2241 + $0x50] sm:$0xff]
  %v2253 = vld [vmem:[%s2241 + $0x58] sm:$0xff]
  %v2254 = vld [vmem:[%s2241 + $0x60] sm:$0xff]
  %v2255 = vld [vmem:[%s2241 + $0x68] sm:$0xff]
  %v2256 = vld [vmem:[%s2241 + $0x70] sm:$0xff]
  %v2257 = vld [vmem:[%s2241 + $0x78] sm:$0xff]
  %v2258 = vld [vmem:[%s2241 + $0x80] sm:$0xff]
  %v2259 = vld [vmem:[%s2241 + $0x88] sm:$0xff]
  %v2260 = vld [vmem:[%s2241 + $0x90] sm:$0xff]
  %v2261 = vld [vmem:[%s2241 + $0x98] sm:$0xff]
  %v2262 = vld [vmem:[%s2241 + $0xa0] sm:$0xff]
  %v2263 = vld [vmem:[%s2241 + $0xa8] sm:$0xff]
  %v2264 = vld [vmem:[%s2241 + $0xb0] sm:$0xff]
  %v2265 = vld [vmem:[%s2241 + $0xb8] sm:$0xff]
  %v2266 = vld [vmem:[%s2241 + $0xc0] sm:$0xff]
  %v2267 = vld [vmem:[%s2241 + $0xc8] sm:$0xff]
  %v2268 = vld [vmem:[%s2241 + $0xd0] sm:$0xff]
  %v2269 = vld [vmem:[%s2241 + $0xd8] sm:$0xff]
  %v2270 = vld [vmem:[%s2241 + $0xe0] sm:$0xff]
  %v2271 = vld [vmem:[%s2241 + $0xe8] sm:$0xff]
  %v2272 = vld [vmem:[%s2241 + $0xf0] sm:$0xff]
  %v2273 = vld [vmem:[%s2241 + $0xf8] sm:$0xff]
  %v2274 = vpack.c.bf16 %v1690, %v1687
  %v2275 = vpack.c.bf16 %v1691, %v1688
  %v2276 = vpack.c.bf16 %v2239, %v2239
  %v2277 = vpack.c.bf16 %v2240, %v2240
  %v2310 = vunpack.c.l.b16 %v2242
  %v2311 = vunpack.c.h.b16 %v2242
  %v2312 = vunpack.c.l.b16 %v2243
  %v2313 = vunpack.c.h.b16 %v2243
  %v2314 = vunpack.c.l.b16 %v2244
  %v2315 = vunpack.c.h.b16 %v2244
  %v2316 = vunpack.c.l.b16 %v2245
  %v2317 = vunpack.c.h.b16 %v2245
  %v2318 = vunpack.c.l.b16 %v2246
  %v2319 = vunpack.c.h.b16 %v2246
  %v2320 = vunpack.c.l.b16 %v2247
  %v2321 = vunpack.c.h.b16 %v2247
  %v2322 = vunpack.c.l.b16 %v2248
  %v2323 = vunpack.c.h.b16 %v2248
  %v2324 = vunpack.c.l.b16 %v2249
  %v2325 = vunpack.c.h.b16 %v2249
  %v2326 = vunpack.c.l.b16 %v2250
  %v2327 = vunpack.c.h.b16 %v2250
  %v2328 = vunpack.c.l.b16 %v2251
  %v2329 = vunpack.c.h.b16 %v2251
  %v2330 = vunpack.c.l.b16 %v2252
  %v2331 = vunpack.c.h.b16 %v2252
  %v2332 = vunpack.c.l.b16 %v2253
  %v2333 = vunpack.c.h.b16 %v2253
  %v2334 = vunpack.c.l.b16 %v2254
  %v2335 = vunpack.c.h.b16 %v2254
  %v2336 = vunpack.c.l.b16 %v2255
  %v2337 = vunpack.c.h.b16 %v2255
  %v2338 = vunpack.c.l.b16 %v2256
  %v2339 = vunpack.c.h.b16 %v2256
  %v2340 = vunpack.c.l.b16 %v2257
  %v2341 = vunpack.c.h.b16 %v2257
  %v2342 = vunpack.c.l.b16 %v2258
  %v2343 = vunpack.c.h.b16 %v2258
  %v2344 = vunpack.c.l.b16 %v2259
  %v2345 = vunpack.c.h.b16 %v2259
  %v2346 = vunpack.c.l.b16 %v2260
  %v2347 = vunpack.c.h.b16 %v2260
  %v2348 = vunpack.c.l.b16 %v2261
  %v2349 = vunpack.c.h.b16 %v2261
  %v2350 = vunpack.c.l.b16 %v2262
  %v2351 = vunpack.c.h.b16 %v2262
  %v2352 = vunpack.c.l.b16 %v2263
  %v2353 = vunpack.c.h.b16 %v2263
  %v2354 = vunpack.c.l.b16 %v2264
  %v2355 = vunpack.c.h.b16 %v2264
  %v2356 = vunpack.c.l.b16 %v2265
  %v2357 = vunpack.c.h.b16 %v2265
  %v2358 = vunpack.c.l.b16 %v2266
  %v2359 = vunpack.c.h.b16 %v2266
  %v2360 = vunpack.c.l.b16 %v2267
  %v2361 = vunpack.c.h.b16 %v2267
  %v2362 = vunpack.c.l.b16 %v2268
  %v2363 = vunpack.c.h.b16 %v2268
  %v2364 = vunpack.c.l.b16 %v2269
  %v2365 = vunpack.c.h.b16 %v2269
  %v2366 = vunpack.c.l.b16 %v2270
  %v2367 = vunpack.c.h.b16 %v2270
  %v2368 = vunpack.c.l.b16 %v2271
  %v2369 = vunpack.c.h.b16 %v2271
  %v2370 = vunpack.c.l.b16 %v2272
  %v2371 = vunpack.c.h.b16 %v2272
  %v2372 = vunpack.c.l.b16 %v2273
  %v2373 = vunpack.c.h.b16 %v2273
  %v2374 = vpack.c.b16 %v2312, %v2310
  %v2375 = vpack.c.b16 %v2313, %v2311
  %v2376 = vpack.c.b16 %v2316, %v2314
  %v2377 = vpack.c.b16 %v2317, %v2315
  %v2378 = vpack.c.b16 %v2320, %v2318
  %v2379 = vpack.c.b16 %v2321, %v2319
  %v2380 = vpack.c.b16 %v2324, %v2322
  %v2381 = vpack.c.b16 %v2325, %v2323
  %v2382 = vpack.c.b16 %v2328, %v2326
  %v2383 = vpack.c.b16 %v2329, %v2327
  %v2384 = vpack.c.b16 %v2332, %v2330
  %v2385 = vpack.c.b16 %v2333, %v2331
  %v2386 = vpack.c.b16 %v2336, %v2334
  %v2387 = vpack.c.b16 %v2337, %v2335
  %v2388 = vpack.c.b16 %v2340, %v2338
  %v2389 = vpack.c.b16 %v2341, %v2339
  %v2390 = vpack.c.b16 %v2344, %v2342
  %v2391 = vpack.c.b16 %v2345, %v2343
  %v2392 = vpack.c.b16 %v2348, %v2346
  %v2393 = vpack.c.b16 %v2349, %v2347
  %v2394 = vpack.c.b16 %v2352, %v2350
  %v2395 = vpack.c.b16 %v2353, %v2351
  %v2396 = vpack.c.b16 %v2356, %v2354
  %v2397 = vpack.c.b16 %v2357, %v2355
  %v2398 = vpack.c.b16 %v2360, %v2358
  %v2399 = vpack.c.b16 %v2361, %v2359
  %v2400 = vpack.c.b16 %v2364, %v2362
  %v2401 = vpack.c.b16 %v2365, %v2363
  %v2402 = vpack.c.b16 %v2368, %v2366
  %v2403 = vpack.c.b16 %v2369, %v2367
  %v2404 = vpack.c.b16 %v2372, %v2370
  %v2405 = vpack.c.b16 %v2373, %v2371
  %2438 = vmatpush.bf16.msra.mxu0 %v2388
  %2439 = vmatpush.bf16.msra.mxu0 %v2386
  %2440 = vmatpush.bf16.msra.mxu0 %v2384
  %2441 = vmatpush.bf16.msra.mxu0 %v2382
  %2442 = vmatpush.bf16.msra.mxu0 %v2380
  %2443 = vmatpush.bf16.msra.mxu0 %v2378
  %2444 = vmatpush.bf16.msra.mxu0 %v2376
  %2445 = vmatpush.bf16.msra.mxu0 %v2374
  %2446 = vmatmul.bf16.gmra.mxu0 %v2274
  %v2447 = vpop.f32.mrf.mxu0
  %v2448 = vadd.f32 0.0, %v2447
  %v2449 = vpop.f32.mrf.mxu0
  %v2450 = vadd.f32 0.0, %v2449
  %2451 = vmatmul.bf16.gmra.mxu0 %v2276
  %v2452 = vpop.f32.mrf.mxu0
  %v2453 = vadd.f32 0.0, %v2452
  %v2454 = vpop.f32.mrf.mxu0
  %2455 = vdwg.mxu0
  %2456 = vmatpush.bf16.msra.mxu0 %v2404
  %2457 = vmatpush.bf16.msra.mxu0 %v2402
  %2458 = vmatpush.bf16.msra.mxu0 %v2400
  %2459 = vmatpush.bf16.msra.mxu0 %v2398
  %2460 = vmatpush.bf16.msra.mxu0 %v2396
  %2461 = vmatpush.bf16.msra.mxu0 %v2394
  %2462 = vmatpush.bf16.msra.mxu0 %v2392
  %2463 = vmatpush.bf16.msra.mxu0 %v2390
  %2464 = vmatmul.bf16.gmra.mxu0 %v2275
  %v2465 = vpop.f32.mrf.mxu0
  %v2466 = vadd.f32 %v2448, %v2465
  %v2467 = vpop.f32.mrf.mxu0
  %v2468 = vadd.f32 %v2450, %v2467
  %2469 = vmatmul.bf16.gmra.mxu0 %v2277
  %v2470 = vpop.f32.mrf.mxu0
  %v2471 = vadd.f32 %v2453, %v2470
  %v2472 = vpop.f32.mrf.mxu0
  %2473 = vdwg.mxu0
  %2474 = vmatpush.bf16.msra.mxu0 %v2389
  %2475 = vmatpush.bf16.msra.mxu0 %v2387
  %2476 = vmatpush.bf16.msra.mxu0 %v2385
  %2477 = vmatpush.bf16.msra.mxu0 %v2383
  %2478 = vmatpush.bf16.msra.mxu0 %v2381
  %2479 = vmatpush.bf16.msra.mxu0 %v2379
  %2480 = vmatpush.bf16.msra.mxu0 %v2377
  %2481 = vmatpush.bf16.msra.mxu0 %v2375
  %2482 = vmatmul.bf16.gmra.mxu0 %v2274
  %v2483 = vpop.f32.mrf.mxu0
  %v2484 = vadd.f32 0.0, %v2483
  %v2485 = vpop.f32.mrf.mxu0
  %v2486 = vadd.f32 0.0, %v2485
  %2487 = vmatmul.bf16.gmra.mxu0 %v2276
  %v2488 = vpop.f32.mrf.mxu0
  %v2489 = vadd.f32 0.0, %v2488
  %v2490 = vpop.f32.mrf.mxu0
  %2491 = vdwg.mxu0
  %2492 = vmatpush.bf16.msra.mxu0 %v2405
  %2493 = vmatpush.bf16.msra.mxu0 %v2403
  %2494 = vmatpush.bf16.msra.mxu0 %v2401
  %2495 = vmatpush.bf16.msra.mxu0 %v2399
  %2496 = vmatpush.bf16.msra.mxu0 %v2397
  %2497 = vmatpush.bf16.msra.mxu0 %v2395
  %2498 = vmatpush.bf16.msra.mxu0 %v2393
  %2499 = vmatpush.bf16.msra.mxu0 %v2391
  %2500 = vmatmul.bf16.gmra.mxu0 %v2275
  %v2501 = vpop.f32.mrf.mxu0
  %v2502 = vadd.f32 %v2484, %v2501
  %v2503 = vpop.f32.mrf.mxu0
  %v2504 = vadd.f32 %v2486, %v2503
  %2505 = vmatmul.bf16.gmra.mxu0 %v2277
  %v2506 = vpop.f32.mrf.mxu0
  %v2507 = vadd.f32 %v2489, %v2506
  %v2508 = vpop.f32.mrf.mxu0
  %2509 = vdwg.mxu0
  %v2510 = vadd.f32 %v2194, %v2466
  %v2511 = vadd.f32 %v2230, %v2502
  %v2512 = vadd.f32 %v2196, %v2468
  %v2513 = vadd.f32 %v2232, %v2504
  %v2514 = vadd.f32 %v2199, %v2471
  %v2515 = vadd.f32 %v2235, %v2507
  %s2516 = scalar_lea.vmem [#allocation2], 112
  %v2517 = vld [vmem:[%s2516] sm:$0xff]
  %v2518 = vld [vmem:[%s2516 + $0x8] sm:$0xff]
  %s2519 = scalar_lea.vmem %s3, 768
  %v2520 = vld [vmem:[%s2519] sm:$0xff]
  %v2521 = vld [vmem:[%s2519 + $0x8] sm:$0xff]
  %v2522 = vld [vmem:[%s2519 + $0x10] sm:$0xff]
  %v2523 = vld [vmem:[%s2519 + $0x18] sm:$0xff]
  %v2524 = vld [vmem:[%s2519 + $0x20] sm:$0xff]
  %v2525 = vld [vmem:[%s2519 + $0x28] sm:$0xff]
  %v2526 = vld [vmem:[%s2519 + $0x30] sm:$0xff]
  %v2527 = vld [vmem:[%s2519 + $0x38] sm:$0xff]
  %v2528 = vld [vmem:[%s2519 + $0x40] sm:$0xff]
  %v2529 = vld [vmem:[%s2519 + $0x48] sm:$0xff]
  %v2530 = vld [vmem:[%s2519 + $0x50] sm:$0xff]
  %v2531 = vld [vmem:[%s2519 + $0x58] sm:$0xff]
  %v2532 = vld [vmem:[%s2519 + $0x60] sm:$0xff]
  %v2533 = vld [vmem:[%s2519 + $0x68] sm:$0xff]
  %v2534 = vld [vmem:[%s2519 + $0x70] sm:$0xff]
  %v2535 = vld [vmem:[%s2519 + $0x78] sm:$0xff]
  %v2536 = vld [vmem:[%s2519 + $0x80] sm:$0xff]
  %v2537 = vld [vmem:[%s2519 + $0x88] sm:$0xff]
  %v2538 = vld [vmem:[%s2519 + $0x90] sm:$0xff]
  %v2539 = vld [vmem:[%s2519 + $0x98] sm:$0xff]
  %v2540 = vld [vmem:[%s2519 + $0xa0] sm:$0xff]
  %v2541 = vld [vmem:[%s2519 + $0xa8] sm:$0xff]
  %v2542 = vld [vmem:[%s2519 + $0xb0] sm:$0xff]
  %v2543 = vld [vmem:[%s2519 + $0xb8] sm:$0xff]
  %v2544 = vld [vmem:[%s2519 + $0xc0] sm:$0xff]
  %v2545 = vld [vmem:[%s2519 + $0xc8] sm:$0xff]
  %v2546 = vld [vmem:[%s2519 + $0xd0] sm:$0xff]
  %v2547 = vld [vmem:[%s2519 + $0xd8] sm:$0xff]
  %v2548 = vld [vmem:[%s2519 + $0xe0] sm:$0xff]
  %v2549 = vld [vmem:[%s2519 + $0xe8] sm:$0xff]
  %v2550 = vld [vmem:[%s2519 + $0xf0] sm:$0xff]
  %v2551 = vld [vmem:[%s2519 + $0xf8] sm:$0xff]
  %v2552 = vpack.c.bf16 %v1735, %v1732
  %v2553 = vpack.c.bf16 %v1736, %v1733
  %v2554 = vpack.c.bf16 %v2517, %v2517
  %v2555 = vpack.c.bf16 %v2518, %v2518
  %v2588 = vunpack.c.l.b16 %v2520
  %v2589 = vunpack.c.h.b16 %v2520
  %v2590 = vunpack.c.l.b16 %v2521
  %v2591 = vunpack.c.h.b16 %v2521
  %v2592 = vunpack.c.l.b16 %v2522
  %v2593 = vunpack.c.h.b16 %v2522
  %v2594 = vunpack.c.l.b16 %v2523
  %v2595 = vunpack.c.h.b16 %v2523
  %v2596 = vunpack.c.l.b16 %v2524
  %v2597 = vunpack.c.h.b16 %v2524
  %v2598 = vunpack.c.l.b16 %v2525
  %v2599 = vunpack.c.h.b16 %v2525
  %v2600 = vunpack.c.l.b16 %v2526
  %v2601 = vunpack.c.h.b16 %v2526
  %v2602 = vunpack.c.l.b16 %v2527
  %v2603 = vunpack.c.h.b16 %v2527
  %v2604 = vunpack.c.l.b16 %v2528
  %v2605 = vunpack.c.h.b16 %v2528
  %v2606 = vunpack.c.l.b16 %v2529
  %v2607 = vunpack.c.h.b16 %v2529
  %v2608 = vunpack.c.l.b16 %v2530
  %v2609 = vunpack.c.h.b16 %v2530
  %v2610 = vunpack.c.l.b16 %v2531
  %v2611 = vunpack.c.h.b16 %v2531
  %v2612 = vunpack.c.l.b16 %v2532
  %v2613 = vunpack.c.h.b16 %v2532
  %v2614 = vunpack.c.l.b16 %v2533
  %v2615 = vunpack.c.h.b16 %v2533
  %v2616 = vunpack.c.l.b16 %v2534
  %v2617 = vunpack.c.h.b16 %v2534
  %v2618 = vunpack.c.l.b16 %v2535
  %v2619 = vunpack.c.h.b16 %v2535
  %v2620 = vunpack.c.l.b16 %v2536
  %v2621 = vunpack.c.h.b16 %v2536
  %v2622 = vunpack.c.l.b16 %v2537
  %v2623 = vunpack.c.h.b16 %v2537
  %v2624 = vunpack.c.l.b16 %v2538
  %v2625 = vunpack.c.h.b16 %v2538
  %v2626 = vunpack.c.l.b16 %v2539
  %v2627 = vunpack.c.h.b16 %v2539
  %v2628 = vunpack.c.l.b16 %v2540
  %v2629 = vunpack.c.h.b16 %v2540
  %v2630 = vunpack.c.l.b16 %v2541
  %v2631 = vunpack.c.h.b16 %v2541
  %v2632 = vunpack.c.l.b16 %v2542
  %v2633 = vunpack.c.h.b16 %v2542
  %v2634 = vunpack.c.l.b16 %v2543
  %v2635 = vunpack.c.h.b16 %v2543
  %v2636 = vunpack.c.l.b16 %v2544
  %v2637 = vunpack.c.h.b16 %v2544
  %v2638 = vunpack.c.l.b16 %v2545
  %v2639 = vunpack.c.h.b16 %v2545
  %v2640 = vunpack.c.l.b16 %v2546
  %v2641 = vunpack.c.h.b16 %v2546
  %v2642 = vunpack.c.l.b16 %v2547
  %v2643 = vunpack.c.h.b16 %v2547
  %v2644 = vunpack.c.l.b16 %v2548
  %v2645 = vunpack.c.h.b16 %v2548
  %v2646 = vunpack.c.l.b16 %v2549
  %v2647 = vunpack.c.h.b16 %v2549
  %v2648 = vunpack.c.l.b16 %v2550
  %v2649 = vunpack.c.h.b16 %v2550
  %v2650 = vunpack.c.l.b16 %v2551
  %v2651 = vunpack.c.h.b16 %v2551
  %v2652 = vpack.c.b16 %v2590, %v2588
  %v2653 = vpack.c.b16 %v2591, %v2589
  %v2654 = vpack.c.b16 %v2594, %v2592
  %v2655 = vpack.c.b16 %v2595, %v2593
  %v2656 = vpack.c.b16 %v2598, %v2596
  %v2657 = vpack.c.b16 %v2599, %v2597
  %v2658 = vpack.c.b16 %v2602, %v2600
  %v2659 = vpack.c.b16 %v2603, %v2601
  %v2660 = vpack.c.b16 %v2606, %v2604
  %v2661 = vpack.c.b16 %v2607, %v2605
  %v2662 = vpack.c.b16 %v2610, %v2608
  %v2663 = vpack.c.b16 %v2611, %v2609
  %v2664 = vpack.c.b16 %v2614, %v2612
  %v2665 = vpack.c.b16 %v2615, %v2613
  %v2666 = vpack.c.b16 %v2618, %v2616
  %v2667 = vpack.c.b16 %v2619, %v2617
  %v2668 = vpack.c.b16 %v2622, %v2620
  %v2669 = vpack.c.b16 %v2623, %v2621
  %v2670 = vpack.c.b16 %v2626, %v2624
  %v2671 = vpack.c.b16 %v2627, %v2625
  %v2672 = vpack.c.b16 %v2630, %v2628
  %v2673 = vpack.c.b16 %v2631, %v2629
  %v2674 = vpack.c.b16 %v2634, %v2632
  %v2675 = vpack.c.b16 %v2635, %v2633
  %v2676 = vpack.c.b16 %v2638, %v2636
  %v2677 = vpack.c.b16 %v2639, %v2637
  %v2678 = vpack.c.b16 %v2642, %v2640
  %v2679 = vpack.c.b16 %v2643, %v2641
  %v2680 = vpack.c.b16 %v2646, %v2644
  %v2681 = vpack.c.b16 %v2647, %v2645
  %v2682 = vpack.c.b16 %v2650, %v2648
  %v2683 = vpack.c.b16 %v2651, %v2649
  %2716 = vmatpush.bf16.msra.mxu0 %v2666
  %2717 = vmatpush.bf16.msra.mxu0 %v2664
  %2718 = vmatpush.bf16.msra.mxu0 %v2662
  %2719 = vmatpush.bf16.msra.mxu0 %v2660
  %2720 = vmatpush.bf16.msra.mxu0 %v2658
  %2721 = vmatpush.bf16.msra.mxu0 %v2656
  %2722 = vmatpush.bf16.msra.mxu0 %v2654
  %2723 = vmatpush.bf16.msra.mxu0 %v2652
  %2724 = vmatmul.bf16.gmra.mxu0 %v2552
  %v2725 = vpop.f32.mrf.mxu0
  %v2726 = vadd.f32 0.0, %v2725
  %v2727 = vpop.f32.mrf.mxu0
  %v2728 = vadd.f32 0.0, %v2727
  %2729 = vmatmul.bf16.gmra.mxu0 %v2554
  %v2730 = vpop.f32.mrf.mxu0
  %v2731 = vadd.f32 0.0, %v2730
  %v2732 = vpop.f32.mrf.mxu0
  %2733 = vdwg.mxu0
  %2734 = vmatpush.bf16.msra.mxu0 %v2682
  %2735 = vmatpush.bf16.msra.mxu0 %v2680
  %2736 = vmatpush.bf16.msra.mxu0 %v2678
  %2737 = vmatpush.bf16.msra.mxu0 %v2676
  %2738 = vmatpush.bf16.msra.mxu0 %v2674
  %2739 = vmatpush.bf16.msra.mxu0 %v2672
  %2740 = vmatpush.bf16.msra.mxu0 %v2670
  %2741 = vmatpush.bf16.msra.mxu0 %v2668
  %2742 = vmatmul.bf16.gmra.mxu0 %v2553
  %v2743 = vpop.f32.mrf.mxu0
  %v2744 = vadd.f32 %v2726, %v2743
  %v2745 = vpop.f32.mrf.mxu0
  %v2746 = vadd.f32 %v2728, %v2745
  %2747 = vmatmul.bf16.gmra.mxu0 %v2555
  %v2748 = vpop.f32.mrf.mxu0
  %v2749 = vadd.f32 %v2731, %v2748
  %v2750 = vpop.f32.mrf.mxu0
  %2751 = vdwg.mxu0
  %2752 = vmatpush.bf16.msra.mxu0 %v2667
  %2753 = vmatpush.bf16.msra.mxu0 %v2665
  %2754 = vmatpush.bf16.msra.mxu0 %v2663
  %2755 = vmatpush.bf16.msra.mxu0 %v2661
  %2756 = vmatpush.bf16.msra.mxu0 %v2659
  %2757 = vmatpush.bf16.msra.mxu0 %v2657
  %2758 = vmatpush.bf16.msra.mxu0 %v2655
  %2759 = vmatpush.bf16.msra.mxu0 %v2653
  %2760 = vmatmul.bf16.gmra.mxu0 %v2552
  %v2761 = vpop.f32.mrf.mxu0
  %v2762 = vadd.f32 0.0, %v2761
  %v2763 = vpop.f32.mrf.mxu0
  %v2764 = vadd.f32 0.0, %v2763
  %2765 = vmatmul.bf16.gmra.mxu0 %v2554
  %v2766 = vpop.f32.mrf.mxu0
  %v2767 = vadd.f32 0.0, %v2766
  %v2768 = vpop.f32.mrf.mxu0
  %2769 = vdwg.mxu0
  %2770 = vmatpush.bf16.msra.mxu0 %v2683
  %2771 = vmatpush.bf16.msra.mxu0 %v2681
  %2772 = vmatpush.bf16.msra.mxu0 %v2679
  %2773 = vmatpush.bf16.msra.mxu0 %v2677
  %2774 = vmatpush.bf16.msra.mxu0 %v2675
  %2775 = vmatpush.bf16.msra.mxu0 %v2673
  %2776 = vmatpush.bf16.msra.mxu0 %v2671
  %2777 = vmatpush.bf16.msra.mxu0 %v2669
  %2778 = vmatmul.bf16.gmra.mxu0 %v2553
  %v2779 = vpop.f32.mrf.mxu0
  %v2780 = vadd.f32 %v2762, %v2779
  %v2781 = vpop.f32.mrf.mxu0
  %v2782 = vadd.f32 %v2764, %v2781
  %2783 = vmatmul.bf16.gmra.mxu0 %v2555
  %v2784 = vpop.f32.mrf.mxu0
  %v2785 = vadd.f32 %v2767, %v2784
  %v2786 = vpop.f32.mrf.mxu0
  %2787 = vdwg.mxu0
  %v2788 = vadd.f32 %v2510, %v2744
  %v2789 = vadd.f32 %v2511, %v2780
  %v2790 = vadd.f32 %v2512, %v2746
  %v2791 = vadd.f32 %v2513, %v2782
  %v2792 = vadd.f32 %v2514, %v2749
  %v2793 = vadd.f32 %v2515, %v2785
  %v2794 = vld [vmem:[%s4] sm:$0x3]
  %v2796 = vperm.slane %v2794, 0
  %v2797 = vperm.slane %v2794, 1
  %v2800 = vadd.f32 %v2788, %v2796
  %v2801 = vadd.f32 %v2789, %v2797
  %v2802 = vadd.f32 %v2790, %v2796
  %v2803 = vadd.f32 %v2791, %v2797
  %v2804 = vadd.f32 %v2792, %v2796
  %v2805 = vadd.f32 %v2793, %v2797
  %v2806 = vmax.f32 %v2800, 0.0
  %v2807 = vmax.f32 %v2801, 0.0
  %v2808 = vmax.f32 %v2802, 0.0
  %v2809 = vmax.f32 %v2803, 0.0
  %v2810 = vmax.f32 %v2804, 0.0
  %v2811 = vmax.f32 %v2805, 0.0
  %2812 = vst [vmem:[#allocation3] sm:$0xff] %v2806
  %2813 = vst [vmem:[#allocation3 + $0x8] sm:$0xff] %v2807
  %2814 = vst [vmem:[#allocation3 + $0x10] sm:$0xff] %v2808
  %2815 = vst [vmem:[#allocation3 + $0x18] sm:$0xff] %v2809
  %2816 = vst [vmem:[#allocation3 + $0x20] sm:$0xff] %v2810
  %2817 = vst [vmem:[#allocation3 + $0x28] sm:$0xff] %v2811
  %v2818 = vld [vmem:[#allocation3] sm:$0xff]
  %v2819 = vld [vmem:[#allocation3 + $0x8] sm:$0xff]
  %v2820 = vld [vmem:[%s5] sm:$0xf]
  %v2821 = vld [vmem:[%s5 + $0x4] sm:$0xf]
  %v2822 = vld [vmem:[%s5 + $0x8] sm:$0xf]
  %v2823 = vld [vmem:[%s5 + $0xc] sm:$0xf]
  %v2824 = vld [vmem:[%s5 + $0x10] sm:$0xf]
  %v2825 = vld [vmem:[%s5 + $0x14] sm:$0xf]
  %v2826 = vld [vmem:[%s5 + $0x18] sm:$0xf]
  %v2827 = vld [vmem:[%s5 + $0x1c] sm:$0xf]
  %v2828 = vld [vmem:[%s5 + $0x20] sm:$0xf]
  %v2829 = vld [vmem:[%s5 + $0x24] sm:$0xf]
  %v2830 = vld [vmem:[%s5 + $0x28] sm:$0xf]
  %v2831 = vld [vmem:[%s5 + $0x2c] sm:$0xf]
  %v2832 = vld [vmem:[%s5 + $0x30] sm:$0xf]
  %v2833 = vld [vmem:[%s5 + $0x34] sm:$0xf]
  %v2834 = vld [vmem:[%s5 + $0x38] sm:$0xf]
  %v2835 = vld [vmem:[%s5 + $0x3c] sm:$0xf]
  %v2836 = vld [vmem:[%s5 + $0x40] sm:$0xf]
  %v2837 = vld [vmem:[%s5 + $0x44] sm:$0xf]
  %v2838 = vld [vmem:[%s5 + $0x48] sm:$0xf]
  %v2839 = vld [vmem:[%s5 + $0x4c] sm:$0xf]
  %v2840 = vld [vmem:[%s5 + $0x50] sm:$0xf]
  %v2841 = vld [vmem:[%s5 + $0x54] sm:$0xf]
  %v2842 = vld [vmem:[%s5 + $0x58] sm:$0xf]
  %v2843 = vld [vmem:[%s5 + $0x5c] sm:$0xf]
  %v2844 = vld [vmem:[%s5 + $0x60] sm:$0xf]
  %v2845 = vld [vmem:[%s5 + $0x64] sm:$0xf]
  %v2846 = vld [vmem:[%s5 + $0x68] sm:$0xf]
  %v2847 = vld [vmem:[%s5 + $0x6c] sm:$0xf]
  %v2848 = vld [vmem:[%s5 + $0x70] sm:$0xf]
  %v2849 = vld [vmem:[%s5 + $0x74] sm:$0xf]
  %v2850 = vld [vmem:[%s5 + $0x78] sm:$0xf]
  %v2851 = vld [vmem:[%s5 + $0x7c] sm:$0xf]
  %v2852 = vpack.c.bf16 %v2818, %v2818
  %v2853 = vpack.c.bf16 %v2819, %v2819
  %s2854 = scalar_lea.vmem [#allocation3], 16
  %v2855 = vld [vmem:[%s2854] sm:$0xff]
  %v2856 = vld [vmem:[%s2854 + $0x8] sm:$0xff]
  %s2857 = scalar_lea.vmem %s5, 128
  %v2858 = vld [vmem:[%s2857] sm:$0xf]
  %v2859 = vld [vmem:[%s2857 + $0x4] sm:$0xf]
  %v2860 = vld [vmem:[%s2857 + $0x8] sm:$0xf]
  %v2861 = vld [vmem:[%s2857 + $0xc] sm:$0xf]
  %v2862 = vld [vmem:[%s2857 + $0x10] sm:$0xf]
  %v2863 = vld [vmem:[%s2857 + $0x14] sm:$0xf]
  %v2864 = vld [vmem:[%s2857 + $0x18] sm:$0xf]
  %v2865 = vld [vmem:[%s2857 + $0x1c] sm:$0xf]
  %v2866 = vld [vmem:[%s2857 + $0x20] sm:$0xf]
  %v2867 = vld [vmem:[%s2857 + $0x24] sm:$0xf]
  %v2868 = vld [vmem:[%s2857 + $0x28] sm:$0xf]
  %v2869 = vld [vmem:[%s2857 + $0x2c] sm:$0xf]
  %v2870 = vld [vmem:[%s2857 + $0x30] sm:$0xf]
  %v2871 = vld [vmem:[%s2857 + $0x34] sm:$0xf]
  %v2872 = vld [vmem:[%s2857 + $0x38] sm:$0xf]
  %v2873 = vld [vmem:[%s2857 + $0x3c] sm:$0xf]
  %v2874 = vld [vmem:[%s2857 + $0x40] sm:$0xf]
  %v2875 = vld [vmem:[%s2857 + $0x44] sm:$0xf]
  %v2876 = vld [vmem:[%s2857 + $0x48] sm:$0xf]
  %v2877 = vld [vmem:[%s2857 + $0x4c] sm:$0xf]
  %v2878 = vld [vmem:[%s2857 + $0x50] sm:$0xf]
  %v2879 = vld [vmem:[%s2857 + $0x54] sm:$0xf]
  %v2880 = vld [vmem:[%s2857 + $0x58] sm:$0xf]
  %v2881 = vld [vmem:[%s2857 + $0x5c] sm:$0xf]
  %v2882 = vld [vmem:[%s2857 + $0x60] sm:$0xf]
  %v2883 = vld [vmem:[%s2857 + $0x64] sm:$0xf]
  %v2884 = vld [vmem:[%s2857 + $0x68] sm:$0xf]
  %v2885 = vld [vmem:[%s2857 + $0x6c] sm:$0xf]
  %v2886 = vld [vmem:[%s2857 + $0x70] sm:$0xf]
  %v2887 = vld [vmem:[%s2857 + $0x74] sm:$0xf]
  %v2888 = vld [vmem:[%s2857 + $0x78] sm:$0xf]
  %v2889 = vld [vmem:[%s2857 + $0x7c] sm:$0xf]
  %v2890 = vpack.c.bf16 %v2855, %v2855
  %v2891 = vpack.c.bf16 %v2856, %v2856
  %v2924 = vunpack.c.l.b16 %v2858
  %v2925 = vunpack.c.l.b16 %v2859
  %v2926 = vunpack.c.l.b16 %v2860
  %v2927 = vunpack.c.l.b16 %v2861
  %v2928 = vunpack.c.l.b16 %v2862
  %v2929 = vunpack.c.l.b16 %v2863
  %v2930 = vunpack.c.l.b16 %v2864
  %v2931 = vunpack.c.l.b16 %v2865
  %v2932 = vunpack.c.l.b16 %v2866
  %v2933 = vunpack.c.l.b16 %v2867
  %v2934 = vunpack.c.l.b16 %v2868
  %v2935 = vunpack.c.l.b16 %v2869
  %v2936 = vunpack.c.l.b16 %v2870
  %v2937 = vunpack.c.l.b16 %v2871
  %v2938 = vunpack.c.l.b16 %v2872
  %v2939 = vunpack.c.l.b16 %v2873
  %v2940 = vunpack.c.l.b16 %v2874
  %v2941 = vunpack.c.l.b16 %v2875
  %v2942 = vunpack.c.l.b16 %v2876
  %v2943 = vunpack.c.l.b16 %v2877
  %v2944 = vunpack.c.l.b16 %v2878
  %v2945 = vunpack.c.l.b16 %v2879
  %v2946 = vunpack.c.l.b16 %v2880
  %v2947 = vunpack.c.l.b16 %v2881
  %v2948 = vunpack.c.l.b16 %v2882
  %v2949 = vunpack.c.l.b16 %v2883
  %v2950 = vunpack.c.l.b16 %v2884
  %v2951 = vunpack.c.l.b16 %v2885
  %v2952 = vunpack.c.l.b16 %v2886
  %v2953 = vunpack.c.l.b16 %v2887
  %v2954 = vunpack.c.l.b16 %v2888
  %v2955 = vunpack.c.l.b16 %v2889
  %v2956 = vpack.c.b16 %v2925, %v2924
  %v2957 = vpack.c.b16 %v2927, %v2926
  %v2958 = vpack.c.b16 %v2929, %v2928
  %v2959 = vpack.c.b16 %v2931, %v2930
  %v2960 = vpack.c.b16 %v2933, %v2932
  %v2961 = vpack.c.b16 %v2935, %v2934
  %v2962 = vpack.c.b16 %v2937, %v2936
  %v2963 = vpack.c.b16 %v2939, %v2938
  %v2964 = vpack.c.b16 %v2941, %v2940
  %v2965 = vpack.c.b16 %v2943, %v2942
  %v2966 = vpack.c.b16 %v2945, %v2944
  %v2967 = vpack.c.b16 %v2947, %v2946
  %v2968 = vpack.c.b16 %v2949, %v2948
  %v2969 = vpack.c.b16 %v2951, %v2950
  %v2970 = vpack.c.b16 %v2953, %v2952
  %v2971 = vpack.c.b16 %v2955, %v2954
  %2988 = vmatpush.bf16.msra.mxu0 %v2963
  %2989 = vmatpush.bf16.msra.mxu0 %v2962
  %2990 = vmatpush.bf16.msra.mxu0 %v2961
  %2991 = vmatpush.bf16.msra.mxu0 %v2960
  %2992 = vmatpush.bf16.msra.mxu0 %v2959
  %2993 = vmatpush.bf16.msra.mxu0 %v2958
  %2994 = vmatpush.bf16.msra.mxu0 %v2957
  %2995 = vmatpush.bf16.msra.mxu0 %v2956
  %2996 = vmatmul.bf16.gmra.mxu0 %v2890
  %v2997 = vpop.f32.mrf.mxu0
  %v2998 = vadd.f32 0.0, %v2997
  %v2999 = vpop.f32.mrf.mxu0
  %3000 = vdwg.mxu0
  %3001 = vmatpush.bf16.msra.mxu0 %v2971
  %3002 = vmatpush.bf16.msra.mxu0 %v2970
  %3003 = vmatpush.bf16.msra.mxu0 %v2969
  %3004 = vmatpush.bf16.msra.mxu0 %v2968
  %3005 = vmatpush.bf16.msra.mxu0 %v2967
  %3006 = vmatpush.bf16.msra.mxu0 %v2966
  %3007 = vmatpush.bf16.msra.mxu0 %v2965
  %3008 = vmatpush.bf16.msra.mxu0 %v2964
  %3009 = vmatmul.bf16.gmra.mxu0 %v2891
  %v3010 = vpop.f32.mrf.mxu0
  %v3011 = vadd.f32 %v2998, %v3010
  %v3012 = vpop.f32.mrf.mxu0
  %3013 = vdwg.mxu0
  %v3046 = vunpack.c.l.b16 %v2820
  %v3047 = vunpack.c.l.b16 %v2821
  %v3048 = vunpack.c.l.b16 %v2822
  %v3049 = vunpack.c.l.b16 %v2823
  %v3050 = vunpack.c.l.b16 %v2824
  %v3051 = vunpack.c.l.b16 %v2825
  %v3052 = vunpack.c.l.b16 %v2826
  %v3053 = vunpack.c.l.b16 %v2827
  %v3054 = vunpack.c.l.b16 %v2828
  %v3055 = vunpack.c.l.b16 %v2829
  %v3056 = vunpack.c.l.b16 %v2830
  %v3057 = vunpack.c.l.b16 %v2831
  %v3058 = vunpack.c.l.b16 %v2832
  %v3059 = vunpack.c.l.b16 %v2833
  %v3060 = vunpack.c.l.b16 %v2834
  %v3061 = vunpack.c.l.b16 %v2835
  %v3062 = vunpack.c.l.b16 %v2836
  %v3063 = vunpack.c.l.b16 %v2837
  %v3064 = vunpack.c.l.b16 %v2838
  %v3065 = vunpack.c.l.b16 %v2839
  %v3066 = vunpack.c.l.b16 %v2840
  %v3067 = vunpack.c.l.b16 %v2841
  %v3068 = vunpack.c.l.b16 %v2842
  %v3069 = vunpack.c.l.b16 %v2843
  %v3070 = vunpack.c.l.b16 %v2844
  %v3071 = vunpack.c.l.b16 %v2845
  %v3072 = vunpack.c.l.b16 %v2846
  %v3073 = vunpack.c.l.b16 %v2847
  %v3074 = vunpack.c.l.b16 %v2848
  %v3075 = vunpack.c.l.b16 %v2849
  %v3076 = vunpack.c.l.b16 %v2850
  %v3077 = vunpack.c.l.b16 %v2851
  %v3078 = vpack.c.b16 %v3047, %v3046
  %v3079 = vpack.c.b16 %v3049, %v3048
  %v3080 = vpack.c.b16 %v3051, %v3050
  %v3081 = vpack.c.b16 %v3053, %v3052
  %v3082 = vpack.c.b16 %v3055, %v3054
  %v3083 = vpack.c.b16 %v3057, %v3056
  %v3084 = vpack.c.b16 %v3059, %v3058
  %v3085 = vpack.c.b16 %v3061, %v3060
  %v3086 = vpack.c.b16 %v3063, %v3062
  %v3087 = vpack.c.b16 %v3065, %v3064
  %v3088 = vpack.c.b16 %v3067, %v3066
  %v3089 = vpack.c.b16 %v3069, %v3068
  %v3090 = vpack.c.b16 %v3071, %v3070
  %v3091 = vpack.c.b16 %v3073, %v3072
  %v3092 = vpack.c.b16 %v3075, %v3074
  %v3093 = vpack.c.b16 %v3077, %v3076
  %3110 = vmatpush.bf16.msra.mxu0 %v3085
  %3111 = vmatpush.bf16.msra.mxu0 %v3084
  %3112 = vmatpush.bf16.msra.mxu0 %v3083
  %3113 = vmatpush.bf16.msra.mxu0 %v3082
  %3114 = vmatpush.bf16.msra.mxu0 %v3081
  %3115 = vmatpush.bf16.msra.mxu0 %v3080
  %3116 = vmatpush.bf16.msra.mxu0 %v3079
  %3117 = vmatpush.bf16.msra.mxu0 %v3078
  %3118 = vmatmul.bf16.gmra.mxu0 %v2852
  %v3119 = vpop.f32.mrf.mxu0
  %v3120 = vadd.f32 %v3011, %v3119
  %v3121 = vpop.f32.mrf.mxu0
  %3122 = vdwg.mxu0
  %3123 = vmatpush.bf16.msra.mxu0 %v3093
  %3124 = vmatpush.bf16.msra.mxu0 %v3092
  %3125 = vmatpush.bf16.msra.mxu0 %v3091
  %3126 = vmatpush.bf16.msra.mxu0 %v3090
  %3127 = vmatpush.bf16.msra.mxu0 %v3089
  %3128 = vmatpush.bf16.msra.mxu0 %v3088
  %3129 = vmatpush.bf16.msra.mxu0 %v3087
  %3130 = vmatpush.bf16.msra.mxu0 %v3086
  %3131 = vmatmul.bf16.gmra.mxu0 %v2853
  %v3132 = vpop.f32.mrf.mxu0
  %v3133 = vadd.f32 %v3120, %v3132
  %v3134 = vpop.f32.mrf.mxu0
  %3135 = vdwg.mxu0
  %s3136 = scalar_lea.vmem [#allocation3], 32
  %v3137 = vld [vmem:[%s3136] sm:$0xff]
  %v3138 = vld [vmem:[%s3136 + $0x8] sm:$0xff]
  %s3139 = scalar_lea.vmem %s5, 256
  %v3140 = vld [vmem:[%s3139] sm:$0xf]
  %v3141 = vld [vmem:[%s3139 + $0x4] sm:$0xf]
  %v3142 = vld [vmem:[%s3139 + $0x8] sm:$0xf]
  %v3143 = vld [vmem:[%s3139 + $0xc] sm:$0xf]
  %v3144 = vld [vmem:[%s3139 + $0x10] sm:$0xf]
  %v3145 = vld [vmem:[%s3139 + $0x14] sm:$0xf]
  %v3146 = vld [vmem:[%s3139 + $0x18] sm:$0xf]
  %v3147 = vld [vmem:[%s3139 + $0x1c] sm:$0xf]
  %v3148 = vld [vmem:[%s3139 + $0x20] sm:$0xf]
  %v3149 = vld [vmem:[%s3139 + $0x24] sm:$0xf]
  %v3150 = vld [vmem:[%s3139 + $0x28] sm:$0xf]
  %v3151 = vld [vmem:[%s3139 + $0x2c] sm:$0xf]
  %v3152 = vld [vmem:[%s3139 + $0x30] sm:$0xf]
  %v3153 = vld [vmem:[%s3139 + $0x34] sm:$0xf]
  %v3154 = vld [vmem:[%s3139 + $0x38] sm:$0xf]
  %v3155 = vld [vmem:[%s3139 + $0x3c] sm:$0xf]
  %v3156 = vld [vmem:[%s3139 + $0x40] sm:$0xf]
  %v3157 = vld [vmem:[%s3139 + $0x44] sm:$0xf]
  %v3158 = vld [vmem:[%s3139 + $0x48] sm:$0xf]
  %v3159 = vld [vmem:[%s3139 + $0x4c] sm:$0xf]
  %v3160 = vld [vmem:[%s3139 + $0x50] sm:$0xf]
  %v3161 = vld [vmem:[%s3139 + $0x54] sm:$0xf]
  %v3162 = vld [vmem:[%s3139 + $0x58] sm:$0xf]
  %v3163 = vld [vmem:[%s3139 + $0x5c] sm:$0xf]
  %v3164 = vld [vmem:[%s3139 + $0x60] sm:$0xf]
  %v3165 = vld [vmem:[%s3139 + $0x64] sm:$0xf]
  %v3166 = vld [vmem:[%s3139 + $0x68] sm:$0xf]
  %v3167 = vld [vmem:[%s3139 + $0x6c] sm:$0xf]
  %v3168 = vld [vmem:[%s3139 + $0x70] sm:$0xf]
  %v3169 = vld [vmem:[%s3139 + $0x74] sm:$0xf]
  %v3170 = vld [vmem:[%s3139 + $0x78] sm:$0xf]
  %v3171 = vld [vmem:[%s3139 + $0x7c] sm:$0xf]
  %v3172 = vpack.c.bf16 %v3137, %v3137
  %v3173 = vpack.c.bf16 %v3138, %v3138
  %v3206 = vunpack.c.l.b16 %v3140
  %v3207 = vunpack.c.l.b16 %v3141
  %v3208 = vunpack.c.l.b16 %v3142
  %v3209 = vunpack.c.l.b16 %v3143
  %v3210 = vunpack.c.l.b16 %v3144
  %v3211 = vunpack.c.l.b16 %v3145
  %v3212 = vunpack.c.l.b16 %v3146
  %v3213 = vunpack.c.l.b16 %v3147
  %v3214 = vunpack.c.l.b16 %v3148
  %v3215 = vunpack.c.l.b16 %v3149
  %v3216 = vunpack.c.l.b16 %v3150
  %v3217 = vunpack.c.l.b16 %v3151
  %v3218 = vunpack.c.l.b16 %v3152
  %v3219 = vunpack.c.l.b16 %v3153
  %v3220 = vunpack.c.l.b16 %v3154
  %v3221 = vunpack.c.l.b16 %v3155
  %v3222 = vunpack.c.l.b16 %v3156
  %v3223 = vunpack.c.l.b16 %v3157
  %v3224 = vunpack.c.l.b16 %v3158
  %v3225 = vunpack.c.l.b16 %v3159
  %v3226 = vunpack.c.l.b16 %v3160
  %v3227 = vunpack.c.l.b16 %v3161
  %v3228 = vunpack.c.l.b16 %v3162
  %v3229 = vunpack.c.l.b16 %v3163
  %v3230 = vunpack.c.l.b16 %v3164
  %v3231 = vunpack.c.l.b16 %v3165
  %v3232 = vunpack.c.l.b16 %v3166
  %v3233 = vunpack.c.l.b16 %v3167
  %v3234 = vunpack.c.l.b16 %v3168
  %v3235 = vunpack.c.l.b16 %v3169
  %v3236 = vunpack.c.l.b16 %v3170
  %v3237 = vunpack.c.l.b16 %v3171
  %v3238 = vpack.c.b16 %v3207, %v3206
  %v3239 = vpack.c.b16 %v3209, %v3208
  %v3240 = vpack.c.b16 %v3211, %v3210
  %v3241 = vpack.c.b16 %v3213, %v3212
  %v3242 = vpack.c.b16 %v3215, %v3214
  %v3243 = vpack.c.b16 %v3217, %v3216
  %v3244 = vpack.c.b16 %v3219, %v3218
  %v3245 = vpack.c.b16 %v3221, %v3220
  %v3246 = vpack.c.b16 %v3223, %v3222
  %v3247 = vpack.c.b16 %v3225, %v3224
  %v3248 = vpack.c.b16 %v3227, %v3226
  %v3249 = vpack.c.b16 %v3229, %v3228
  %v3250 = vpack.c.b16 %v3231, %v3230
  %v3251 = vpack.c.b16 %v3233, %v3232
  %v3252 = vpack.c.b16 %v3235, %v3234
  %v3253 = vpack.c.b16 %v3237, %v3236
  %3270 = vmatpush.bf16.msra.mxu0 %v3245
  %3271 = vmatpush.bf16.msra.mxu0 %v3244
  %3272 = vmatpush.bf16.msra.mxu0 %v3243
  %3273 = vmatpush.bf16.msra.mxu0 %v3242
  %3274 = vmatpush.bf16.msra.mxu0 %v3241
  %3275 = vmatpush.bf16.msra.mxu0 %v3240
  %3276 = vmatpush.bf16.msra.mxu0 %v3239
  %3277 = vmatpush.bf16.msra.mxu0 %v3238
  %3278 = vmatmul.bf16.gmra.mxu0 %v3172
  %v3279 = vpop.f32.mrf.mxu0
  %v3280 = vadd.f32 0.0, %v3279
  %v3281 = vpop.f32.mrf.mxu0
  %3282 = vdwg.mxu0
  %3283 = vmatpush.bf16.msra.mxu0 %v3253
  %3284 = vmatpush.bf16.msra.mxu0 %v3252
  %3285 = vmatpush.bf16.msra.mxu0 %v3251
  %3286 = vmatpush.bf16.msra.mxu0 %v3250
  %3287 = vmatpush.bf16.msra.mxu0 %v3249
  %3288 = vmatpush.bf16.msra.mxu0 %v3248
  %3289 = vmatpush.bf16.msra.mxu0 %v3247
  %3290 = vmatpush.bf16.msra.mxu0 %v3246
  %3291 = vmatmul.bf16.gmra.mxu0 %v3173
  %v3292 = vpop.f32.mrf.mxu0
  %v3293 = vadd.f32 %v3280, %v3292
  %v3294 = vpop.f32.mrf.mxu0
  %3295 = vdwg.mxu0
  %v3296 = vadd.f32 %v3133, %v3293
  %v3297 = vld [vmem:[%s6] sm:$0x1]
  %v3299 = vperm.slane %v3297, 0
  %v3301 = vadd.f32 %v3296, %v3299
  %v3302 = vmax.f32 %v3301, 0.0
  %v3303 = vld [vmem:[%s7] sm:$0xff]
  %v3304 = vld [vmem:[%s7 + $0x8] sm:$0xff]
  %v3305 = vld [vmem:[%s7 + $0x10] sm:$0xff]
  %v3306 = vld [vmem:[%s7 + $0x18] sm:$0xff]
  %v3307 = vld [vmem:[%s7 + $0x20] sm:$0xff]
  %v3308 = vld [vmem:[%s7 + $0x28] sm:$0xff]
  %v3309 = vld [vmem:[%s7 + $0x30] sm:$0xff]
  %v3310 = vld [vmem:[%s7 + $0x38] sm:$0xff]
  %v3311 = vld [vmem:[%s7 + $0x40] sm:$0xff]
  %v3312 = vld [vmem:[%s7 + $0x48] sm:$0xff]
  %v3313 = vld [vmem:[%s7 + $0x50] sm:$0xff]
  %v3314 = vld [vmem:[%s7 + $0x58] sm:$0xff]
  %v3315 = vld [vmem:[%s7 + $0x60] sm:$0xff]
  %v3316 = vld [vmem:[%s7 + $0x68] sm:$0xff]
  %v3317 = vld [vmem:[%s7 + $0x70] sm:$0xff]
  %v3318 = vld [vmem:[%s7 + $0x78] sm:$0xff]
  %v3319 = vld [vmem:[%s7 + $0x80] sm:$0xff]
  %v3320 = vld [vmem:[%s7 + $0x88] sm:$0xff]
  %v3321 = vld [vmem:[%s7 + $0x90] sm:$0xff]
  %v3322 = vld [vmem:[%s7 + $0x98] sm:$0xff]
  %v3323 = vld [vmem:[%s7 + $0xa0] sm:$0xff]
  %v3324 = vld [vmem:[%s7 + $0xa8] sm:$0xff]
  %v3325 = vld [vmem:[%s7 + $0xb0] sm:$0xff]
  %v3326 = vld [vmem:[%s7 + $0xb8] sm:$0xff]
  %v3327 = vld [vmem:[%s7 + $0xc0] sm:$0xff]
  %v3328 = vld [vmem:[%s7 + $0xc8] sm:$0xff]
  %v3329 = vld [vmem:[%s7 + $0xd0] sm:$0xff]
  %v3330 = vld [vmem:[%s7 + $0xd8] sm:$0xff]
  %v3331 = vld [vmem:[%s7 + $0xe0] sm:$0xff]
  %v3332 = vld [vmem:[%s7 + $0xe8] sm:$0xff]
  %v3333 = vld [vmem:[%s7 + $0xf0] sm:$0xff]
  %v3334 = vld [vmem:[%s7 + $0xf8] sm:$0xff]
  %v3335 = vpack.c.bf16 %v3302, %v3302
  %v3336 = vld [vmem:[%s8] sm:$0xf]
  %v3338 = vperm.slane %v3336, 0
  %v3339 = vperm.slane %v3336, 1
  %v3340 = vperm.slane %v3336, 2
  %v3341 = vperm.slane %v3336, 3
  %v3378 = vunpack.c.l.b16 %v3303
  %v3379 = vunpack.c.h.b16 %v3303
  %v3380 = vunpack.c.l.b16 %v3304
  %v3381 = vunpack.c.h.b16 %v3304
  %v3382 = vunpack.c.l.b16 %v3305
  %v3383 = vunpack.c.h.b16 %v3305
  %v3384 = vunpack.c.l.b16 %v3306
  %v3385 = vunpack.c.h.b16 %v3306
  %v3386 = vunpack.c.l.b16 %v3307
  %v3387 = vunpack.c.h.b16 %v3307
  %v3388 = vunpack.c.l.b16 %v3308
  %v3389 = vunpack.c.h.b16 %v3308
  %v3390 = vunpack.c.l.b16 %v3309
  %v3391 = vunpack.c.h.b16 %v3309
  %v3392 = vunpack.c.l.b16 %v3310
  %v3393 = vunpack.c.h.b16 %v3310
  %v3394 = vunpack.c.l.b16 %v3311
  %v3395 = vunpack.c.h.b16 %v3311
  %v3396 = vunpack.c.l.b16 %v3312
  %v3397 = vunpack.c.h.b16 %v3312
  %v3398 = vunpack.c.l.b16 %v3313
  %v3399 = vunpack.c.h.b16 %v3313
  %v3400 = vunpack.c.l.b16 %v3314
  %v3401 = vunpack.c.h.b16 %v3314
  %v3402 = vunpack.c.l.b16 %v3315
  %v3403 = vunpack.c.h.b16 %v3315
  %v3404 = vunpack.c.l.b16 %v3316
  %v3405 = vunpack.c.h.b16 %v3316
  %v3406 = vunpack.c.l.b16 %v3317
  %v3407 = vunpack.c.h.b16 %v3317
  %v3408 = vunpack.c.l.b16 %v3318
  %v3409 = vunpack.c.h.b16 %v3318
  %v3410 = vunpack.c.l.b16 %v3319
  %v3411 = vunpack.c.h.b16 %v3319
  %v3412 = vunpack.c.l.b16 %v3320
  %v3413 = vunpack.c.h.b16 %v3320
  %v3414 = vunpack.c.l.b16 %v3321
  %v3415 = vunpack.c.h.b16 %v3321
  %v3416 = vunpack.c.l.b16 %v3322
  %v3417 = vunpack.c.h.b16 %v3322
  %v3418 = vunpack.c.l.b16 %v3323
  %v3419 = vunpack.c.h.b16 %v3323
  %v3420 = vunpack.c.l.b16 %v3324
  %v3421 = vunpack.c.h.b16 %v3324
  %v3422 = vunpack.c.l.b16 %v3325
  %v3423 = vunpack.c.h.b16 %v3325
  %v3424 = vunpack.c.l.b16 %v3326
  %v3425 = vunpack.c.h.b16 %v3326
  %v3426 = vunpack.c.l.b16 %v3327
  %v3427 = vunpack.c.h.b16 %v3327
  %v3428 = vunpack.c.l.b16 %v3328
  %v3429 = vunpack.c.h.b16 %v3328
  %v3430 = vunpack.c.l.b16 %v3329
  %v3431 = vunpack.c.h.b16 %v3329
  %v3432 = vunpack.c.l.b16 %v3330
  %v3433 = vunpack.c.h.b16 %v3330
  %v3434 = vunpack.c.l.b16 %v3331
  %v3435 = vunpack.c.h.b16 %v3331
  %v3436 = vunpack.c.l.b16 %v3332
  %v3437 = vunpack.c.h.b16 %v3332
  %v3438 = vunpack.c.l.b16 %v3333
  %v3439 = vunpack.c.h.b16 %v3333
  %v3440 = vunpack.c.l.b16 %v3334
  %v3441 = vunpack.c.h.b16 %v3334
  %v3442 = vpack.c.b16 %v3382, %v3378
  %v3443 = vpack.c.b16 %v3383, %v3379
  %v3444 = vpack.c.b16 %v3384, %v3380
  %v3445 = vpack.c.b16 %v3385, %v3381
  %v3446 = vpack.c.b16 %v3390, %v3386
  %v3447 = vpack.c.b16 %v3391, %v3387
  %v3448 = vpack.c.b16 %v3392, %v3388
  %v3449 = vpack.c.b16 %v3393, %v3389
  %v3450 = vpack.c.b16 %v3398, %v3394
  %v3451 = vpack.c.b16 %v3399, %v3395
  %v3452 = vpack.c.b16 %v3400, %v3396
  %v3453 = vpack.c.b16 %v3401, %v3397
  %v3454 = vpack.c.b16 %v3406, %v3402
  %v3455 = vpack.c.b16 %v3407, %v3403
  %v3456 = vpack.c.b16 %v3408, %v3404
  %v3457 = vpack.c.b16 %v3409, %v3405
  %v3458 = vpack.c.b16 %v3414, %v3410
  %v3459 = vpack.c.b16 %v3415, %v3411
  %v3460 = vpack.c.b16 %v3416, %v3412
  %v3461 = vpack.c.b16 %v3417, %v3413
  %v3462 = vpack.c.b16 %v3422, %v3418
  %v3463 = vpack.c.b16 %v3423, %v3419
  %v3464 = vpack.c.b16 %v3424, %v3420
  %v3465 = vpack.c.b16 %v3425, %v3421
  %v3466 = vpack.c.b16 %v3430, %v3426
  %v3467 = vpack.c.b16 %v3431, %v3427
  %v3468 = vpack.c.b16 %v3432, %v3428
  %v3469 = vpack.c.b16 %v3433, %v3429
  %v3470 = vpack.c.b16 %v3438, %v3434
  %v3471 = vpack.c.b16 %v3439, %v3435
  %v3472 = vpack.c.b16 %v3440, %v3436
  %v3473 = vpack.c.b16 %v3441, %v3437
  %3506 = vmatpush.bf16.msra.mxu0 %v3470
  %3507 = vmatpush.bf16.msra.mxu0 %v3466
  %3508 = vmatpush.bf16.msra.mxu0 %v3462
  %3509 = vmatpush.bf16.msra.mxu0 %v3458
  %3510 = vmatpush.bf16.msra.mxu0 %v3454
  %3511 = vmatpush.bf16.msra.mxu0 %v3450
  %3512 = vmatpush.bf16.msra.mxu0 %v3446
  %3513 = vmatpush.bf16.msra.mxu0 %v3442
  %3514 = vmatmul.bf16.gmra.mxu0 %v3335
  %v3515 = vpop.f32.mrf.mxu0
  %v3516 = vadd.f32 %v3338, %v3515
  %v3517 = vpop.f32.mrf.mxu0
  %3518 = vdwg.mxu0
  %3519 = vmatpush.bf16.msra.mxu0 %v3471
  %3520 = vmatpush.bf16.msra.mxu0 %v3467
  %3521 = vmatpush.bf16.msra.mxu0 %v3463
  %3522 = vmatpush.bf16.msra.mxu0 %v3459
  %3523 = vmatpush.bf16.msra.mxu0 %v3455
  %3524 = vmatpush.bf16.msra.mxu0 %v3451
  %3525 = vmatpush.bf16.msra.mxu0 %v3447
  %3526 = vmatpush.bf16.msra.mxu0 %v3443
  %3527 = vmatmul.bf16.gmra.mxu0 %v3335
  %v3528 = vpop.f32.mrf.mxu0
  %v3529 = vadd.f32 %v3339, %v3528
  %v3530 = vpop.f32.mrf.mxu0
  %3531 = vdwg.mxu0
  %3532 = vmatpush.bf16.msra.mxu0 %v3472
  %3533 = vmatpush.bf16.msra.mxu0 %v3468
  %3534 = vmatpush.bf16.msra.mxu0 %v3464
  %3535 = vmatpush.bf16.msra.mxu0 %v3460
  %3536 = vmatpush.bf16.msra.mxu0 %v3456
  %3537 = vmatpush.bf16.msra.mxu0 %v3452
  %3538 = vmatpush.bf16.msra.mxu0 %v3448
  %3539 = vmatpush.bf16.msra.mxu0 %v3444
  %3540 = vmatmul.bf16.gmra.mxu0 %v3335
  %v3541 = vpop.f32.mrf.mxu0
  %v3542 = vadd.f32 %v3340, %v3541
  %v3543 = vpop.f32.mrf.mxu0
  %3544 = vdwg.mxu0
  %3545 = vmatpush.bf16.msra.mxu0 %v3473
  %3546 = vmatpush.bf16.msra.mxu0 %v3469
  %3547 = vmatpush.bf16.msra.mxu0 %v3465
  %3548 = vmatpush.bf16.msra.mxu0 %v3461
  %3549 = vmatpush.bf16.msra.mxu0 %v3457
  %3550 = vmatpush.bf16.msra.mxu0 %v3453
  %3551 = vmatpush.bf16.msra.mxu0 %v3449
  %3552 = vmatpush.bf16.msra.mxu0 %v3445
  %3553 = vmatmul.bf16.gmra.mxu0 %v3335
  %v3554 = vpop.f32.mrf.mxu0
  %v3555 = vadd.f32 %v3341, %v3554
  %v3556 = vpop.f32.mrf.mxu0
  %3557 = vdwg.mxu0
  %v3558 = vmax.f32 %v3516, 0.0
  %v3559 = vmax.f32 %v3529, 0.0
  %v3560 = vmax.f32 %v3542, 0.0
  %v3561 = vmax.f32 %v3555, 0.0
  %v3562 = vld [vmem:[%s9] sm:$0xf]
  %v3563 = vld [vmem:[%s9 + $0x4] sm:$0xf]
  %v3564 = vld [vmem:[%s9 + $0x8] sm:$0xf]
  %v3565 = vld [vmem:[%s9 + $0xc] sm:$0xf]
  %v3566 = vld [vmem:[%s9 + $0x10] sm:$0xf]
  %v3567 = vld [vmem:[%s9 + $0x14] sm:$0xf]
  %v3568 = vld [vmem:[%s9 + $0x18] sm:$0xf]
  %v3569 = vld [vmem:[%s9 + $0x1c] sm:$0xf]
  %v3570 = vld [vmem:[%s9 + $0x20] sm:$0xf]
  %v3571 = vld [vmem:[%s9 + $0x24] sm:$0xf]
  %v3572 = vld [vmem:[%s9 + $0x28] sm:$0xf]
  %v3573 = vld [vmem:[%s9 + $0x2c] sm:$0xf]
  %v3574 = vld [vmem:[%s9 + $0x30] sm:$0xf]
  %v3575 = vld [vmem:[%s9 + $0x34] sm:$0xf]
  %v3576 = vld [vmem:[%s9 + $0x38] sm:$0xf]
  %v3577 = vld [vmem:[%s9 + $0x3c] sm:$0xf]
  %v3578 = vld [vmem:[%s9 + $0x40] sm:$0xf]
  %v3579 = vld [vmem:[%s9 + $0x44] sm:$0xf]
  %v3580 = vld [vmem:[%s9 + $0x48] sm:$0xf]
  %v3581 = vld [vmem:[%s9 + $0x4c] sm:$0xf]
  %v3582 = vld [vmem:[%s9 + $0x50] sm:$0xf]
  %v3583 = vld [vmem:[%s9 + $0x54] sm:$0xf]
  %v3584 = vld [vmem:[%s9 + $0x58] sm:$0xf]
  %v3585 = vld [vmem:[%s9 + $0x5c] sm:$0xf]
  %v3586 = vld [vmem:[%s9 + $0x60] sm:$0xf]
  %v3587 = vld [vmem:[%s9 + $0x64] sm:$0xf]
  %v3588 = vld [vmem:[%s9 + $0x68] sm:$0xf]
  %v3589 = vld [vmem:[%s9 + $0x6c] sm:$0xf]
  %v3590 = vld [vmem:[%s9 + $0x70] sm:$0xf]
  %v3591 = vld [vmem:[%s9 + $0x74] sm:$0xf]
  %v3592 = vld [vmem:[%s9 + $0x78] sm:$0xf]
  %v3593 = vld [vmem:[%s9 + $0x7c] sm:$0xf]
  %v3594 = vld [vmem:[%s9 + $0x80] sm:$0xf]
  %v3595 = vld [vmem:[%s9 + $0x84] sm:$0xf]
  %v3596 = vld [vmem:[%s9 + $0x88] sm:$0xf]
  %v3597 = vld [vmem:[%s9 + $0x8c] sm:$0xf]
  %v3598 = vld [vmem:[%s9 + $0x90] sm:$0xf]
  %v3599 = vld [vmem:[%s9 + $0x94] sm:$0xf]
  %v3600 = vld [vmem:[%s9 + $0x98] sm:$0xf]
  %v3601 = vld [vmem:[%s9 + $0x9c] sm:$0xf]
  %v3602 = vld [vmem:[%s9 + $0xa0] sm:$0xf]
  %v3603 = vld [vmem:[%s9 + $0xa4] sm:$0xf]
  %v3604 = vld [vmem:[%s9 + $0xa8] sm:$0xf]
  %v3605 = vld [vmem:[%s9 + $0xac] sm:$0xf]
  %v3606 = vld [vmem:[%s9 + $0xb0] sm:$0xf]
  %v3607 = vld [vmem:[%s9 + $0xb4] sm:$0xf]
  %v3608 = vld [vmem:[%s9 + $0xb8] sm:$0xf]
  %v3609 = vld [vmem:[%s9 + $0xbc] sm:$0xf]
  %v3610 = vld [vmem:[%s9 + $0xc0] sm:$0xf]
  %v3611 = vld [vmem:[%s9 + $0xc4] sm:$0xf]
  %v3612 = vld [vmem:[%s9 + $0xc8] sm:$0xf]
  %v3613 = vld [vmem:[%s9 + $0xcc] sm:$0xf]
  %v3614 = vld [vmem:[%s9 + $0xd0] sm:$0xf]
  %v3615 = vld [vmem:[%s9 + $0xd4] sm:$0xf]
  %v3616 = vld [vmem:[%s9 + $0xd8] sm:$0xf]
  %v3617 = vld [vmem:[%s9 + $0xdc] sm:$0xf]
  %v3618 = vld [vmem:[%s9 + $0xe0] sm:$0xf]
  %v3619 = vld [vmem:[%s9 + $0xe4] sm:$0xf]
  %v3620 = vld [vmem:[%s9 + $0xe8] sm:$0xf]
  %v3621 = vld [vmem:[%s9 + $0xec] sm:$0xf]
  %v3622 = vld [vmem:[%s9 + $0xf0] sm:$0xf]
  %v3623 = vld [vmem:[%s9 + $0xf4] sm:$0xf]
  %v3624 = vld [vmem:[%s9 + $0xf8] sm:$0xf]
  %v3625 = vld [vmem:[%s9 + $0xfc] sm:$0xf]
  %v3626 = vpack.c.bf16 %v3558, %v3558
  %v3627 = vpack.c.bf16 %v3559, %v3559
  %v3628 = vpack.c.bf16 %v3560, %v3560
  %v3629 = vpack.c.bf16 %v3561, %v3561
  %v3630 = vld [vmem:[%s10] sm:$0x1]
  %v3632 = vperm.slane %v3630, 0
  %v3698 = vunpack.c.l.b16 %v3562
  %v3699 = vunpack.c.l.b16 %v3563
  %v3700 = vunpack.c.l.b16 %v3564
  %v3701 = vunpack.c.l.b16 %v3565
  %v3702 = vunpack.c.l.b16 %v3566
  %v3703 = vunpack.c.l.b16 %v3567
  %v3704 = vunpack.c.l.b16 %v3568
  %v3705 = vunpack.c.l.b16 %v3569
  %v3706 = vunpack.c.l.b16 %v3570
  %v3707 = vunpack.c.l.b16 %v3571
  %v3708 = vunpack.c.l.b16 %v3572
  %v3709 = vunpack.c.l.b16 %v3573
  %v3710 = vunpack.c.l.b16 %v3574
  %v3711 = vunpack.c.l.b16 %v3575
  %v3712 = vunpack.c.l.b16 %v3576
  %v3713 = vunpack.c.l.b16 %v3577
  %v3714 = vunpack.c.l.b16 %v3578
  %v3715 = vunpack.c.l.b16 %v3579
  %v3716 = vunpack.c.l.b16 %v3580
  %v3717 = vunpack.c.l.b16 %v3581
  %v3718 = vunpack.c.l.b16 %v3582
  %v3719 = vunpack.c.l.b16 %v3583
  %v3720 = vunpack.c.l.b16 %v3584
  %v3721 = vunpack.c.l.b16 %v3585
  %v3722 = vunpack.c.l.b16 %v3586
  %v3723 = vunpack.c.l.b16 %v3587
  %v3724 = vunpack.c.l.b16 %v3588
  %v3725 = vunpack.c.l.b16 %v3589
  %v3726 = vunpack.c.l.b16 %v3590
  %v3727 = vunpack.c.l.b16 %v3591
  %v3728 = vunpack.c.l.b16 %v3592
  %v3729 = vunpack.c.l.b16 %v3593
  %v3730 = vunpack.c.l.b16 %v3594
  %v3731 = vunpack.c.l.b16 %v3595
  %v3732 = vunpack.c.l.b16 %v3596
  %v3733 = vunpack.c.l.b16 %v3597
  %v3734 = vunpack.c.l.b16 %v3598
  %v3735 = vunpack.c.l.b16 %v3599
  %v3736 = vunpack.c.l.b16 %v3600
  %v3737 = vunpack.c.l.b16 %v3601
  %v3738 = vunpack.c.l.b16 %v3602
  %v3739 = vunpack.c.l.b16 %v3603
  %v3740 = vunpack.c.l.b16 %v3604
  %v3741 = vunpack.c.l.b16 %v3605
  %v3742 = vunpack.c.l.b16 %v3606
  %v3743 = vunpack.c.l.b16 %v3607
  %v3744 = vunpack.c.l.b16 %v3608
  %v3745 = vunpack.c.l.b16 %v3609
  %v3746 = vunpack.c.l.b16 %v3610
  %v3747 = vunpack.c.l.b16 %v3611
  %v3748 = vunpack.c.l.b16 %v3612
  %v3749 = vunpack.c.l.b16 %v3613
  %v3750 = vunpack.c.l.b16 %v3614
  %v3751 = vunpack.c.l.b16 %v3615
  %v3752 = vunpack.c.l.b16 %v3616
  %v3753 = vunpack.c.l.b16 %v3617
  %v3754 = vunpack.c.l.b16 %v3618
  %v3755 = vunpack.c.l.b16 %v3619
  %v3756 = vunpack.c.l.b16 %v3620
  %v3757 = vunpack.c.l.b16 %v3621
  %v3758 = vunpack.c.l.b16 %v3622
  %v3759 = vunpack.c.l.b16 %v3623
  %v3760 = vunpack.c.l.b16 %v3624
  %v3761 = vunpack.c.l.b16 %v3625
  %v3762 = vpack.c.b16 %v3699, %v3698
  %v3763 = vpack.c.b16 %v3701, %v3700
  %v3764 = vpack.c.b16 %v3703, %v3702
  %v3765 = vpack.c.b16 %v3705, %v3704
  %v3766 = vpack.c.b16 %v3707, %v3706
  %v3767 = vpack.c.b16 %v3709, %v3708
  %v3768 = vpack.c.b16 %v3711, %v3710
  %v3769 = vpack.c.b16 %v3713, %v3712
  %v3770 = vpack.c.b16 %v3715, %v3714
  %v3771 = vpack.c.b16 %v3717, %v3716
  %v3772 = vpack.c.b16 %v3719, %v3718
  %v3773 = vpack.c.b16 %v3721, %v3720
  %v3774 = vpack.c.b16 %v3723, %v3722
  %v3775 = vpack.c.b16 %v3725, %v3724
  %v3776 = vpack.c.b16 %v3727, %v3726
  %v3777 = vpack.c.b16 %v3729, %v3728
  %v3778 = vpack.c.b16 %v3731, %v3730
  %v3779 = vpack.c.b16 %v3733, %v3732
  %v3780 = vpack.c.b16 %v3735, %v3734
  %v3781 = vpack.c.b16 %v3737, %v3736
  %v3782 = vpack.c.b16 %v3739, %v3738
  %v3783 = vpack.c.b16 %v3741, %v3740
  %v3784 = vpack.c.b16 %v3743, %v3742
  %v3785 = vpack.c.b16 %v3745, %v3744
  %v3786 = vpack.c.b16 %v3747, %v3746
  %v3787 = vpack.c.b16 %v3749, %v3748
  %v3788 = vpack.c.b16 %v3751, %v3750
  %v3789 = vpack.c.b16 %v3753, %v3752
  %v3790 = vpack.c.b16 %v3755, %v3754
  %v3791 = vpack.c.b16 %v3757, %v3756
  %v3792 = vpack.c.b16 %v3759, %v3758
  %v3793 = vpack.c.b16 %v3761, %v3760
  %3826 = vmatpush.bf16.msra.mxu0 %v3769
  %3827 = vmatpush.bf16.msra.mxu0 %v3768
  %3828 = vmatpush.bf16.msra.mxu0 %v3767
  %3829 = vmatpush.bf16.msra.mxu0 %v3766
  %3830 = vmatpush.bf16.msra.mxu0 %v3765
  %3831 = vmatpush.bf16.msra.mxu0 %v3764
  %3832 = vmatpush.bf16.msra.mxu0 %v3763
  %3833 = vmatpush.bf16.msra.mxu0 %v3762
  %3834 = vmatmul.bf16.gmra.mxu0 %v3626
  %v3835 = vpop.f32.mrf.mxu0
  %v3836 = vadd.f32 %v3632, %v3835
  %v3837 = vpop.f32.mrf.mxu0
  %3838 = vdwg.mxu0
  %3839 = vmatpush.bf16.msra.mxu0 %v3777
  %3840 = vmatpush.bf16.msra.mxu0 %v3776
  %3841 = vmatpush.bf16.msra.mxu0 %v3775
  %3842 = vmatpush.bf16.msra.mxu0 %v3774
  %3843 = vmatpush.bf16.msra.mxu0 %v3773
  %3844 = vmatpush.bf16.msra.mxu0 %v3772
  %3845 = vmatpush.bf16.msra.mxu0 %v3771
  %3846 = vmatpush.bf16.msra.mxu0 %v3770
  %3847 = vmatmul.bf16.gmra.mxu0 %v3627
  %v3848 = vpop.f32.mrf.mxu0
  %v3849 = vadd.f32 %v3836, %v3848
  %v3850 = vpop.f32.mrf.mxu0
  %3851 = vdwg.mxu0
  %3852 = vmatpush.bf16.msra.mxu0 %v3785
  %3853 = vmatpush.bf16.msra.mxu0 %v3784
  %3854 = vmatpush.bf16.msra.mxu0 %v3783
  %3855 = vmatpush.bf16.msra.mxu0 %v3782
  %3856 = vmatpush.bf16.msra.mxu0 %v3781
  %3857 = vmatpush.bf16.msra.mxu0 %v3780
  %3858 = vmatpush.bf16.msra.mxu0 %v3779
  %3859 = vmatpush.bf16.msra.mxu0 %v3778
  %3860 = vmatmul.bf16.gmra.mxu0 %v3628
  %v3861 = vpop.f32.mrf.mxu0
  %v3862 = vadd.f32 %v3849, %v3861
  %v3863 = vpop.f32.mrf.mxu0
  %3864 = vdwg.mxu0
  %3865 = vmatpush.bf16.msra.mxu0 %v3793
  %3866 = vmatpush.bf16.msra.mxu0 %v3792
  %3867 = vmatpush.bf16.msra.mxu0 %v3791
  %3868 = vmatpush.bf16.msra.mxu0 %v3790
  %3869 = vmatpush.bf16.msra.mxu0 %v3789
  %3870 = vmatpush.bf16.msra.mxu0 %v3788
  %3871 = vmatpush.bf16.msra.mxu0 %v3787
  %3872 = vmatpush.bf16.msra.mxu0 %v3786
  %3873 = vmatmul.bf16.gmra.mxu0 %v3629
  %v3874 = vpop.f32.mrf.mxu0
  %v3875 = vadd.f32 %v3862, %v3874
  %v3876 = vpop.f32.mrf.mxu0
  %3877 = vdwg.mxu0
  %3878 = vst [vmem:[%s11] sm:$0xff] %v3875
  // Predicated region
  $region46: #{ac_forward.1} parent=0 // pred_check
    _
  $region47: #{ac_forward.1} parent=0 // pred_check_branch
    %3880 = sbr.rel (0) target = $region49
  $region48: #{ac_forward.1} parent=0 // pred_region
    _
  $region49: #{ac_forward.1} parent=0 // pred_fallthru
    _
  // Predicated region
  $region50: #{ac_forward.1} parent=0 // pred_check
    _
  $region51: #{ac_forward.1} parent=0 // pred_check_branch
    %3882 = sbr.rel (0) target = $region53
  $region52: #{ac_forward.1} parent=0 // pred_region
    _
  $region53: #{ac_forward.1} parent=0 // pred_fallthru
    _

// kernel: ac_forward.1
$region0: #{ac_forward.1}
  #allocation0 [shape = 'u32[]', space=smem, size = 0x4, offset = 0x4, fixed_abs, tag = 'smem constant byte address 0x4 - core index']
  #allocation1 [shape = 'u32[72,128]{1,0:T(1,128)}', space=vmem, size = 0x9000, scoped, tag = 'internal scratch']
  #allocation2 [shape = 'f32[8,8,256]{2,1,0:T(8,128)}', space=vmem, size = 0x10000, scoped, tag = 'scratch operand']
  #allocation3 [shape = 'f32[3,8,256]{2,1,0:T(8,128)}', space=vmem, size = 0x6000, scoped, tag = 'scratch operand']
  %s0 = inlined_call_operand.vmem [shape: f32[9,8,576], index: 0, kind: input, shape index: {}]
  %s1 = inlined_call_operand.vmem [shape: bf16[2,576,256], index: 1, kind: input, shape index: {}]
  %s2 = inlined_call_operand.vmem [shape: f32[1,256], index: 2, kind: input, shape index: {}]
  %s3 = inlined_call_operand.vmem [shape: bf16[4,256,256], index: 3, kind: input, shape index: {}]
  %s4 = inlined_call_operand.vmem [shape: f32[1,256], index: 4, kind: input, shape index: {}]
  %s5 = inlined_call_operand.vmem [shape: bf16[3,256,128], index: 5, kind: input, shape index: {}]
  %s6 = inlined_call_operand.vmem [shape: f32[1,128], index: 6, kind: input, shape index: {}]
  %s7 = inlined_call_operand.vmem [shape: bf16[1,128,512], index: 7, kind: input, shape index: {}]
  %s8 = inlined_call_operand.vmem [shape: f32[1,512], index: 8, kind: input, shape index: {}]
  %s9 = inlined_call_operand.vmem [shape: bf16[512,128], index: 9, kind: input, shape index: {}]
  %s10 = inlined_call_operand.vmem [shape: f32[1,128], index: 10, kind: input, shape index: {}]
  %s11 = inlined_call_operand.vmem [shape: f32[8,128], index: 11, kind: output, shape index: {}]
  %s12 = sld [smem:[#allocation0]]
  $region54: #{ac_forward.1} parent=0
    _
  %s14 = ssub.s32 1, %s12
  %s15 = scalar_select 0, %s14, %s12
  // Predicated region
  $region2: #{ac_forward.1} parent=0 // pred_check
    _
  $region3: #{ac_forward.1} parent=0 // pred_check_branch
    %17 = sbr.rel (0) target = $region5
  $region4: #{ac_forward.1} parent=0 // pred_region
    _
  $region5: #{ac_forward.1} parent=0 // pred_fallthru
    _
  // Predicated region
  $region6: #{ac_forward.1} parent=0 // pred_check
    _
  $region7: #{ac_forward.1} parent=0 // pred_check_branch
    %19 = sbr.rel (0) target = $region9
  $region8: #{ac_forward.1} parent=0 // pred_region
    _
  $region9: #{ac_forward.1} parent=0 // pred_fallthru
    _
  // Predicated region
  $region10: #{ac_forward.1} parent=0 // pred_check
    _
  $region11: #{ac_forward.1} parent=0 // pred_check_branch
    %21 = sbr.rel (0) target = $region13
  $region12: #{ac_forward.1} parent=0 // pred_region
    _
  $region13: #{ac_forward.1} parent=0 // pred_fallthru
    _
  // Predicated region
  $region14: #{ac_forward.1} parent=0 // pred_check
    _
  $region15: #{ac_forward.1} parent=0 // pred_check_branch
    %23 = sbr.rel (0) target = $region17
  $region16: #{ac_forward.1} parent=0 // pred_region
    _
  $region17: #{ac_forward.1} parent=0 // pred_fallthru
    _
  // Predicated region
  $region18: #{ac_forward.1} parent=0 // pred_check
    _
  $region19: #{ac_forward.1} parent=0 // pred_check_branch
    %25 = sbr.rel (0) target = $region21
  $region20: #{ac_forward.1} parent=0 // pred_region
    _
  $region21: #{ac_forward.1} parent=0 // pred_fallthru
    _
  // Predicated region
  $region22: #{ac_forward.1} parent=0 // pred_check
    _
  $region23: #{ac_forward.1} parent=0 // pred_check_branch
    %27 = sbr.rel (0) target = $region25
  $region24: #{ac_forward.1} parent=0 // pred_region
    _
  $region25: #{ac_forward.1} parent=0 // pred_fallthru
    _
  // Predicated region
  $region26: #{ac_forward.1} parent=0 // pred_check
    _
  $region27: #{ac_forward.1} parent=0 // pred_check_branch
    %29 = sbr.rel (0) target = $region29
  $region28: #{ac_forward.1} parent=0 // pred_region
    _
  $region29: #{ac_forward.1} parent=0 // pred_fallthru
    _
  // Predicated region
  $region30: #{ac_forward.1} parent=0 // pred_check
    _
  $region31: #{ac_forward.1} parent=0 // pred_check_branch
    %31 = sbr.rel (0) target = $region33
  $region32: #{ac_forward.1} parent=0 // pred_region
    _
  $region33: #{ac_forward.1} parent=0 // pred_fallthru
    _
  // Predicated region
  $region34: #{ac_forward.1} parent=0 // pred_check
    _
  $region35: #{ac_forward.1} parent=0 // pred_check_branch
    %33 = sbr.rel (0) target = $region37
  $region36: #{ac_forward.1} parent=0 // pred_region
    _
  $region37: #{ac_forward.1} parent=0 // pred_fallthru
    _
  // Predicated region
  $region38: #{ac_forward.1} parent=0 // pred_check
    _
  $region39: #{ac_forward.1} parent=0 // pred_check_branch
    %35 = sbr.rel (0) target = $region41
  $region40: #{ac_forward.1} parent=0 // pred_region
    _
  $region41: #{ac_forward.1} parent=0 // pred_fallthru
    _
  // Predicated region
  $region42: #{ac_forward.1} parent=0 // pred_check
    _
  $region43: #{ac_forward.1} parent=0 // pred_check_branch
    %37 = sbr.rel (0) target = $region45
  $region44: #{ac_forward.1} parent=0 // pred_region
    _
  $region45: #{ac_forward.1} parent=0 // pred_fallthru
    _
  %v39 = vld [vmem:[%s0] sm:$0xff]
  %v40 = vld [vmem:[%s0 + $0x8] sm:$0xff]
  %v41 = vld [vmem:[%s0 + $0x10] sm:$0xff]
  %v42 = vld [vmem:[%s0 + $0x18] sm:$0xff]
  %v43 = vld [vmem:[%s0 + $0x20] sm:$0xff]
  %v44 = vld [vmem:[%s0 + $0x28] sm:$0xff]
  %v45 = vld [vmem:[%s0 + $0x30] sm:$0xff]
  %v46 = vld [vmem:[%s0 + $0x38] sm:$0xff]
  %v47 = vld [vmem:[%s0 + $0x40] sm:$0xff]
  %v48 = vld [vmem:[%s0 + $0x48] sm:$0xff]
  %v49 = vld [vmem:[%s0 + $0x50] sm:$0xff]
  %v50 = vld [vmem:[%s0 + $0x58] sm:$0xff]
  %v51 = vld [vmem:[%s0 + $0x60] sm:$0xff]
  %v52 = vld [vmem:[%s0 + $0x68] sm:$0xff]
  %v53 = vld [vmem:[%s0 + $0x70] sm:$0xff]
  %v54 = vld [vmem:[%s0 + $0x78] sm:$0xff]
  %v55 = vld [vmem:[%s0 + $0x80] sm:$0xff]
  %v56 = vld [vmem:[%s0 + $0x88] sm:$0xff]
  %v57 = vld [vmem:[%s0 + $0x90] sm:$0xff]
  %v58 = vld [vmem:[%s0 + $0x98] sm:$0xff]
  %v59 = vld [vmem:[%s0 + $0xa0] sm:$0xff]
  %v60 = vld [vmem:[%s0 + $0xa8] sm:$0xff]
  %v61 = vld [vmem:[%s0 + $0xb0] sm:$0xff]
  %v62 = vld [vmem:[%s0 + $0xb8] sm:$0xff]
  %v63 = vld [vmem:[%s0 + $0xc0] sm:$0xff]
  %v64 = vld [vmem:[%s0 + $0xc8] sm:$0xff]
  %v65 = vld [vmem:[%s0 + $0xd0] sm:$0xff]
  %v66 = vld [vmem:[%s0 + $0xd8] sm:$0xff]
  %v67 = vld [vmem:[%s0 + $0xe0] sm:$0xff]
  %v68 = vld [vmem:[%s0 + $0xe8] sm:$0xff]
  %v69 = vld [vmem:[%s0 + $0xf0] sm:$0xff]
  %v70 = vld [vmem:[%s0 + $0xf8] sm:$0xff]
  %v71 = vld [vmem:[%s0 + $0x100] sm:$0xff]
  %v72 = vld [vmem:[%s0 + $0x108] sm:$0xff]
  %v73 = vld [vmem:[%s0 + $0x110] sm:$0xff]
  %v74 = vld [vmem:[%s0 + $0x118] sm:$0xff]
  %v75 = vld [vmem:[%s0 + $0x120] sm:$0xff]
  %v76 = vld [vmem:[%s0 + $0x128] sm:$0xff]
  %v77 = vld [vmem:[%s0 + $0x130] sm:$0xff]
  %v78 = vld [vmem:[%s0 + $0x138] sm:$0xff]
  %v79 = vld [vmem:[%s1] sm:$0xff]
  %v80 = vld [vmem:[%s1 + $0x8] sm:$0xff]
  %v81 = vld [vmem:[%s1 + $0x10] sm:$0xff]
  %v82 = vld [vmem:[%s1 + $0x18] sm:$0xff]
  %v83 = vld [vmem:[%s1 + $0x20] sm:$0xff]
  %v84 = vld [vmem:[%s1 + $0x28] sm:$0xff]
  %v85 = vld [vmem:[%s1 + $0x30] sm:$0xff]
  %v86 = vld [vmem:[%s1 + $0x38] sm:$0xff]
  %v87 = vld [vmem:[%s1 + $0x40] sm:$0xff]
  %v88 = vld [vmem:[%s1 + $0x48] sm:$0xff]
  %v89 = vld [vmem:[%s1 + $0x50] sm:$0xff]
  %v90 = vld [vmem:[%s1 + $0x58] sm:$0xff]
  %v91 = vld [vmem:[%s1 + $0x60] sm:$0xff]
  %v92 = vld [vmem:[%s1 + $0x68] sm:$0xff]
  %v93 = vld [vmem:[%s1 + $0x70] sm:$0xff]
  %v94 = vld [vmem:[%s1 + $0x78] sm:$0xff]
  %v95 = vld [vmem:[%s1 + $0x80] sm:$0xff]
  %v96 = vld [vmem:[%s1 + $0x88] sm:$0xff]
  %v97 = vld [vmem:[%s1 + $0x90] sm:$0xff]
  %v98 = vld [vmem:[%s1 + $0x98] sm:$0xff]
  %v99 = vld [vmem:[%s1 + $0xa0] sm:$0xff]
  %v100 = vld [vmem:[%s1 + $0xa8] sm:$0xff]
  %v101 = vld [vmem:[%s1 + $0xb0] sm:$0xff]
  %v102 = vld [vmem:[%s1 + $0xb8] sm:$0xff]
  %v103 = vld [vmem:[%s1 + $0xc0] sm:$0xff]
  %v104 = vld [vmem:[%s1 + $0xc8] sm:$0xff]
  %v105 = vld [vmem:[%s1 + $0xd0] sm:$0xff]
  %v106 = vld [vmem:[%s1 + $0xd8] sm:$0xff]
  %v107 = vld [vmem:[%s1 + $0xe0] sm:$0xff]
  %v108 = vld [vmem:[%s1 + $0xe8] sm:$0xff]
  %v109 = vld [vmem:[%s1 + $0xf0] sm:$0xff]
  %v110 = vld [vmem:[%s1 + $0xf8] sm:$0xff]
  %v111 = vld [vmem:[%s1 + $0x100] sm:$0xff]
  %v112 = vld [vmem:[%s1 + $0x108] sm:$0xff]
  %v113 = vld [vmem:[%s1 + $0x110] sm:$0xff]
  %v114 = vld [vmem:[%s1 + $0x118] sm:$0xff]
  %v115 = vld [vmem:[%s1 + $0x120] sm:$0xff]
  %v116 = vld [vmem:[%s1 + $0x128] sm:$0xff]
  %v117 = vld [vmem:[%s1 + $0x130] sm:$0xff]
  %v118 = vld [vmem:[%s1 + $0x138] sm:$0xff]
  %v119 = vld [vmem:[%s1 + $0x140] sm:$0xff]
  %v120 = vld [vmem:[%s1 + $0x148] sm:$0xff]
  %v121 = vld [vmem:[%s1 + $0x150] sm:$0xff]
  %v122 = vld [vmem:[%s1 + $0x158] sm:$0xff]
  %v123 = vld [vmem:[%s1 + $0x160] sm:$0xff]
  %v124 = vld [vmem:[%s1 + $0x168] sm:$0xff]
  %v125 = vld [vmem:[%s1 + $0x170] sm:$0xff]
  %v126 = vld [vmem:[%s1 + $0x178] sm:$0xff]
  %v127 = vld [vmem:[%s1 + $0x180] sm:$0xff]
  %v128 = vld [vmem:[%s1 + $0x188] sm:$0xff]
  %v129 = vld [vmem:[%s1 + $0x190] sm:$0xff]
  %v130 = vld [vmem:[%s1 + $0x198] sm:$0xff]
  %v131 = vld [vmem:[%s1 + $0x1a0] sm:$0xff]
  %v132 = vld [vmem:[%s1 + $0x1a8] sm:$0xff]
  %v133 = vld [vmem:[%s1 + $0x1b0] sm:$0xff]
  %v134 = vld [vmem:[%s1 + $0x1b8] sm:$0xff]
  %v135 = vld [vmem:[%s1 + $0x1c0] sm:$0xff]
  %v136 = vld [vmem:[%s1 + $0x1c8] sm:$0xff]
  %v137 = vld [vmem:[%s1 + $0x1d0] sm:$0xff]
  %v138 = vld [vmem:[%s1 + $0x1d8] sm:$0xff]
  %v139 = vld [vmem:[%s1 + $0x1e0] sm:$0xff]
  %v140 = vld [vmem:[%s1 + $0x1e8] sm:$0xff]
  %v141 = vld [vmem:[%s1 + $0x1f0] sm:$0xff]
  %v142 = vld [vmem:[%s1 + $0x1f8] sm:$0xff]
  %v143 = vld [vmem:[%s1 + $0x200] sm:$0xff]
  %v144 = vld [vmem:[%s1 + $0x208] sm:$0xff]
  %v145 = vld [vmem:[%s1 + $0x210] sm:$0xff]
  %v146 = vld [vmem:[%s1 + $0x218] sm:$0xff]
  %v147 = vld [vmem:[%s1 + $0x220] sm:$0xff]
  %v148 = vld [vmem:[%s1 + $0x228] sm:$0xff]
  %v149 = vld [vmem:[%s1 + $0x230] sm:$0xff]
  %v150 = vld [vmem:[%s1 + $0x238] sm:$0xff]
  %v151 = vpack.c.bf16 %v44, %v39
  %v152 = vpack.c.bf16 %v45, %v40
  %v153 = vpack.c.bf16 %v46, %v41
  %v154 = vpack.c.bf16 %v47, %v42
  %v155 = vpack.c.bf16 %v48, %v43
  %v156 = vpack.c.bf16 %v54, %v49
  %v157 = vpack.c.bf16 %v55, %v50
  %v158 = vpack.c.bf16 %v56, %v51
  %v159 = vpack.c.bf16 %v57, %v52
  %v160 = vpack.c.bf16 %v58, %v53
  %v161 = vpack.c.bf16 %v64, %v59
  %v162 = vpack.c.bf16 %v65, %v60
  %v163 = vpack.c.bf16 %v66, %v61
  %v164 = vpack.c.bf16 %v67, %v62
  %v165 = vpack.c.bf16 %v68, %v63
  %v166 = vpack.c.bf16 %v74, %v69
  %v167 = vpack.c.bf16 %v75, %v70
  %v168 = vpack.c.bf16 %v76, %v71
  %v169 = vpack.c.bf16 %v77, %v72
  %v170 = vpack.c.bf16 %v78, %v73
  %s171 = scalar_lea.vmem %s0, 40
  %v172 = vld [vmem:[%s171] sm:$0xff]
  %v173 = vld [vmem:[%s171 + $0x8] sm:$0xff]
  %v174 = vld [vmem:[%s171 + $0x10] sm:$0xff]
  %v175 = vld [vmem:[%s171 + $0x18] sm:$0xff]
  %v176 = vld [vmem:[%s171 + $0x20] sm:$0xff]
  %v177 = vld [vmem:[%s171 + $0x28] sm:$0xff]
  %v178 = vld [vmem:[%s171 + $0x30] sm:$0xff]
  %v179 = vld [vmem:[%s171 + $0x38] sm:$0xff]
  %v180 = vld [vmem:[%s171 + $0x40] sm:$0xff]
  %v181 = vld [vmem:[%s171 + $0x48] sm:$0xff]
  %v182 = vld [vmem:[%s171 + $0x50] sm:$0xff]
  %v183 = vld [vmem:[%s171 + $0x58] sm:$0xff]
  %v184 = vld [vmem:[%s171 + $0x60] sm:$0xff]
  %v185 = vld [vmem:[%s171 + $0x68] sm:$0xff]
  %v186 = vld [vmem:[%s171 + $0x70] sm:$0xff]
  %v187 = vld [vmem:[%s171 + $0x78] sm:$0xff]
  %v188 = vld [vmem:[%s171 + $0x80] sm:$0xff]
  %v189 = vld [vmem:[%s171 + $0x88] sm:$0xff]
  %v190 = vld [vmem:[%s171 + $0x90] sm:$0xff]
  %v191 = vld [vmem:[%s171 + $0x98] sm:$0xff]
  %v192 = vld [vmem:[%s171 + $0xa0] sm:$0xff]
  %v193 = vld [vmem:[%s171 + $0xa8] sm:$0xff]
  %v194 = vld [vmem:[%s171 + $0xb0] sm:$0xff]
  %v195 = vld [vmem:[%s171 + $0xb8] sm:$0xff]
  %v196 = vld [vmem:[%s171 + $0xc0] sm:$0xff]
  %v197 = vld [vmem:[%s171 + $0xc8] sm:$0xff]
  %v198 = vld [vmem:[%s171 + $0xd0] sm:$0xff]
  %v199 = vld [vmem:[%s171 + $0xd8] sm:$0xff]
  %v200 = vld [vmem:[%s171 + $0xe0] sm:$0xff]
  %v201 = vld [vmem:[%s171 + $0xe8] sm:$0xff]
  %v202 = vld [vmem:[%s171 + $0xf0] sm:$0xff]
  %v203 = vld [vmem:[%s171 + $0xf8] sm:$0xff]
  %v204 = vld [vmem:[%s171 + $0x100] sm:$0xff]
  %v205 = vld [vmem:[%s171 + $0x108] sm:$0xff]
  %v206 = vld [vmem:[%s171 + $0x110] sm:$0xff]
  %v207 = vld [vmem:[%s171 + $0x118] sm:$0xff]
  %v208 = vld [vmem:[%s171 + $0x120] sm:$0xff]
  %v209 = vld [vmem:[%s171 + $0x128] sm:$0xff]
  %v210 = vld [vmem:[%s171 + $0x130] sm:$0xff]
  %v211 = vld [vmem:[%s171 + $0x138] sm:$0xff]
  %s212 = scalar_lea.vmem %s1, 576
  %v213 = vld [vmem:[%s212] sm:$0xff]
  %v214 = vld [vmem:[%s212 + $0x8] sm:$0xff]
  %v215 = vld [vmem:[%s212 + $0x10] sm:$0xff]
  %v216 = vld [vmem:[%s212 + $0x18] sm:$0xff]
  %v217 = vld [vmem:[%s212 + $0x20] sm:$0xff]
  %v218 = vld [vmem:[%s212 + $0x28] sm:$0xff]
  %v219 = vld [vmem:[%s212 + $0x30] sm:$0xff]
  %v220 = vld [vmem:[%s212 + $0x38] sm:$0xff]
  %v221 = vld [vmem:[%s212 + $0x40] sm:$0xff]
  %v222 = vld [vmem:[%s212 + $0x48] sm:$0xff]
  %v223 = vld [vmem:[%s212 + $0x50] sm:$0xff]
  %v224 = vld [vmem:[%s212 + $0x58] sm:$0xff]
  %v225 = vld [vmem:[%s212 + $0x60] sm:$0xff]
  %v226 = vld [vmem:[%s212 + $0x68] sm:$0xff]
  %v227 = vld [vmem:[%s212 + $0x70] sm:$0xff]
  %v228 = vld [vmem:[%s212 + $0x78] sm:$0xff]
  %v229 = vld [vmem:[%s212 + $0x80] sm:$0xff]
  %v230 = vld [vmem:[%s212 + $0x88] sm:$0xff]
  %v231 = vld [vmem:[%s212 + $0x90] sm:$0xff]
  %v232 = vld [vmem:[%s212 + $0x98] sm:$0xff]
  %v233 = vld [vmem:[%s212 + $0xa0] sm:$0xff]
  %v234 = vld [vmem:[%s212 + $0xa8] sm:$0xff]
  %v235 = vld [vmem:[%s212 + $0xb0] sm:$0xff]
  %v236 = vld [vmem:[%s212 + $0xb8] sm:$0xff]
  %v237 = vld [vmem:[%s212 + $0xc0] sm:$0xff]
  %v238 = vld [vmem:[%s212 + $0xc8] sm:$0xff]
  %v239 = vld [vmem:[%s212 + $0xd0] sm:$0xff]
  %v240 = vld [vmem:[%s212 + $0xd8] sm:$0xff]
  %v241 = vld [vmem:[%s212 + $0xe0] sm:$0xff]
  %v242 = vld [vmem:[%s212 + $0xe8] sm:$0xff]
  %v243 = vld [vmem:[%s212 + $0xf0] sm:$0xff]
  %v244 = vld [vmem:[%s212 + $0xf8] sm:$0xff]
  %v245 = vld [vmem:[%s212 + $0x100] sm:$0xff]
  %v246 = vld [vmem:[%s212 + $0x108] sm:$0xff]
  %v247 = vld [vmem:[%s212 + $0x110] sm:$0xff]
  %v248 = vld [vmem:[%s212 + $0x118] sm:$0xff]
  %v249 = vld [vmem:[%s212 + $0x120] sm:$0xff]
  %v250 = vld [vmem:[%s212 + $0x128] sm:$0xff]
  %v251 = vld [vmem:[%s212 + $0x130] sm:$0xff]
  %v252 = vld [vmem:[%s212 + $0x138] sm:$0xff]
  %v253 = vld [vmem:[%s212 + $0x140] sm:$0xff]
  %v254 = vld [vmem:[%s212 + $0x148] sm:$0xff]
  %v255 = vld [vmem:[%s212 + $0x150] sm:$0xff]
  %v256 = vld [vmem:[%s212 + $0x158] sm:$0xff]
  %v257 = vld [vmem:[%s212 + $0x160] sm:$0xff]
  %v258 = vld [vmem:[%s212 + $0x168] sm:$0xff]
  %v259 = vld [vmem:[%s212 + $0x170] sm:$0xff]
  %v260 = vld [vmem:[%s212 + $0x178] sm:$0xff]
  %v261 = vld [vmem:[%s212 + $0x180] sm:$0xff]
  %v262 = vld [vmem:[%s212 + $0x188] sm:$0xff]
  %v263 = vld [vmem:[%s212 + $0x190] sm:$0xff]
  %v264 = vld [vmem:[%s212 + $0x198] sm:$0xff]
  %v265 = vld [vmem:[%s212 + $0x1a0] sm:$0xff]
  %v266 = vld [vmem:[%s212 + $0x1a8] sm:$0xff]
  %v267 = vld [vmem:[%s212 + $0x1b0] sm:$0xff]
  %v268 = vld [vmem:[%s212 + $0x1b8] sm:$0xff]
  %v269 = vld [vmem:[%s212 + $0x1c0] sm:$0xff]
  %v270 = vld [vmem:[%s212 + $0x1c8] sm:$0xff]
  %v271 = vld [vmem:[%s212 + $0x1d0] sm:$0xff]
  %v272 = vld [vmem:[%s212 + $0x1d8] sm:$0xff]
  %v273 = vld [vmem:[%s212 + $0x1e0] sm:$0xff]
  %v274 = vld [vmem:[%s212 + $0x1e8] sm:$0xff]
  %v275 = vld [vmem:[%s212 + $0x1f0] sm:$0xff]
  %v276 = vld [vmem:[%s212 + $0x1f8] sm:$0xff]
  %v277 = vld [vmem:[%s212 + $0x200] sm:$0xff]
  %v278 = vld [vmem:[%s212 + $0x208] sm:$0xff]
  %v279 = vld [vmem:[%s212 + $0x210] sm:$0xff]
  %v280 = vld [vmem:[%s212 + $0x218] sm:$0xff]
  %v281 = vld [vmem:[%s212 + $0x220] sm:$0xff]
  %v282 = vld [vmem:[%s212 + $0x228] sm:$0xff]
  %v283 = vld [vmem:[%s212 + $0x230] sm:$0xff]
  %v284 = vld [vmem:[%s212 + $0x238] sm:$0xff]
  %v285 = vpack.c.bf16 %v177, %v172
  %v286 = vpack.c.bf16 %v178, %v173
  %v287 = vpack.c.bf16 %v179, %v174
  %v288 = vpack.c.bf16 %v180, %v175
  %v289 = vpack.c.bf16 %v181, %v176
  %v290 = vpack.c.bf16 %v187, %v182
  %v291 = vpack.c.bf16 %v188, %v183
  %v292 = vpack.c.bf16 %v189, %v184
  %v293 = vpack.c.bf16 %v190, %v185
  %v294 = vpack.c.bf16 %v191, %v186
  %v295 = vpack.c.bf16 %v197, %v192
  %v296 = vpack.c.bf16 %v198, %v193
  %v297 = vpack.c.bf16 %v199, %v194
  %v298 = vpack.c.bf16 %v200, %v195
  %v299 = vpack.c.bf16 %v201, %v196
  %v300 = vpack.c.bf16 %v207, %v202
  %v301 = vpack.c.bf16 %v208, %v203
  %v302 = vpack.c.bf16 %v209, %v204
  %v303 = vpack.c.bf16 %v210, %v205
  %v304 = vpack.c.bf16 %v211, %v206
  %v377 = vunpack.c.l.b16 %v213
  %v378 = vunpack.c.h.b16 %v213
  %v379 = vunpack.c.l.b16 %v214
  %v380 = vunpack.c.h.b16 %v214
  %v381 = vunpack.c.l.b16 %v215
  %v382 = vunpack.c.h.b16 %v215
  %v383 = vunpack.c.l.b16 %v216
  %v384 = vunpack.c.h.b16 %v216
  %v385 = vunpack.c.l.b16 %v217
  %v386 = vunpack.c.h.b16 %v217
  %v387 = vunpack.c.l.b16 %v218
  %v388 = vunpack.c.h.b16 %v218
  %v389 = vunpack.c.l.b16 %v219
  %v390 = vunpack.c.h.b16 %v219
  %v391 = vunpack.c.l.b16 %v220
  %v392 = vunpack.c.h.b16 %v220
  %v393 = vunpack.c.l.b16 %v221
  %v394 = vunpack.c.h.b16 %v221
  %v395 = vunpack.c.l.b16 %v222
  %v396 = vunpack.c.h.b16 %v222
  %v397 = vunpack.c.l.b16 %v223
  %v398 = vunpack.c.h.b16 %v223
  %v399 = vunpack.c.l.b16 %v224
  %v400 = vunpack.c.h.b16 %v224
  %v401 = vunpack.c.l.b16 %v225
  %v402 = vunpack.c.h.b16 %v225
  %v403 = vunpack.c.l.b16 %v226
  %v404 = vunpack.c.h.b16 %v226
  %v405 = vunpack.c.l.b16 %v227
  %v406 = vunpack.c.h.b16 %v227
  %v407 = vunpack.c.l.b16 %v228
  %v408 = vunpack.c.h.b16 %v228
  %v409 = vunpack.c.l.b16 %v229
  %v410 = vunpack.c.h.b16 %v229
  %v411 = vunpack.c.l.b16 %v230
  %v412 = vunpack.c.h.b16 %v230
  %v413 = vunpack.c.l.b16 %v231
  %v414 = vunpack.c.h.b16 %v231
  %v415 = vunpack.c.l.b16 %v232
  %v416 = vunpack.c.h.b16 %v232
  %v417 = vunpack.c.l.b16 %v233
  %v418 = vunpack.c.h.b16 %v233
  %v419 = vunpack.c.l.b16 %v234
  %v420 = vunpack.c.h.b16 %v234
  %v421 = vunpack.c.l.b16 %v235
  %v422 = vunpack.c.h.b16 %v235
  %v423 = vunpack.c.l.b16 %v236
  %v424 = vunpack.c.h.b16 %v236
  %v425 = vunpack.c.l.b16 %v237
  %v426 = vunpack.c.h.b16 %v237
  %v427 = vunpack.c.l.b16 %v238
  %v428 = vunpack.c.h.b16 %v238
  %v429 = vunpack.c.l.b16 %v239
  %v430 = vunpack.c.h.b16 %v239
  %v431 = vunpack.c.l.b16 %v240
  %v432 = vunpack.c.h.b16 %v240
  %v433 = vunpack.c.l.b16 %v241
  %v434 = vunpack.c.h.b16 %v241
  %v435 = vunpack.c.l.b16 %v242
  %v436 = vunpack.c.h.b16 %v242
  %v437 = vunpack.c.l.b16 %v243
  %v438 = vunpack.c.h.b16 %v243
  %v439 = vunpack.c.l.b16 %v244
  %v440 = vunpack.c.h.b16 %v244
  %v441 = vunpack.c.l.b16 %v245
  %v442 = vunpack.c.h.b16 %v245
  %v443 = vunpack.c.l.b16 %v246
  %v444 = vunpack.c.h.b16 %v246
  %v445 = vunpack.c.l.b16 %v247
  %v446 = vunpack.c.h.b16 %v247
  %v447 = vunpack.c.l.b16 %v248
  %v448 = vunpack.c.h.b16 %v248
  %v449 = vunpack.c.l.b16 %v249
  %v450 = vunpack.c.h.b16 %v249
  %v451 = vunpack.c.l.b16 %v250
  %v452 = vunpack.c.h.b16 %v250
  %v453 = vunpack.c.l.b16 %v251
  %v454 = vunpack.c.h.b16 %v251
  %v455 = vunpack.c.l.b16 %v252
  %v456 = vunpack.c.h.b16 %v252
  %v457 = vunpack.c.l.b16 %v253
  %v458 = vunpack.c.h.b16 %v253
  %v459 = vunpack.c.l.b16 %v254
  %v460 = vunpack.c.h.b16 %v254
  %v461 = vunpack.c.l.b16 %v255
  %v462 = vunpack.c.h.b16 %v255
  %v463 = vunpack.c.l.b16 %v256
  %v464 = vunpack.c.h.b16 %v256
  %v465 = vunpack.c.l.b16 %v257
  %v466 = vunpack.c.h.b16 %v257
  %v467 = vunpack.c.l.b16 %v258
  %v468 = vunpack.c.h.b16 %v258
  %v469 = vunpack.c.l.b16 %v259
  %v470 = vunpack.c.h.b16 %v259
  %v471 = vunpack.c.l.b16 %v260
  %v472 = vunpack.c.h.b16 %v260
  %v473 = vunpack.c.l.b16 %v261
  %v474 = vunpack.c.h.b16 %v261
  %v475 = vunpack.c.l.b16 %v262
  %v476 = vunpack.c.h.b16 %v262
  %v477 = vunpack.c.l.b16 %v263
  %v478 = vunpack.c.h.b16 %v263
  %v479 = vunpack.c.l.b16 %v264
  %v480 = vunpack.c.h.b16 %v264
  %v481 = vunpack.c.l.b16 %v265
  %v482 = vunpack.c.h.b16 %v265
  %v483 = vunpack.c.l.b16 %v266
  %v484 = vunpack.c.h.b16 %v266
  %v485 = vunpack.c.l.b16 %v267
  %v486 = vunpack.c.h.b16 %v267
  %v487 = vunpack.c.l.b16 %v268
  %v488 = vunpack.c.h.b16 %v268
  %v489 = vunpack.c.l.b16 %v269
  %v490 = vunpack.c.h.b16 %v269
  %v491 = vunpack.c.l.b16 %v270
  %v492 = vunpack.c.h.b16 %v270
  %v493 = vunpack.c.l.b16 %v271
  %v494 = vunpack.c.h.b16 %v271
  %v495 = vunpack.c.l.b16 %v272
  %v496 = vunpack.c.h.b16 %v272
  %v497 = vunpack.c.l.b16 %v273
  %v498 = vunpack.c.h.b16 %v273
  %v499 = vunpack.c.l.b16 %v274
  %v500 = vunpack.c.h.b16 %v274
  %v501 = vunpack.c.l.b16 %v275
  %v502 = vunpack.c.h.b16 %v275
  %v503 = vunpack.c.l.b16 %v276
  %v504 = vunpack.c.h.b16 %v276
  %v505 = vunpack.c.l.b16 %v277
  %v506 = vunpack.c.h.b16 %v277
  %v507 = vunpack.c.l.b16 %v278
  %v508 = vunpack.c.h.b16 %v278
  %v509 = vunpack.c.l.b16 %v279
  %v510 = vunpack.c.h.b16 %v279
  %v511 = vunpack.c.l.b16 %v280
  %v512 = vunpack.c.h.b16 %v280
  %v513 = vunpack.c.l.b16 %v281
  %v514 = vunpack.c.h.b16 %v281
  %v515 = vunpack.c.l.b16 %v282
  %v516 = vunpack.c.h.b16 %v282
  %v517 = vunpack.c.l.b16 %v283
  %v518 = vunpack.c.h.b16 %v283
  %v519 = vunpack.c.l.b16 %v284
  %v520 = vunpack.c.h.b16 %v284
  %v521 = vpack.c.b16 %v379, %v377
  %v522 = vpack.c.b16 %v380, %v378
  %v523 = vpack.c.b16 %v383, %v381
  %v524 = vpack.c.b16 %v384, %v382
  %v525 = vpack.c.b16 %v387, %v385
  %v526 = vpack.c.b16 %v388, %v386
  %v527 = vpack.c.b16 %v391, %v389
  %v528 = vpack.c.b16 %v392, %v390
  %v529 = vpack.c.b16 %v395, %v393
  %v530 = vpack.c.b16 %v396, %v394
  %v531 = vpack.c.b16 %v399, %v397
  %v532 = vpack.c.b16 %v400, %v398
  %v533 = vpack.c.b16 %v403, %v401
  %v534 = vpack.c.b16 %v404, %v402
  %v535 = vpack.c.b16 %v407, %v405
  %v536 = vpack.c.b16 %v408, %v406
  %v537 = vpack.c.b16 %v411, %v409
  %v538 = vpack.c.b16 %v412, %v410
  %v539 = vpack.c.b16 %v415, %v413
  %v540 = vpack.c.b16 %v416, %v414
  %v541 = vpack.c.b16 %v419, %v417
  %v542 = vpack.c.b16 %v420, %v418
  %v543 = vpack.c.b16 %v423, %v421
  %v544 = vpack.c.b16 %v424, %v422
  %v545 = vpack.c.b16 %v427, %v425
  %v546 = vpack.c.b16 %v428, %v426
  %v547 = vpack.c.b16 %v431, %v429
  %v548 = vpack.c.b16 %v432, %v430
  %v549 = vpack.c.b16 %v435, %v433
  %v550 = vpack.c.b16 %v436, %v434
  %v551 = vpack.c.b16 %v439, %v437
  %v552 = vpack.c.b16 %v440, %v438
  %v553 = vpack.c.b16 %v443, %v441
  %v554 = vpack.c.b16 %v444, %v442
  %v555 = vpack.c.b16 %v447, %v445
  %v556 = vpack.c.b16 %v448, %v446
  %v557 = vpack.c.b16 %v451, %v449
  %v558 = vpack.c.b16 %v452, %v450
  %v559 = vpack.c.b16 %v455, %v453
  %v560 = vpack.c.b16 %v456, %v454
  %v561 = vpack.c.b16 %v459, %v457
  %v562 = vpack.c.b16 %v460, %v458
  %v563 = vpack.c.b16 %v463, %v461
  %v564 = vpack.c.b16 %v464, %v462
  %v565 = vpack.c.b16 %v467, %v465
  %v566 = vpack.c.b16 %v468, %v466
  %v567 = vpack.c.b16 %v471, %v469
  %v568 = vpack.c.b16 %v472, %v470
  %v569 = vpack.c.b16 %v475, %v473
  %v570 = vpack.c.b16 %v476, %v474
  %v571 = vpack.c.b16 %v479, %v477
  %v572 = vpack.c.b16 %v480, %v478
  %v573 = vpack.c.b16 %v483, %v481
  %v574 = vpack.c.b16 %v484, %v482
  %v575 = vpack.c.b16 %v487, %v485
  %v576 = vpack.c.b16 %v488, %v486
  %v577 = vpack.c.b16 %v491, %v489
  %v578 = vpack.c.b16 %v492, %v490
  %v579 = vpack.c.b16 %v495, %v493
  %v580 = vpack.c.b16 %v496, %v494
  %v581 = vpack.c.b16 %v499, %v497
  %v582 = vpack.c.b16 %v500, %v498
  %v583 = vpack.c.b16 %v503, %v501
  %v584 = vpack.c.b16 %v504, %v502
  %v585 = vpack.c.b16 %v507, %v505
  %v586 = vpack.c.b16 %v508, %v506
  %v587 = vpack.c.b16 %v511, %v509
  %v588 = vpack.c.b16 %v512, %v510
  %v589 = vpack.c.b16 %v515, %v513
  %v590 = vpack.c.b16 %v516, %v514
  %v591 = vpack.c.b16 %v519, %v517
  %v592 = vpack.c.b16 %v520, %v518
  %vm665 = vcmask 523264
  %v667 = vsel %vm665, %v289, 0
  %v670 = vsel %vm665, %v294, 0
  %v673 = vsel %vm665, %v299, 0
  %v676 = vsel %vm665, %v304, 0
  %678 = vmatpush.bf16.msra.mxu0 %v535
  %679 = vmatpush.bf16.msra.mxu0 %v533
  %680 = vmatpush.bf16.msra.mxu0 %v531
  %681 = vmatpush.bf16.msra.mxu0 %v529
  %682 = vmatpush.bf16.msra.mxu0 %v527
  %683 = vmatpush.bf16.msra.mxu0 %v525
  %684 = vmatpush.bf16.msra.mxu0 %v523
  %685 = vmatpush.bf16.msra.mxu0 %v521
  %686 = vmatmul.bf16.gmra.mxu0 %v285
  %v687 = vpop.f32.mrf.mxu0
  %v688 = vadd.f32 0.0, %v687
  %v689 = vpop.f32.mrf.mxu0
  %v690 = vadd.f32 0.0, %v689
  %691 = vmatmul.bf16.gmra.mxu0 %v290
  %v692 = vpop.f32.mrf.mxu0
  %v693 = vadd.f32 0.0, %v692
  %v694 = vpop.f32.mrf.mxu0
  %v695 = vadd.f32 0.0, %v694
  %696 = vmatmul.bf16.gmra.mxu0 %v295
  %v697 = vpop.f32.mrf.mxu0
  %v698 = vadd.f32 0.0, %v697
  %v699 = vpop.f32.mrf.mxu0
  %v700 = vadd.f32 0.0, %v699
  %701 = vmatmul.bf16.gmra.mxu0 %v300
  %v702 = vpop.f32.mrf.mxu0
  %v703 = vadd.f32 0.0, %v702
  %v704 = vpop.f32.mrf.mxu0
  %v705 = vadd.f32 0.0, %v704
  %706 = vdwg.mxu0
  %707 = vmatpush.bf16.msra.mxu0 %v551
  %708 = vmatpush.bf16.msra.mxu0 %v549
  %709 = vmatpush.bf16.msra.mxu0 %v547
  %710 = vmatpush.bf16.msra.mxu0 %v545
  %711 = vmatpush.bf16.msra.mxu0 %v543
  %712 = vmatpush.bf16.msra.mxu0 %v541
  %713 = vmatpush.bf16.msra.mxu0 %v539
  %714 = vmatpush.bf16.msra.mxu0 %v537
  %715 = vmatmul.bf16.gmra.mxu0 %v286
  %v716 = vpop.f32.mrf.mxu0
  %v717 = vadd.f32 %v688, %v716
  %v718 = vpop.f32.mrf.mxu0
  %v719 = vadd.f32 %v690, %v718
  %720 = vmatmul.bf16.gmra.mxu0 %v291
  %v721 = vpop.f32.mrf.mxu0
  %v722 = vadd.f32 %v693, %v721
  %v723 = vpop.f32.mrf.mxu0
  %v724 = vadd.f32 %v695, %v723
  %725 = vmatmul.bf16.gmra.mxu0 %v296
  %v726 = vpop.f32.mrf.mxu0
  %v727 = vadd.f32 %v698, %v726
  %v728 = vpop.f32.mrf.mxu0
  %v729 = vadd.f32 %v700, %v728
  %730 = vmatmul.bf16.gmra.mxu0 %v301
  %v731 = vpop.f32.mrf.mxu0
  %v732 = vadd.f32 %v703, %v731
  %v733 = vpop.f32.mrf.mxu0
  %v734 = vadd.f32 %v705, %v733
  %735 = vdwg.mxu0
  %736 = vmatpush.bf16.msra.mxu0 %v567
  %737 = vmatpush.bf16.msra.mxu0 %v565
  %738 = vmatpush.bf16.msra.mxu0 %v563
  %739 = vmatpush.bf16.msra.mxu0 %v561
  %740 = vmatpush.bf16.msra.mxu0 %v559
  %741 = vmatpush.bf16.msra.mxu0 %v557
  %742 = vmatpush.bf16.msra.mxu0 %v555
  %743 = vmatpush.bf16.msra.mxu0 %v553
  %744 = vmatmul.bf16.gmra.mxu0 %v287
  %v745 = vpop.f32.mrf.mxu0
  %v746 = vadd.f32 %v717, %v745
  %v747 = vpop.f32.mrf.mxu0
  %v748 = vadd.f32 %v719, %v747
  %749 = vmatmul.bf16.gmra.mxu0 %v292
  %v750 = vpop.f32.mrf.mxu0
  %v751 = vadd.f32 %v722, %v750
  %v752 = vpop.f32.mrf.mxu0
  %v753 = vadd.f32 %v724, %v752
  %754 = vmatmul.bf16.gmra.mxu0 %v297
  %v755 = vpop.f32.mrf.mxu0
  %v756 = vadd.f32 %v727, %v755
  %v757 = vpop.f32.mrf.mxu0
  %v758 = vadd.f32 %v729, %v757
  %759 = vmatmul.bf16.gmra.mxu0 %v302
  %v760 = vpop.f32.mrf.mxu0
  %v761 = vadd.f32 %v732, %v760
  %v762 = vpop.f32.mrf.mxu0
  %v763 = vadd.f32 %v734, %v762
  %764 = vdwg.mxu0
  %765 = vmatpush.bf16.msra.mxu0 %v583
  %766 = vmatpush.bf16.msra.mxu0 %v581
  %767 = vmatpush.bf16.msra.mxu0 %v579
  %768 = vmatpush.bf16.msra.mxu0 %v577
  %769 = vmatpush.bf16.msra.mxu0 %v575
  %770 = vmatpush.bf16.msra.mxu0 %v573
  %771 = vmatpush.bf16.msra.mxu0 %v571
  %772 = vmatpush.bf16.msra.mxu0 %v569
  %773 = vmatmul.bf16.gmra.mxu0 %v288
  %v774 = vpop.f32.mrf.mxu0
  %v775 = vadd.f32 %v746, %v774
  %v776 = vpop.f32.mrf.mxu0
  %v777 = vadd.f32 %v748, %v776
  %778 = vmatmul.bf16.gmra.mxu0 %v293
  %v779 = vpop.f32.mrf.mxu0
  %v780 = vadd.f32 %v751, %v779
  %v781 = vpop.f32.mrf.mxu0
  %v782 = vadd.f32 %v753, %v781
  %783 = vmatmul.bf16.gmra.mxu0 %v298
  %v784 = vpop.f32.mrf.mxu0
  %v785 = vadd.f32 %v756, %v784
  %v786 = vpop.f32.mrf.mxu0
  %v787 = vadd.f32 %v758, %v786
  %788 = vmatmul.bf16.gmra.mxu0 %v303
  %v789 = vpop.f32.mrf.mxu0
  %v790 = vadd.f32 %v761, %v789
  %v791 = vpop.f32.mrf.mxu0
  %v792 = vadd.f32 %v763, %v791
  %793 = vdwg.mxu0
  %794 = vmatpush.bf16.msra.mxu0 0
  %795 = vmatpush.bf16.msra.mxu0 0
  %796 = vmatpush.bf16.msra.mxu0 0
  %797 = vmatpush.bf16.msra.mxu0 0
  %798 = vmatpush.bf16.msra.mxu0 %v591
  %799 = vmatpush.bf16.msra.mxu0 %v589
  %800 = vmatpush.bf16.msra.mxu0 %v587
  %801 = vmatpush.bf16.msra.mxu0 %v585
  %802 = vmatmul.bf16.gmra.mxu0 %v667
  %v803 = vpop.f32.mrf.mxu0
  %v804 = vadd.f32 %v775, %v803
  %v805 = vpop.f32.mrf.mxu0
  %v806 = vadd.f32 %v777, %v805
  %807 = vmatmul.bf16.gmra.mxu0 %v670
  %v808 = vpop.f32.mrf.mxu0
  %v809 = vadd.f32 %v780, %v808
  %v810 = vpop.f32.mrf.mxu0
  %v811 = vadd.f32 %v782, %v810
  %812 = vmatmul.bf16.gmra.mxu0 %v673
  %v813 = vpop.f32.mrf.mxu0
  %v814 = vadd.f32 %v785, %v813
  %v815 = vpop.f32.mrf.mxu0
  %v816 = vadd.f32 %v787, %v815
  %817 = vmatmul.bf16.gmra.mxu0 %v676
  %v818 = vpop.f32.mrf.mxu0
  %v819 = vadd.f32 %v790, %v818
  %v820 = vpop.f32.mrf.mxu0
  %v821 = vadd.f32 %v792, %v820
  %822 = vdwg.mxu0
  %823 = vmatpush.bf16.msra.mxu0 %v536
  %824 = vmatpush.bf16.msra.mxu0 %v534
  %825 = vmatpush.bf16.msra.mxu0 %v532
  %826 = vmatpush.bf16.msra.mxu0 %v530
  %827 = vmatpush.bf16.msra.mxu0 %v528
  %828 = vmatpush.bf16.msra.mxu0 %v526
  %829 = vmatpush.bf16.msra.mxu0 %v524
  %830 = vmatpush.bf16.msra.mxu0 %v522
  %831 = vmatmul.bf16.gmra.mxu0 %v285
  %v832 = vpop.f32.mrf.mxu0
  %v833 = vadd.f32 0.0, %v832
  %v834 = vpop.f32.mrf.mxu0
  %v835 = vadd.f32 0.0, %v834
  %836 = vmatmul.bf16.gmra.mxu0 %v290
  %v837 = vpop.f32.mrf.mxu0
  %v838 = vadd.f32 0.0, %v837
  %v839 = vpop.f32.mrf.mxu0
  %v840 = vadd.f32 0.0, %v839
  %841 = vmatmul.bf16.gmra.mxu0 %v295
  %v842 = vpop.f32.mrf.mxu0
  %v843 = vadd.f32 0.0, %v842
  %v844 = vpop.f32.mrf.mxu0
  %v845 = vadd.f32 0.0, %v844
  %846 = vmatmul.bf16.gmra.mxu0 %v300
  %v847 = vpop.f32.mrf.mxu0
  %v848 = vadd.f32 0.0, %v847
  %v849 = vpop.f32.mrf.mxu0
  %v850 = vadd.f32 0.0, %v849
  %851 = vdwg.mxu0
  %852 = vmatpush.bf16.msra.mxu0 %v552
  %853 = vmatpush.bf16.msra.mxu0 %v550
  %854 = vmatpush.bf16.msra.mxu0 %v548
  %855 = vmatpush.bf16.msra.mxu0 %v546
  %856 = vmatpush.bf16.msra.mxu0 %v544
  %857 = vmatpush.bf16.msra.mxu0 %v542
  %858 = vmatpush.bf16.msra.mxu0 %v540
  %859 = vmatpush.bf16.msra.mxu0 %v538
  %860 = vmatmul.bf16.gmra.mxu0 %v286
  %v861 = vpop.f32.mrf.mxu0
  %v862 = vadd.f32 %v833, %v861
  %v863 = vpop.f32.mrf.mxu0
  %v864 = vadd.f32 %v835, %v863
  %865 = vmatmul.bf16.gmra.mxu0 %v291
  %v866 = vpop.f32.mrf.mxu0
  %v867 = vadd.f32 %v838, %v866
  %v868 = vpop.f32.mrf.mxu0
  %v869 = vadd.f32 %v840, %v868
  %870 = vmatmul.bf16.gmra.mxu0 %v296
  %v871 = vpop.f32.mrf.mxu0
  %v872 = vadd.f32 %v843, %v871
  %v873 = vpop.f32.mrf.mxu0
  %v874 = vadd.f32 %v845, %v873
  %875 = vmatmul.bf16.gmra.mxu0 %v301
  %v876 = vpop.f32.mrf.mxu0
  %v877 = vadd.f32 %v848, %v876
  %v878 = vpop.f32.mrf.mxu0
  %v879 = vadd.f32 %v850, %v878
  %880 = vdwg.mxu0
  %881 = vmatpush.bf16.msra.mxu0 %v568
  %882 = vmatpush.bf16.msra.mxu0 %v566
  %883 = vmatpush.bf16.msra.mxu0 %v564
  %884 = vmatpush.bf16.msra.mxu0 %v562
  %885 = vmatpush.bf16.msra.mxu0 %v560
  %886 = vmatpush.bf16.msra.mxu0 %v558
  %887 = vmatpush.bf16.msra.mxu0 %v556
  %888 = vmatpush.bf16.msra.mxu0 %v554
  %889 = vmatmul.bf16.gmra.mxu0 %v287
  %v890 = vpop.f32.mrf.mxu0
  %v891 = vadd.f32 %v862, %v890
  %v892 = vpop.f32.mrf.mxu0
  %v893 = vadd.f32 %v864, %v892
  %894 = vmatmul.bf16.gmra.mxu0 %v292
  %v895 = vpop.f32.mrf.mxu0
  %v896 = vadd.f32 %v867, %v895
  %v897 = vpop.f32.mrf.mxu0
  %v898 = vadd.f32 %v869, %v897
  %899 = vmatmul.bf16.gmra.mxu0 %v297
  %v900 = vpop.f32.mrf.mxu0
  %v901 = vadd.f32 %v872, %v900
  %v902 = vpop.f32.mrf.mxu0
  %v903 = vadd.f32 %v874, %v902
  %904 = vmatmul.bf16.gmra.mxu0 %v302
  %v905 = vpop.f32.mrf.mxu0
  %v906 = vadd.f32 %v877, %v905
  %v907 = vpop.f32.mrf.mxu0
  %v908 = vadd.f32 %v879, %v907
  %909 = vdwg.mxu0
  %910 = vmatpush.bf16.msra.mxu0 %v584
  %911 = vmatpush.bf16.msra.mxu0 %v582
  %912 = vmatpush.bf16.msra.mxu0 %v580
  %913 = vmatpush.bf16.msra.mxu0 %v578
  %914 = vmatpush.bf16.msra.mxu0 %v576
  %915 = vmatpush.bf16.msra.mxu0 %v574
  %916 = vmatpush.bf16.msra.mxu0 %v572
  %917 = vmatpush.bf16.msra.mxu0 %v570
  %918 = vmatmul.bf16.gmra.mxu0 %v288
  %v919 = vpop.f32.mrf.mxu0
  %v920 = vadd.f32 %v891, %v919
  %v921 = vpop.f32.mrf.mxu0
  %v922 = vadd.f32 %v893, %v921
  %923 = vmatmul.bf16.gmra.mxu0 %v293
  %v924 = vpop.f32.mrf.mxu0
  %v925 = vadd.f32 %v896, %v924
  %v926 = vpop.f32.mrf.mxu0
  %v927 = vadd.f32 %v898, %v926
  %928 = vmatmul.bf16.gmra.mxu0 %v298
  %v929 = vpop.f32.mrf.mxu0
  %v930 = vadd.f32 %v901, %v929
  %v931 = vpop.f32.mrf.mxu0
  %v932 = vadd.f32 %v903, %v931
  %933 = vmatmul.bf16.gmra.mxu0 %v303
  %v934 = vpop.f32.mrf.mxu0
  %v935 = vadd.f32 %v906, %v934
  %v936 = vpop.f32.mrf.mxu0
  %v937 = vadd.f32 %v908, %v936
  %938 = vdwg.mxu0
  %939 = vmatpush.bf16.msra.mxu0 0
  %940 = vmatpush.bf16.msra.mxu0 0
  %941 = vmatpush.bf16.msra.mxu0 0
  %942 = vmatpush.bf16.msra.mxu0 0
  %943 = vmatpush.bf16.msra.mxu0 %v592
  %944 = vmatpush.bf16.msra.mxu0 %v590
  %945 = vmatpush.bf16.msra.mxu0 %v588
  %946 = vmatpush.bf16.msra.mxu0 %v586
  %947 = vmatmul.bf16.gmra.mxu0 %v667
  %v948 = vpop.f32.mrf.mxu0
  %v949 = vadd.f32 %v920, %v948
  %v950 = vpop.f32.mrf.mxu0
  %v951 = vadd.f32 %v922, %v950
  %952 = vmatmul.bf16.gmra.mxu0 %v670
  %v953 = vpop.f32.mrf.mxu0
  %v954 = vadd.f32 %v925, %v953
  %v955 = vpop.f32.mrf.mxu0
  %v956 = vadd.f32 %v927, %v955
  %957 = vmatmul.bf16.gmra.mxu0 %v673
  %v958 = vpop.f32.mrf.mxu0
  %v959 = vadd.f32 %v930, %v958
  %v960 = vpop.f32.mrf.mxu0
  %v961 = vadd.f32 %v932, %v960
  %962 = vmatmul.bf16.gmra.mxu0 %v676
  %v963 = vpop.f32.mrf.mxu0
  %v964 = vadd.f32 %v935, %v963
  %v965 = vpop.f32.mrf.mxu0
  %v966 = vadd.f32 %v937, %v965
  %967 = vdwg.mxu0
  %v1040 = vunpack.c.l.b16 %v79
  %v1041 = vunpack.c.h.b16 %v79
  %v1042 = vunpack.c.l.b16 %v80
  %v1043 = vunpack.c.h.b16 %v80
  %v1044 = vunpack.c.l.b16 %v81
  %v1045 = vunpack.c.h.b16 %v81
  %v1046 = vunpack.c.l.b16 %v82
  %v1047 = vunpack.c.h.b16 %v82
  %v1048 = vunpack.c.l.b16 %v83
  %v1049 = vunpack.c.h.b16 %v83
  %v1050 = vunpack.c.l.b16 %v84
  %v1051 = vunpack.c.h.b16 %v84
  %v1052 = vunpack.c.l.b16 %v85
  %v1053 = vunpack.c.h.b16 %v85
  %v1054 = vunpack.c.l.b16 %v86
  %v1055 = vunpack.c.h.b16 %v86
  %v1056 = vunpack.c.l.b16 %v87
  %v1057 = vunpack.c.h.b16 %v87
  %v1058 = vunpack.c.l.b16 %v88
  %v1059 = vunpack.c.h.b16 %v88
  %v1060 = vunpack.c.l.b16 %v89
  %v1061 = vunpack.c.h.b16 %v89
  %v1062 = vunpack.c.l.b16 %v90
  %v1063 = vunpack.c.h.b16 %v90
  %v1064 = vunpack.c.l.b16 %v91
  %v1065 = vunpack.c.h.b16 %v91
  %v1066 = vunpack.c.l.b16 %v92
  %v1067 = vunpack.c.h.b16 %v92
  %v1068 = vunpack.c.l.b16 %v93
  %v1069 = vunpack.c.h.b16 %v93
  %v1070 = vunpack.c.l.b16 %v94
  %v1071 = vunpack.c.h.b16 %v94
  %v1072 = vunpack.c.l.b16 %v95
  %v1073 = vunpack.c.h.b16 %v95
  %v1074 = vunpack.c.l.b16 %v96
  %v1075 = vunpack.c.h.b16 %v96
  %v1076 = vunpack.c.l.b16 %v97
  %v1077 = vunpack.c.h.b16 %v97
  %v1078 = vunpack.c.l.b16 %v98
  %v1079 = vunpack.c.h.b16 %v98
  %v1080 = vunpack.c.l.b16 %v99
  %v1081 = vunpack.c.h.b16 %v99
  %v1082 = vunpack.c.l.b16 %v100
  %v1083 = vunpack.c.h.b16 %v100
  %v1084 = vunpack.c.l.b16 %v101
  %v1085 = vunpack.c.h.b16 %v101
  %v1086 = vunpack.c.l.b16 %v102
  %v1087 = vunpack.c.h.b16 %v102
  %v1088 = vunpack.c.l.b16 %v103
  %v1089 = vunpack.c.h.b16 %v103
  %v1090 = vunpack.c.l.b16 %v104
  %v1091 = vunpack.c.h.b16 %v104
  %v1092 = vunpack.c.l.b16 %v105
  %v1093 = vunpack.c.h.b16 %v105
  %v1094 = vunpack.c.l.b16 %v106
  %v1095 = vunpack.c.h.b16 %v106
  %v1096 = vunpack.c.l.b16 %v107
  %v1097 = vunpack.c.h.b16 %v107
  %v1098 = vunpack.c.l.b16 %v108
  %v1099 = vunpack.c.h.b16 %v108
  %v1100 = vunpack.c.l.b16 %v109
  %v1101 = vunpack.c.h.b16 %v109
  %v1102 = vunpack.c.l.b16 %v110
  %v1103 = vunpack.c.h.b16 %v110
  %v1104 = vunpack.c.l.b16 %v111
  %v1105 = vunpack.c.h.b16 %v111
  %v1106 = vunpack.c.l.b16 %v112
  %v1107 = vunpack.c.h.b16 %v112
  %v1108 = vunpack.c.l.b16 %v113
  %v1109 = vunpack.c.h.b16 %v113
  %v1110 = vunpack.c.l.b16 %v114
  %v1111 = vunpack.c.h.b16 %v114
  %v1112 = vunpack.c.l.b16 %v115
  %v1113 = vunpack.c.h.b16 %v115
  %v1114 = vunpack.c.l.b16 %v116
  %v1115 = vunpack.c.h.b16 %v116
  %v1116 = vunpack.c.l.b16 %v117
  %v1117 = vunpack.c.h.b16 %v117
  %v1118 = vunpack.c.l.b16 %v118
  %v1119 = vunpack.c.h.b16 %v118
  %v1120 = vunpack.c.l.b16 %v119
  %v1121 = vunpack.c.h.b16 %v119
  %v1122 = vunpack.c.l.b16 %v120
  %v1123 = vunpack.c.h.b16 %v120
  %v1124 = vunpack.c.l.b16 %v121
  %v1125 = vunpack.c.h.b16 %v121
  %v1126 = vunpack.c.l.b16 %v122
  %v1127 = vunpack.c.h.b16 %v122
  %v1128 = vunpack.c.l.b16 %v123
  %v1129 = vunpack.c.h.b16 %v123
  %v1130 = vunpack.c.l.b16 %v124
  %v1131 = vunpack.c.h.b16 %v124
  %v1132 = vunpack.c.l.b16 %v125
  %v1133 = vunpack.c.h.b16 %v125
  %v1134 = vunpack.c.l.b16 %v126
  %v1135 = vunpack.c.h.b16 %v126
  %v1136 = vunpack.c.l.b16 %v127
  %v1137 = vunpack.c.h.b16 %v127
  %v1138 = vunpack.c.l.b16 %v128
  %v1139 = vunpack.c.h.b16 %v128
  %v1140 = vunpack.c.l.b16 %v129
  %v1141 = vunpack.c.h.b16 %v129
  %v1142 = vunpack.c.l.b16 %v130
  %v1143 = vunpack.c.h.b16 %v130
  %v1144 = vunpack.c.l.b16 %v131
  %v1145 = vunpack.c.h.b16 %v131
  %v1146 = vunpack.c.l.b16 %v132
  %v1147 = vunpack.c.h.b16 %v132
  %v1148 = vunpack.c.l.b16 %v133
  %v1149 = vunpack.c.h.b16 %v133
  %v1150 = vunpack.c.l.b16 %v134
  %v1151 = vunpack.c.h.b16 %v134
  %v1152 = vunpack.c.l.b16 %v135
  %v1153 = vunpack.c.h.b16 %v135
  %v1154 = vunpack.c.l.b16 %v136
  %v1155 = vunpack.c.h.b16 %v136
  %v1156 = vunpack.c.l.b16 %v137
  %v1157 = vunpack.c.h.b16 %v137
  %v1158 = vunpack.c.l.b16 %v138
  %v1159 = vunpack.c.h.b16 %v138
  %v1160 = vunpack.c.l.b16 %v139
  %v1161 = vunpack.c.h.b16 %v139
  %v1162 = vunpack.c.l.b16 %v140
  %v1163 = vunpack.c.h.b16 %v140
  %v1164 = vunpack.c.l.b16 %v141
  %v1165 = vunpack.c.h.b16 %v141
  %v1166 = vunpack.c.l.b16 %v142
  %v1167 = vunpack.c.h.b16 %v142
  %v1168 = vunpack.c.l.b16 %v143
  %v1169 = vunpack.c.h.b16 %v143
  %v1170 = vunpack.c.l.b16 %v144
  %v1171 = vunpack.c.h.b16 %v144
  %v1172 = vunpack.c.l.b16 %v145
  %v1173 = vunpack.c.h.b16 %v145
  %v1174 = vunpack.c.l.b16 %v146
  %v1175 = vunpack.c.h.b16 %v146
  %v1176 = vunpack.c.l.b16 %v147
  %v1177 = vunpack.c.h.b16 %v147
  %v1178 = vunpack.c.l.b16 %v148
  %v1179 = vunpack.c.h.b16 %v148
  %v1180 = vunpack.c.l.b16 %v149
  %v1181 = vunpack.c.h.b16 %v149
  %v1182 = vunpack.c.l.b16 %v150
  %v1183 = vunpack.c.h.b16 %v150
  %v1184 = vpack.c.b16 %v1042, %v1040
  %v1185 = vpack.c.b16 %v1043, %v1041
  %v1186 = vpack.c.b16 %v1046, %v1044
  %v1187 = vpack.c.b16 %v1047, %v1045
  %v1188 = vpack.c.b16 %v1050, %v1048
  %v1189 = vpack.c.b16 %v1051, %v1049
  %v1190 = vpack.c.b16 %v1054, %v1052
  %v1191 = vpack.c.b16 %v1055, %v1053
  %v1192 = vpack.c.b16 %v1058, %v1056
  %v1193 = vpack.c.b16 %v1059, %v1057
  %v1194 = vpack.c.b16 %v1062, %v1060
  %v1195 = vpack.c.b16 %v1063, %v1061
  %v1196 = vpack.c.b16 %v1066, %v1064
  %v1197 = vpack.c.b16 %v1067, %v1065
  %v1198 = vpack.c.b16 %v1070, %v1068
  %v1199 = vpack.c.b16 %v1071, %v1069
  %v1200 = vpack.c.b16 %v1074, %v1072
  %v1201 = vpack.c.b16 %v1075, %v1073
  %v1202 = vpack.c.b16 %v1078, %v1076
  %v1203 = vpack.c.b16 %v1079, %v1077
  %v1204 = vpack.c.b16 %v1082, %v1080
  %v1205 = vpack.c.b16 %v1083, %v1081
  %v1206 = vpack.c.b16 %v1086, %v1084
  %v1207 = vpack.c.b16 %v1087, %v1085
  %v1208 = vpack.c.b16 %v1090, %v1088
  %v1209 = vpack.c.b16 %v1091, %v1089
  %v1210 = vpack.c.b16 %v1094, %v1092
  %v1211 = vpack.c.b16 %v1095, %v1093
  %v1212 = vpack.c.b16 %v1098, %v1096
  %v1213 = vpack.c.b16 %v1099, %v1097
  %v1214 = vpack.c.b16 %v1102, %v1100
  %v1215 = vpack.c.b16 %v1103, %v1101
  %v1216 = vpack.c.b16 %v1106, %v1104
  %v1217 = vpack.c.b16 %v1107, %v1105
  %v1218 = vpack.c.b16 %v1110, %v1108
  %v1219 = vpack.c.b16 %v1111, %v1109
  %v1220 = vpack.c.b16 %v1114, %v1112
  %v1221 = vpack.c.b16 %v1115, %v1113
  %v1222 = vpack.c.b16 %v1118, %v1116
  %v1223 = vpack.c.b16 %v1119, %v1117
  %v1224 = vpack.c.b16 %v1122, %v1120
  %v1225 = vpack.c.b16 %v1123, %v1121
  %v1226 = vpack.c.b16 %v1126, %v1124
  %v1227 = vpack.c.b16 %v1127, %v1125
  %v1228 = vpack.c.b16 %v1130, %v1128
  %v1229 = vpack.c.b16 %v1131, %v1129
  %v1230 = vpack.c.b16 %v1134, %v1132
  %v1231 = vpack.c.b16 %v1135, %v1133
  %v1232 = vpack.c.b16 %v1138, %v1136
  %v1233 = vpack.c.b16 %v1139, %v1137
  %v1234 = vpack.c.b16 %v1142, %v1140
  %v1235 = vpack.c.b16 %v1143, %v1141
  %v1236 = vpack.c.b16 %v1146, %v1144
  %v1237 = vpack.c.b16 %v1147, %v1145
  %v1238 = vpack.c.b16 %v1150, %v1148
  %v1239 = vpack.c.b16 %v1151, %v1149
  %v1240 = vpack.c.b16 %v1154, %v1152
  %v1241 = vpack.c.b16 %v1155, %v1153
  %v1242 = vpack.c.b16 %v1158, %v1156
  %v1243 = vpack.c.b16 %v1159, %v1157
  %v1244 = vpack.c.b16 %v1162, %v1160
  %v1245 = vpack.c.b16 %v1163, %v1161
  %v1246 = vpack.c.b16 %v1166, %v1164
  %v1247 = vpack.c.b16 %v1167, %v1165
  %v1248 = vpack.c.b16 %v1170, %v1168
  %v1249 = vpack.c.b16 %v1171, %v1169
  %v1250 = vpack.c.b16 %v1174, %v1172
  %v1251 = vpack.c.b16 %v1175, %v1173
  %v1252 = vpack.c.b16 %v1178, %v1176
  %v1253 = vpack.c.b16 %v1179, %v1177
  %v1254 = vpack.c.b16 %v1182, %v1180
  %v1255 = vpack.c.b16 %v1183, %v1181
  %v1329 = vsel %vm665, %v155, 0
  %v1332 = vsel %vm665, %v160, 0
  %v1335 = vsel %vm665, %v165, 0
  %v1338 = vsel %vm665, %v170, 0
  %1340 = vmatpush.bf16.msra.mxu0 %v1198
  %1341 = vmatpush.bf16.msra.mxu0 %v1196
  %1342 = vmatpush.bf16.msra.mxu0 %v1194
  %1343 = vmatpush.bf16.msra.mxu0 %v1192
  %1344 = vmatpush.bf16.msra.mxu0 %v1190
  %1345 = vmatpush.bf16.msra.mxu0 %v1188
  %1346 = vmatpush.bf16.msra.mxu0 %v1186
  %1347 = vmatpush.bf16.msra.mxu0 %v1184
  %1348 = vmatmul.bf16.gmra.mxu0 %v151
  %v1349 = vpop.f32.mrf.mxu0
  %v1350 = vadd.f32 %v804, %v1349
  %v1351 = vpop.f32.mrf.mxu0
  %v1352 = vadd.f32 %v806, %v1351
  %1353 = vmatmul.bf16.gmra.mxu0 %v156
  %v1354 = vpop.f32.mrf.mxu0
  %v1355 = vadd.f32 %v809, %v1354
  %v1356 = vpop.f32.mrf.mxu0
  %v1357 = vadd.f32 %v811, %v1356
  %1358 = vmatmul.bf16.gmra.mxu0 %v161
  %v1359 = vpop.f32.mrf.mxu0
  %v1360 = vadd.f32 %v814, %v1359
  %v1361 = vpop.f32.mrf.mxu0
  %v1362 = vadd.f32 %v816, %v1361
  %1363 = vmatmul.bf16.gmra.mxu0 %v166
  %v1364 = vpop.f32.mrf.mxu0
  %v1365 = vadd.f32 %v819, %v1364
  %v1366 = vpop.f32.mrf.mxu0
  %v1367 = vadd.f32 %v821, %v1366
  %1368 = vdwg.mxu0
  %1369 = vmatpush.bf16.msra.mxu0 %v1214
  %1370 = vmatpush.bf16.msra.mxu0 %v1212
  %1371 = vmatpush.bf16.msra.mxu0 %v1210
  %1372 = vmatpush.bf16.msra.mxu0 %v1208
  %1373 = vmatpush.bf16.msra.mxu0 %v1206
  %1374 = vmatpush.bf16.msra.mxu0 %v1204
  %1375 = vmatpush.bf16.msra.mxu0 %v1202
  %1376 = vmatpush.bf16.msra.mxu0 %v1200
  %1377 = vmatmul.bf16.gmra.mxu0 %v152
  %v1378 = vpop.f32.mrf.mxu0
  %v1379 = vadd.f32 %v1350, %v1378
  %v1380 = vpop.f32.mrf.mxu0
  %v1381 = vadd.f32 %v1352, %v1380
  %1382 = vmatmul.bf16.gmra.mxu0 %v157
  %v1383 = vpop.f32.mrf.mxu0
  %v1384 = vadd.f32 %v1355, %v1383
  %v1385 = vpop.f32.mrf.mxu0
  %v1386 = vadd.f32 %v1357, %v1385
  %1387 = vmatmul.bf16.gmra.mxu0 %v162
  %v1388 = vpop.f32.mrf.mxu0
  %v1389 = vadd.f32 %v1360, %v1388
  %v1390 = vpop.f32.mrf.mxu0
  %v1391 = vadd.f32 %v1362, %v1390
  %1392 = vmatmul.bf16.gmra.mxu0 %v167
  %v1393 = vpop.f32.mrf.mxu0
  %v1394 = vadd.f32 %v1365, %v1393
  %v1395 = vpop.f32.mrf.mxu0
  %v1396 = vadd.f32 %v1367, %v1395
  %1397 = vdwg.mxu0
  %1398 = vmatpush.bf16.msra.mxu0 %v1230
  %1399 = vmatpush.bf16.msra.mxu0 %v1228
  %1400 = vmatpush.bf16.msra.mxu0 %v1226
  %1401 = vmatpush.bf16.msra.mxu0 %v1224
  %1402 = vmatpush.bf16.msra.mxu0 %v1222
  %1403 = vmatpush.bf16.msra.mxu0 %v1220
  %1404 = vmatpush.bf16.msra.mxu0 %v1218
  %1405 = vmatpush.bf16.msra.mxu0 %v1216
  %1406 = vmatmul.bf16.gmra.mxu0 %v153
  %v1407 = vpop.f32.mrf.mxu0
  %v1408 = vadd.f32 %v1379, %v1407
  %v1409 = vpop.f32.mrf.mxu0
  %v1410 = vadd.f32 %v1381, %v1409
  %1411 = vmatmul.bf16.gmra.mxu0 %v158
  %v1412 = vpop.f32.mrf.mxu0
  %v1413 = vadd.f32 %v1384, %v1412
  %v1414 = vpop.f32.mrf.mxu0
  %v1415 = vadd.f32 %v1386, %v1414
  %1416 = vmatmul.bf16.gmra.mxu0 %v163
  %v1417 = vpop.f32.mrf.mxu0
  %v1418 = vadd.f32 %v1389, %v1417
  %v1419 = vpop.f32.mrf.mxu0
  %v1420 = vadd.f32 %v1391, %v1419
  %1421 = vmatmul.bf16.gmra.mxu0 %v168
  %v1422 = vpop.f32.mrf.mxu0
  %v1423 = vadd.f32 %v1394, %v1422
  %v1424 = vpop.f32.mrf.mxu0
  %v1425 = vadd.f32 %v1396, %v1424
  %1426 = vdwg.mxu0
  %1427 = vmatpush.bf16.msra.mxu0 %v1246
  %1428 = vmatpush.bf16.msra.mxu0 %v1244
  %1429 = vmatpush.bf16.msra.mxu0 %v1242
  %1430 = vmatpush.bf16.msra.mxu0 %v1240
  %1431 = vmatpush.bf16.msra.mxu0 %v1238
  %1432 = vmatpush.bf16.msra.mxu0 %v1236
  %1433 = vmatpush.bf16.msra.mxu0 %v1234
  %1434 = vmatpush.bf16.msra.mxu0 %v1232
  %1435 = vmatmul.bf16.gmra.mxu0 %v154
  %v1436 = vpop.f32.mrf.mxu0
  %v1437 = vadd.f32 %v1408, %v1436
  %v1438 = vpop.f32.mrf.mxu0
  %v1439 = vadd.f32 %v1410, %v1438
  %1440 = vmatmul.bf16.gmra.mxu0 %v159
  %v1441 = vpop.f32.mrf.mxu0
  %v1442 = vadd.f32 %v1413, %v1441
  %v1443 = vpop.f32.mrf.mxu0
  %v1444 = vadd.f32 %v1415, %v1443
  %1445 = vmatmul.bf16.gmra.mxu0 %v164
  %v1446 = vpop.f32.mrf.mxu0
  %v1447 = vadd.f32 %v1418, %v1446
  %v1448 = vpop.f32.mrf.mxu0
  %v1449 = vadd.f32 %v1420, %v1448
  %1450 = vmatmul.bf16.gmra.mxu0 %v169
  %v1451 = vpop.f32.mrf.mxu0
  %v1452 = vadd.f32 %v1423, %v1451
  %v1453 = vpop.f32.mrf.mxu0
  %v1454 = vadd.f32 %v1425, %v1453
  %1455 = vdwg.mxu0
  %1456 = vmatpush.bf16.msra.mxu0 0
  %1457 = vmatpush.bf16.msra.mxu0 0
  %1458 = vmatpush.bf16.msra.mxu0 0
  %1459 = vmatpush.bf16.msra.mxu0 0
  %1460 = vmatpush.bf16.msra.mxu0 %v1254
  %1461 = vmatpush.bf16.msra.mxu0 %v1252
  %1462 = vmatpush.bf16.msra.mxu0 %v1250
  %1463 = vmatpush.bf16.msra.mxu0 %v1248
  %1464 = vmatmul.bf16.gmra.mxu0 %v1329
  %v1465 = vpop.f32.mrf.mxu0
  %v1466 = vadd.f32 %v1437, %v1465
  %v1467 = vpop.f32.mrf.mxu0
  %v1468 = vadd.f32 %v1439, %v1467
  %1469 = vmatmul.bf16.gmra.mxu0 %v1332
  %v1470 = vpop.f32.mrf.mxu0
  %v1471 = vadd.f32 %v1442, %v1470
  %v1472 = vpop.f32.mrf.mxu0
  %v1473 = vadd.f32 %v1444, %v1472
  %1474 = vmatmul.bf16.gmra.mxu0 %v1335
  %v1475 = vpop.f32.mrf.mxu0
  %v1476 = vadd.f32 %v1447, %v1475
  %v1477 = vpop.f32.mrf.mxu0
  %v1478 = vadd.f32 %v1449, %v1477
  %1479 = vmatmul.bf16.gmra.mxu0 %v1338
  %v1480 = vpop.f32.mrf.mxu0
  %v1481 = vadd.f32 %v1452, %v1480
  %v1482 = vpop.f32.mrf.mxu0
  %v1483 = vadd.f32 %v1454, %v1482
  %1484 = vdwg.mxu0
  %1485 = vmatpush.bf16.msra.mxu0 %v1199
  %1486 = vmatpush.bf16.msra.mxu0 %v1197
  %1487 = vmatpush.bf16.msra.mxu0 %v1195
  %1488 = vmatpush.bf16.msra.mxu0 %v1193
  %1489 = vmatpush.bf16.msra.mxu0 %v1191
  %1490 = vmatpush.bf16.msra.mxu0 %v1189
  %1491 = vmatpush.bf16.msra.mxu0 %v1187
  %1492 = vmatpush.bf16.msra.mxu0 %v1185
  %1493 = vmatmul.bf16.gmra.mxu0 %v151
  %v1494 = vpop.f32.mrf.mxu0
  %v1495 = vadd.f32 %v949, %v1494
  %v1496 = vpop.f32.mrf.mxu0
  %v1497 = vadd.f32 %v951, %v1496
  %1498 = vmatmul.bf16.gmra.mxu0 %v156
  %v1499 = vpop.f32.mrf.mxu0
  %v1500 = vadd.f32 %v954, %v1499
  %v1501 = vpop.f32.mrf.mxu0
  %v1502 = vadd.f32 %v956, %v1501
  %1503 = vmatmul.bf16.gmra.mxu0 %v161
  %v1504 = vpop.f32.mrf.mxu0
  %v1505 = vadd.f32 %v959, %v1504
  %v1506 = vpop.f32.mrf.mxu0
  %v1507 = vadd.f32 %v961, %v1506
  %1508 = vmatmul.bf16.gmra.mxu0 %v166
  %v1509 = vpop.f32.mrf.mxu0
  %v1510 = vadd.f32 %v964, %v1509
  %v1511 = vpop.f32.mrf.mxu0
  %v1512 = vadd.f32 %v966, %v1511
  %1513 = vdwg.mxu0
  %1514 = vmatpush.bf16.msra.mxu0 %v1215
  %1515 = vmatpush.bf16.msra.mxu0 %v1213
  %1516 = vmatpush.bf16.msra.mxu0 %v1211
  %1517 = vmatpush.bf16.msra.mxu0 %v1209
  %1518 = vmatpush.bf16.msra.mxu0 %v1207
  %1519 = vmatpush.bf16.msra.mxu0 %v1205
  %1520 = vmatpush.bf16.msra.mxu0 %v1203
  %1521 = vmatpush.bf16.msra.mxu0 %v1201
  %1522 = vmatmul.bf16.gmra.mxu0 %v152
  %v1523 = vpop.f32.mrf.mxu0
  %v1524 = vadd.f32 %v1495, %v1523
  %v1525 = vpop.f32.mrf.mxu0
  %v1526 = vadd.f32 %v1497, %v1525
  %1527 = vmatmul.bf16.gmra.mxu0 %v157
  %v1528 = vpop.f32.mrf.mxu0
  %v1529 = vadd.f32 %v1500, %v1528
  %v1530 = vpop.f32.mrf.mxu0
  %v1531 = vadd.f32 %v1502, %v1530
  %1532 = vmatmul.bf16.gmra.mxu0 %v162
  %v1533 = vpop.f32.mrf.mxu0
  %v1534 = vadd.f32 %v1505, %v1533
  %v1535 = vpop.f32.mrf.mxu0
  %v1536 = vadd.f32 %v1507, %v1535
  %1537 = vmatmul.bf16.gmra.mxu0 %v167
  %v1538 = vpop.f32.mrf.mxu0
  %v1539 = vadd.f32 %v1510, %v1538
  %v1540 = vpop.f32.mrf.mxu0
  %v1541 = vadd.f32 %v1512, %v1540
  %1542 = vdwg.mxu0
  %1543 = vmatpush.bf16.msra.mxu0 %v1231
  %1544 = vmatpush.bf16.msra.mxu0 %v1229
  %1545 = vmatpush.bf16.msra.mxu0 %v1227
  %1546 = vmatpush.bf16.msra.mxu0 %v1225
  %1547 = vmatpush.bf16.msra.mxu0 %v1223
  %1548 = vmatpush.bf16.msra.mxu0 %v1221
  %1549 = vmatpush.bf16.msra.mxu0 %v1219
  %1550 = vmatpush.bf16.msra.mxu0 %v1217
  %1551 = vmatmul.bf16.gmra.mxu0 %v153
  %v1552 = vpop.f32.mrf.mxu0
  %v1553 = vadd.f32 %v1524, %v1552
  %v1554 = vpop.f32.mrf.mxu0
  %v1555 = vadd.f32 %v1526, %v1554
  %1556 = vmatmul.bf16.gmra.mxu0 %v158
  %v1557 = vpop.f32.mrf.mxu0
  %v1558 = vadd.f32 %v1529, %v1557
  %v1559 = vpop.f32.mrf.mxu0
  %v1560 = vadd.f32 %v1531, %v1559
  %1561 = vmatmul.bf16.gmra.mxu0 %v163
  %v1562 = vpop.f32.mrf.mxu0
  %v1563 = vadd.f32 %v1534, %v1562
  %v1564 = vpop.f32.mrf.mxu0
  %v1565 = vadd.f32 %v1536, %v1564
  %1566 = vmatmul.bf16.gmra.mxu0 %v168
  %v1567 = vpop.f32.mrf.mxu0
  %v1568 = vadd.f32 %v1539, %v1567
  %v1569 = vpop.f32.mrf.mxu0
  %v1570 = vadd.f32 %v1541, %v1569
  %1571 = vdwg.mxu0
  %1572 = vmatpush.bf16.msra.mxu0 %v1247
  %1573 = vmatpush.bf16.msra.mxu0 %v1245
  %1574 = vmatpush.bf16.msra.mxu0 %v1243
  %1575 = vmatpush.bf16.msra.mxu0 %v1241
  %1576 = vmatpush.bf16.msra.mxu0 %v1239
  %1577 = vmatpush.bf16.msra.mxu0 %v1237
  %1578 = vmatpush.bf16.msra.mxu0 %v1235
  %1579 = vmatpush.bf16.msra.mxu0 %v1233
  %1580 = vmatmul.bf16.gmra.mxu0 %v154
  %v1581 = vpop.f32.mrf.mxu0
  %v1582 = vadd.f32 %v1553, %v1581
  %v1583 = vpop.f32.mrf.mxu0
  %v1584 = vadd.f32 %v1555, %v1583
  %1585 = vmatmul.bf16.gmra.mxu0 %v159
  %v1586 = vpop.f32.mrf.mxu0
  %v1587 = vadd.f32 %v1558, %v1586
  %v1588 = vpop.f32.mrf.mxu0
  %v1589 = vadd.f32 %v1560, %v1588
  %1590 = vmatmul.bf16.gmra.mxu0 %v164
  %v1591 = vpop.f32.mrf.mxu0
  %v1592 = vadd.f32 %v1563, %v1591
  %v1593 = vpop.f32.mrf.mxu0
  %v1594 = vadd.f32 %v1565, %v1593
  %1595 = vmatmul.bf16.gmra.mxu0 %v169
  %v1596 = vpop.f32.mrf.mxu0
  %v1597 = vadd.f32 %v1568, %v1596
  %v1598 = vpop.f32.mrf.mxu0
  %v1599 = vadd.f32 %v1570, %v1598
  %1600 = vdwg.mxu0
  %1601 = vmatpush.bf16.msra.mxu0 0
  %1602 = vmatpush.bf16.msra.mxu0 0
  %1603 = vmatpush.bf16.msra.mxu0 0
  %1604 = vmatpush.bf16.msra.mxu0 0
  %1605 = vmatpush.bf16.msra.mxu0 %v1255
  %1606 = vmatpush.bf16.msra.mxu0 %v1253
  %1607 = vmatpush.bf16.msra.mxu0 %v1251
  %1608 = vmatpush.bf16.msra.mxu0 %v1249
  %1609 = vmatmul.bf16.gmra.mxu0 %v1329
  %v1610 = vpop.f32.mrf.mxu0
  %v1611 = vadd.f32 %v1582, %v1610
  %v1612 = vpop.f32.mrf.mxu0
  %v1613 = vadd.f32 %v1584, %v1612
  %1614 = vmatmul.bf16.gmra.mxu0 %v1332
  %v1615 = vpop.f32.mrf.mxu0
  %v1616 = vadd.f32 %v1587, %v1615
  %v1617 = vpop.f32.mrf.mxu0
  %v1618 = vadd.f32 %v1589, %v1617
  %1619 = vmatmul.bf16.gmra.mxu0 %v1335
  %v1620 = vpop.f32.mrf.mxu0
  %v1621 = vadd.f32 %v1592, %v1620
  %v1622 = vpop.f32.mrf.mxu0
  %v1623 = vadd.f32 %v1594, %v1622
  %1624 = vmatmul.bf16.gmra.mxu0 %v1338
  %v1625 = vpop.f32.mrf.mxu0
  %v1626 = vadd.f32 %v1597, %v1625
  %v1627 = vpop.f32.mrf.mxu0
  %v1628 = vadd.f32 %v1599, %v1627
  %1629 = vdwg.mxu0
  %v1630 = vld [vmem:[%s2] sm:$0x3]
  %v1632 = vperm.slane %v1630, 0
  %v1633 = vperm.slane %v1630, 1
  %v1636 = vadd.f32 %v1466, %v1632
  %v1637 = vadd.f32 %v1611, %v1633
  %v1638 = vadd.f32 %v1468, %v1632
  %v1639 = vadd.f32 %v1613, %v1633
  %v1640 = vadd.f32 %v1471, %v1632
  %v1641 = vadd.f32 %v1616, %v1633
  %v1642 = vadd.f32 %v1473, %v1632
  %v1643 = vadd.f32 %v1618, %v1633
  %v1644 = vadd.f32 %v1476, %v1632
  %v1645 = vadd.f32 %v1621, %v1633
  %v1646 = vadd.f32 %v1478, %v1632
  %v1647 = vadd.f32 %v1623, %v1633
  %v1648 = vadd.f32 %v1481, %v1632
  %v1649 = vadd.f32 %v1626, %v1633
  %v1650 = vadd.f32 %v1483, %v1632
  %v1651 = vadd.f32 %v1628, %v1633
  %v1652 = vmax.f32 %v1636, 0.0
  %v1653 = vmax.f32 %v1637, 0.0
  %v1654 = vmax.f32 %v1638, 0.0
  %v1655 = vmax.f32 %v1639, 0.0
  %v1656 = vmax.f32 %v1640, 0.0
  %v1657 = vmax.f32 %v1641, 0.0
  %v1658 = vmax.f32 %v1642, 0.0
  %v1659 = vmax.f32 %v1643, 0.0
  %v1660 = vmax.f32 %v1644, 0.0
  %v1661 = vmax.f32 %v1645, 0.0
  %v1662 = vmax.f32 %v1646, 0.0
  %v1663 = vmax.f32 %v1647, 0.0
  %v1664 = vmax.f32 %v1648, 0.0
  %v1665 = vmax.f32 %v1649, 0.0
  %v1666 = vmax.f32 %v1650, 0.0
  %v1667 = vmax.f32 %v1651, 0.0
  %1668 = vst [vmem:[#allocation2] sm:$0xff] %v1652
  %1669 = vst [vmem:[#allocation2 + $0x8] sm:$0xff] %v1653
  %1670 = vst [vmem:[#allocation2 + $0x10] sm:$0xff] %v1654
  %1671 = vst [vmem:[#allocation2 + $0x18] sm:$0xff] %v1655
  %1672 = vst [vmem:[#allocation2 + $0x20] sm:$0xff] %v1656
  %1673 = vst [vmem:[#allocation2 + $0x28] sm:$0xff] %v1657
  %1674 = vst [vmem:[#allocation2 + $0x30] sm:$0xff] %v1658
  %1675 = vst [vmem:[#allocation2 + $0x38] sm:$0xff] %v1659
  %1676 = vst [vmem:[#allocation2 + $0x40] sm:$0xff] %v1660
  %1677 = vst [vmem:[#allocation2 + $0x48] sm:$0xff] %v1661
  %1678 = vst [vmem:[#allocation2 + $0x50] sm:$0xff] %v1662
  %1679 = vst [vmem:[#allocation2 + $0x58] sm:$0xff] %v1663
  %1680 = vst [vmem:[#allocation2 + $0x60] sm:$0xff] %v1664
  %1681 = vst [vmem:[#allocation2 + $0x68] sm:$0xff] %v1665
  %1682 = vst [vmem:[#allocation2 + $0x70] sm:$0xff] %v1666
  %1683 = vst [vmem:[#allocation2 + $0x78] sm:$0xff] %v1667
  %v1684 = vld [vmem:[#allocation2] sm:$0xff]
  %v1685 = vld [vmem:[#allocation2 + $0x8] sm:$0xff]
  %s1686 = scalar_lea.vmem [#allocation2], 32
  %v1687 = vld [vmem:[%s1686] sm:$0xff]
  %v1688 = vld [vmem:[%s1686 + $0x8] sm:$0xff]
  %s1689 = scalar_lea.vmem [#allocation2], 64
  %v1690 = vld [vmem:[%s1689] sm:$0xff]
  %v1691 = vld [vmem:[%s1689 + $0x8] sm:$0xff]
  %v1692 = vld [vmem:[%s3] sm:$0xff]
  %v1693 = vld [vmem:[%s3 + $0x8] sm:$0xff]
  %v1694 = vld [vmem:[%s3 + $0x10] sm:$0xff]
  %v1695 = vld [vmem:[%s3 + $0x18] sm:$0xff]
  %v1696 = vld [vmem:[%s3 + $0x20] sm:$0xff]
  %v1697 = vld [vmem:[%s3 + $0x28] sm:$0xff]
  %v1698 = vld [vmem:[%s3 + $0x30] sm:$0xff]
  %v1699 = vld [vmem:[%s3 + $0x38] sm:$0xff]
  %v1700 = vld [vmem:[%s3 + $0x40] sm:$0xff]
  %v1701 = vld [vmem:[%s3 + $0x48] sm:$0xff]
  %v1702 = vld [vmem:[%s3 + $0x50] sm:$0xff]
  %v1703 = vld [vmem:[%s3 + $0x58] sm:$0xff]
  %v1704 = vld [vmem:[%s3 + $0x60] sm:$0xff]
  %v1705 = vld [vmem:[%s3 + $0x68] sm:$0xff]
  %v1706 = vld [vmem:[%s3 + $0x70] sm:$0xff]
  %v1707 = vld [vmem:[%s3 + $0x78] sm:$0xff]
  %v1708 = vld [vmem:[%s3 + $0x80] sm:$0xff]
  %v1709 = vld [vmem:[%s3 + $0x88] sm:$0xff]
  %v1710 = vld [vmem:[%s3 + $0x90] sm:$0xff]
  %v1711 = vld [vmem:[%s3 + $0x98] sm:$0xff]
  %v1712 = vld [vmem:[%s3 + $0xa0] sm:$0xff]
  %v1713 = vld [vmem:[%s3 + $0xa8] sm:$0xff]
  %v1714 = vld [vmem:[%s3 + $0xb0] sm:$0xff]
  %v1715 = vld [vmem:[%s3 + $0xb8] sm:$0xff]
  %v1716 = vld [vmem:[%s3 + $0xc0] sm:$0xff]
  %v1717 = vld [vmem:[%s3 + $0xc8] sm:$0xff]
  %v1718 = vld [vmem:[%s3 + $0xd0] sm:$0xff]
  %v1719 = vld [vmem:[%s3 + $0xd8] sm:$0xff]
  %v1720 = vld [vmem:[%s3 + $0xe0] sm:$0xff]
  %v1721 = vld [vmem:[%s3 + $0xe8] sm:$0xff]
  %v1722 = vld [vmem:[%s3 + $0xf0] sm:$0xff]
  %v1723 = vld [vmem:[%s3 + $0xf8] sm:$0xff]
  %v1724 = vpack.c.bf16 %v1687, %v1684
  %v1725 = vpack.c.bf16 %v1688, %v1685
  %v1726 = vpack.c.bf16 %v1690, %v1690
  %v1727 = vpack.c.bf16 %v1691, %v1691
  %s1728 = scalar_lea.vmem [#allocation2], 16
  %v1729 = vld [vmem:[%s1728] sm:$0xff]
  %v1730 = vld [vmem:[%s1728 + $0x8] sm:$0xff]
  %s1731 = scalar_lea.vmem [#allocation2], 48
  %v1732 = vld [vmem:[%s1731] sm:$0xff]
  %v1733 = vld [vmem:[%s1731 + $0x8] sm:$0xff]
  %s1734 = scalar_lea.vmem [#allocation2], 80
  %v1735 = vld [vmem:[%s1734] sm:$0xff]
  %v1736 = vld [vmem:[%s1734 + $0x8] sm:$0xff]
  %s1737 = scalar_lea.vmem %s3, 256
  %v1738 = vld [vmem:[%s1737] sm:$0xff]
  %v1739 = vld [vmem:[%s1737 + $0x8] sm:$0xff]
  %v1740 = vld [vmem:[%s1737 + $0x10] sm:$0xff]
  %v1741 = vld [vmem:[%s1737 + $0x18] sm:$0xff]
  %v1742 = vld [vmem:[%s1737 + $0x20] sm:$0xff]
  %v1743 = vld [vmem:[%s1737 + $0x28] sm:$0xff]
  %v1744 = vld [vmem:[%s1737 + $0x30] sm:$0xff]
  %v1745 = vld [vmem:[%s1737 + $0x38] sm:$0xff]
  %v1746 = vld [vmem:[%s1737 + $0x40] sm:$0xff]
  %v1747 = vld [vmem:[%s1737 + $0x48] sm:$0xff]
  %v1748 = vld [vmem:[%s1737 + $0x50] sm:$0xff]
  %v1749 = vld [vmem:[%s1737 + $0x58] sm:$0xff]
  %v1750 = vld [vmem:[%s1737 + $0x60] sm:$0xff]
  %v1751 = vld [vmem:[%s1737 + $0x68] sm:$0xff]
  %v1752 = vld [vmem:[%s1737 + $0x70] sm:$0xff]
  %v1753 = vld [vmem:[%s1737 + $0x78] sm:$0xff]
  %v1754 = vld [vmem:[%s1737 + $0x80] sm:$0xff]
  %v1755 = vld [vmem:[%s1737 + $0x88] sm:$0xff]
  %v1756 = vld [vmem:[%s1737 + $0x90] sm:$0xff]
  %v1757 = vld [vmem:[%s1737 + $0x98] sm:$0xff]
  %v1758 = vld [vmem:[%s1737 + $0xa0] sm:$0xff]
  %v1759 = vld [vmem:[%s1737 + $0xa8] sm:$0xff]
  %v1760 = vld [vmem:[%s1737 + $0xb0] sm:$0xff]
  %v1761 = vld [vmem:[%s1737 + $0xb8] sm:$0xff]
  %v1762 = vld [vmem:[%s1737 + $0xc0] sm:$0xff]
  %v1763 = vld [vmem:[%s1737 + $0xc8] sm:$0xff]
  %v1764 = vld [vmem:[%s1737 + $0xd0] sm:$0xff]
  %v1765 = vld [vmem:[%s1737 + $0xd8] sm:$0xff]
  %v1766 = vld [vmem:[%s1737 + $0xe0] sm:$0xff]
  %v1767 = vld [vmem:[%s1737 + $0xe8] sm:$0xff]
  %v1768 = vld [vmem:[%s1737 + $0xf0] sm:$0xff]
  %v1769 = vld [vmem:[%s1737 + $0xf8] sm:$0xff]
  %v1770 = vpack.c.bf16 %v1732, %v1729
  %v1771 = vpack.c.bf16 %v1733, %v1730
  %v1772 = vpack.c.bf16 %v1735, %v1735
  %v1773 = vpack.c.bf16 %v1736, %v1736
  %v1806 = vunpack.c.l.b16 %v1738
  %v1807 = vunpack.c.h.b16 %v1738
  %v1808 = vunpack.c.l.b16 %v1739
  %v1809 = vunpack.c.h.b16 %v1739
  %v1810 = vunpack.c.l.b16 %v1740
  %v1811 = vunpack.c.h.b16 %v1740
  %v1812 = vunpack.c.l.b16 %v1741
  %v1813 = vunpack.c.h.b16 %v1741
  %v1814 = vunpack.c.l.b16 %v1742
  %v1815 = vunpack.c.h.b16 %v1742
  %v1816 = vunpack.c.l.b16 %v1743
  %v1817 = vunpack.c.h.b16 %v1743
  %v1818 = vunpack.c.l.b16 %v1744
  %v1819 = vunpack.c.h.b16 %v1744
  %v1820 = vunpack.c.l.b16 %v1745
  %v1821 = vunpack.c.h.b16 %v1745
  %v1822 = vunpack.c.l.b16 %v1746
  %v1823 = vunpack.c.h.b16 %v1746
  %v1824 = vunpack.c.l.b16 %v1747
  %v1825 = vunpack.c.h.b16 %v1747
  %v1826 = vunpack.c.l.b16 %v1748
  %v1827 = vunpack.c.h.b16 %v1748
  %v1828 = vunpack.c.l.b16 %v1749
  %v1829 = vunpack.c.h.b16 %v1749
  %v1830 = vunpack.c.l.b16 %v1750
  %v1831 = vunpack.c.h.b16 %v1750
  %v1832 = vunpack.c.l.b16 %v1751
  %v1833 = vunpack.c.h.b16 %v1751
  %v1834 = vunpack.c.l.b16 %v1752
  %v1835 = vunpack.c.h.b16 %v1752
  %v1836 = vunpack.c.l.b16 %v1753
  %v1837 = vunpack.c.h.b16 %v1753
  %v1838 = vunpack.c.l.b16 %v1754
  %v1839 = vunpack.c.h.b16 %v1754
  %v1840 = vunpack.c.l.b16 %v1755
  %v1841 = vunpack.c.h.b16 %v1755
  %v1842 = vunpack.c.l.b16 %v1756
  %v1843 = vunpack.c.h.b16 %v1756
  %v1844 = vunpack.c.l.b16 %v1757
  %v1845 = vunpack.c.h.b16 %v1757
  %v1846 = vunpack.c.l.b16 %v1758
  %v1847 = vunpack.c.h.b16 %v1758
  %v1848 = vunpack.c.l.b16 %v1759
  %v1849 = vunpack.c.h.b16 %v1759
  %v1850 = vunpack.c.l.b16 %v1760
  %v1851 = vunpack.c.h.b16 %v1760
  %v1852 = vunpack.c.l.b16 %v1761
  %v1853 = vunpack.c.h.b16 %v1761
  %v1854 = vunpack.c.l.b16 %v1762
  %v1855 = vunpack.c.h.b16 %v1762
  %v1856 = vunpack.c.l.b16 %v1763
  %v1857 = vunpack.c.h.b16 %v1763
  %v1858 = vunpack.c.l.b16 %v1764
  %v1859 = vunpack.c.h.b16 %v1764
  %v1860 = vunpack.c.l.b16 %v1765
  %v1861 = vunpack.c.h.b16 %v1765
  %v1862 = vunpack.c.l.b16 %v1766
  %v1863 = vunpack.c.h.b16 %v1766
  %v1864 = vunpack.c.l.b16 %v1767
  %v1865 = vunpack.c.h.b16 %v1767
  %v1866 = vunpack.c.l.b16 %v1768
  %v1867 = vunpack.c.h.b16 %v1768
  %v1868 = vunpack.c.l.b16 %v1769
  %v1869 = vunpack.c.h.b16 %v1769
  %v1870 = vpack.c.b16 %v1808, %v1806
  %v1871 = vpack.c.b16 %v1809, %v1807
  %v1872 = vpack.c.b16 %v1812, %v1810
  %v1873 = vpack.c.b16 %v1813, %v1811
  %v1874 = vpack.c.b16 %v1816, %v1814
  %v1875 = vpack.c.b16 %v1817, %v1815
  %v1876 = vpack.c.b16 %v1820, %v1818
  %v1877 = vpack.c.b16 %v1821, %v1819
  %v1878 = vpack.c.b16 %v1824, %v1822
  %v1879 = vpack.c.b16 %v1825, %v1823
  %v1880 = vpack.c.b16 %v1828, %v1826
  %v1881 = vpack.c.b16 %v1829, %v1827
  %v1882 = vpack.c.b16 %v1832, %v1830
  %v1883 = vpack.c.b16 %v1833, %v1831
  %v1884 = vpack.c.b16 %v1836, %v1834
  %v1885 = vpack.c.b16 %v1837, %v1835
  %v1886 = vpack.c.b16 %v1840, %v1838
  %v1887 = vpack.c.b16 %v1841, %v1839
  %v1888 = vpack.c.b16 %v1844, %v1842
  %v1889 = vpack.c.b16 %v1845, %v1843
  %v1890 = vpack.c.b16 %v1848, %v1846
  %v1891 = vpack.c.b16 %v1849, %v1847
  %v1892 = vpack.c.b16 %v1852, %v1850
  %v1893 = vpack.c.b16 %v1853, %v1851
  %v1894 = vpack.c.b16 %v1856, %v1854
  %v1895 = vpack.c.b16 %v1857, %v1855
  %v1896 = vpack.c.b16 %v1860, %v1858
  %v1897 = vpack.c.b16 %v1861, %v1859
  %v1898 = vpack.c.b16 %v1864, %v1862
  %v1899 = vpack.c.b16 %v1865, %v1863
  %v1900 = vpack.c.b16 %v1868, %v1866
  %v1901 = vpack.c.b16 %v1869, %v1867
  %1934 = vmatpush.bf16.msra.mxu0 %v1884
  %1935 = vmatpush.bf16.msra.mxu0 %v1882
  %1936 = vmatpush.bf16.msra.mxu0 %v1880
  %1937 = vmatpush.bf16.msra.mxu0 %v1878
  %1938 = vmatpush.bf16.msra.mxu0 %v1876
  %1939 = vmatpush.bf16.msra.mxu0 %v1874
  %1940 = vmatpush.bf16.msra.mxu0 %v1872
  %1941 = vmatpush.bf16.msra.mxu0 %v1870
  %1942 = vmatmul.bf16.gmra.mxu0 %v1770
  %v1943 = vpop.f32.mrf.mxu0
  %v1944 = vadd.f32 0.0, %v1943
  %v1945 = vpop.f32.mrf.mxu0
  %v1946 = vadd.f32 0.0, %v1945
  %1947 = vmatmul.bf16.gmra.mxu0 %v1772
  %v1948 = vpop.f32.mrf.mxu0
  %v1949 = vadd.f32 0.0, %v1948
  %v1950 = vpop.f32.mrf.mxu0
  %1951 = vdwg.mxu0
  %1952 = vmatpush.bf16.msra.mxu0 %v1900
  %1953 = vmatpush.bf16.msra.mxu0 %v1898
  %1954 = vmatpush.bf16.msra.mxu0 %v1896
  %1955 = vmatpush.bf16.msra.mxu0 %v1894
  %1956 = vmatpush.bf16.msra.mxu0 %v1892
  %1957 = vmatpush.bf16.msra.mxu0 %v1890
  %1958 = vmatpush.bf16.msra.mxu0 %v1888
  %1959 = vmatpush.bf16.msra.mxu0 %v1886
  %1960 = vmatmul.bf16.gmra.mxu0 %v1771
  %v1961 = vpop.f32.mrf.mxu0
  %v1962 = vadd.f32 %v1944, %v1961
  %v1963 = vpop.f32.mrf.mxu0
  %v1964 = vadd.f32 %v1946, %v1963
  %1965 = vmatmul.bf16.gmra.mxu0 %v1773
  %v1966 = vpop.f32.mrf.mxu0
  %v1967 = vadd.f32 %v1949, %v1966
  %v1968 = vpop.f32.mrf.mxu0
  %1969 = vdwg.mxu0
  %1970 = vmatpush.bf16.msra.mxu0 %v1885
  %1971 = vmatpush.bf16.msra.mxu0 %v1883
  %1972 = vmatpush.bf16.msra.mxu0 %v1881
  %1973 = vmatpush.bf16.msra.mxu0 %v1879
  %1974 = vmatpush.bf16.msra.mxu0 %v1877
  %1975 = vmatpush.bf16.msra.mxu0 %v1875
  %1976 = vmatpush.bf16.msra.mxu0 %v1873
  %1977 = vmatpush.bf16.msra.mxu0 %v1871
  %1978 = vmatmul.bf16.gmra.mxu0 %v1770
  %v1979 = vpop.f32.mrf.mxu0
  %v1980 = vadd.f32 0.0, %v1979
  %v1981 = vpop.f32.mrf.mxu0
  %v1982 = vadd.f32 0.0, %v1981
  %1983 = vmatmul.bf16.gmra.mxu0 %v1772
  %v1984 = vpop.f32.mrf.mxu0
  %v1985 = vadd.f32 0.0, %v1984
  %v1986 = vpop.f32.mrf.mxu0
  %1987 = vdwg.mxu0
  %1988 = vmatpush.bf16.msra.mxu0 %v1901
  %1989 = vmatpush.bf16.msra.mxu0 %v1899
  %1990 = vmatpush.bf16.msra.mxu0 %v1897
  %1991 = vmatpush.bf16.msra.mxu0 %v1895
  %1992 = vmatpush.bf16.msra.mxu0 %v1893
  %1993 = vmatpush.bf16.msra.mxu0 %v1891
  %1994 = vmatpush.bf16.msra.mxu0 %v1889
  %1995 = vmatpush.bf16.msra.mxu0 %v1887
  %1996 = vmatmul.bf16.gmra.mxu0 %v1771
  %v1997 = vpop.f32.mrf.mxu0
  %v1998 = vadd.f32 %v1980, %v1997
  %v1999 = vpop.f32.mrf.mxu0
  %v2000 = vadd.f32 %v1982, %v1999
  %2001 = vmatmul.bf16.gmra.mxu0 %v1773
  %v2002 = vpop.f32.mrf.mxu0
  %v2003 = vadd.f32 %v1985, %v2002
  %v2004 = vpop.f32.mrf.mxu0
  %2005 = vdwg.mxu0
  %v2038 = vunpack.c.l.b16 %v1692
  %v2039 = vunpack.c.h.b16 %v1692
  %v2040 = vunpack.c.l.b16 %v1693
  %v2041 = vunpack.c.h.b16 %v1693
  %v2042 = vunpack.c.l.b16 %v1694
  %v2043 = vunpack.c.h.b16 %v1694
  %v2044 = vunpack.c.l.b16 %v1695
  %v2045 = vunpack.c.h.b16 %v1695
  %v2046 = vunpack.c.l.b16 %v1696
  %v2047 = vunpack.c.h.b16 %v1696
  %v2048 = vunpack.c.l.b16 %v1697
  %v2049 = vunpack.c.h.b16 %v1697
  %v2050 = vunpack.c.l.b16 %v1698
  %v2051 = vunpack.c.h.b16 %v1698
  %v2052 = vunpack.c.l.b16 %v1699
  %v2053 = vunpack.c.h.b16 %v1699
  %v2054 = vunpack.c.l.b16 %v1700
  %v2055 = vunpack.c.h.b16 %v1700
  %v2056 = vunpack.c.l.b16 %v1701
  %v2057 = vunpack.c.h.b16 %v1701
  %v2058 = vunpack.c.l.b16 %v1702
  %v2059 = vunpack.c.h.b16 %v1702
  %v2060 = vunpack.c.l.b16 %v1703
  %v2061 = vunpack.c.h.b16 %v1703
  %v2062 = vunpack.c.l.b16 %v1704
  %v2063 = vunpack.c.h.b16 %v1704
  %v2064 = vunpack.c.l.b16 %v1705
  %v2065 = vunpack.c.h.b16 %v1705
  %v2066 = vunpack.c.l.b16 %v1706
  %v2067 = vunpack.c.h.b16 %v1706
  %v2068 = vunpack.c.l.b16 %v1707
  %v2069 = vunpack.c.h.b16 %v1707
  %v2070 = vunpack.c.l.b16 %v1708
  %v2071 = vunpack.c.h.b16 %v1708
  %v2072 = vunpack.c.l.b16 %v1709
  %v2073 = vunpack.c.h.b16 %v1709
  %v2074 = vunpack.c.l.b16 %v1710
  %v2075 = vunpack.c.h.b16 %v1710
  %v2076 = vunpack.c.l.b16 %v1711
  %v2077 = vunpack.c.h.b16 %v1711
  %v2078 = vunpack.c.l.b16 %v1712
  %v2079 = vunpack.c.h.b16 %v1712
  %v2080 = vunpack.c.l.b16 %v1713
  %v2081 = vunpack.c.h.b16 %v1713
  %v2082 = vunpack.c.l.b16 %v1714
  %v2083 = vunpack.c.h.b16 %v1714
  %v2084 = vunpack.c.l.b16 %v1715
  %v2085 = vunpack.c.h.b16 %v1715
  %v2086 = vunpack.c.l.b16 %v1716
  %v2087 = vunpack.c.h.b16 %v1716
  %v2088 = vunpack.c.l.b16 %v1717
  %v2089 = vunpack.c.h.b16 %v1717
  %v2090 = vunpack.c.l.b16 %v1718
  %v2091 = vunpack.c.h.b16 %v1718
  %v2092 = vunpack.c.l.b16 %v1719
  %v2093 = vunpack.c.h.b16 %v1719
  %v2094 = vunpack.c.l.b16 %v1720
  %v2095 = vunpack.c.h.b16 %v1720
  %v2096 = vunpack.c.l.b16 %v1721
  %v2097 = vunpack.c.h.b16 %v1721
  %v2098 = vunpack.c.l.b16 %v1722
  %v2099 = vunpack.c.h.b16 %v1722
  %v2100 = vunpack.c.l.b16 %v1723
  %v2101 = vunpack.c.h.b16 %v1723
  %v2102 = vpack.c.b16 %v2040, %v2038
  %v2103 = vpack.c.b16 %v2041, %v2039
  %v2104 = vpack.c.b16 %v2044, %v2042
  %v2105 = vpack.c.b16 %v2045, %v2043
  %v2106 = vpack.c.b16 %v2048, %v2046
  %v2107 = vpack.c.b16 %v2049, %v2047
  %v2108 = vpack.c.b16 %v2052, %v2050
  %v2109 = vpack.c.b16 %v2053, %v2051
  %v2110 = vpack.c.b16 %v2056, %v2054
  %v2111 = vpack.c.b16 %v2057, %v2055
  %v2112 = vpack.c.b16 %v2060, %v2058
  %v2113 = vpack.c.b16 %v2061, %v2059
  %v2114 = vpack.c.b16 %v2064, %v2062
  %v2115 = vpack.c.b16 %v2065, %v2063
  %v2116 = vpack.c.b16 %v2068, %v2066
  %v2117 = vpack.c.b16 %v2069, %v2067
  %v2118 = vpack.c.b16 %v2072, %v2070
  %v2119 = vpack.c.b16 %v2073, %v2071
  %v2120 = vpack.c.b16 %v2076, %v2074
  %v2121 = vpack.c.b16 %v2077, %v2075
  %v2122 = vpack.c.b16 %v2080, %v2078
  %v2123 = vpack.c.b16 %v2081, %v2079
  %v2124 = vpack.c.b16 %v2084, %v2082
  %v2125 = vpack.c.b16 %v2085, %v2083
  %v2126 = vpack.c.b16 %v2088, %v2086
  %v2127 = vpack.c.b16 %v2089, %v2087
  %v2128 = vpack.c.b16 %v2092, %v2090
  %v2129 = vpack.c.b16 %v2093, %v2091
  %v2130 = vpack.c.b16 %v2096, %v2094
  %v2131 = vpack.c.b16 %v2097, %v2095
  %v2132 = vpack.c.b16 %v2100, %v2098
  %v2133 = vpack.c.b16 %v2101, %v2099
  %2166 = vmatpush.bf16.msra.mxu0 %v2116
  %2167 = vmatpush.bf16.msra.mxu0 %v2114
  %2168 = vmatpush.bf16.msra.mxu0 %v2112
  %2169 = vmatpush.bf16.msra.mxu0 %v2110
  %2170 = vmatpush.bf16.msra.mxu0 %v2108
  %2171 = vmatpush.bf16.msra.mxu0 %v2106
  %2172 = vmatpush.bf16.msra.mxu0 %v2104
  %2173 = vmatpush.bf16.msra.mxu0 %v2102
  %2174 = vmatmul.bf16.gmra.mxu0 %v1724
  %v2175 = vpop.f32.mrf.mxu0
  %v2176 = vadd.f32 %v1962, %v2175
  %v2177 = vpop.f32.mrf.mxu0
  %v2178 = vadd.f32 %v1964, %v2177
  %2179 = vmatmul.bf16.gmra.mxu0 %v1726
  %v2180 = vpop.f32.mrf.mxu0
  %v2181 = vadd.f32 %v1967, %v2180
  %v2182 = vpop.f32.mrf.mxu0
  %2183 = vdwg.mxu0
  %2184 = vmatpush.bf16.msra.mxu0 %v2132
  %2185 = vmatpush.bf16.msra.mxu0 %v2130
  %2186 = vmatpush.bf16.msra.mxu0 %v2128
  %2187 = vmatpush.bf16.msra.mxu0 %v2126
  %2188 = vmatpush.bf16.msra.mxu0 %v2124
  %2189 = vmatpush.bf16.msra.mxu0 %v2122
  %2190 = vmatpush.bf16.msra.mxu0 %v2120
  %2191 = vmatpush.bf16.msra.mxu0 %v2118
  %2192 = vmatmul.bf16.gmra.mxu0 %v1725
  %v2193 = vpop.f32.mrf.mxu0
  %v2194 = vadd.f32 %v2176, %v2193
  %v2195 = vpop.f32.mrf.mxu0
  %v2196 = vadd.f32 %v2178, %v2195
  %2197 = vmatmul.bf16.gmra.mxu0 %v1727
  %v2198 = vpop.f32.mrf.mxu0
  %v2199 = vadd.f32 %v2181, %v2198
  %v2200 = vpop.f32.mrf.mxu0
  %2201 = vdwg.mxu0
  %2202 = vmatpush.bf16.msra.mxu0 %v2117
  %2203 = vmatpush.bf16.msra.mxu0 %v2115
  %2204 = vmatpush.bf16.msra.mxu0 %v2113
  %2205 = vmatpush.bf16.msra.mxu0 %v2111
  %2206 = vmatpush.bf16.msra.mxu0 %v2109
  %2207 = vmatpush.bf16.msra.mxu0 %v2107
  %2208 = vmatpush.bf16.msra.mxu0 %v2105
  %2209 = vmatpush.bf16.msra.mxu0 %v2103
  %2210 = vmatmul.bf16.gmra.mxu0 %v1724
  %v2211 = vpop.f32.mrf.mxu0
  %v2212 = vadd.f32 %v1998, %v2211
  %v2213 = vpop.f32.mrf.mxu0
  %v2214 = vadd.f32 %v2000, %v2213
  %2215 = vmatmul.bf16.gmra.mxu0 %v1726
  %v2216 = vpop.f32.mrf.mxu0
  %v2217 = vadd.f32 %v2003, %v2216
  %v2218 = vpop.f32.mrf.mxu0
  %2219 = vdwg.mxu0
  %2220 = vmatpush.bf16.msra.mxu0 %v2133
  %2221 = vmatpush.bf16.msra.mxu0 %v2131
  %2222 = vmatpush.bf16.msra.mxu0 %v2129
  %2223 = vmatpush.bf16.msra.mxu0 %v2127
  %2224 = vmatpush.bf16.msra.mxu0 %v2125
  %2225 = vmatpush.bf16.msra.mxu0 %v2123
  %2226 = vmatpush.bf16.msra.mxu0 %v2121
  %2227 = vmatpush.bf16.msra.mxu0 %v2119
  %2228 = vmatmul.bf16.gmra.mxu0 %v1725
  %v2229 = vpop.f32.mrf.mxu0
  %v2230 = vadd.f32 %v2212, %v2229
  %v2231 = vpop.f32.mrf.mxu0
  %v2232 = vadd.f32 %v2214, %v2231
  %2233 = vmatmul.bf16.gmra.mxu0 %v1727
  %v2234 = vpop.f32.mrf.mxu0
  %v2235 = vadd.f32 %v2217, %v2234
  %v2236 = vpop.f32.mrf.mxu0
  %2237 = vdwg.mxu0
  %s2238 = scalar_lea.vmem [#allocation2], 96
  %v2239 = vld [vmem:[%s2238] sm:$0xff]
  %v2240 = vld [vmem:[%s2238 + $0x8] sm:$0xff]
  %s2241 = scalar_lea.vmem %s3, 512
  %v2242 = vld [vmem:[%s2241] sm:$0xff]
  %v2243 = vld [vmem:[%s2241 + $0x8] sm:$0xff]
  %v2244 = vld [vmem:[%s2241 + $0x10] sm:$0xff]
  %v2245 = vld [vmem:[%s2241 + $0x18] sm:$0xff]
  %v2246 = vld [vmem:[%s2241 + $0x20] sm:$0xff]
  %v2247 = vld [vmem:[%s2241 + $0x28] sm:$0xff]
  %v2248 = vld [vmem:[%s2241 + $0x30] sm:$0xff]
  %v2249 = vld [vmem:[%s2241 + $0x38] sm:$0xff]
  %v2250 = vld [vmem:[%s2241 + $0x40] sm:$0xff]
  %v2251 = vld [vmem:[%s2241 + $0x48] sm:$0xff]
  %v2252 = vld [vmem:[%s2241 + $0x50] sm:$0xff]
  %v2253 = vld [vmem:[%s2241 + $0x58] sm:$0xff]
  %v2254 = vld [vmem:[%s2241 + $0x60] sm:$0xff]
  %v2255 = vld [vmem:[%s2241 + $0x68] sm:$0xff]
  %v2256 = vld [vmem:[%s2241 + $0x70] sm:$0xff]
  %v2257 = vld [vmem:[%s2241 + $0x78] sm:$0xff]
  %v2258 = vld [vmem:[%s2241 + $0x80] sm:$0xff]
  %v2259 = vld [vmem:[%s2241 + $0x88] sm:$0xff]
  %v2260 = vld [vmem:[%s2241 + $0x90] sm:$0xff]
  %v2261 = vld [vmem:[%s2241 + $0x98] sm:$0xff]
  %v2262 = vld [vmem:[%s2241 + $0xa0] sm:$0xff]
  %v2263 = vld [vmem:[%s2241 + $0xa8] sm:$0xff]
  %v2264 = vld [vmem:[%s2241 + $0xb0] sm:$0xff]
  %v2265 = vld [vmem:[%s2241 + $0xb8] sm:$0xff]
  %v2266 = vld [vmem:[%s2241 + $0xc0] sm:$0xff]
  %v2267 = vld [vmem:[%s2241 + $0xc8] sm:$0xff]
  %v2268 = vld [vmem:[%s2241 + $0xd0] sm:$0xff]
  %v2269 = vld [vmem:[%s2241 + $0xd8] sm:$0xff]
  %v2270 = vld [vmem:[%s2241 + $0xe0] sm:$0xff]
  %v2271 = vld [vmem:[%s2241 + $0xe8] sm:$0xff]
  %v2272 = vld [vmem:[%s2241 + $0xf0] sm:$0xff]
  %v2273 = vld [vmem:[%s2241 + $0xf8] sm:$0xff]
  %v2274 = vpack.c.bf16 %v1690, %v1687
  %v2275 = vpack.c.bf16 %v1691, %v1688
  %v2276 = vpack.c.bf16 %v2239, %v2239
  %v2277 = vpack.c.bf16 %v2240, %v2240
  %v2310 = vunpack.c.l.b16 %v2242
  %v2311 = vunpack.c.h.b16 %v2242
  %v2312 = vunpack.c.l.b16 %v2243
  %v2313 = vunpack.c.h.b16 %v2243
  %v2314 = vunpack.c.l.b16 %v2244
  %v2315 = vunpack.c.h.b16 %v2244
  %v2316 = vunpack.c.l.b16 %v2245
  %v2317 = vunpack.c.h.b16 %v2245
  %v2318 = vunpack.c.l.b16 %v2246
  %v2319 = vunpack.c.h.b16 %v2246
  %v2320 = vunpack.c.l.b16 %v2247
  %v2321 = vunpack.c.h.b16 %v2247
  %v2322 = vunpack.c.l.b16 %v2248
  %v2323 = vunpack.c.h.b16 %v2248
  %v2324 = vunpack.c.l.b16 %v2249
  %v2325 = vunpack.c.h.b16 %v2249
  %v2326 = vunpack.c.l.b16 %v2250
  %v2327 = vunpack.c.h.b16 %v2250
  %v2328 = vunpack.c.l.b16 %v2251
  %v2329 = vunpack.c.h.b16 %v2251
  %v2330 = vunpack.c.l.b16 %v2252
  %v2331 = vunpack.c.h.b16 %v2252
  %v2332 = vunpack.c.l.b16 %v2253
  %v2333 = vunpack.c.h.b16 %v2253
  %v2334 = vunpack.c.l.b16 %v2254
  %v2335 = vunpack.c.h.b16 %v2254
  %v2336 = vunpack.c.l.b16 %v2255
  %v2337 = vunpack.c.h.b16 %v2255
  %v2338 = vunpack.c.l.b16 %v2256
  %v2339 = vunpack.c.h.b16 %v2256
  %v2340 = vunpack.c.l.b16 %v2257
  %v2341 = vunpack.c.h.b16 %v2257
  %v2342 = vunpack.c.l.b16 %v2258
  %v2343 = vunpack.c.h.b16 %v2258
  %v2344 = vunpack.c.l.b16 %v2259
  %v2345 = vunpack.c.h.b16 %v2259
  %v2346 = vunpack.c.l.b16 %v2260
  %v2347 = vunpack.c.h.b16 %v2260
  %v2348 = vunpack.c.l.b16 %v2261
  %v2349 = vunpack.c.h.b16 %v2261
  %v2350 = vunpack.c.l.b16 %v2262
  %v2351 = vunpack.c.h.b16 %v2262
  %v2352 = vunpack.c.l.b16 %v2263
  %v2353 = vunpack.c.h.b16 %v2263
  %v2354 = vunpack.c.l.b16 %v2264
  %v2355 = vunpack.c.h.b16 %v2264
  %v2356 = vunpack.c.l.b16 %v2265
  %v2357 = vunpack.c.h.b16 %v2265
  %v2358 = vunpack.c.l.b16 %v2266
  %v2359 = vunpack.c.h.b16 %v2266
  %v2360 = vunpack.c.l.b16 %v2267
  %v2361 = vunpack.c.h.b16 %v2267
  %v2362 = vunpack.c.l.b16 %v2268
  %v2363 = vunpack.c.h.b16 %v2268
  %v2364 = vunpack.c.l.b16 %v2269
  %v2365 = vunpack.c.h.b16 %v2269
  %v2366 = vunpack.c.l.b16 %v2270
  %v2367 = vunpack.c.h.b16 %v2270
  %v2368 = vunpack.c.l.b16 %v2271
  %v2369 = vunpack.c.h.b16 %v2271
  %v2370 = vunpack.c.l.b16 %v2272
  %v2371 = vunpack.c.h.b16 %v2272
  %v2372 = vunpack.c.l.b16 %v2273
  %v2373 = vunpack.c.h.b16 %v2273
  %v2374 = vpack.c.b16 %v2312, %v2310
  %v2375 = vpack.c.b16 %v2313, %v2311
  %v2376 = vpack.c.b16 %v2316, %v2314
  %v2377 = vpack.c.b16 %v2317, %v2315
  %v2378 = vpack.c.b16 %v2320, %v2318
  %v2379 = vpack.c.b16 %v2321, %v2319
  %v2380 = vpack.c.b16 %v2324, %v2322
  %v2381 = vpack.c.b16 %v2325, %v2323
  %v2382 = vpack.c.b16 %v2328, %v2326
  %v2383 = vpack.c.b16 %v2329, %v2327
  %v2384 = vpack.c.b16 %v2332, %v2330
  %v2385 = vpack.c.b16 %v2333, %v2331
  %v2386 = vpack.c.b16 %v2336, %v2334
  %v2387 = vpack.c.b16 %v2337, %v2335
  %v2388 = vpack.c.b16 %v2340, %v2338
  %v2389 = vpack.c.b16 %v2341, %v2339
  %v2390 = vpack.c.b16 %v2344, %v2342
  %v2391 = vpack.c.b16 %v2345, %v2343
  %v2392 = vpack.c.b16 %v2348, %v2346
  %v2393 = vpack.c.b16 %v2349, %v2347
  %v2394 = vpack.c.b16 %v2352, %v2350
  %v2395 = vpack.c.b16 %v2353, %v2351
  %v2396 = vpack.c.b16 %v2356, %v2354
  %v2397 = vpack.c.b16 %v2357, %v2355
  %v2398 = vpack.c.b16 %v2360, %v2358
  %v2399 = vpack.c.b16 %v2361, %v2359
  %v2400 = vpack.c.b16 %v2364, %v2362
  %v2401 = vpack.c.b16 %v2365, %v2363
  %v2402 = vpack.c.b16 %v2368, %v2366
  %v2403 = vpack.c.b16 %v2369, %v2367
  %v2404 = vpack.c.b16 %v2372, %v2370
  %v2405 = vpack.c.b16 %v2373, %v2371
  %2438 = vmatpush.bf16.msra.mxu0 %v2388
  %2439 = vmatpush.bf16.msra.mxu0 %v2386
  %2440 = vmatpush.bf16.msra.mxu0 %v2384
  %2441 = vmatpush.bf16.msra.mxu0 %v2382
  %2442 = vmatpush.bf16.msra.mxu0 %v2380
  %2443 = vmatpush.bf16.msra.mxu0 %v2378
  %2444 = vmatpush.bf16.msra.mxu0 %v2376
  %2445 = vmatpush.bf16.msra.mxu0 %v2374
  %2446 = vmatmul.bf16.gmra.mxu0 %v2274
  %v2447 = vpop.f32.mrf.mxu0
  %v2448 = vadd.f32 0.0, %v2447
  %v2449 = vpop.f32.mrf.mxu0
  %v2450 = vadd.f32 0.0, %v2449
  %2451 = vmatmul.bf16.gmra.mxu0 %v2276
  %v2452 = vpop.f32.mrf.mxu0
  %v2453 = vadd.f32 0.0, %v2452
  %v2454 = vpop.f32.mrf.mxu0
  %2455 = vdwg.mxu0
  %2456 = vmatpush.bf16.msra.mxu0 %v2404
  %2457 = vmatpush.bf16.msra.mxu0 %v2402
  %2458 = vmatpush.bf16.msra.mxu0 %v2400
  %2459 = vmatpush.bf16.msra.mxu0 %v2398
  %2460 = vmatpush.bf16.msra.mxu0 %v2396
  %2461 = vmatpush.bf16.msra.mxu0 %v2394
  %2462 = vmatpush.bf16.msra.mxu0 %v2392
  %2463 = vmatpush.bf16.msra.mxu0 %v2390
  %2464 = vmatmul.bf16.gmra.mxu0 %v2275
  %v2465 = vpop.f32.mrf.mxu0
  %v2466 = vadd.f32 %v2448, %v2465
  %v2467 = vpop.f32.mrf.mxu0
  %v2468 = vadd.f32 %v2450, %v2467
  %2469 = vmatmul.bf16.gmra.mxu0 %v2277
  %v2470 = vpop.f32.mrf.mxu0
  %v2471 = vadd.f32 %v2453, %v2470
  %v2472 = vpop.f32.mrf.mxu0
  %2473 = vdwg.mxu0
  %2474 = vmatpush.bf16.msra.mxu0 %v2389
  %2475 = vmatpush.bf16.msra.mxu0 %v2387
  %2476 = vmatpush.bf16.msra.mxu0 %v2385
  %2477 = vmatpush.bf16.msra.mxu0 %v2383
  %2478 = vmatpush.bf16.msra.mxu0 %v2381
  %2479 = vmatpush.bf16.msra.mxu0 %v2379
  %2480 = vmatpush.bf16.msra.mxu0 %v2377
  %2481 = vmatpush.bf16.msra.mxu0 %v2375
  %2482 = vmatmul.bf16.gmra.mxu0 %v2274
  %v2483 = vpop.f32.mrf.mxu0
  %v2484 = vadd.f32 0.0, %v2483
  %v2485 = vpop.f32.mrf.mxu0
  %v2486 = vadd.f32 0.0, %v2485
  %2487 = vmatmul.bf16.gmra.mxu0 %v2276
  %v2488 = vpop.f32.mrf.mxu0
  %v2489 = vadd.f32 0.0, %v2488
  %v2490 = vpop.f32.mrf.mxu0
  %2491 = vdwg.mxu0
  %2492 = vmatpush.bf16.msra.mxu0 %v2405
  %2493 = vmatpush.bf16.msra.mxu0 %v2403
  %2494 = vmatpush.bf16.msra.mxu0 %v2401
  %2495 = vmatpush.bf16.msra.mxu0 %v2399
  %2496 = vmatpush.bf16.msra.mxu0 %v2397
  %2497 = vmatpush.bf16.msra.mxu0 %v2395
  %2498 = vmatpush.bf16.msra.mxu0 %v2393
  %2499 = vmatpush.bf16.msra.mxu0 %v2391
  %2500 = vmatmul.bf16.gmra.mxu0 %v2275
  %v2501 = vpop.f32.mrf.mxu0
  %v2502 = vadd.f32 %v2484, %v2501
  %v2503 = vpop.f32.mrf.mxu0
  %v2504 = vadd.f32 %v2486, %v2503
  %2505 = vmatmul.bf16.gmra.mxu0 %v2277
  %v2506 = vpop.f32.mrf.mxu0
  %v2507 = vadd.f32 %v2489, %v2506
  %v2508 = vpop.f32.mrf.mxu0
  %2509 = vdwg.mxu0
  %v2510 = vadd.f32 %v2194, %v2466
  %v2511 = vadd.f32 %v2230, %v2502
  %v2512 = vadd.f32 %v2196, %v2468
  %v2513 = vadd.f32 %v2232, %v2504
  %v2514 = vadd.f32 %v2199, %v2471
  %v2515 = vadd.f32 %v2235, %v2507
  %s2516 = scalar_lea.vmem [#allocation2], 112
  %v2517 = vld [vmem:[%s2516] sm:$0xff]
  %v2518 = vld [vmem:[%s2516 + $0x8] sm:$0xff]
  %s2519 = scalar_lea.vmem %s3, 768
  %v2520 = vld [vmem:[%s2519] sm:$0xff]
  %v2521 = vld [vmem:[%s2519 + $0x8] sm:$0xff]
  %v2522 = vld [vmem:[%s2519 + $0x10] sm:$0xff]
  %v2523 = vld [vmem:[%s2519 + $0x18] sm:$0xff]
  %v2524 = vld [vmem:[%s2519 + $0x20] sm:$0xff]
  %v2525 = vld [vmem:[%s2519 + $0x28] sm:$0xff]
  %v2526 = vld [vmem:[%s2519 + $0x30] sm:$0xff]
  %v2527 = vld [vmem:[%s2519 + $0x38] sm:$0xff]
  %v2528 = vld [vmem:[%s2519 + $0x40] sm:$0xff]
  %v2529 = vld [vmem:[%s2519 + $0x48] sm:$0xff]
  %v2530 = vld [vmem:[%s2519 + $0x50] sm:$0xff]
  %v2531 = vld [vmem:[%s2519 + $0x58] sm:$0xff]
  %v2532 = vld [vmem:[%s2519 + $0x60] sm:$0xff]
  %v2533 = vld [vmem:[%s2519 + $0x68] sm:$0xff]
  %v2534 = vld [vmem:[%s2519 + $0x70] sm:$0xff]
  %v2535 = vld [vmem:[%s2519 + $0x78] sm:$0xff]
  %v2536 = vld [vmem:[%s2519 + $0x80] sm:$0xff]
  %v2537 = vld [vmem:[%s2519 + $0x88] sm:$0xff]
  %v2538 = vld [vmem:[%s2519 + $0x90] sm:$0xff]
  %v2539 = vld [vmem:[%s2519 + $0x98] sm:$0xff]
  %v2540 = vld [vmem:[%s2519 + $0xa0] sm:$0xff]
  %v2541 = vld [vmem:[%s2519 + $0xa8] sm:$0xff]
  %v2542 = vld [vmem:[%s2519 + $0xb0] sm:$0xff]
  %v2543 = vld [vmem:[%s2519 + $0xb8] sm:$0xff]
  %v2544 = vld [vmem:[%s2519 + $0xc0] sm:$0xff]
  %v2545 = vld [vmem:[%s2519 + $0xc8] sm:$0xff]
  %v2546 = vld [vmem:[%s2519 + $0xd0] sm:$0xff]
  %v2547 = vld [vmem:[%s2519 + $0xd8] sm:$0xff]
  %v2548 = vld [vmem:[%s2519 + $0xe0] sm:$0xff]
  %v2549 = vld [vmem:[%s2519 + $0xe8] sm:$0xff]
  %v2550 = vld [vmem:[%s2519 + $0xf0] sm:$0xff]
  %v2551 = vld [vmem:[%s2519 + $0xf8] sm:$0xff]
  %v2552 = vpack.c.bf16 %v1735, %v1732
  %v2553 = vpack.c.bf16 %v1736, %v1733
  %v2554 = vpack.c.bf16 %v2517, %v2517
  %v2555 = vpack.c.bf16 %v2518, %v2518
  %v2588 = vunpack.c.l.b16 %v2520
  %v2589 = vunpack.c.h.b16 %v2520
  %v2590 = vunpack.c.l.b16 %v2521
  %v2591 = vunpack.c.h.b16 %v2521
  %v2592 = vunpack.c.l.b16 %v2522
  %v2593 = vunpack.c.h.b16 %v2522
  %v2594 = vunpack.c.l.b16 %v2523
  %v2595 = vunpack.c.h.b16 %v2523
  %v2596 = vunpack.c.l.b16 %v2524
  %v2597 = vunpack.c.h.b16 %v2524
  %v2598 = vunpack.c.l.b16 %v2525
  %v2599 = vunpack.c.h.b16 %v2525
  %v2600 = vunpack.c.l.b16 %v2526
  %v2601 = vunpack.c.h.b16 %v2526
  %v2602 = vunpack.c.l.b16 %v2527
  %v2603 = vunpack.c.h.b16 %v2527
  %v2604 = vunpack.c.l.b16 %v2528
  %v2605 = vunpack.c.h.b16 %v2528
  %v2606 = vunpack.c.l.b16 %v2529
  %v2607 = vunpack.c.h.b16 %v2529
  %v2608 = vunpack.c.l.b16 %v2530
  %v2609 = vunpack.c.h.b16 %v2530
  %v2610 = vunpack.c.l.b16 %v2531
  %v2611 = vunpack.c.h.b16 %v2531
  %v2612 = vunpack.c.l.b16 %v2532
  %v2613 = vunpack.c.h.b16 %v2532
  %v2614 = vunpack.c.l.b16 %v2533
  %v2615 = vunpack.c.h.b16 %v2533
  %v2616 = vunpack.c.l.b16 %v2534
  %v2617 = vunpack.c.h.b16 %v2534
  %v2618 = vunpack.c.l.b16 %v2535
  %v2619 = vunpack.c.h.b16 %v2535
  %v2620 = vunpack.c.l.b16 %v2536
  %v2621 = vunpack.c.h.b16 %v2536
  %v2622 = vunpack.c.l.b16 %v2537
  %v2623 = vunpack.c.h.b16 %v2537
  %v2624 = vunpack.c.l.b16 %v2538
  %v2625 = vunpack.c.h.b16 %v2538
  %v2626 = vunpack.c.l.b16 %v2539
  %v2627 = vunpack.c.h.b16 %v2539
  %v2628 = vunpack.c.l.b16 %v2540
  %v2629 = vunpack.c.h.b16 %v2540
  %v2630 = vunpack.c.l.b16 %v2541
  %v2631 = vunpack.c.h.b16 %v2541
  %v2632 = vunpack.c.l.b16 %v2542
  %v2633 = vunpack.c.h.b16 %v2542
  %v2634 = vunpack.c.l.b16 %v2543
  %v2635 = vunpack.c.h.b16 %v2543
  %v2636 = vunpack.c.l.b16 %v2544
  %v2637 = vunpack.c.h.b16 %v2544
  %v2638 = vunpack.c.l.b16 %v2545
  %v2639 = vunpack.c.h.b16 %v2545
  %v2640 = vunpack.c.l.b16 %v2546
  %v2641 = vunpack.c.h.b16 %v2546
  %v2642 = vunpack.c.l.b16 %v2547
  %v2643 = vunpack.c.h.b16 %v2547
  %v2644 = vunpack.c.l.b16 %v2548
  %v2645 = vunpack.c.h.b16 %v2548
  %v2646 = vunpack.c.l.b16 %v2549
  %v2647 = vunpack.c.h.b16 %v2549
  %v2648 = vunpack.c.l.b16 %v2550
  %v2649 = vunpack.c.h.b16 %v2550
  %v2650 = vunpack.c.l.b16 %v2551
  %v2651 = vunpack.c.h.b16 %v2551
  %v2652 = vpack.c.b16 %v2590, %v2588
  %v2653 = vpack.c.b16 %v2591, %v2589
  %v2654 = vpack.c.b16 %v2594, %v2592
  %v2655 = vpack.c.b16 %v2595, %v2593
  %v2656 = vpack.c.b16 %v2598, %v2596
  %v2657 = vpack.c.b16 %v2599, %v2597
  %v2658 = vpack.c.b16 %v2602, %v2600
  %v2659 = vpack.c.b16 %v2603, %v2601
  %v2660 = vpack.c.b16 %v2606, %v2604
  %v2661 = vpack.c.b16 %v2607, %v2605
  %v2662 = vpack.c.b16 %v2610, %v2608
  %v2663 = vpack.c.b16 %v2611, %v2609
  %v2664 = vpack.c.b16 %v2614, %v2612
  %v2665 = vpack.c.b16 %v2615, %v2613
  %v2666 = vpack.c.b16 %v2618, %v2616
  %v2667 = vpack.c.b16 %v2619, %v2617
  %v2668 = vpack.c.b16 %v2622, %v2620
  %v2669 = vpack.c.b16 %v2623, %v2621
  %v2670 = vpack.c.b16 %v2626, %v2624
  %v2671 = vpack.c.b16 %v2627, %v2625
  %v2672 = vpack.c.b16 %v2630, %v2628
  %v2673 = vpack.c.b16 %v2631, %v2629
  %v2674 = vpack.c.b16 %v2634, %v2632
  %v2675 = vpack.c.b16 %v2635, %v2633
  %v2676 = vpack.c.b16 %v2638, %v2636
  %v2677 = vpack.c.b16 %v2639, %v2637
  %v2678 = vpack.c.b16 %v2642, %v2640
  %v2679 = vpack.c.b16 %v2643, %v2641
  %v2680 = vpack.c.b16 %v2646, %v2644
  %v2681 = vpack.c.b16 %v2647, %v2645
  %v2682 = vpack.c.b16 %v2650, %v2648
  %v2683 = vpack.c.b16 %v2651, %v2649
  %2716 = vmatpush.bf16.msra.mxu0 %v2666
  %2717 = vmatpush.bf16.msra.mxu0 %v2664
  %2718 = vmatpush.bf16.msra.mxu0 %v2662
  %2719 = vmatpush.bf16.msra.mxu0 %v2660
  %2720 = vmatpush.bf16.msra.mxu0 %v2658
  %2721 = vmatpush.bf16.msra.mxu0 %v2656
  %2722 = vmatpush.bf16.msra.mxu0 %v2654
  %2723 = vmatpush.bf16.msra.mxu0 %v2652
  %2724 = vmatmul.bf16.gmra.mxu0 %v2552
  %v2725 = vpop.f32.mrf.mxu0
  %v2726 = vadd.f32 0.0, %v2725
  %v2727 = vpop.f32.mrf.mxu0
  %v2728 = vadd.f32 0.0, %v2727
  %2729 = vmatmul.bf16.gmra.mxu0 %v2554
  %v2730 = vpop.f32.mrf.mxu0
  %v2731 = vadd.f32 0.0, %v2730
  %v2732 = vpop.f32.mrf.mxu0
  %2733 = vdwg.mxu0
  %2734 = vmatpush.bf16.msra.mxu0 %v2682
  %2735 = vmatpush.bf16.msra.mxu0 %v2680
  %2736 = vmatpush.bf16.msra.mxu0 %v2678
  %2737 = vmatpush.bf16.msra.mxu0 %v2676
  %2738 = vmatpush.bf16.msra.mxu0 %v2674
  %2739 = vmatpush.bf16.msra.mxu0 %v2672
  %2740 = vmatpush.bf16.msra.mxu0 %v2670
  %2741 = vmatpush.bf16.msra.mxu0 %v2668
  %2742 = vmatmul.bf16.gmra.mxu0 %v2553
  %v2743 = vpop.f32.mrf.mxu0
  %v2744 = vadd.f32 %v2726, %v2743
  %v2745 = vpop.f32.mrf.mxu0
  %v2746 = vadd.f32 %v2728, %v2745
  %2747 = vmatmul.bf16.gmra.mxu0 %v2555
  %v2748 = vpop.f32.mrf.mxu0
  %v2749 = vadd.f32 %v2731, %v2748
  %v2750 = vpop.f32.mrf.mxu0
  %2751 = vdwg.mxu0
  %2752 = vmatpush.bf16.msra.mxu0 %v2667
  %2753 = vmatpush.bf16.msra.mxu0 %v2665
  %2754 = vmatpush.bf16.msra.mxu0 %v2663
  %2755 = vmatpush.bf16.msra.mxu0 %v2661
  %2756 = vmatpush.bf16.msra.mxu0 %v2659
  %2757 = vmatpush.bf16.msra.mxu0 %v2657
  %2758 = vmatpush.bf16.msra.mxu0 %v2655
  %2759 = vmatpush.bf16.msra.mxu0 %v2653
  %2760 = vmatmul.bf16.gmra.mxu0 %v2552
  %v2761 = vpop.f32.mrf.mxu0
  %v2762 = vadd.f32 0.0, %v2761
  %v2763 = vpop.f32.mrf.mxu0
  %v2764 = vadd.f32 0.0, %v2763
  %2765 = vmatmul.bf16.gmra.mxu0 %v2554
  %v2766 = vpop.f32.mrf.mxu0
  %v2767 = vadd.f32 0.0, %v2766
  %v2768 = vpop.f32.mrf.mxu0
  %2769 = vdwg.mxu0
  %2770 = vmatpush.bf16.msra.mxu0 %v2683
  %2771 = vmatpush.bf16.msra.mxu0 %v2681
  %2772 = vmatpush.bf16.msra.mxu0 %v2679
  %2773 = vmatpush.bf16.msra.mxu0 %v2677
  %2774 = vmatpush.bf16.msra.mxu0 %v2675
  %2775 = vmatpush.bf16.msra.mxu0 %v2673
  %2776 = vmatpush.bf16.msra.mxu0 %v2671
  %2777 = vmatpush.bf16.msra.mxu0 %v2669
  %2778 = vmatmul.bf16.gmra.mxu0 %v2553
  %v2779 = vpop.f32.mrf.mxu0
  %v2780 = vadd.f32 %v2762, %v2779
  %v2781 = vpop.f32.mrf.mxu0
  %v2782 = vadd.f32 %v2764, %v2781
  %2783 = vmatmul.bf16.gmra.mxu0 %v2555
  %v2784 = vpop.f32.mrf.mxu0
  %v2785 = vadd.f32 %v2767, %v2784
  %v2786 = vpop.f32.mrf.mxu0
  %2787 = vdwg.mxu0
  %v2788 = vadd.f32 %v2510, %v2744
  %v2789 = vadd.f32 %v2511, %v2780
  %v2790 = vadd.f32 %v2512, %v2746
  %v2791 = vadd.f32 %v2513, %v2782
  %v2792 = vadd.f32 %v2514, %v2749
  %v2793 = vadd.f32 %v2515, %v2785
  %v2794 = vld [vmem:[%s4] sm:$0x3]
  %v2796 = vperm.slane %v2794, 0
  %v2797 = vperm.slane %v2794, 1
  %v2800 = vadd.f32 %v2788, %v2796
  %v2801 = vadd.f32 %v2789, %v2797
  %v2802 = vadd.f32 %v2790, %v2796
  %v2803 = vadd.f32 %v2791, %v2797
  %v2804 = vadd.f32 %v2792, %v2796
  %v2805 = vadd.f32 %v2793, %v2797
  %v2806 = vmax.f32 %v2800, 0.0
  %v2807 = vmax.f32 %v2801, 0.0
  %v2808 = vmax.f32 %v2802, 0.0
  %v2809 = vmax.f32 %v2803, 0.0
  %v2810 = vmax.f32 %v2804, 0.0
  %v2811 = vmax.f32 %v2805, 0.0
  %2812 = vst [vmem:[#allocation3] sm:$0xff] %v2806
  %2813 = vst [vmem:[#allocation3 + $0x8] sm:$0xff] %v2807
  %2814 = vst [vmem:[#allocation3 + $0x10] sm:$0xff] %v2808
  %2815 = vst [vmem:[#allocation3 + $0x18] sm:$0xff] %v2809
  %2816 = vst [vmem:[#allocation3 + $0x20] sm:$0xff] %v2810
  %2817 = vst [vmem:[#allocation3 + $0x28] sm:$0xff] %v2811
  %v2818 = vld [vmem:[#allocation3] sm:$0xff]
  %v2819 = vld [vmem:[#allocation3 + $0x8] sm:$0xff]
  %v2820 = vld [vmem:[%s5] sm:$0xf]
  %v2821 = vld [vmem:[%s5 + $0x4] sm:$0xf]
  %v2822 = vld [vmem:[%s5 + $0x8] sm:$0xf]
  %v2823 = vld [vmem:[%s5 + $0xc] sm:$0xf]
  %v2824 = vld [vmem:[%s5 + $0x10] sm:$0xf]
  %v2825 = vld [vmem:[%s5 + $0x14] sm:$0xf]
  %v2826 = vld [vmem:[%s5 + $0x18] sm:$0xf]
  %v2827 = vld [vmem:[%s5 + $0x1c] sm:$0xf]
  %v2828 = vld [vmem:[%s5 + $0x20] sm:$0xf]
  %v2829 = vld [vmem:[%s5 + $0x24] sm:$0xf]
  %v2830 = vld [vmem:[%s5 + $0x28] sm:$0xf]
  %v2831 = vld [vmem:[%s5 + $0x2c] sm:$0xf]
  %v2832 = vld [vmem:[%s5 + $0x30] sm:$0xf]
  %v2833 = vld [vmem:[%s5 + $0x34] sm:$0xf]
  %v2834 = vld [vmem:[%s5 + $0x38] sm:$0xf]
  %v2835 = vld [vmem:[%s5 + $0x3c] sm:$0xf]
  %v2836 = vld [vmem:[%s5 + $0x40] sm:$0xf]
  %v2837 = vld [vmem:[%s5 + $0x44] sm:$0xf]
  %v2838 = vld [vmem:[%s5 + $0x48] sm:$0xf]
  %v2839 = vld [vmem:[%s5 + $0x4c] sm:$0xf]
  %v2840 = vld [vmem:[%s5 + $0x50] sm:$0xf]
  %v2841 = vld [vmem:[%s5 + $0x54] sm:$0xf]
  %v2842 = vld [vmem:[%s5 + $0x58] sm:$0xf]
  %v2843 = vld [vmem:[%s5 + $0x5c] sm:$0xf]
  %v2844 = vld [vmem:[%s5 + $0x60] sm:$0xf]
  %v2845 = vld [vmem:[%s5 + $0x64] sm:$0xf]
  %v2846 = vld [vmem:[%s5 + $0x68] sm:$0xf]
  %v2847 = vld [vmem:[%s5 + $0x6c] sm:$0xf]
  %v2848 = vld [vmem:[%s5 + $0x70] sm:$0xf]
  %v2849 = vld [vmem:[%s5 + $0x74] sm:$0xf]
  %v2850 = vld [vmem:[%s5 + $0x78] sm:$0xf]
  %v2851 = vld [vmem:[%s5 + $0x7c] sm:$0xf]
  %v2852 = vpack.c.bf16 %v2818, %v2818
  %v2853 = vpack.c.bf16 %v2819, %v2819
  %s2854 = scalar_lea.vmem [#allocation3], 16
  %v2855 = vld [vmem:[%s2854] sm:$0xff]
  %v2856 = vld [vmem:[%s2854 + $0x8] sm:$0xff]
  %s2857 = scalar_lea.vmem %s5, 128
  %v2858 = vld [vmem:[%s2857] sm:$0xf]
  %v2859 = vld [vmem:[%s2857 + $0x4] sm:$0xf]
  %v2860 = vld [vmem:[%s2857 + $0x8] sm:$0xf]
  %v2861 = vld [vmem:[%s2857 + $0xc] sm:$0xf]
  %v2862 = vld [vmem:[%s2857 + $0x10] sm:$0xf]
  %v2863 = vld [vmem:[%s2857 + $0x14] sm:$0xf]
  %v2864 = vld [vmem:[%s2857 + $0x18] sm:$0xf]
  %v2865 = vld [vmem:[%s2857 + $0x1c] sm:$0xf]
  %v2866 = vld [vmem:[%s2857 + $0x20] sm:$0xf]
  %v2867 = vld [vmem:[%s2857 + $0x24] sm:$0xf]
  %v2868 = vld [vmem:[%s2857 + $0x28] sm:$0xf]
  %v2869 = vld [vmem:[%s2857 + $0x2c] sm:$0xf]
  %v2870 = vld [vmem:[%s2857 + $0x30] sm:$0xf]
  %v2871 = vld [vmem:[%s2857 + $0x34] sm:$0xf]
  %v2872 = vld [vmem:[%s2857 + $0x38] sm:$0xf]
  %v2873 = vld [vmem:[%s2857 + $0x3c] sm:$0xf]
  %v2874 = vld [vmem:[%s2857 + $0x40] sm:$0xf]
  %v2875 = vld [vmem:[%s2857 + $0x44] sm:$0xf]
  %v2876 = vld [vmem:[%s2857 + $0x48] sm:$0xf]
  %v2877 = vld [vmem:[%s2857 + $0x4c] sm:$0xf]
  %v2878 = vld [vmem:[%s2857 + $0x50] sm:$0xf]
  %v2879 = vld [vmem:[%s2857 + $0x54] sm:$0xf]
  %v2880 = vld [vmem:[%s2857 + $0x58] sm:$0xf]
  %v2881 = vld [vmem:[%s2857 + $0x5c] sm:$0xf]
  %v2882 = vld [vmem:[%s2857 + $0x60] sm:$0xf]
  %v2883 = vld [vmem:[%s2857 + $0x64] sm:$0xf]
  %v2884 = vld [vmem:[%s2857 + $0x68] sm:$0xf]
  %v2885 = vld [vmem:[%s2857 + $0x6c] sm:$0xf]
  %v2886 = vld [vmem:[%s2857 + $0x70] sm:$0xf]
  %v2887 = vld [vmem:[%s2857 + $0x74] sm:$0xf]
  %v2888 = vld [vmem:[%s2857 + $0x78] sm:$0xf]
  %v2889 = vld [vmem:[%s2857 + $0x7c] sm:$0xf]
  %v2890 = vpack.c.bf16 %v2855, %v2855
  %v2891 = vpack.c.bf16 %v2856, %v2856
  %v2924 = vunpack.c.l.b16 %v2858
  %v2925 = vunpack.c.l.b16 %v2859
  %v2926 = vunpack.c.l.b16 %v2860
  %v2927 = vunpack.c.l.b16 %v2861
  %v2928 = vunpack.c.l.b16 %v2862
  %v2929 = vunpack.c.l.b16 %v2863
  %v2930 = vunpack.c.l.b16 %v2864
  %v2931 = vunpack.c.l.b16 %v2865
  %v2932 = vunpack.c.l.b16 %v2866
  %v2933 = vunpack.c.l.b16 %v2867
  %v2934 = vunpack.c.l.b16 %v2868
  %v2935 = vunpack.c.l.b16 %v2869
  %v2936 = vunpack.c.l.b16 %v2870
  %v2937 = vunpack.c.l.b16 %v2871
  %v2938 = vunpack.c.l.b16 %v2872
  %v2939 = vunpack.c.l.b16 %v2873
  %v2940 = vunpack.c.l.b16 %v2874
  %v2941 = vunpack.c.l.b16 %v2875
  %v2942 = vunpack.c.l.b16 %v2876
  %v2943 = vunpack.c.l.b16 %v2877
  %v2944 = vunpack.c.l.b16 %v2878
  %v2945 = vunpack.c.l.b16 %v2879
  %v2946 = vunpack.c.l.b16 %v2880
  %v2947 = vunpack.c.l.b16 %v2881
  %v2948 = vunpack.c.l.b16 %v2882
  %v2949 = vunpack.c.l.b16 %v2883
  %v2950 = vunpack.c.l.b16 %v2884
  %v2951 = vunpack.c.l.b16 %v2885
  %v2952 = vunpack.c.l.b16 %v2886
  %v2953 = vunpack.c.l.b16 %v2887
  %v2954 = vunpack.c.l.b16 %v2888
  %v2955 = vunpack.c.l.b16 %v2889
  %v2956 = vpack.c.b16 %v2925, %v2924
  %v2957 = vpack.c.b16 %v2927, %v2926
  %v2958 = vpack.c.b16 %v2929, %v2928
  %v2959 = vpack.c.b16 %v2931, %v2930
  %v2960 = vpack.c.b16 %v2933, %v2932
  %v2961 = vpack.c.b16 %v2935, %v2934
  %v2962 = vpack.c.b16 %v2937, %v2936
  %v2963 = vpack.c.b16 %v2939, %v2938
  %v2964 = vpack.c.b16 %v2941, %v2940
  %v2965 = vpack.c.b16 %v2943, %v2942
  %v2966 = vpack.c.b16 %v2945, %v2944
  %v2967 = vpack.c.b16 %v2947, %v2946
  %v2968 = vpack.c.b16 %v2949, %v2948
  %v2969 = vpack.c.b16 %v2951, %v2950
  %v2970 = vpack.c.b16 %v2953, %v2952
  %v2971 = vpack.c.b16 %v2955, %v2954
  %2988 = vmatpush.bf16.msra.mxu0 %v2963
  %2989 = vmatpush.bf16.msra.mxu0 %v2962
  %2990 = vmatpush.bf16.msra.mxu0 %v2961
  %2991 = vmatpush.bf16.msra.mxu0 %v2960
  %2992 = vmatpush.bf16.msra.mxu0 %v2959
  %2993 = vmatpush.bf16.msra.mxu0 %v2958
  %2994 = vmatpush.bf16.msra.mxu0 %v2957
  %2995 = vmatpush.bf16.msra.mxu0 %v2956
  %2996 = vmatmul.bf16.gmra.mxu0 %v2890
  %v2997 = vpop.f32.mrf.mxu0
  %v2998 = vadd.f32 0.0, %v2997
  %v2999 = vpop.f32.mrf.mxu0
  %3000 = vdwg.mxu0
  %3001 = vmatpush.bf16.msra.mxu0 %v2971
  %3002 = vmatpush.bf16.msra.mxu0 %v2970
  %3003 = vmatpush.bf16.msra.mxu0 %v2969
  %3004 = vmatpush.bf16.msra.mxu0 %v2968
  %3005 = vmatpush.bf16.msra.mxu0 %v2967
  %3006 = vmatpush.bf16.msra.mxu0 %v2966
  %3007 = vmatpush.bf16.msra.mxu0 %v2965
  %3008 = vmatpush.bf16.msra.mxu0 %v2964
  %3009 = vmatmul.bf16.gmra.mxu0 %v2891
  %v3010 = vpop.f32.mrf.mxu0
  %v3011 = vadd.f32 %v2998, %v3010
  %v3012 = vpop.f32.mrf.mxu0
  %3013 = vdwg.mxu0
  %v3046 = vunpack.c.l.b16 %v2820
  %v3047 = vunpack.c.l.b16 %v2821
  %v3048 = vunpack.c.l.b16 %v2822
  %v3049 = vunpack.c.l.b16 %v2823
  %v3050 = vunpack.c.l.b16 %v2824
  %v3051 = vunpack.c.l.b16 %v2825
  %v3052 = vunpack.c.l.b16 %v2826
  %v3053 = vunpack.c.l.b16 %v2827
  %v3054 = vunpack.c.l.b16 %v2828
  %v3055 = vunpack.c.l.b16 %v2829
  %v3056 = vunpack.c.l.b16 %v2830
  %v3057 = vunpack.c.l.b16 %v2831
  %v3058 = vunpack.c.l.b16 %v2832
  %v3059 = vunpack.c.l.b16 %v2833
  %v3060 = vunpack.c.l.b16 %v2834
  %v3061 = vunpack.c.l.b16 %v2835
  %v3062 = vunpack.c.l.b16 %v2836
  %v3063 = vunpack.c.l.b16 %v2837
  %v3064 = vunpack.c.l.b16 %v2838
  %v3065 = vunpack.c.l.b16 %v2839
  %v3066 = vunpack.c.l.b16 %v2840
  %v3067 = vunpack.c.l.b16 %v2841
  %v3068 = vunpack.c.l.b16 %v2842
  %v3069 = vunpack.c.l.b16 %v2843
  %v3070 = vunpack.c.l.b16 %v2844
  %v3071 = vunpack.c.l.b16 %v2845
  %v3072 = vunpack.c.l.b16 %v2846
  %v3073 = vunpack.c.l.b16 %v2847
  %v3074 = vunpack.c.l.b16 %v2848
  %v3075 = vunpack.c.l.b16 %v2849
  %v3076 = vunpack.c.l.b16 %v2850
  %v3077 = vunpack.c.l.b16 %v2851
  %v3078 = vpack.c.b16 %v3047, %v3046
  %v3079 = vpack.c.b16 %v3049, %v3048
  %v3080 = vpack.c.b16 %v3051, %v3050
  %v3081 = vpack.c.b16 %v3053, %v3052
  %v3082 = vpack.c.b16 %v3055, %v3054
  %v3083 = vpack.c.b16 %v3057, %v3056
  %v3084 = vpack.c.b16 %v3059, %v3058
  %v3085 = vpack.c.b16 %v3061, %v3060
  %v3086 = vpack.c.b16 %v3063, %v3062
  %v3087 = vpack.c.b16 %v3065, %v3064
  %v3088 = vpack.c.b16 %v3067, %v3066
  %v3089 = vpack.c.b16 %v3069, %v3068
  %v3090 = vpack.c.b16 %v3071, %v3070
  %v3091 = vpack.c.b16 %v3073, %v3072
  %v3092 = vpack.c.b16 %v3075, %v3074
  %v3093 = vpack.c.b16 %v3077, %v3076
  %3110 = vmatpush.bf16.msra.mxu0 %v3085
  %3111 = vmatpush.bf16.msra.mxu0 %v3084
  %3112 = vmatpush.bf16.msra.mxu0 %v3083
  %3113 = vmatpush.bf16.msra.mxu0 %v3082
  %3114 = vmatpush.bf16.msra.mxu0 %v3081
  %3115 = vmatpush.bf16.msra.mxu0 %v3080
  %3116 = vmatpush.bf16.msra.mxu0 %v3079
  %3117 = vmatpush.bf16.msra.mxu0 %v3078
  %3118 = vmatmul.bf16.gmra.mxu0 %v2852
  %v3119 = vpop.f32.mrf.mxu0
  %v3120 = vadd.f32 %v3011, %v3119
  %v3121 = vpop.f32.mrf.mxu0
  %3122 = vdwg.mxu0
  %3123 = vmatpush.bf16.msra.mxu0 %v3093
  %3124 = vmatpush.bf16.msra.mxu0 %v3092
  %3125 = vmatpush.bf16.msra.mxu0 %v3091
  %3126 = vmatpush.bf16.msra.mxu0 %v3090
  %3127 = vmatpush.bf16.msra.mxu0 %v3089
  %3128 = vmatpush.bf16.msra.mxu0 %v3088
  %3129 = vmatpush.bf16.msra.mxu0 %v3087
  %3130 = vmatpush.bf16.msra.mxu0 %v3086
  %3131 = vmatmul.bf16.gmra.mxu0 %v2853
  %v3132 = vpop.f32.mrf.mxu0
  %v3133 = vadd.f32 %v3120, %v3132
  %v3134 = vpop.f32.mrf.mxu0
  %3135 = vdwg.mxu0
  %s3136 = scalar_lea.vmem [#allocation3], 32
  %v3137 = vld [vmem:[%s3136] sm:$0xff]
  %v3138 = vld [vmem:[%s3136 + $0x8] sm:$0xff]
  %s3139 = scalar_lea.vmem %s5, 256
  %v3140 = vld [vmem:[%s3139] sm:$0xf]
  %v3141 = vld [vmem:[%s3139 + $0x4] sm:$0xf]
  %v3142 = vld [vmem:[%s3139 + $0x8] sm:$0xf]
  %v3143 = vld [vmem:[%s3139 + $0xc] sm:$0xf]
  %v3144 = vld [vmem:[%s3139 + $0x10] sm:$0xf]
  %v3145 = vld [vmem:[%s3139 + $0x14] sm:$0xf]
  %v3146 = vld [vmem:[%s3139 + $0x18] sm:$0xf]
  %v3147 = vld [vmem:[%s3139 + $0x1c] sm:$0xf]
  %v3148 = vld [vmem:[%s3139 + $0x20] sm:$0xf]
  %v3149 = vld [vmem:[%s3139 + $0x24] sm:$0xf]
  %v3150 = vld [vmem:[%s3139 + $0x28] sm:$0xf]
  %v3151 = vld [vmem:[%s3139 + $0x2c] sm:$0xf]
  %v3152 = vld [vmem:[%s3139 + $0x30] sm:$0xf]
  %v3153 = vld [vmem:[%s3139 + $0x34] sm:$0xf]
  %v3154 = vld [vmem:[%s3139 + $0x38] sm:$0xf]
  %v3155 = vld [vmem:[%s3139 + $0x3c] sm:$0xf]
  %v3156 = vld [vmem:[%s3139 + $0x40] sm:$0xf]
  %v3157 = vld [vmem:[%s3139 + $0x44] sm:$0xf]
  %v3158 = vld [vmem:[%s3139 + $0x48] sm:$0xf]
  %v3159 = vld [vmem:[%s3139 + $0x4c] sm:$0xf]
  %v3160 = vld [vmem:[%s3139 + $0x50] sm:$0xf]
  %v3161 = vld [vmem:[%s3139 + $0x54] sm:$0xf]
  %v3162 = vld [vmem:[%s3139 + $0x58] sm:$0xf]
  %v3163 = vld [vmem:[%s3139 + $0x5c] sm:$0xf]
  %v3164 = vld [vmem:[%s3139 + $0x60] sm:$0xf]
  %v3165 = vld [vmem:[%s3139 + $0x64] sm:$0xf]
  %v3166 = vld [vmem:[%s3139 + $0x68] sm:$0xf]
  %v3167 = vld [vmem:[%s3139 + $0x6c] sm:$0xf]
  %v3168 = vld [vmem:[%s3139 + $0x70] sm:$0xf]
  %v3169 = vld [vmem:[%s3139 + $0x74] sm:$0xf]
  %v3170 = vld [vmem:[%s3139 + $0x78] sm:$0xf]
  %v3171 = vld [vmem:[%s3139 + $0x7c] sm:$0xf]
  %v3172 = vpack.c.bf16 %v3137, %v3137
  %v3173 = vpack.c.bf16 %v3138, %v3138
  %v3206 = vunpack.c.l.b16 %v3140
  %v3207 = vunpack.c.l.b16 %v3141
  %v3208 = vunpack.c.l.b16 %v3142
  %v3209 = vunpack.c.l.b16 %v3143
  %v3210 = vunpack.c.l.b16 %v3144
  %v3211 = vunpack.c.l.b16 %v3145
  %v3212 = vunpack.c.l.b16 %v3146
  %v3213 = vunpack.c.l.b16 %v3147
  %v3214 = vunpack.c.l.b16 %v3148
  %v3215 = vunpack.c.l.b16 %v3149
  %v3216 = vunpack.c.l.b16 %v3150
  %v3217 = vunpack.c.l.b16 %v3151
  %v3218 = vunpack.c.l.b16 %v3152
  %v3219 = vunpack.c.l.b16 %v3153
  %v3220 = vunpack.c.l.b16 %v3154
  %v3221 = vunpack.c.l.b16 %v3155
  %v3222 = vunpack.c.l.b16 %v3156
  %v3223 = vunpack.c.l.b16 %v3157
  %v3224 = vunpack.c.l.b16 %v3158
  %v3225 = vunpack.c.l.b16 %v3159
  %v3226 = vunpack.c.l.b16 %v3160
  %v3227 = vunpack.c.l.b16 %v3161
  %v3228 = vunpack.c.l.b16 %v3162
  %v3229 = vunpack.c.l.b16 %v3163
  %v3230 = vunpack.c.l.b16 %v3164
  %v3231 = vunpack.c.l.b16 %v3165
  %v3232 = vunpack.c.l.b16 %v3166
  %v3233 = vunpack.c.l.b16 %v3167
  %v3234 = vunpack.c.l.b16 %v3168
  %v3235 = vunpack.c.l.b16 %v3169
  %v3236 = vunpack.c.l.b16 %v3170
  %v3237 = vunpack.c.l.b16 %v3171
  %v3238 = vpack.c.b16 %v3207, %v3206
  %v3239 = vpack.c.b16 %v3209, %v3208
  %v3240 = vpack.c.b16 %v3211, %v3210
  %v3241 = vpack.c.b16 %v3213, %v3212
  %v3242 = vpack.c.b16 %v3215, %v3214
  %v3243 = vpack.c.b16 %v3217, %v3216
  %v3244 = vpack.c.b16 %v3219, %v3218
  %v3245 = vpack.c.b16 %v3221, %v3220
  %v3246 = vpack.c.b16 %v3223, %v3222
  %v3247 = vpack.c.b16 %v3225, %v3224
  %v3248 = vpack.c.b16 %v3227, %v3226
  %v3249 = vpack.c.b16 %v3229, %v3228
  %v3250 = vpack.c.b16 %v3231, %v3230
  %v3251 = vpack.c.b16 %v3233, %v3232
  %v3252 = vpack.c.b16 %v3235, %v3234
  %v3253 = vpack.c.b16 %v3237, %v3236
  %3270 = vmatpush.bf16.msra.mxu0 %v3245
  %3271 = vmatpush.bf16.msra.mxu0 %v3244
  %3272 = vmatpush.bf16.msra.mxu0 %v3243
  %3273 = vmatpush.bf16.msra.mxu0 %v3242
  %3274 = vmatpush.bf16.msra.mxu0 %v3241
  %3275 = vmatpush.bf16.msra.mxu0 %v3240
  %3276 = vmatpush.bf16.msra.mxu0 %v3239
  %3277 = vmatpush.bf16.msra.mxu0 %v3238
  %3278 = vmatmul.bf16.gmra.mxu0 %v3172
  %v3279 = vpop.f32.mrf.mxu0
  %v3280 = vadd.f32 0.0, %v3279
  %v3281 = vpop.f32.mrf.mxu0
  %3282 = vdwg.mxu0
  %3283 = vmatpush.bf16.msra.mxu0 %v3253
  %3284 = vmatpush.bf16.msra.mxu0 %v3252
  %3285 = vmatpush.bf16.msra.mxu0 %v3251
  %3286 = vmatpush.bf16.msra.mxu0 %v3250
  %3287 = vmatpush.bf16.msra.mxu0 %v3249
  %3288 = vmatpush.bf16.msra.mxu0 %v3248
  %3289 = vmatpush.bf16.msra.mxu0 %v3247
  %3290 = vmatpush.bf16.msra.mxu0 %v3246
  %3291 = vmatmul.bf16.gmra.mxu0 %v3173
  %v3292 = vpop.f32.mrf.mxu0
  %v3293 = vadd.f32 %v3280, %v3292
  %v3294 = vpop.f32.mrf.mxu0
  %3295 = vdwg.mxu0
  %v3296 = vadd.f32 %v3133, %v3293
  %v3297 = vld [vmem:[%s6] sm:$0x1]
  %v3299 = vperm.slane %v3297, 0
  %v3301 = vadd.f32 %v3296, %v3299
  %v3302 = vmax.f32 %v3301, 0.0
  %v3303 = vld [vmem:[%s7] sm:$0xff]
  %v3304 = vld [vmem:[%s7 + $0x8] sm:$0xff]
  %v3305 = vld [vmem:[%s7 + $0x10] sm:$0xff]
  %v3306 = vld [vmem:[%s7 + $0x18] sm:$0xff]
  %v3307 = vld [vmem:[%s7 + $0x20] sm:$0xff]
  %v3308 = vld [vmem:[%s7 + $0x28] sm:$0xff]
  %v3309 = vld [vmem:[%s7 + $0x30] sm:$0xff]
  %v3310 = vld [vmem:[%s7 + $0x38] sm:$0xff]
  %v3311 = vld [vmem:[%s7 + $0x40] sm:$0xff]
  %v3312 = vld [vmem:[%s7 + $0x48] sm:$0xff]
  %v3313 = vld [vmem:[%s7 + $0x50] sm:$0xff]
  %v3314 = vld [vmem:[%s7 + $0x58] sm:$0xff]
  %v3315 = vld [vmem:[%s7 + $0x60] sm:$0xff]
  %v3316 = vld [vmem:[%s7 + $0x68] sm:$0xff]
  %v3317 = vld [vmem:[%s7 + $0x70] sm:$0xff]
  %v3318 = vld [vmem:[%s7 + $0x78] sm:$0xff]
  %v3319 = vld [vmem:[%s7 + $0x80] sm:$0xff]
  %v3320 = vld [vmem:[%s7 + $0x88] sm:$0xff]
  %v3321 = vld [vmem:[%s7 + $0x90] sm:$0xff]
  %v3322 = vld [vmem:[%s7 + $0x98] sm:$0xff]
  %v3323 = vld [vmem:[%s7 + $0xa0] sm:$0xff]
  %v3324 = vld [vmem:[%s7 + $0xa8] sm:$0xff]
  %v3325 = vld [vmem:[%s7 + $0xb0] sm:$0xff]
  %v3326 = vld [vmem:[%s7 + $0xb8] sm:$0xff]
  %v3327 = vld [vmem:[%s7 + $0xc0] sm:$0xff]
  %v3328 = vld [vmem:[%s7 + $0xc8] sm:$0xff]
  %v3329 = vld [vmem:[%s7 + $0xd0] sm:$0xff]
  %v3330 = vld [vmem:[%s7 + $0xd8] sm:$0xff]
  %v3331 = vld [vmem:[%s7 + $0xe0] sm:$0xff]
  %v3332 = vld [vmem:[%s7 + $0xe8] sm:$0xff]
  %v3333 = vld [vmem:[%s7 + $0xf0] sm:$0xff]
  %v3334 = vld [vmem:[%s7 + $0xf8] sm:$0xff]
  %v3335 = vpack.c.bf16 %v3302, %v3302
  %v3336 = vld [vmem:[%s8] sm:$0xf]
  %v3338 = vperm.slane %v3336, 0
  %v3339 = vperm.slane %v3336, 1
  %v3340 = vperm.slane %v3336, 2
  %v3341 = vperm.slane %v3336, 3
  %v3378 = vunpack.c.l.b16 %v3303
  %v3379 = vunpack.c.h.b16 %v3303
  %v3380 = vunpack.c.l.b16 %v3304
  %v3381 = vunpack.c.h.b16 %v3304
  %v3382 = vunpack.c.l.b16 %v3305
  %v3383 = vunpack.c.h.b16 %v3305
  %v3384 = vunpack.c.l.b16 %v3306
  %v3385 = vunpack.c.h.b16 %v3306
  %v3386 = vunpack.c.l.b16 %v3307
  %v3387 = vunpack.c.h.b16 %v3307
  %v3388 = vunpack.c.l.b16 %v3308
  %v3389 = vunpack.c.h.b16 %v3308
  %v3390 = vunpack.c.l.b16 %v3309
  %v3391 = vunpack.c.h.b16 %v3309
  %v3392 = vunpack.c.l.b16 %v3310
  %v3393 = vunpack.c.h.b16 %v3310
  %v3394 = vunpack.c.l.b16 %v3311
  %v3395 = vunpack.c.h.b16 %v3311
  %v3396 = vunpack.c.l.b16 %v3312
  %v3397 = vunpack.c.h.b16 %v3312
  %v3398 = vunpack.c.l.b16 %v3313
  %v3399 = vunpack.c.h.b16 %v3313
  %v3400 = vunpack.c.l.b16 %v3314
  %v3401 = vunpack.c.h.b16 %v3314
  %v3402 = vunpack.c.l.b16 %v3315
  %v3403 = vunpack.c.h.b16 %v3315
  %v3404 = vunpack.c.l.b16 %v3316
  %v3405 = vunpack.c.h.b16 %v3316
  %v3406 = vunpack.c.l.b16 %v3317
  %v3407 = vunpack.c.h.b16 %v3317
  %v3408 = vunpack.c.l.b16 %v3318
  %v3409 = vunpack.c.h.b16 %v3318
  %v3410 = vunpack.c.l.b16 %v3319
  %v3411 = vunpack.c.h.b16 %v3319
  %v3412 = vunpack.c.l.b16 %v3320
  %v3413 = vunpack.c.h.b16 %v3320
  %v3414 = vunpack.c.l.b16 %v3321
  %v3415 = vunpack.c.h.b16 %v3321
  %v3416 = vunpack.c.l.b16 %v3322
  %v3417 = vunpack.c.h.b16 %v3322
  %v3418 = vunpack.c.l.b16 %v3323
  %v3419 = vunpack.c.h.b16 %v3323
  %v3420 = vunpack.c.l.b16 %v3324
  %v3421 = vunpack.c.h.b16 %v3324
  %v3422 = vunpack.c.l.b16 %v3325
  %v3423 = vunpack.c.h.b16 %v3325
  %v3424 = vunpack.c.l.b16 %v3326
  %v3425 = vunpack.c.h.b16 %v3326
  %v3426 = vunpack.c.l.b16 %v3327
  %v3427 = vunpack.c.h.b16 %v3327
  %v3428 = vunpack.c.l.b16 %v3328
  %v3429 = vunpack.c.h.b16 %v3328
  %v3430 = vunpack.c.l.b16 %v3329
  %v3431 = vunpack.c.h.b16 %v3329
  %v3432 = vunpack.c.l.b16 %v3330
  %v3433 = vunpack.c.h.b16 %v3330
  %v3434 = vunpack.c.l.b16 %v3331
  %v3435 = vunpack.c.h.b16 %v3331
  %v3436 = vunpack.c.l.b16 %v3332
  %v3437 = vunpack.c.h.b16 %v3332
  %v3438 = vunpack.c.l.b16 %v3333
  %v3439 = vunpack.c.h.b16 %v3333
  %v3440 = vunpack.c.l.b16 %v3334
  %v3441 = vunpack.c.h.b16 %v3334
  %v3442 = vpack.c.b16 %v3382, %v3378
  %v3443 = vpack.c.b16 %v3383, %v3379
  %v3444 = vpack.c.b16 %v3384, %v3380
  %v3445 = vpack.c.b16 %v3385, %v3381
  %v3446 = vpack.c.b16 %v3390, %v3386
  %v3447 = vpack.c.b16 %v3391, %v3387
  %v3448 = vpack.c.b16 %v3392, %v3388
  %v3449 = vpack.c.b16 %v3393, %v3389
  %v3450 = vpack.c.b16 %v3398, %v3394
  %v3451 = vpack.c.b16 %v3399, %v3395
  %v3452 = vpack.c.b16 %v3400, %v3396
  %v3453 = vpack.c.b16 %v3401, %v3397
  %v3454 = vpack.c.b16 %v3406, %v3402
  %v3455 = vpack.c.b16 %v3407, %v3403
  %v3456 = vpack.c.b16 %v3408, %v3404
  %v3457 = vpack.c.b16 %v3409, %v3405
  %v3458 = vpack.c.b16 %v3414, %v3410
  %v3459 = vpack.c.b16 %v3415, %v3411
  %v3460 = vpack.c.b16 %v3416, %v3412
  %v3461 = vpack.c.b16 %v3417, %v3413
  %v3462 = vpack.c.b16 %v3422, %v3418
  %v3463 = vpack.c.b16 %v3423, %v3419
  %v3464 = vpack.c.b16 %v3424, %v3420
  %v3465 = vpack.c.b16 %v3425, %v3421
  %v3466 = vpack.c.b16 %v3430, %v3426
  %v3467 = vpack.c.b16 %v3431, %v3427
  %v3468 = vpack.c.b16 %v3432, %v3428
  %v3469 = vpack.c.b16 %v3433, %v3429
  %v3470 = vpack.c.b16 %v3438, %v3434
  %v3471 = vpack.c.b16 %v3439, %v3435
  %v3472 = vpack.c.b16 %v3440, %v3436
  %v3473 = vpack.c.b16 %v3441, %v3437
  %3506 = vmatpush.bf16.msra.mxu0 %v3470
  %3507 = vmatpush.bf16.msra.mxu0 %v3466
  %3508 = vmatpush.bf16.msra.mxu0 %v3462
  %3509 = vmatpush.bf16.msra.mxu0 %v3458
  %3510 = vmatpush.bf16.msra.mxu0 %v3454
  %3511 = vmatpush.bf16.msra.mxu0 %v3450
  %3512 = vmatpush.bf16.msra.mxu0 %v3446
  %3513 = vmatpush.bf16.msra.mxu0 %v3442
  %3514 = vmatmul.bf16.gmra.mxu0 %v3335
  %v3515 = vpop.f32.mrf.mxu0
  %v3516 = vadd.f32 %v3338, %v3515
  %v3517 = vpop.f32.mrf.mxu0
  %3518 = vdwg.mxu0
  %3519 = vmatpush.bf16.msra.mxu0 %v3471
  %3520 = vmatpush.bf16.msra.mxu0 %v3467
  %3521 = vmatpush.bf16.msra.mxu0 %v3463
  %3522 = vmatpush.bf16.msra.mxu0 %v3459
  %3523 = vmatpush.bf16.msra.mxu0 %v3455
  %3524 = vmatpush.bf16.msra.mxu0 %v3451
  %3525 = vmatpush.bf16.msra.mxu0 %v3447
  %3526 = vmatpush.bf16.msra.mxu0 %v3443
  %3527 = vmatmul.bf16.gmra.mxu0 %v3335
  %v3528 = vpop.f32.mrf.mxu0
  %v3529 = vadd.f32 %v3339, %v3528
  %v3530 = vpop.f32.mrf.mxu0
  %3531 = vdwg.mxu0
  %3532 = vmatpush.bf16.msra.mxu0 %v3472
  %3533 = vmatpush.bf16.msra.mxu0 %v3468
  %3534 = vmatpush.bf16.msra.mxu0 %v3464
  %3535 = vmatpush.bf16.msra.mxu0 %v3460
  %3536 = vmatpush.bf16.msra.mxu0 %v3456
  %3537 = vmatpush.bf16.msra.mxu0 %v3452
  %3538 = vmatpush.bf16.msra.mxu0 %v3448
  %3539 = vmatpush.bf16.msra.mxu0 %v3444
  %3540 = vmatmul.bf16.gmra.mxu0 %v3335
  %v3541 = vpop.f32.mrf.mxu0
  %v3542 = vadd.f32 %v3340, %v3541
  %v3543 = vpop.f32.mrf.mxu0
  %3544 = vdwg.mxu0
  %3545 = vmatpush.bf16.msra.mxu0 %v3473
  %3546 = vmatpush.bf16.msra.mxu0 %v3469
  %3547 = vmatpush.bf16.msra.mxu0 %v3465
  %3548 = vmatpush.bf16.msra.mxu0 %v3461
  %3549 = vmatpush.bf16.msra.mxu0 %v3457
  %3550 = vmatpush.bf16.msra.mxu0 %v3453
  %3551 = vmatpush.bf16.msra.mxu0 %v3449
  %3552 = vmatpush.bf16.msra.mxu0 %v3445
  %3553 = vmatmul.bf16.gmra.mxu0 %v3335
  %v3554 = vpop.f32.mrf.mxu0
  %v3555 = vadd.f32 %v3341, %v3554
  %v3556 = vpop.f32.mrf.mxu0
  %3557 = vdwg.mxu0
  %v3558 = vmax.f32 %v3516, 0.0
  %v3559 = vmax.f32 %v3529, 0.0
  %v3560 = vmax.f32 %v3542, 0.0
  %v3561 = vmax.f32 %v3555, 0.0
  %v3562 = vld [vmem:[%s9] sm:$0xf]
  %v3563 = vld [vmem:[%s9 + $0x4] sm:$0xf]
  %v3564 = vld [vmem:[%s9 + $0x8] sm:$0xf]
  %v3565 = vld [vmem:[%s9 + $0xc] sm:$0xf]
  %v3566 = vld [vmem:[%s9 + $0x10] sm:$0xf]
  %v3567 = vld [vmem:[%s9 + $0x14] sm:$0xf]
  %v3568 = vld [vmem:[%s9 + $0x18] sm:$0xf]
  %v3569 = vld [vmem:[%s9 + $0x1c] sm:$0xf]
  %v3570 = vld [vmem:[%s9 + $0x20] sm:$0xf]
  %v3571 = vld [vmem:[%s9 + $0x24] sm:$0xf]
  %v3572 = vld [vmem:[%s9 + $0x28] sm:$0xf]
  %v3573 = vld [vmem:[%s9 + $0x2c] sm:$0xf]
  %v3574 = vld [vmem:[%s9 + $0x30] sm:$0xf]
  %v3575 = vld [vmem:[%s9 + $0x34] sm:$0xf]
  %v3576 = vld [vmem:[%s9 + $0x38] sm:$0xf]
  %v3577 = vld [vmem:[%s9 + $0x3c] sm:$0xf]
  %v3578 = vld [vmem:[%s9 + $0x40] sm:$0xf]
  %v3579 = vld [vmem:[%s9 + $0x44] sm:$0xf]
  %v3580 = vld [vmem:[%s9 + $0x48] sm:$0xf]
  %v3581 = vld [vmem:[%s9 + $0x4c] sm:$0xf]
  %v3582 = vld [vmem:[%s9 + $0x50] sm:$0xf]
  %v3583 = vld [vmem:[%s9 + $0x54] sm:$0xf]
  %v3584 = vld [vmem:[%s9 + $0x58] sm:$0xf]
  %v3585 = vld [vmem:[%s9 + $0x5c] sm:$0xf]
  %v3586 = vld [vmem:[%s9 + $0x60] sm:$0xf]
  %v3587 = vld [vmem:[%s9 + $0x64] sm:$0xf]
  %v3588 = vld [vmem:[%s9 + $0x68] sm:$0xf]
  %v3589 = vld [vmem:[%s9 + $0x6c] sm:$0xf]
  %v3590 = vld [vmem:[%s9 + $0x70] sm:$0xf]
  %v3591 = vld [vmem:[%s9 + $0x74] sm:$0xf]
  %v3592 = vld [vmem:[%s9 + $0x78] sm:$0xf]
  %v3593 = vld [vmem:[%s9 + $0x7c] sm:$0xf]
  %v3594 = vld [vmem:[%s9 + $0x80] sm:$0xf]
  %v3595 = vld [vmem:[%s9 + $0x84] sm:$0xf]
  %v3596 = vld [vmem:[%s9 + $0x88] sm:$0xf]
  %v3597 = vld [vmem:[%s9 + $0x8c] sm:$0xf]
  %v3598 = vld [vmem:[%s9 + $0x90] sm:$0xf]
  %v3599 = vld [vmem:[%s9 + $0x94] sm:$0xf]
  %v3600 = vld [vmem:[%s9 + $0x98] sm:$0xf]
  %v3601 = vld [vmem:[%s9 + $0x9c] sm:$0xf]
  %v3602 = vld [vmem:[%s9 + $0xa0] sm:$0xf]
  %v3603 = vld [vmem:[%s9 + $0xa4] sm:$0xf]
  %v3604 = vld [vmem:[%s9 + $0xa8] sm:$0xf]
  %v3605 = vld [vmem:[%s9 + $0xac] sm:$0xf]
  %v3606 = vld [vmem:[%s9 + $0xb0] sm:$0xf]
  %v3607 = vld [vmem:[%s9 + $0xb4] sm:$0xf]
  %v3608 = vld [vmem:[%s9 + $0xb8] sm:$0xf]
  %v3609 = vld [vmem:[%s9 + $0xbc] sm:$0xf]
  %v3610 = vld [vmem:[%s9 + $0xc0] sm:$0xf]
  %v3611 = vld [vmem:[%s9 + $0xc4] sm:$0xf]
  %v3612 = vld [vmem:[%s9 + $0xc8] sm:$0xf]
  %v3613 = vld [vmem:[%s9 + $0xcc] sm:$0xf]
  %v3614 = vld [vmem:[%s9 + $0xd0] sm:$0xf]
  %v3615 = vld [vmem:[%s9 + $0xd4] sm:$0xf]
  %v3616 = vld [vmem:[%s9 + $0xd8] sm:$0xf]
  %v3617 = vld [vmem:[%s9 + $0xdc] sm:$0xf]
  %v3618 = vld [vmem:[%s9 + $0xe0] sm:$0xf]
  %v3619 = vld [vmem:[%s9 + $0xe4] sm:$0xf]
  %v3620 = vld [vmem:[%s9 + $0xe8] sm:$0xf]
  %v3621 = vld [vmem:[%s9 + $0xec] sm:$0xf]
  %v3622 = vld [vmem:[%s9 + $0xf0] sm:$0xf]
  %v3623 = vld [vmem:[%s9 + $0xf4] sm:$0xf]
  %v3624 = vld [vmem:[%s9 + $0xf8] sm:$0xf]
  %v3625 = vld [vmem:[%s9 + $0xfc] sm:$0xf]
  %v3626 = vpack.c.bf16 %v3558, %v3558
  %v3627 = vpack.c.bf16 %v3559, %v3559
  %v3628 = vpack.c.bf16 %v3560, %v3560
  %v3629 = vpack.c.bf16 %v3561, %v3561
  %v3630 = vld [vmem:[%s10] sm:$0x1]
  %v3632 = vperm.slane %v3630, 0
  %v3698 = vunpack.c.l.b16 %v3562
  %v3699 = vunpack.c.l.b16 %v3563
  %v3700 = vunpack.c.l.b16 %v3564
  %v3701 = vunpack.c.l.b16 %v3565
  %v3702 = vunpack.c.l.b16 %v3566
  %v3703 = vunpack.c.l.b16 %v3567
  %v3704 = vunpack.c.l.b16 %v3568
  %v3705 = vunpack.c.l.b16 %v3569
  %v3706 = vunpack.c.l.b16 %v3570
  %v3707 = vunpack.c.l.b16 %v3571
  %v3708 = vunpack.c.l.b16 %v3572
  %v3709 = vunpack.c.l.b16 %v3573
  %v3710 = vunpack.c.l.b16 %v3574
  %v3711 = vunpack.c.l.b16 %v3575
  %v3712 = vunpack.c.l.b16 %v3576
  %v3713 = vunpack.c.l.b16 %v3577
  %v3714 = vunpack.c.l.b16 %v3578
  %v3715 = vunpack.c.l.b16 %v3579
  %v3716 = vunpack.c.l.b16 %v3580
  %v3717 = vunpack.c.l.b16 %v3581
  %v3718 = vunpack.c.l.b16 %v3582
  %v3719 = vunpack.c.l.b16 %v3583
  %v3720 = vunpack.c.l.b16 %v3584
  %v3721 = vunpack.c.l.b16 %v3585
  %v3722 = vunpack.c.l.b16 %v3586
  %v3723 = vunpack.c.l.b16 %v3587
  %v3724 = vunpack.c.l.b16 %v3588
  %v3725 = vunpack.c.l.b16 %v3589
  %v3726 = vunpack.c.l.b16 %v3590
  %v3727 = vunpack.c.l.b16 %v3591
  %v3728 = vunpack.c.l.b16 %v3592
  %v3729 = vunpack.c.l.b16 %v3593
  %v3730 = vunpack.c.l.b16 %v3594
  %v3731 = vunpack.c.l.b16 %v3595
  %v3732 = vunpack.c.l.b16 %v3596
  %v3733 = vunpack.c.l.b16 %v3597
  %v3734 = vunpack.c.l.b16 %v3598
  %v3735 = vunpack.c.l.b16 %v3599
  %v3736 = vunpack.c.l.b16 %v3600
  %v3737 = vunpack.c.l.b16 %v3601
  %v3738 = vunpack.c.l.b16 %v3602
  %v3739 = vunpack.c.l.b16 %v3603
  %v3740 = vunpack.c.l.b16 %v3604
  %v3741 = vunpack.c.l.b16 %v3605
  %v3742 = vunpack.c.l.b16 %v3606
  %v3743 = vunpack.c.l.b16 %v3607
  %v3744 = vunpack.c.l.b16 %v3608
  %v3745 = vunpack.c.l.b16 %v3609
  %v3746 = vunpack.c.l.b16 %v3610
  %v3747 = vunpack.c.l.b16 %v3611
  %v3748 = vunpack.c.l.b16 %v3612
  %v3749 = vunpack.c.l.b16 %v3613
  %v3750 = vunpack.c.l.b16 %v3614
  %v3751 = vunpack.c.l.b16 %v3615
  %v3752 = vunpack.c.l.b16 %v3616
  %v3753 = vunpack.c.l.b16 %v3617
  %v3754 = vunpack.c.l.b16 %v3618
  %v3755 = vunpack.c.l.b16 %v3619
  %v3756 = vunpack.c.l.b16 %v3620
  %v3757 = vunpack.c.l.b16 %v3621
  %v3758 = vunpack.c.l.b16 %v3622
  %v3759 = vunpack.c.l.b16 %v3623
  %v3760 = vunpack.c.l.b16 %v3624
  %v3761 = vunpack.c.l.b16 %v3625
  %v3762 = vpack.c.b16 %v3699, %v3698
  %v3763 = vpack.c.b16 %v3701, %v3700
  %v3764 = vpack.c.b16 %v3703, %v3702
  %v3765 = vpack.c.b16 %v3705, %v3704
  %v3766 = vpack.c.b16 %v3707, %v3706
  %v3767 = vpack.c.b16 %v3709, %v3708
  %v3768 = vpack.c.b16 %v3711, %v3710
  %v3769 = vpack.c.b16 %v3713, %v3712
  %v3770 = vpack.c.b16 %v3715, %v3714
  %v3771 = vpack.c.b16 %v3717, %v3716
  %v3772 = vpack.c.b16 %v3719, %v3718
  %v3773 = vpack.c.b16 %v3721, %v3720
  %v3774 = vpack.c.b16 %v3723, %v3722
  %v3775 = vpack.c.b16 %v3725, %v3724
  %v3776 = vpack.c.b16 %v3727, %v3726
  %v3777 = vpack.c.b16 %v3729, %v3728
  %v3778 = vpack.c.b16 %v3731, %v3730
  %v3779 = vpack.c.b16 %v3733, %v3732
  %v3780 = vpack.c.b16 %v3735, %v3734
  %v3781 = vpack.c.b16 %v3737, %v3736
  %v3782 = vpack.c.b16 %v3739, %v3738
  %v3783 = vpack.c.b16 %v3741, %v3740
  %v3784 = vpack.c.b16 %v3743, %v3742
  %v3785 = vpack.c.b16 %v3745, %v3744
  %v3786 = vpack.c.b16 %v3747, %v3746
  %v3787 = vpack.c.b16 %v3749, %v3748
  %v3788 = vpack.c.b16 %v3751, %v3750
  %v3789 = vpack.c.b16 %v3753, %v3752
  %v3790 = vpack.c.b16 %v3755, %v3754
  %v3791 = vpack.c.b16 %v3757, %v3756
  %v3792 = vpack.c.b16 %v3759, %v3758
  %v3793 = vpack.c.b16 %v3761, %v3760
  %3826 = vmatpush.bf16.msra.mxu0 %v3769
  %3827 = vmatpush.bf16.msra.mxu0 %v3768
  %3828 = vmatpush.bf16.msra.mxu0 %v3767
  %3829 = vmatpush.bf16.msra.mxu0 %v3766
  %3830 = vmatpush.bf16.msra.mxu0 %v3765
  %3831 = vmatpush.bf16.msra.mxu0 %v3764
  %3832 = vmatpush.bf16.msra.mxu0 %v3763
  %3833 = vmatpush.bf16.msra.mxu0 %v3762
  %3834 = vmatmul.bf16.gmra.mxu0 %v3626
  %v3835 = vpop.f32.mrf.mxu0
  %v3836 = vadd.f32 %v3632, %v3835
  %v3837 = vpop.f32.mrf.mxu0
  %3838 = vdwg.mxu0
  %3839 = vmatpush.bf16.msra.mxu0 %v3777
  %3840 = vmatpush.bf16.msra.mxu0 %v3776
  %3841 = vmatpush.bf16.msra.mxu0 %v3775
  %3842 = vmatpush.bf16.msra.mxu0 %v3774
  %3843 = vmatpush.bf16.msra.mxu0 %v3773
  %3844 = vmatpush.bf16.msra.mxu0 %v3772
  %3845 = vmatpush.bf16.msra.mxu0 %v3771
  %3846 = vmatpush.bf16.msra.mxu0 %v3770
  %3847 = vmatmul.bf16.gmra.mxu0 %v3627
  %v3848 = vpop.f32.mrf.mxu0
  %v3849 = vadd.f32 %v3836, %v3848
  %v3850 = vpop.f32.mrf.mxu0
  %3851 = vdwg.mxu0
  %3852 = vmatpush.bf16.msra.mxu0 %v3785
  %3853 = vmatpush.bf16.msra.mxu0 %v3784
  %3854 = vmatpush.bf16.msra.mxu0 %v3783
  %3855 = vmatpush.bf16.msra.mxu0 %v3782
  %3856 = vmatpush.bf16.msra.mxu0 %v3781
  %3857 = vmatpush.bf16.msra.mxu0 %v3780
  %3858 = vmatpush.bf16.msra.mxu0 %v3779
  %3859 = vmatpush.bf16.msra.mxu0 %v3778
  %3860 = vmatmul.bf16.gmra.mxu0 %v3628
  %v3861 = vpop.f32.mrf.mxu0
  %v3862 = vadd.f32 %v3849, %v3861
  %v3863 = vpop.f32.mrf.mxu0
  %3864 = vdwg.mxu0
  %3865 = vmatpush.bf16.msra.mxu0 %v3793
  %3866 = vmatpush.bf16.msra.mxu0 %v3792
  %3867 = vmatpush.bf16.msra.mxu0 %v3791
  %3868 = vmatpush.bf16.msra.mxu0 %v3790
  %3869 = vmatpush.bf16.msra.mxu0 %v3789
  %3870 = vmatpush.bf16.msra.mxu0 %v3788
  %3871 = vmatpush.bf16.msra.mxu0 %v3787
  %3872 = vmatpush.bf16.msra.mxu0 %v3786
  %3873 = vmatmul.bf16.gmra.mxu0 %v3629
  %v3874 = vpop.f32.mrf.mxu0
  %v3875 = vadd.f32 %v3862, %v3874
  %v3876 = vpop.f32.mrf.mxu0
  %3877 = vdwg.mxu0
  %3878 = vst [vmem:[%s11] sm:$0xff] %v3875
  // Predicated region
  $region46: #{ac_forward.1} parent=0 // pred_check
    _
  $region47: #{ac_forward.1} parent=0 // pred_check_branch
    %3880 = sbr.rel (0) target = $region49
  $region48: #{ac_forward.1} parent=0 // pred_region
    _
  $region49: #{ac_forward.1} parent=0 // pred_fallthru
    _
  // Predicated region
  $region50: #{ac_forward.1} parent=0 // pred_check
    _
  $region51: #{ac_forward.1} parent=0 // pred_check_branch
    %3882 = sbr.rel (0) target = $region53
  $region52: #{ac_forward.1} parent=0 // pred_region
    _
  $region53: #{ac_forward.1} parent=0 // pred_fallthru
    _

</llo_original>
